<compile_context>
chip_gen: v7x
topology: tpu7x:2x2x1
jax: 0.10.0
libtpu: 0.0.40
codegen_flags: <defaults>
</compile_context>

<pallas_src>
import math

import jax
import jax.numpy as jnp
from jax.experimental import pallas as pl
from jax.experimental.pallas import tpu as pltpu

BATCH = 2
SEQ_LEN = 8
N_FEATURES = 5
HIDDEN_LSTM = 32                 # H
HIDDEN_FC = 32
N_LAYERS_LSTM = 3
N_HEADS = 8
EMBED = 2 * HIDDEN_LSTM          # 64, bidirectional concat
HEAD_DIM = EMBED // N_HEADS      # 8
N_OUT = 2                        # multi == False


# ---------------------------------------------------------------------------
# Single fused kernel: 3-layer BiLSTM + multi-head attention + FC stack + head
# ---------------------------------------------------------------------------
def _bilstm_attn_mlp_kernel(x_ref, wxf_ref, wxb_ref, wh_ref, b_ref,
                            wqkv_ref, bqkv_ref, wo_ref, bo_ref,
                            w1_ref, b1_ref, w2_ref, b2_ref, w3_ref, b3_ref,
                            wout_ref, bout_ref, out_ref):
    """Fused forward.

    x_ref:    [T*B, 2H]  time-major (row t*B + b), zero-padded input
    wxf_ref:  [L, 2H, 8H] input weights -> forward gate columns only
    wxb_ref:  [L, 2H, 8H] input weights -> backward gate columns only
    wh_ref:   [L, 2H, 8H] block-diagonal recurrent weights (fw/bw interleaved)
    b_ref:    [L, 1, 8H]  fused biases (b_ih + b_hh), fw/bw interleaved
    Gate-column layout (32 lanes each): i_f|i_b|f_f|f_b|g_f|g_b|o_f|o_b so the
    packed state [h_fw|h_bw] / [c_fw|c_bw] updates with lane-aligned ops.
    """
    B, T, H = BATCH, SEQ_LEN, HIDDEN_LSTM
    H2, E, HD = 2 * H, EMBED, HEAD_DIM

    act = x_ref[...]                                          # [T*B, 2H] t-major

    # Lane mask picking the forward half of the packed state.
    fw_half = jax.lax.broadcasted_iota(jnp.int32, (B, H2), 1) < H   # [B, 2H]

    def time_reverse(v):                                      # reverse blocks of B rows
        return jnp.concatenate(
            [v[(T - 1 - t) * B:(T - t) * B, :] for t in range(T)], axis=0)

    for layer in range(N_LAYERS_LSTM):
        wxf = wxf_ref[layer]                                  # [2H, 8H]
        wxb = wxb_ref[layer]                                  # [2H, 8H]
        wh = wh_ref[layer]                                    # [2H, 8H]
        bb = b_ref[layer]                                     # [1, 8H]

        # Hoisted input projection; fw/bw time selection is folded into the
        # (wxf, wxb) column packing -> no per-step select on the recurrence.
        act_rev = time_reverse(act)
        gx = (jnp.dot(act, wxf, preferred_element_type=jnp.float32)
              + jnp.dot(act_rev, wxb, preferred_element_type=jnp.float32)
              + bb)                                           # [T*B, 8H]

        h = jnp.zeros((B, H2), jnp.float32)                   # [h_fw | h_bw]
        c = jnp.zeros((B, H2), jnp.float32)                   # [c_fw | c_bw]
        hs = [None] * T

        # TODO(synk): hold wh resident in the MXU across the T unrolled steps
        # (pltpu.matmul_push_rhs / matmul_acc_lhs / matmul_pop) instead of
        # re-pushing the 64x256 RHS for every jnp.dot on the serial chain.
        for t in range(T):                                    # fully unrolled
            gates = gx[t * B:(t + 1) * B, :] + jnp.dot(
                h, wh, preferred_element_type=jnp.float32)    # [B, 8H]
            s = jax.nn.sigmoid(gates)                         # one full-width sigmoid
            i_g = s[:, 0:H2]
            f_g = s[:, H2:2 * H2]
            o_g = s[:, 3 * H2:4 * H2]
            g_g = jnp.tanh(gates[:, 2 * H2:3 * H2])           # single 64-wide tanh
            c = f_g * c + i_g * g_g
            h = o_g * jnp.tanh(c)
            hs[t] = h

        # Layer output at time t = [h_fw(step t) | h_bw(step T-1-t)].
        act = jnp.concatenate(
            [jnp.where(fw_half, hs[t], hs[T - 1 - t]) for t in range(T)],
            axis=0)                                           # [T*B, 2H]

    # ---- multi-head self-attention on the whole [T*B, E] slab -------------
    scale = 1.0 / math.sqrt(HD)
    qkv = (jnp.dot(act, wqkv_ref[...], preferred_element_type=jnp.float32)
           + bqkv_ref[...])                                   # [T*B, 3E]
    q = qkv[:, 0:E] * scale
    k = qkv[:, E:2 * E]
    v = qkv[:, 2 * E:3 * E]

    # Same-batch mask: row i (= t*B + b) may only attend to columns with the
    # same b; this lets both batch elements share every matmul.
    ri = jax.lax.broadcasted_iota(jnp.int32, (T * B, T * B), 0)
    ci = jax.lax.broadcasted_iota(jnp.int32, (T * B, T * B), 1)
    same_batch = (ri % B) == (ci % B)

    ctx_heads = []
    for hh in range(N_HEADS):                                 # static, unrolled
        lo = hh * HD
        qh = q[:, lo:lo + HD]
        kh = k[:, lo:lo + HD]
        vh = v[:, lo:lo + HD]
        sc = jax.lax.dot_general(qh, kh, (((1,), (1,)), ((), ())),
                                 preferred_element_type=jnp.float32)  # [T*B, T*B]
        sc = jnp.where(same_batch, sc, -1e30)
        sc = sc - jnp.max(sc, axis=-1, keepdims=True)
        p = jnp.exp(sc)
        p = p / jnp.sum(p, axis=-1, keepdims=True)            # exact divide
        ctx_heads.append(jnp.dot(p, vh, preferred_element_type=jnp.float32))
    ctx = jnp.concatenate(ctx_heads, axis=1)                  # [T*B, E]
    attn = (jnp.dot(ctx, wo_ref[...], preferred_element_type=jnp.float32)
            + bo_ref[...])                                    # [T*B, E], t-major

    # ---- FC1 as a time-accumulation (no in-kernel flatten) -----------------
    # torch: attn.view(B, T*E) @ w1  ==  sum_t attn[:, t, :] @ w1[t*E:(t+1)*E]
    w1 = w1_ref[...]                                          # [T*E, HFC]
    acc = jnp.zeros((B, HIDDEN_FC), jnp.float32)
    for t in range(T):
        acc = acc + jnp.dot(attn[t * B:(t + 1) * B, :],
                            w1[t * E:(t + 1) * E, :],
                            preferred_element_type=jnp.float32)

    def hardswish(u):
        return u * jnp.clip(u + 3.0, 0.0, 6.0) * (1.0 / 6.0)

    h1 = hardswish(acc + b1_ref[...])
    h2 = hardswish(jnp.dot(h1, w2_ref[...],
                           preferred_element_type=jnp.float32) + b2_ref[...])
    h3 = hardswish(jnp.dot(h2, w3_ref[...],
                           preferred_element_type=jnp.float32) + b3_ref[...])
    out_ref[...] = (jnp.dot(h3, wout_ref[...],
                            preferred_element_type=jnp.float32) + bout_ref[...])


# ---------------------------------------------------------------------------
# Parameter init (deterministic, mimics the module's init scheme) + packing
# ---------------------------------------------------------------------------
def _xavier(key, fan_in, fan_out):
    bound = math.sqrt(6.0 / (fan_in + fan_out))
    return jax.random.uniform(key, (fan_in, fan_out), jnp.float32, -bound, bound)


def init_params(key):
    H = HIDDEN_LSTM
    E = EMBED
    k = 1.0 / math.sqrt(H)
    keys = iter(jax.random.split(key, 64))

    wxf_layers, wxb_layers, wh_layers, b_layers = [], [], [], []
    for layer in range(N_LAYERS_LSTM):
        din = N_FEATURES if layer == 0 else 2 * H
        wxf_l = jnp.zeros((2 * H, 8 * H), jnp.float32)
        wxb_l = jnp.zeros((2 * H, 8 * H), jnp.float32)
        wh_l = jnp.zeros((2 * H, 8 * H), jnp.float32)
        b_l = jnp.zeros((1, 8 * H), jnp.float32)
        for d in range(2):                       # 0 = forward, 1 = backward
            wih = jax.random.uniform(next(keys), (din, 4 * H), jnp.float32, -k, k)
            whh = jax.random.uniform(next(keys), (H, 4 * H), jnp.float32, -k, k)
            b_ih = jax.random.uniform(next(keys), (4 * H,), jnp.float32, -k, k)
            b_hh = jax.random.uniform(next(keys), (4 * H,), jnp.float32, -k, k)
            bias = b_ih + b_hh
            for g in range(4):                   # PyTorch gate order i, f, g, o
                col = (2 * g + d) * H            # interleave fw/bw gate blocks
                blk = wih[:, g * H:(g + 1) * H]
                if d == 0:
                    wxf_l = wxf_l.at[:din, col:col + H].set(blk)
                else:
                    wxb_l = wxb_l.at[:din, col:col + H].set(blk)
                wh_l = wh_l.at[d * H:(d + 1) * H, col:col + H].set(
                    whh[:, g * H:(g + 1) * H])
                b_l = b_l.at[0, col:col + H].set(bias[g * H:(g + 1) * H])
        wxf_layers.append(wxf_l)
        wxb_layers.append(wxb_l)
        wh_layers.append(wh_l)
        b_layers.append(b_l)

    params = {
        "wxf": jnp.stack(wxf_layers),            # [L, 2H, 8H]
        "wxb": jnp.stack(wxb_layers),            # [L, 2H, 8H]
        "wh": jnp.stack(wh_layers),              # [L, 2H, 8H]
        "b": jnp.stack(b_layers),                # [L, 1, 8H]
        "attn": {
            # xavier_uniform_ on the full (3E, E) in_proj_weight, stored transposed.
            "wqkv": _xavier(next(keys), E, 3 * E),
            "bqkv": jnp.zeros((1, 3 * E), jnp.float32),
            "wo": _xavier(next(keys), E, E),
            "bo": jnp.zeros((1, E), jnp.float32),
        },
        "fc": {
            "w1": _xavier(next(keys), E * SEQ_LEN, HIDDEN_FC),
            "b1": jnp.zeros((1, HIDDEN_FC), jnp.float32),
            "w2": _xavier(next(keys), HIDDEN_FC, HIDDEN_FC),
            "b2": jnp.zeros((1, HIDDEN_FC), jnp.float32),
            "w3": _xavier(next(keys), HIDDEN_FC, HIDDEN_FC),
            "b3": jnp.zeros((1, HIDDEN_FC), jnp.float32),
            "wo": _xavier(next(keys), HIDDEN_FC, N_OUT),
            "bo": jnp.zeros((1, N_OUT), jnp.float32),
        },
    }
    return params


# ---------------------------------------------------------------------------
# Full forward pass: exactly ONE pallas_call
# ---------------------------------------------------------------------------
def forward(x, params):
    B, T, F = x.shape
    H = HIDDEN_LSTM
    E = EMBED
    L = N_LAYERS_LSTM
    HFC = HIDDEN_FC

    # One-time wrapper layout op (tiny fused XLA copy): time-major rows
    # (row = t*B + b), zero-padded to an aligned [T*B, 2H] = [16, 64] tile.
    x_tm = jnp.transpose(x, (1, 0, 2)).reshape(T * B, F)
    x_pad = jnp.pad(x_tm, ((0, 0), (0, 2 * H - F)))

    fa = params["attn"]
    ff = params["fc"]
    logits = pl.pallas_call(
        _bilstm_attn_mlp_kernel,
        out_shape=jax.ShapeDtypeStruct((B, N_OUT), jnp.float32),
        grid=(1,),
        in_specs=[
            pl.BlockSpec((T * B, 2 * H), lambda i: (0, 0)),          # x (packed)
            pl.BlockSpec((L, 2 * H, 8 * H), lambda i: (0, 0, 0)),    # wxf
            pl.BlockSpec((L, 2 * H, 8 * H), lambda i: (0, 0, 0)),    # wxb
            pl.BlockSpec((L, 2 * H, 8 * H), lambda i: (0, 0, 0)),    # wh
            pl.BlockSpec((L, 1, 8 * H), lambda i: (0, 0, 0)),        # b
            pl.BlockSpec((E, 3 * E), lambda i: (0, 0)),              # wqkv
            pl.BlockSpec((1, 3 * E), lambda i: (0, 0)),              # bqkv
            pl.BlockSpec((E, E), lambda i: (0, 0)),                  # wo
            pl.BlockSpec((1, E), lambda i: (0, 0)),                  # bo
            pl.BlockSpec((T * E, HFC), lambda i: (0, 0)),            # w1
            pl.BlockSpec((1, HFC), lambda i: (0, 0)),                # b1
            pl.BlockSpec((HFC, HFC), lambda i: (0, 0)),              # w2
            pl.BlockSpec((1, HFC), lambda i: (0, 0)),                # b2
            pl.BlockSpec((HFC, HFC), lambda i: (0, 0)),              # w3
            pl.BlockSpec((1, HFC), lambda i: (0, 0)),                # b3
            pl.BlockSpec((HFC, N_OUT), lambda i: (0, 0)),            # wout
            pl.BlockSpec((1, N_OUT), lambda i: (0, 0)),              # bout
        ],
        out_specs=pl.BlockSpec((B, N_OUT), lambda i: (0, 0)),
        compiler_params=pltpu.CompilerParams(dimension_semantics=("arbitrary",)),
    )(x_pad, params["wxf"], params["wxb"], params["wh"], params["b"],
      fa["wqkv"], fa["bqkv"], fa["wo"], fa["bo"],
      ff["w1"], ff["b1"], ff["w2"], ff["b2"], ff["w3"], ff["b3"],
      ff["wo"], ff["bo"])
    return logits


if __name__ == "__main__":
    key = jax.random.PRNGKey(0)
    pkey, xkey = jax.random.split(key)
    params = init_params(pkey)
    x = jax.random.normal(xkey, (BATCH, SEQ_LEN, N_FEATURES), dtype=jnp.float32)

    logits = jax.jit(forward)(x, params)
    logits = jax.block_until_ready(logits)
    assert logits.shape == (BATCH, N_OUT)
    assert bool(jnp.all(jnp.isfinite(logits)))
    print("KERNEL_OK")
</pallas_src>

<mosaic_0001>
module attributes {stable_mosaic.version = 11 : i64} {
  func.func @_bilstm_attn_mlp_kernel(%arg0: i32, %arg1: memref<16x64xf32, #tpu.memory_space<vmem>>, %arg2: memref<3x64x256xf32, #tpu.memory_space<vmem>>, %arg3: memref<3x64x256xf32, #tpu.memory_space<vmem>>, %arg4: memref<3x64x256xf32, #tpu.memory_space<vmem>>, %arg5: memref<3x1x256xf32, #tpu.memory_space<vmem>>, %arg6: memref<64x192xf32, #tpu.memory_space<vmem>>, %arg7: memref<1x192xf32, #tpu.memory_space<vmem>>, %arg8: memref<64x64xf32, #tpu.memory_space<vmem>>, %arg9: memref<1x64xf32, #tpu.memory_space<vmem>>, %arg10: memref<512x32xf32, #tpu.memory_space<vmem>>, %arg11: memref<1x32xf32, #tpu.memory_space<vmem>>, %arg12: memref<32x32xf32, #tpu.memory_space<vmem>>, %arg13: memref<1x32xf32, #tpu.memory_space<vmem>>, %arg14: memref<32x32xf32, #tpu.memory_space<vmem>>, %arg15: memref<1x32xf32, #tpu.memory_space<vmem>>, %arg16: memref<32x2xf32, #tpu.memory_space<vmem>>, %arg17: memref<1x2xf32, #tpu.memory_space<vmem>>, %arg18: memref<2x2xf32, #tpu.memory_space<vmem>>) attributes {dimension_semantics = [#tpu.dimension_semantics<arbitrary>], iteration_bounds = array<i64: 1>, scalar_prefetch = 0 : i64, scratch_operands = 0 : i64, tpu.core_type = #tpu.core_type<tc>, window_params = [{pipeline_mode = #tpu.pipeline_mode<synchronous>, transform_indices = @transform_0, window_bounds = array<i64: 16, 64>}, {pipeline_mode = #tpu.pipeline_mode<synchronous>, transform_indices = @transform_1, window_bounds = array<i64: 3, 64, 256>}, {pipeline_mode = #tpu.pipeline_mode<synchronous>, transform_indices = @transform_2, window_bounds = array<i64: 3, 64, 256>}, {pipeline_mode = #tpu.pipeline_mode<synchronous>, transform_indices = @transform_3, window_bounds = array<i64: 3, 64, 256>}, {pipeline_mode = #tpu.pipeline_mode<synchronous>, transform_indices = @transform_4, window_bounds = array<i64: 3, 1, 256>}, {pipeline_mode = #tpu.pipeline_mode<synchronous>, transform_indices = @transform_5, window_bounds = array<i64: 64, 192>}, {pipeline_mode = #tpu.pipeline_mode<synchronous>, transform_indices = @transform_6, window_bounds = array<i64: 1, 192>}, {pipeline_mode = #tpu.pipeline_mode<synchronous>, transform_indices = @transform_7, window_bounds = array<i64: 64, 64>}, {pipeline_mode = #tpu.pipeline_mode<synchronous>, transform_indices = @transform_8, window_bounds = array<i64: 1, 64>}, {pipeline_mode = #tpu.pipeline_mode<synchronous>, transform_indices = @transform_9, window_bounds = array<i64: 512, 32>}, {pipeline_mode = #tpu.pipeline_mode<synchronous>, transform_indices = @transform_10, window_bounds = array<i64: 1, 32>}, {pipeline_mode = #tpu.pipeline_mode<synchronous>, transform_indices = @transform_11, window_bounds = array<i64: 32, 32>}, {pipeline_mode = #tpu.pipeline_mode<synchronous>, transform_indices = @transform_12, window_bounds = array<i64: 1, 32>}, {pipeline_mode = #tpu.pipeline_mode<synchronous>, transform_indices = @transform_13, window_bounds = array<i64: 32, 32>}, {pipeline_mode = #tpu.pipeline_mode<synchronous>, transform_indices = @transform_14, window_bounds = array<i64: 1, 32>}, {pipeline_mode = #tpu.pipeline_mode<synchronous>, transform_indices = @transform_15, window_bounds = array<i64: 32, 2>}, {pipeline_mode = #tpu.pipeline_mode<synchronous>, transform_indices = @transform_16, window_bounds = array<i64: 1, 2>}, {pipeline_mode = #tpu.pipeline_mode<synchronous>, transform_indices = @transform_17, window_bounds = array<i64: 2, 2>}]} {
    %c0 = arith.constant 0 : index
    %c0_0 = arith.constant 0 : index
    %0 = vector.load %arg1[%c0, %c0_0] : memref<16x64xf32, #tpu.memory_space<vmem>>, vector<16x64xf32>
    %1 = tpu.iota {dimensions = array<i32: 1>} : vector<2x64xi32>
    %c32_i32 = arith.constant 32 : i32
    %2 = vector.broadcast %c32_i32 : i32 to vector<2x64xi32>
    %3 = arith.cmpi slt, %1, %2 : vector<2x64xi32>
    %c0_1 = arith.constant 0 : index
    %c0_2 = arith.constant 0 : index
    %c0_3 = arith.constant 0 : index
    %4 = vector.load %arg2[%c0_1, %c0_2, %c0_3] : memref<3x64x256xf32, #tpu.memory_space<vmem>>, vector<1x64x256xf32>
    %5 = vector.shape_cast %4 : vector<1x64x256xf32> to vector<64x256xf32>
    %c0_4 = arith.constant 0 : index
    %c0_5 = arith.constant 0 : index
    %c0_6 = arith.constant 0 : index
    %6 = vector.load %arg3[%c0_4, %c0_5, %c0_6] : memref<3x64x256xf32, #tpu.memory_space<vmem>>, vector<1x64x256xf32>
    %7 = vector.shape_cast %6 : vector<1x64x256xf32> to vector<64x256xf32>
    %c0_7 = arith.constant 0 : index
    %c0_8 = arith.constant 0 : index
    %c0_9 = arith.constant 0 : index
    %8 = vector.load %arg4[%c0_7, %c0_8, %c0_9] : memref<3x64x256xf32, #tpu.memory_space<vmem>>, vector<1x64x256xf32>
    %9 = vector.shape_cast %8 : vector<1x64x256xf32> to vector<64x256xf32>
    %c0_10 = arith.constant 0 : index
    %c0_11 = arith.constant 0 : index
    %c0_12 = arith.constant 0 : index
    %10 = vector.load %arg5[%c0_10, %c0_11, %c0_12] : memref<3x1x256xf32, #tpu.memory_space<vmem>>, vector<1x1x256xf32>
    %11 = vector.shape_cast %10 : vector<1x1x256xf32> to vector<1x256xf32>
    %12 = vector.extract_strided_slice %0 {offsets = [14, 0], sizes = [2, 64], strides = [1, 1]} : vector<16x64xf32> to vector<2x64xf32>
    %13 = vector.extract_strided_slice %0 {offsets = [12, 0], sizes = [2, 64], strides = [1, 1]} : vector<16x64xf32> to vector<2x64xf32>
    %14 = vector.extract_strided_slice %0 {offsets = [10, 0], sizes = [2, 64], strides = [1, 1]} : vector<16x64xf32> to vector<2x64xf32>
    %15 = vector.extract_strided_slice %0 {offsets = [8, 0], sizes = [2, 64], strides = [1, 1]} : vector<16x64xf32> to vector<2x64xf32>
    %16 = vector.extract_strided_slice %0 {offsets = [6, 0], sizes = [2, 64], strides = [1, 1]} : vector<16x64xf32> to vector<2x64xf32>
    %17 = vector.extract_strided_slice %0 {offsets = [4, 0], sizes = [2, 64], strides = [1, 1]} : vector<16x64xf32> to vector<2x64xf32>
    %18 = vector.extract_strided_slice %0 {offsets = [2, 0], sizes = [2, 64], strides = [1, 1]} : vector<16x64xf32> to vector<2x64xf32>
    %19 = vector.extract_strided_slice %0 {offsets = [0, 0], sizes = [2, 64], strides = [1, 1]} : vector<16x64xf32> to vector<2x64xf32>
    %20 = tpu.concatenate %12, %13, %14, %15, %16, %17, %18, %19 in 0 : vector<2x64xf32>, vector<2x64xf32>, vector<2x64xf32>, vector<2x64xf32>, vector<2x64xf32>, vector<2x64xf32>, vector<2x64xf32>, vector<2x64xf32> -> vector<16x64xf32>
    %cst = arith.constant dense<0.000000e+00> : vector<16x256xf32>
    %21 = tpu.matmul %0, %5, %cst {dimension_numbers = #tpu.dot_dimension_numbers<[1], [0], [0], [1], [0, 0, 1, 1], [], []>} : vector<16x64xf32>, vector<64x256xf32>, vector<16x256xf32> -> vector<16x256xf32>
    %cst_13 = arith.constant dense<0.000000e+00> : vector<16x256xf32>
    %22 = tpu.matmul %20, %7, %cst_13 {dimension_numbers = #tpu.dot_dimension_numbers<[1], [0], [0], [1], [0, 0, 1, 1], [], []>} : vector<16x64xf32>, vector<64x256xf32>, vector<16x256xf32> -> vector<16x256xf32>
    %23 = arith.addf %21, %22 : vector<16x256xf32>
    %24 = vector.broadcast %11 : vector<1x256xf32> to vector<16x256xf32>
    %25 = arith.addf %23, %24 : vector<16x256xf32>
    %cst_14 = arith.constant 0.000000e+00 : f32
    %26 = vector.broadcast %cst_14 : f32 to vector<2x64xf32>
    %cst_15 = arith.constant 0.000000e+00 : f32
    %27 = vector.broadcast %cst_15 : f32 to vector<2x64xf32>
    %28 = vector.extract_strided_slice %25 {offsets = [0, 0], sizes = [2, 256], strides = [1, 1]} : vector<16x256xf32> to vector<2x256xf32>
    %cst_16 = arith.constant dense<0.000000e+00> : vector<2x256xf32>
    %29 = tpu.matmul %26, %9, %cst_16 {dimension_numbers = #tpu.dot_dimension_numbers<[1], [0], [0], [1], [0, 0, 1, 1], [], []>} : vector<2x64xf32>, vector<64x256xf32>, vector<2x256xf32> -> vector<2x256xf32>
    %30 = arith.addf %28, %29 : vector<2x256xf32>
    %31 = arith.negf %30 : vector<2x256xf32>
    %32 = math.exp %31 : vector<2x256xf32>
    %cst_17 = arith.constant 1.000000e+00 : f32
    %33 = vector.broadcast %cst_17 : f32 to vector<2x256xf32>
    %34 = arith.addf %33, %32 : vector<2x256xf32>
    %35 = arith.divf %33, %34 : vector<2x256xf32>
    %36 = vector.extract_strided_slice %35 {offsets = [0, 0], sizes = [2, 64], strides = [1, 1]} : vector<2x256xf32> to vector<2x64xf32>
    %37 = vector.extract_strided_slice %35 {offsets = [0, 64], sizes = [2, 64], strides = [1, 1]} : vector<2x256xf32> to vector<2x64xf32>
    %38 = vector.extract_strided_slice %35 {offsets = [0, 192], sizes = [2, 64], strides = [1, 1]} : vector<2x256xf32> to vector<2x64xf32>
    %39 = vector.extract_strided_slice %30 {offsets = [0, 128], sizes = [2, 64], strides = [1, 1]} : vector<2x256xf32> to vector<2x64xf32>
    %40 = math.tanh %39 : vector<2x64xf32>
    %41 = arith.mulf %37, %27 : vector<2x64xf32>
    %42 = arith.mulf %36, %40 : vector<2x64xf32>
    %43 = arith.addf %41, %42 : vector<2x64xf32>
    %44 = math.tanh %43 : vector<2x64xf32>
    %45 = arith.mulf %38, %44 : vector<2x64xf32>
    %46 = vector.extract_strided_slice %25 {offsets = [2, 0], sizes = [2, 256], strides = [1, 1]} : vector<16x256xf32> to vector<2x256xf32>
    %cst_18 = arith.constant dense<0.000000e+00> : vector<2x256xf32>
    %47 = tpu.matmul %45, %9, %cst_18 {dimension_numbers = #tpu.dot_dimension_numbers<[1], [0], [0], [1], [0, 0, 1, 1], [], []>} : vector<2x64xf32>, vector<64x256xf32>, vector<2x256xf32> -> vector<2x256xf32>
    %48 = arith.addf %46, %47 : vector<2x256xf32>
    %49 = arith.negf %48 : vector<2x256xf32>
    %50 = math.exp %49 : vector<2x256xf32>
    %cst_19 = arith.constant 1.000000e+00 : f32
    %51 = vector.broadcast %cst_19 : f32 to vector<2x256xf32>
    %52 = arith.addf %51, %50 : vector<2x256xf32>
    %53 = arith.divf %51, %52 : vector<2x256xf32>
    %54 = vector.extract_strided_slice %53 {offsets = [0, 0], sizes = [2, 64], strides = [1, 1]} : vector<2x256xf32> to vector<2x64xf32>
    %55 = vector.extract_strided_slice %53 {offsets = [0, 64], sizes = [2, 64], strides = [1, 1]} : vector<2x256xf32> to vector<2x64xf32>
    %56 = vector.extract_strided_slice %53 {offsets = [0, 192], sizes = [2, 64], strides = [1, 1]} : vector<2x256xf32> to vector<2x64xf32>
    %57 = vector.extract_strided_slice %48 {offsets = [0, 128], sizes = [2, 64], strides = [1, 1]} : vector<2x256xf32> to vector<2x64xf32>
    %58 = math.tanh %57 : vector<2x64xf32>
    %59 = arith.mulf %55, %43 : vector<2x64xf32>
    %60 = arith.mulf %54, %58 : vector<2x64xf32>
    %61 = arith.addf %59, %60 : vector<2x64xf32>
    %62 = math.tanh %61 : vector<2x64xf32>
    %63 = arith.mulf %56, %62 : vector<2x64xf32>
    %64 = vector.extract_strided_slice %25 {offsets = [4, 0], sizes = [2, 256], strides = [1, 1]} : vector<16x256xf32> to vector<2x256xf32>
    %cst_20 = arith.constant dense<0.000000e+00> : vector<2x256xf32>
    %65 = tpu.matmul %63, %9, %cst_20 {dimension_numbers = #tpu.dot_dimension_numbers<[1], [0], [0], [1], [0, 0, 1, 1], [], []>} : vector<2x64xf32>, vector<64x256xf32>, vector<2x256xf32> -> vector<2x256xf32>
    %66 = arith.addf %64, %65 : vector<2x256xf32>
    %67 = arith.negf %66 : vector<2x256xf32>
    %68 = math.exp %67 : vector<2x256xf32>
    %cst_21 = arith.constant 1.000000e+00 : f32
    %69 = vector.broadcast %cst_21 : f32 to vector<2x256xf32>
    %70 = arith.addf %69, %68 : vector<2x256xf32>
    %71 = arith.divf %69, %70 : vector<2x256xf32>
    %72 = vector.extract_strided_slice %71 {offsets = [0, 0], sizes = [2, 64], strides = [1, 1]} : vector<2x256xf32> to vector<2x64xf32>
    %73 = vector.extract_strided_slice %71 {offsets = [0, 64], sizes = [2, 64], strides = [1, 1]} : vector<2x256xf32> to vector<2x64xf32>
    %74 = vector.extract_strided_slice %71 {offsets = [0, 192], sizes = [2, 64], strides = [1, 1]} : vector<2x256xf32> to vector<2x64xf32>
    %75 = vector.extract_strided_slice %66 {offsets = [0, 128], sizes = [2, 64], strides = [1, 1]} : vector<2x256xf32> to vector<2x64xf32>
    %76 = math.tanh %75 : vector<2x64xf32>
    %77 = arith.mulf %73, %61 : vector<2x64xf32>
    %78 = arith.mulf %72, %76 : vector<2x64xf32>
    %79 = arith.addf %77, %78 : vector<2x64xf32>
    %80 = math.tanh %79 : vector<2x64xf32>
    %81 = arith.mulf %74, %80 : vector<2x64xf32>
    %82 = vector.extract_strided_slice %25 {offsets = [6, 0], sizes = [2, 256], strides = [1, 1]} : vector<16x256xf32> to vector<2x256xf32>
    %cst_22 = arith.constant dense<0.000000e+00> : vector<2x256xf32>
    %83 = tpu.matmul %81, %9, %cst_22 {dimension_numbers = #tpu.dot_dimension_numbers<[1], [0], [0], [1], [0, 0, 1, 1], [], []>} : vector<2x64xf32>, vector<64x256xf32>, vector<2x256xf32> -> vector<2x256xf32>
    %84 = arith.addf %82, %83 : vector<2x256xf32>
    %85 = arith.negf %84 : vector<2x256xf32>
    %86 = math.exp %85 : vector<2x256xf32>
    %cst_23 = arith.constant 1.000000e+00 : f32
    %87 = vector.broadcast %cst_23 : f32 to vector<2x256xf32>
    %88 = arith.addf %87, %86 : vector<2x256xf32>
    %89 = arith.divf %87, %88 : vector<2x256xf32>
    %90 = vector.extract_strided_slice %89 {offsets = [0, 0], sizes = [2, 64], strides = [1, 1]} : vector<2x256xf32> to vector<2x64xf32>
    %91 = vector.extract_strided_slice %89 {offsets = [0, 64], sizes = [2, 64], strides = [1, 1]} : vector<2x256xf32> to vector<2x64xf32>
    %92 = vector.extract_strided_slice %89 {offsets = [0, 192], sizes = [2, 64], strides = [1, 1]} : vector<2x256xf32> to vector<2x64xf32>
    %93 = vector.extract_strided_slice %84 {offsets = [0, 128], sizes = [2, 64], strides = [1, 1]} : vector<2x256xf32> to vector<2x64xf32>
    %94 = math.tanh %93 : vector<2x64xf32>
    %95 = arith.mulf %91, %79 : vector<2x64xf32>
    %96 = arith.mulf %90, %94 : vector<2x64xf32>
    %97 = arith.addf %95, %96 : vector<2x64xf32>
    %98 = math.tanh %97 : vector<2x64xf32>
    %99 = arith.mulf %92, %98 : vector<2x64xf32>
    %100 = vector.extract_strided_slice %25 {offsets = [8, 0], sizes = [2, 256], strides = [1, 1]} : vector<16x256xf32> to vector<2x256xf32>
    %cst_24 = arith.constant dense<0.000000e+00> : vector<2x256xf32>
    %101 = tpu.matmul %99, %9, %cst_24 {dimension_numbers = #tpu.dot_dimension_numbers<[1], [0], [0], [1], [0, 0, 1, 1], [], []>} : vector<2x64xf32>, vector<64x256xf32>, vector<2x256xf32> -> vector<2x256xf32>
    %102 = arith.addf %100, %101 : vector<2x256xf32>
    %103 = arith.negf %102 : vector<2x256xf32>
    %104 = math.exp %103 : vector<2x256xf32>
    %cst_25 = arith.constant 1.000000e+00 : f32
    %105 = vector.broadcast %cst_25 : f32 to vector<2x256xf32>
    %106 = arith.addf %105, %104 : vector<2x256xf32>
    %107 = arith.divf %105, %106 : vector<2x256xf32>
    %108 = vector.extract_strided_slice %107 {offsets = [0, 0], sizes = [2, 64], strides = [1, 1]} : vector<2x256xf32> to vector<2x64xf32>
    %109 = vector.extract_strided_slice %107 {offsets = [0, 64], sizes = [2, 64], strides = [1, 1]} : vector<2x256xf32> to vector<2x64xf32>
    %110 = vector.extract_strided_slice %107 {offsets = [0, 192], sizes = [2, 64], strides = [1, 1]} : vector<2x256xf32> to vector<2x64xf32>
    %111 = vector.extract_strided_slice %102 {offsets = [0, 128], sizes = [2, 64], strides = [1, 1]} : vector<2x256xf32> to vector<2x64xf32>
    %112 = math.tanh %111 : vector<2x64xf32>
    %113 = arith.mulf %109, %97 : vector<2x64xf32>
    %114 = arith.mulf %108, %112 : vector<2x64xf32>
    %115 = arith.addf %113, %114 : vector<2x64xf32>
    %116 = math.tanh %115 : vector<2x64xf32>
    %117 = arith.mulf %110, %116 : vector<2x64xf32>
    %118 = vector.extract_strided_slice %25 {offsets = [10, 0], sizes = [2, 256], strides = [1, 1]} : vector<16x256xf32> to vector<2x256xf32>
    %cst_26 = arith.constant dense<0.000000e+00> : vector<2x256xf32>
    %119 = tpu.matmul %117, %9, %cst_26 {dimension_numbers = #tpu.dot_dimension_numbers<[1], [0], [0], [1], [0, 0, 1, 1], [], []>} : vector<2x64xf32>, vector<64x256xf32>, vector<2x256xf32> -> vector<2x256xf32>
    %120 = arith.addf %118, %119 : vector<2x256xf32>
    %121 = arith.negf %120 : vector<2x256xf32>
    %122 = math.exp %121 : vector<2x256xf32>
    %cst_27 = arith.constant 1.000000e+00 : f32
    %123 = vector.broadcast %cst_27 : f32 to vector<2x256xf32>
    %124 = arith.addf %123, %122 : vector<2x256xf32>
    %125 = arith.divf %123, %124 : vector<2x256xf32>
    %126 = vector.extract_strided_slice %125 {offsets = [0, 0], sizes = [2, 64], strides = [1, 1]} : vector<2x256xf32> to vector<2x64xf32>
    %127 = vector.extract_strided_slice %125 {offsets = [0, 64], sizes = [2, 64], strides = [1, 1]} : vector<2x256xf32> to vector<2x64xf32>
    %128 = vector.extract_strided_slice %125 {offsets = [0, 192], sizes = [2, 64], strides = [1, 1]} : vector<2x256xf32> to vector<2x64xf32>
    %129 = vector.extract_strided_slice %120 {offsets = [0, 128], sizes = [2, 64], strides = [1, 1]} : vector<2x256xf32> to vector<2x64xf32>
    %130 = math.tanh %129 : vector<2x64xf32>
    %131 = arith.mulf %127, %115 : vector<2x64xf32>
    %132 = arith.mulf %126, %130 : vector<2x64xf32>
    %133 = arith.addf %131, %132 : vector<2x64xf32>
    %134 = math.tanh %133 : vector<2x64xf32>
    %135 = arith.mulf %128, %134 : vector<2x64xf32>
    %136 = vector.extract_strided_slice %25 {offsets = [12, 0], sizes = [2, 256], strides = [1, 1]} : vector<16x256xf32> to vector<2x256xf32>
    %cst_28 = arith.constant dense<0.000000e+00> : vector<2x256xf32>
    %137 = tpu.matmul %135, %9, %cst_28 {dimension_numbers = #tpu.dot_dimension_numbers<[1], [0], [0], [1], [0, 0, 1, 1], [], []>} : vector<2x64xf32>, vector<64x256xf32>, vector<2x256xf32> -> vector<2x256xf32>
    %138 = arith.addf %136, %137 : vector<2x256xf32>
    %139 = arith.negf %138 : vector<2x256xf32>
    %140 = math.exp %139 : vector<2x256xf32>
    %cst_29 = arith.constant 1.000000e+00 : f32
    %141 = vector.broadcast %cst_29 : f32 to vector<2x256xf32>
    %142 = arith.addf %141, %140 : vector<2x256xf32>
    %143 = arith.divf %141, %142 : vector<2x256xf32>
    %144 = vector.extract_strided_slice %143 {offsets = [0, 0], sizes = [2, 64], strides = [1, 1]} : vector<2x256xf32> to vector<2x64xf32>
    %145 = vector.extract_strided_slice %143 {offsets = [0, 64], sizes = [2, 64], strides = [1, 1]} : vector<2x256xf32> to vector<2x64xf32>
    %146 = vector.extract_strided_slice %143 {offsets = [0, 192], sizes = [2, 64], strides = [1, 1]} : vector<2x256xf32> to vector<2x64xf32>
    %147 = vector.extract_strided_slice %138 {offsets = [0, 128], sizes = [2, 64], strides = [1, 1]} : vector<2x256xf32> to vector<2x64xf32>
    %148 = math.tanh %147 : vector<2x64xf32>
    %149 = arith.mulf %145, %133 : vector<2x64xf32>
    %150 = arith.mulf %144, %148 : vector<2x64xf32>
    %151 = arith.addf %149, %150 : vector<2x64xf32>
    %152 = math.tanh %151 : vector<2x64xf32>
    %153 = arith.mulf %146, %152 : vector<2x64xf32>
    %154 = vector.extract_strided_slice %25 {offsets = [14, 0], sizes = [2, 256], strides = [1, 1]} : vector<16x256xf32> to vector<2x256xf32>
    %cst_30 = arith.constant dense<0.000000e+00> : vector<2x256xf32>
    %155 = tpu.matmul %153, %9, %cst_30 {dimension_numbers = #tpu.dot_dimension_numbers<[1], [0], [0], [1], [0, 0, 1, 1], [], []>} : vector<2x64xf32>, vector<64x256xf32>, vector<2x256xf32> -> vector<2x256xf32>
    %156 = arith.addf %154, %155 : vector<2x256xf32>
    %157 = arith.negf %156 : vector<2x256xf32>
    %158 = math.exp %157 : vector<2x256xf32>
    %cst_31 = arith.constant 1.000000e+00 : f32
    %159 = vector.broadcast %cst_31 : f32 to vector<2x256xf32>
    %160 = arith.addf %159, %158 : vector<2x256xf32>
    %161 = arith.divf %159, %160 : vector<2x256xf32>
    %162 = vector.extract_strided_slice %161 {offsets = [0, 0], sizes = [2, 64], strides = [1, 1]} : vector<2x256xf32> to vector<2x64xf32>
    %163 = vector.extract_strided_slice %161 {offsets = [0, 64], sizes = [2, 64], strides = [1, 1]} : vector<2x256xf32> to vector<2x64xf32>
    %164 = vector.extract_strided_slice %161 {offsets = [0, 192], sizes = [2, 64], strides = [1, 1]} : vector<2x256xf32> to vector<2x64xf32>
    %165 = vector.extract_strided_slice %156 {offsets = [0, 128], sizes = [2, 64], strides = [1, 1]} : vector<2x256xf32> to vector<2x64xf32>
    %166 = math.tanh %165 : vector<2x64xf32>
    %167 = arith.mulf %163, %151 : vector<2x64xf32>
    %168 = arith.mulf %162, %166 : vector<2x64xf32>
    %169 = arith.addf %167, %168 : vector<2x64xf32>
    %170 = math.tanh %169 : vector<2x64xf32>
    %171 = arith.mulf %164, %170 : vector<2x64xf32>
    %172 = arith.select %3, %45, %171 : vector<2x64xi1>, vector<2x64xf32>
    %173 = arith.select %3, %63, %153 : vector<2x64xi1>, vector<2x64xf32>
    %174 = arith.select %3, %81, %135 : vector<2x64xi1>, vector<2x64xf32>
    %175 = arith.select %3, %99, %117 : vector<2x64xi1>, vector<2x64xf32>
    %176 = arith.select %3, %117, %99 : vector<2x64xi1>, vector<2x64xf32>
    %177 = arith.select %3, %135, %81 : vector<2x64xi1>, vector<2x64xf32>
    %178 = arith.select %3, %153, %63 : vector<2x64xi1>, vector<2x64xf32>
    %179 = arith.select %3, %171, %45 : vector<2x64xi1>, vector<2x64xf32>
    %180 = tpu.concatenate %172, %173, %174, %175, %176, %177, %178, %179 in 0 : vector<2x64xf32>, vector<2x64xf32>, vector<2x64xf32>, vector<2x64xf32>, vector<2x64xf32>, vector<2x64xf32>, vector<2x64xf32>, vector<2x64xf32> -> vector<16x64xf32>
    %c1 = arith.constant 1 : index
    %c0_32 = arith.constant 0 : index
    %c0_33 = arith.constant 0 : index
    %181 = vector.load %arg2[%c1, %c0_32, %c0_33] : memref<3x64x256xf32, #tpu.memory_space<vmem>>, vector<1x64x256xf32>
    %182 = vector.shape_cast %181 : vector<1x64x256xf32> to vector<64x256xf32>
    %c1_34 = arith.constant 1 : index
    %c0_35 = arith.constant 0 : index
    %c0_36 = arith.constant 0 : index
    %183 = vector.load %arg3[%c1_34, %c0_35, %c0_36] : memref<3x64x256xf32, #tpu.memory_space<vmem>>, vector<1x64x256xf32>
    %184 = vector.shape_cast %183 : vector<1x64x256xf32> to vector<64x256xf32>
    %c1_37 = arith.constant 1 : index
    %c0_38 = arith.constant 0 : index
    %c0_39 = arith.constant 0 : index
    %185 = vector.load %arg4[%c1_37, %c0_38, %c0_39] : memref<3x64x256xf32, #tpu.memory_space<vmem>>, vector<1x64x256xf32>
    %186 = vector.shape_cast %185 : vector<1x64x256xf32> to vector<64x256xf32>
    %c1_40 = arith.constant 1 : index
    %c0_41 = arith.constant 0 : index
    %c0_42 = arith.constant 0 : index
    %187 = vector.load %arg5[%c1_40, %c0_41, %c0_42] : memref<3x1x256xf32, #tpu.memory_space<vmem>>, vector<1x1x256xf32>
    %188 = vector.shape_cast %187 : vector<1x1x256xf32> to vector<1x256xf32>
    %189 = vector.extract_strided_slice %180 {offsets = [14, 0], sizes = [2, 64], strides = [1, 1]} : vector<16x64xf32> to vector<2x64xf32>
    %190 = vector.extract_strided_slice %180 {offsets = [12, 0], sizes = [2, 64], strides = [1, 1]} : vector<16x64xf32> to vector<2x64xf32>
    %191 = vector.extract_strided_slice %180 {offsets = [10, 0], sizes = [2, 64], strides = [1, 1]} : vector<16x64xf32> to vector<2x64xf32>
    %192 = vector.extract_strided_slice %180 {offsets = [8, 0], sizes = [2, 64], strides = [1, 1]} : vector<16x64xf32> to vector<2x64xf32>
    %193 = vector.extract_strided_slice %180 {offsets = [6, 0], sizes = [2, 64], strides = [1, 1]} : vector<16x64xf32> to vector<2x64xf32>
    %194 = vector.extract_strided_slice %180 {offsets = [4, 0], sizes = [2, 64], strides = [1, 1]} : vector<16x64xf32> to vector<2x64xf32>
    %195 = vector.extract_strided_slice %180 {offsets = [2, 0], sizes = [2, 64], strides = [1, 1]} : vector<16x64xf32> to vector<2x64xf32>
    %196 = vector.extract_strided_slice %180 {offsets = [0, 0], sizes = [2, 64], strides = [1, 1]} : vector<16x64xf32> to vector<2x64xf32>
    %197 = tpu.concatenate %189, %190, %191, %192, %193, %194, %195, %196 in 0 : vector<2x64xf32>, vector<2x64xf32>, vector<2x64xf32>, vector<2x64xf32>, vector<2x64xf32>, vector<2x64xf32>, vector<2x64xf32>, vector<2x64xf32> -> vector<16x64xf32>
    %cst_43 = arith.constant dense<0.000000e+00> : vector<16x256xf32>
    %198 = tpu.matmul %180, %182, %cst_43 {dimension_numbers = #tpu.dot_dimension_numbers<[1], [0], [0], [1], [0, 0, 1, 1], [], []>} : vector<16x64xf32>, vector<64x256xf32>, vector<16x256xf32> -> vector<16x256xf32>
    %cst_44 = arith.constant dense<0.000000e+00> : vector<16x256xf32>
    %199 = tpu.matmul %197, %184, %cst_44 {dimension_numbers = #tpu.dot_dimension_numbers<[1], [0], [0], [1], [0, 0, 1, 1], [], []>} : vector<16x64xf32>, vector<64x256xf32>, vector<16x256xf32> -> vector<16x256xf32>
    %200 = arith.addf %198, %199 : vector<16x256xf32>
    %201 = vector.broadcast %188 : vector<1x256xf32> to vector<16x256xf32>
    %202 = arith.addf %200, %201 : vector<16x256xf32>
    %cst_45 = arith.constant 0.000000e+00 : f32
    %203 = vector.broadcast %cst_45 : f32 to vector<2x64xf32>
    %cst_46 = arith.constant 0.000000e+00 : f32
    %204 = vector.broadcast %cst_46 : f32 to vector<2x64xf32>
    %205 = vector.extract_strided_slice %202 {offsets = [0, 0], sizes = [2, 256], strides = [1, 1]} : vector<16x256xf32> to vector<2x256xf32>
    %cst_47 = arith.constant dense<0.000000e+00> : vector<2x256xf32>
    %206 = tpu.matmul %203, %186, %cst_47 {dimension_numbers = #tpu.dot_dimension_numbers<[1], [0], [0], [1], [0, 0, 1, 1], [], []>} : vector<2x64xf32>, vector<64x256xf32>, vector<2x256xf32> -> vector<2x256xf32>
    %207 = arith.addf %205, %206 : vector<2x256xf32>
    %208 = arith.negf %207 : vector<2x256xf32>
    %209 = math.exp %208 : vector<2x256xf32>
    %cst_48 = arith.constant 1.000000e+00 : f32
    %210 = vector.broadcast %cst_48 : f32 to vector<2x256xf32>
    %211 = arith.addf %210, %209 : vector<2x256xf32>
    %212 = arith.divf %210, %211 : vector<2x256xf32>
    %213 = vector.extract_strided_slice %212 {offsets = [0, 0], sizes = [2, 64], strides = [1, 1]} : vector<2x256xf32> to vector<2x64xf32>
    %214 = vector.extract_strided_slice %212 {offsets = [0, 64], sizes = [2, 64], strides = [1, 1]} : vector<2x256xf32> to vector<2x64xf32>
    %215 = vector.extract_strided_slice %212 {offsets = [0, 192], sizes = [2, 64], strides = [1, 1]} : vector<2x256xf32> to vector<2x64xf32>
    %216 = vector.extract_strided_slice %207 {offsets = [0, 128], sizes = [2, 64], strides = [1, 1]} : vector<2x256xf32> to vector<2x64xf32>
    %217 = math.tanh %216 : vector<2x64xf32>
    %218 = arith.mulf %214, %204 : vector<2x64xf32>
    %219 = arith.mulf %213, %217 : vector<2x64xf32>
    %220 = arith.addf %218, %219 : vector<2x64xf32>
    %221 = math.tanh %220 : vector<2x64xf32>
    %222 = arith.mulf %215, %221 : vector<2x64xf32>
    %223 = vector.extract_strided_slice %202 {offsets = [2, 0], sizes = [2, 256], strides = [1, 1]} : vector<16x256xf32> to vector<2x256xf32>
    %cst_49 = arith.constant dense<0.000000e+00> : vector<2x256xf32>
    %224 = tpu.matmul %222, %186, %cst_49 {dimension_numbers = #tpu.dot_dimension_numbers<[1], [0], [0], [1], [0, 0, 1, 1], [], []>} : vector<2x64xf32>, vector<64x256xf32>, vector<2x256xf32> -> vector<2x256xf32>
    %225 = arith.addf %223, %224 : vector<2x256xf32>
    %226 = arith.negf %225 : vector<2x256xf32>
    %227 = math.exp %226 : vector<2x256xf32>
    %cst_50 = arith.constant 1.000000e+00 : f32
    %228 = vector.broadcast %cst_50 : f32 to vector<2x256xf32>
    %229 = arith.addf %228, %227 : vector<2x256xf32>
    %230 = arith.divf %228, %229 : vector<2x256xf32>
    %231 = vector.extract_strided_slice %230 {offsets = [0, 0], sizes = [2, 64], strides = [1, 1]} : vector<2x256xf32> to vector<2x64xf32>
    %232 = vector.extract_strided_slice %230 {offsets = [0, 64], sizes = [2, 64], strides = [1, 1]} : vector<2x256xf32> to vector<2x64xf32>
    %233 = vector.extract_strided_slice %230 {offsets = [0, 192], sizes = [2, 64], strides = [1, 1]} : vector<2x256xf32> to vector<2x64xf32>
    %234 = vector.extract_strided_slice %225 {offsets = [0, 128], sizes = [2, 64], strides = [1, 1]} : vector<2x256xf32> to vector<2x64xf32>
    %235 = math.tanh %234 : vector<2x64xf32>
    %236 = arith.mulf %232, %220 : vector<2x64xf32>
    %237 = arith.mulf %231, %235 : vector<2x64xf32>
    %238 = arith.addf %236, %237 : vector<2x64xf32>
    %239 = math.tanh %238 : vector<2x64xf32>
    %240 = arith.mulf %233, %239 : vector<2x64xf32>
    %241 = vector.extract_strided_slice %202 {offsets = [4, 0], sizes = [2, 256], strides = [1, 1]} : vector<16x256xf32> to vector<2x256xf32>
    %cst_51 = arith.constant dense<0.000000e+00> : vector<2x256xf32>
    %242 = tpu.matmul %240, %186, %cst_51 {dimension_numbers = #tpu.dot_dimension_numbers<[1], [0], [0], [1], [0, 0, 1, 1], [], []>} : vector<2x64xf32>, vector<64x256xf32>, vector<2x256xf32> -> vector<2x256xf32>
    %243 = arith.addf %241, %242 : vector<2x256xf32>
    %244 = arith.negf %243 : vector<2x256xf32>
    %245 = math.exp %244 : vector<2x256xf32>
    %cst_52 = arith.constant 1.000000e+00 : f32
    %246 = vector.broadcast %cst_52 : f32 to vector<2x256xf32>
    %247 = arith.addf %246, %245 : vector<2x256xf32>
    %248 = arith.divf %246, %247 : vector<2x256xf32>
    %249 = vector.extract_strided_slice %248 {offsets = [0, 0], sizes = [2, 64], strides = [1, 1]} : vector<2x256xf32> to vector<2x64xf32>
    %250 = vector.extract_strided_slice %248 {offsets = [0, 64], sizes = [2, 64], strides = [1, 1]} : vector<2x256xf32> to vector<2x64xf32>
    %251 = vector.extract_strided_slice %248 {offsets = [0, 192], sizes = [2, 64], strides = [1, 1]} : vector<2x256xf32> to vector<2x64xf32>
    %252 = vector.extract_strided_slice %243 {offsets = [0, 128], sizes = [2, 64], strides = [1, 1]} : vector<2x256xf32> to vector<2x64xf32>
    %253 = math.tanh %252 : vector<2x64xf32>
    %254 = arith.mulf %250, %238 : vector<2x64xf32>
    %255 = arith.mulf %249, %253 : vector<2x64xf32>
    %256 = arith.addf %254, %255 : vector<2x64xf32>
    %257 = math.tanh %256 : vector<2x64xf32>
    %258 = arith.mulf %251, %257 : vector<2x64xf32>
    %259 = vector.extract_strided_slice %202 {offsets = [6, 0], sizes = [2, 256], strides = [1, 1]} : vector<16x256xf32> to vector<2x256xf32>
    %cst_53 = arith.constant dense<0.000000e+00> : vector<2x256xf32>
    %260 = tpu.matmul %258, %186, %cst_53 {dimension_numbers = #tpu.dot_dimension_numbers<[1], [0], [0], [1], [0, 0, 1, 1], [], []>} : vector<2x64xf32>, vector<64x256xf32>, vector<2x256xf32> -> vector<2x256xf32>
    %261 = arith.addf %259, %260 : vector<2x256xf32>
    %262 = arith.negf %261 : vector<2x256xf32>
    %263 = math.exp %262 : vector<2x256xf32>
    %cst_54 = arith.constant 1.000000e+00 : f32
    %264 = vector.broadcast %cst_54 : f32 to vector<2x256xf32>
    %265 = arith.addf %264, %263 : vector<2x256xf32>
    %266 = arith.divf %264, %265 : vector<2x256xf32>
    %267 = vector.extract_strided_slice %266 {offsets = [0, 0], sizes = [2, 64], strides = [1, 1]} : vector<2x256xf32> to vector<2x64xf32>
    %268 = vector.extract_strided_slice %266 {offsets = [0, 64], sizes = [2, 64], strides = [1, 1]} : vector<2x256xf32> to vector<2x64xf32>
    %269 = vector.extract_strided_slice %266 {offsets = [0, 192], sizes = [2, 64], strides = [1, 1]} : vector<2x256xf32> to vector<2x64xf32>
    %270 = vector.extract_strided_slice %261 {offsets = [0, 128], sizes = [2, 64], strides = [1, 1]} : vector<2x256xf32> to vector<2x64xf32>
    %271 = math.tanh %270 : vector<2x64xf32>
    %272 = arith.mulf %268, %256 : vector<2x64xf32>
    %273 = arith.mulf %267, %271 : vector<2x64xf32>
    %274 = arith.addf %272, %273 : vector<2x64xf32>
    %275 = math.tanh %274 : vector<2x64xf32>
    %276 = arith.mulf %269, %275 : vector<2x64xf32>
    %277 = vector.extract_strided_slice %202 {offsets = [8, 0], sizes = [2, 256], strides = [1, 1]} : vector<16x256xf32> to vector<2x256xf32>
    %cst_55 = arith.constant dense<0.000000e+00> : vector<2x256xf32>
    %278 = tpu.matmul %276, %186, %cst_55 {dimension_numbers = #tpu.dot_dimension_numbers<[1], [0], [0], [1], [0, 0, 1, 1], [], []>} : vector<2x64xf32>, vector<64x256xf32>, vector<2x256xf32> -> vector<2x256xf32>
    %279 = arith.addf %277, %278 : vector<2x256xf32>
    %280 = arith.negf %279 : vector<2x256xf32>
    %281 = math.exp %280 : vector<2x256xf32>
    %cst_56 = arith.constant 1.000000e+00 : f32
    %282 = vector.broadcast %cst_56 : f32 to vector<2x256xf32>
    %283 = arith.addf %282, %281 : vector<2x256xf32>
    %284 = arith.divf %282, %283 : vector<2x256xf32>
    %285 = vector.extract_strided_slice %284 {offsets = [0, 0], sizes = [2, 64], strides = [1, 1]} : vector<2x256xf32> to vector<2x64xf32>
    %286 = vector.extract_strided_slice %284 {offsets = [0, 64], sizes = [2, 64], strides = [1, 1]} : vector<2x256xf32> to vector<2x64xf32>
    %287 = vector.extract_strided_slice %284 {offsets = [0, 192], sizes = [2, 64], strides = [1, 1]} : vector<2x256xf32> to vector<2x64xf32>
    %288 = vector.extract_strided_slice %279 {offsets = [0, 128], sizes = [2, 64], strides = [1, 1]} : vector<2x256xf32> to vector<2x64xf32>
    %289 = math.tanh %288 : vector<2x64xf32>
    %290 = arith.mulf %286, %274 : vector<2x64xf32>
    %291 = arith.mulf %285, %289 : vector<2x64xf32>
    %292 = arith.addf %290, %291 : vector<2x64xf32>
    %293 = math.tanh %292 : vector<2x64xf32>
    %294 = arith.mulf %287, %293 : vector<2x64xf32>
    %295 = vector.extract_strided_slice %202 {offsets = [10, 0], sizes = [2, 256], strides = [1, 1]} : vector<16x256xf32> to vector<2x256xf32>
    %cst_57 = arith.constant dense<0.000000e+00> : vector<2x256xf32>
    %296 = tpu.matmul %294, %186, %cst_57 {dimension_numbers = #tpu.dot_dimension_numbers<[1], [0], [0], [1], [0, 0, 1, 1], [], []>} : vector<2x64xf32>, vector<64x256xf32>, vector<2x256xf32> -> vector<2x256xf32>
    %297 = arith.addf %295, %296 : vector<2x256xf32>
    %298 = arith.negf %297 : vector<2x256xf32>
    %299 = math.exp %298 : vector<2x256xf32>
    %cst_58 = arith.constant 1.000000e+00 : f32
    %300 = vector.broadcast %cst_58 : f32 to vector<2x256xf32>
    %301 = arith.addf %300, %299 : vector<2x256xf32>
    %302 = arith.divf %300, %301 : vector<2x256xf32>
    %303 = vector.extract_strided_slice %302 {offsets = [0, 0], sizes = [2, 64], strides = [1, 1]} : vector<2x256xf32> to vector<2x64xf32>
    %304 = vector.extract_strided_slice %302 {offsets = [0, 64], sizes = [2, 64], strides = [1, 1]} : vector<2x256xf32> to vector<2x64xf32>
    %305 = vector.extract_strided_slice %302 {offsets = [0, 192], sizes = [2, 64], strides = [1, 1]} : vector<2x256xf32> to vector<2x64xf32>
    %306 = vector.extract_strided_slice %297 {offsets = [0, 128], sizes = [2, 64], strides = [1, 1]} : vector<2x256xf32> to vector<2x64xf32>
    %307 = math.tanh %306 : vector<2x64xf32>
    %308 = arith.mulf %304, %292 : vector<2x64xf32>
    %309 = arith.mulf %303, %307 : vector<2x64xf32>
    %310 = arith.addf %308, %309 : vector<2x64xf32>
    %311 = math.tanh %310 : vector<2x64xf32>
    %312 = arith.mulf %305, %311 : vector<2x64xf32>
    %313 = vector.extract_strided_slice %202 {offsets = [12, 0], sizes = [2, 256], strides = [1, 1]} : vector<16x256xf32> to vector<2x256xf32>
    %cst_59 = arith.constant dense<0.000000e+00> : vector<2x256xf32>
    %314 = tpu.matmul %312, %186, %cst_59 {dimension_numbers = #tpu.dot_dimension_numbers<[1], [0], [0], [1], [0, 0, 1, 1], [], []>} : vector<2x64xf32>, vector<64x256xf32>, vector<2x256xf32> -> vector<2x256xf32>
    %315 = arith.addf %313, %314 : vector<2x256xf32>
    %316 = arith.negf %315 : vector<2x256xf32>
    %317 = math.exp %316 : vector<2x256xf32>
    %cst_60 = arith.constant 1.000000e+00 : f32
    %318 = vector.broadcast %cst_60 : f32 to vector<2x256xf32>
    %319 = arith.addf %318, %317 : vector<2x256xf32>
    %320 = arith.divf %318, %319 : vector<2x256xf32>
    %321 = vector.extract_strided_slice %320 {offsets = [0, 0], sizes = [2, 64], strides = [1, 1]} : vector<2x256xf32> to vector<2x64xf32>
    %322 = vector.extract_strided_slice %320 {offsets = [0, 64], sizes = [2, 64], strides = [1, 1]} : vector<2x256xf32> to vector<2x64xf32>
    %323 = vector.extract_strided_slice %320 {offsets = [0, 192], sizes = [2, 64], strides = [1, 1]} : vector<2x256xf32> to vector<2x64xf32>
    %324 = vector.extract_strided_slice %315 {offsets = [0, 128], sizes = [2, 64], strides = [1, 1]} : vector<2x256xf32> to vector<2x64xf32>
    %325 = math.tanh %324 : vector<2x64xf32>
    %326 = arith.mulf %322, %310 : vector<2x64xf32>
    %327 = arith.mulf %321, %325 : vector<2x64xf32>
    %328 = arith.addf %326, %327 : vector<2x64xf32>
    %329 = math.tanh %328 : vector<2x64xf32>
    %330 = arith.mulf %323, %329 : vector<2x64xf32>
    %331 = vector.extract_strided_slice %202 {offsets = [14, 0], sizes = [2, 256], strides = [1, 1]} : vector<16x256xf32> to vector<2x256xf32>
    %cst_61 = arith.constant dense<0.000000e+00> : vector<2x256xf32>
    %332 = tpu.matmul %330, %186, %cst_61 {dimension_numbers = #tpu.dot_dimension_numbers<[1], [0], [0], [1], [0, 0, 1, 1], [], []>} : vector<2x64xf32>, vector<64x256xf32>, vector<2x256xf32> -> vector<2x256xf32>
    %333 = arith.addf %331, %332 : vector<2x256xf32>
    %334 = arith.negf %333 : vector<2x256xf32>
    %335 = math.exp %334 : vector<2x256xf32>
    %cst_62 = arith.constant 1.000000e+00 : f32
    %336 = vector.broadcast %cst_62 : f32 to vector<2x256xf32>
    %337 = arith.addf %336, %335 : vector<2x256xf32>
    %338 = arith.divf %336, %337 : vector<2x256xf32>
    %339 = vector.extract_strided_slice %338 {offsets = [0, 0], sizes = [2, 64], strides = [1, 1]} : vector<2x256xf32> to vector<2x64xf32>
    %340 = vector.extract_strided_slice %338 {offsets = [0, 64], sizes = [2, 64], strides = [1, 1]} : vector<2x256xf32> to vector<2x64xf32>
    %341 = vector.extract_strided_slice %338 {offsets = [0, 192], sizes = [2, 64], strides = [1, 1]} : vector<2x256xf32> to vector<2x64xf32>
    %342 = vector.extract_strided_slice %333 {offsets = [0, 128], sizes = [2, 64], strides = [1, 1]} : vector<2x256xf32> to vector<2x64xf32>
    %343 = math.tanh %342 : vector<2x64xf32>
    %344 = arith.mulf %340, %328 : vector<2x64xf32>
    %345 = arith.mulf %339, %343 : vector<2x64xf32>
    %346 = arith.addf %344, %345 : vector<2x64xf32>
    %347 = math.tanh %346 : vector<2x64xf32>
    %348 = arith.mulf %341, %347 : vector<2x64xf32>
    %349 = arith.select %3, %222, %348 : vector<2x64xi1>, vector<2x64xf32>
    %350 = arith.select %3, %240, %330 : vector<2x64xi1>, vector<2x64xf32>
    %351 = arith.select %3, %258, %312 : vector<2x64xi1>, vector<2x64xf32>
    %352 = arith.select %3, %276, %294 : vector<2x64xi1>, vector<2x64xf32>
    %353 = arith.select %3, %294, %276 : vector<2x64xi1>, vector<2x64xf32>
    %354 = arith.select %3, %312, %258 : vector<2x64xi1>, vector<2x64xf32>
    %355 = arith.select %3, %330, %240 : vector<2x64xi1>, vector<2x64xf32>
    %356 = arith.select %3, %348, %222 : vector<2x64xi1>, vector<2x64xf32>
    %357 = tpu.concatenate %349, %350, %351, %352, %353, %354, %355, %356 in 0 : vector<2x64xf32>, vector<2x64xf32>, vector<2x64xf32>, vector<2x64xf32>, vector<2x64xf32>, vector<2x64xf32>, vector<2x64xf32>, vector<2x64xf32> -> vector<16x64xf32>
    %c2 = arith.constant 2 : index
    %c0_63 = arith.constant 0 : index
    %c0_64 = arith.constant 0 : index
    %358 = vector.load %arg2[%c2, %c0_63, %c0_64] : memref<3x64x256xf32, #tpu.memory_space<vmem>>, vector<1x64x256xf32>
    %359 = vector.shape_cast %358 : vector<1x64x256xf32> to vector<64x256xf32>
    %c2_65 = arith.constant 2 : index
    %c0_66 = arith.constant 0 : index
    %c0_67 = arith.constant 0 : index
    %360 = vector.load %arg3[%c2_65, %c0_66, %c0_67] : memref<3x64x256xf32, #tpu.memory_space<vmem>>, vector<1x64x256xf32>
    %361 = vector.shape_cast %360 : vector<1x64x256xf32> to vector<64x256xf32>
    %c2_68 = arith.constant 2 : index
    %c0_69 = arith.constant 0 : index
    %c0_70 = arith.constant 0 : index
    %362 = vector.load %arg4[%c2_68, %c0_69, %c0_70] : memref<3x64x256xf32, #tpu.memory_space<vmem>>, vector<1x64x256xf32>
    %363 = vector.shape_cast %362 : vector<1x64x256xf32> to vector<64x256xf32>
    %c2_71 = arith.constant 2 : index
    %c0_72 = arith.constant 0 : index
    %c0_73 = arith.constant 0 : index
    %364 = vector.load %arg5[%c2_71, %c0_72, %c0_73] : memref<3x1x256xf32, #tpu.memory_space<vmem>>, vector<1x1x256xf32>
    %365 = vector.shape_cast %364 : vector<1x1x256xf32> to vector<1x256xf32>
    %366 = vector.extract_strided_slice %357 {offsets = [14, 0], sizes = [2, 64], strides = [1, 1]} : vector<16x64xf32> to vector<2x64xf32>
    %367 = vector.extract_strided_slice %357 {offsets = [12, 0], sizes = [2, 64], strides = [1, 1]} : vector<16x64xf32> to vector<2x64xf32>
    %368 = vector.extract_strided_slice %357 {offsets = [10, 0], sizes = [2, 64], strides = [1, 1]} : vector<16x64xf32> to vector<2x64xf32>
    %369 = vector.extract_strided_slice %357 {offsets = [8, 0], sizes = [2, 64], strides = [1, 1]} : vector<16x64xf32> to vector<2x64xf32>
    %370 = vector.extract_strided_slice %357 {offsets = [6, 0], sizes = [2, 64], strides = [1, 1]} : vector<16x64xf32> to vector<2x64xf32>
    %371 = vector.extract_strided_slice %357 {offsets = [4, 0], sizes = [2, 64], strides = [1, 1]} : vector<16x64xf32> to vector<2x64xf32>
    %372 = vector.extract_strided_slice %357 {offsets = [2, 0], sizes = [2, 64], strides = [1, 1]} : vector<16x64xf32> to vector<2x64xf32>
    %373 = vector.extract_strided_slice %357 {offsets = [0, 0], sizes = [2, 64], strides = [1, 1]} : vector<16x64xf32> to vector<2x64xf32>
    %374 = tpu.concatenate %366, %367, %368, %369, %370, %371, %372, %373 in 0 : vector<2x64xf32>, vector<2x64xf32>, vector<2x64xf32>, vector<2x64xf32>, vector<2x64xf32>, vector<2x64xf32>, vector<2x64xf32>, vector<2x64xf32> -> vector<16x64xf32>
    %cst_74 = arith.constant dense<0.000000e+00> : vector<16x256xf32>
    %375 = tpu.matmul %357, %359, %cst_74 {dimension_numbers = #tpu.dot_dimension_numbers<[1], [0], [0], [1], [0, 0, 1, 1], [], []>} : vector<16x64xf32>, vector<64x256xf32>, vector<16x256xf32> -> vector<16x256xf32>
    %cst_75 = arith.constant dense<0.000000e+00> : vector<16x256xf32>
    %376 = tpu.matmul %374, %361, %cst_75 {dimension_numbers = #tpu.dot_dimension_numbers<[1], [0], [0], [1], [0, 0, 1, 1], [], []>} : vector<16x64xf32>, vector<64x256xf32>, vector<16x256xf32> -> vector<16x256xf32>
    %377 = arith.addf %375, %376 : vector<16x256xf32>
    %378 = vector.broadcast %365 : vector<1x256xf32> to vector<16x256xf32>
    %379 = arith.addf %377, %378 : vector<16x256xf32>
    %cst_76 = arith.constant 0.000000e+00 : f32
    %380 = vector.broadcast %cst_76 : f32 to vector<2x64xf32>
    %cst_77 = arith.constant 0.000000e+00 : f32
    %381 = vector.broadcast %cst_77 : f32 to vector<2x64xf32>
    %382 = vector.extract_strided_slice %379 {offsets = [0, 0], sizes = [2, 256], strides = [1, 1]} : vector<16x256xf32> to vector<2x256xf32>
    %cst_78 = arith.constant dense<0.000000e+00> : vector<2x256xf32>
    %383 = tpu.matmul %380, %363, %cst_78 {dimension_numbers = #tpu.dot_dimension_numbers<[1], [0], [0], [1], [0, 0, 1, 1], [], []>} : vector<2x64xf32>, vector<64x256xf32>, vector<2x256xf32> -> vector<2x256xf32>
    %384 = arith.addf %382, %383 : vector<2x256xf32>
    %385 = arith.negf %384 : vector<2x256xf32>
    %386 = math.exp %385 : vector<2x256xf32>
    %cst_79 = arith.constant 1.000000e+00 : f32
    %387 = vector.broadcast %cst_79 : f32 to vector<2x256xf32>
    %388 = arith.addf %387, %386 : vector<2x256xf32>
    %389 = arith.divf %387, %388 : vector<2x256xf32>
    %390 = vector.extract_strided_slice %389 {offsets = [0, 0], sizes = [2, 64], strides = [1, 1]} : vector<2x256xf32> to vector<2x64xf32>
    %391 = vector.extract_strided_slice %389 {offsets = [0, 64], sizes = [2, 64], strides = [1, 1]} : vector<2x256xf32> to vector<2x64xf32>
    %392 = vector.extract_strided_slice %389 {offsets = [0, 192], sizes = [2, 64], strides = [1, 1]} : vector<2x256xf32> to vector<2x64xf32>
    %393 = vector.extract_strided_slice %384 {offsets = [0, 128], sizes = [2, 64], strides = [1, 1]} : vector<2x256xf32> to vector<2x64xf32>
    %394 = math.tanh %393 : vector<2x64xf32>
    %395 = arith.mulf %391, %381 : vector<2x64xf32>
    %396 = arith.mulf %390, %394 : vector<2x64xf32>
    %397 = arith.addf %395, %396 : vector<2x64xf32>
    %398 = math.tanh %397 : vector<2x64xf32>
    %399 = arith.mulf %392, %398 : vector<2x64xf32>
    %400 = vector.extract_strided_slice %379 {offsets = [2, 0], sizes = [2, 256], strides = [1, 1]} : vector<16x256xf32> to vector<2x256xf32>
    %cst_80 = arith.constant dense<0.000000e+00> : vector<2x256xf32>
    %401 = tpu.matmul %399, %363, %cst_80 {dimension_numbers = #tpu.dot_dimension_numbers<[1], [0], [0], [1], [0, 0, 1, 1], [], []>} : vector<2x64xf32>, vector<64x256xf32>, vector<2x256xf32> -> vector<2x256xf32>
    %402 = arith.addf %400, %401 : vector<2x256xf32>
    %403 = arith.negf %402 : vector<2x256xf32>
    %404 = math.exp %403 : vector<2x256xf32>
    %cst_81 = arith.constant 1.000000e+00 : f32
    %405 = vector.broadcast %cst_81 : f32 to vector<2x256xf32>
    %406 = arith.addf %405, %404 : vector<2x256xf32>
    %407 = arith.divf %405, %406 : vector<2x256xf32>
    %408 = vector.extract_strided_slice %407 {offsets = [0, 0], sizes = [2, 64], strides = [1, 1]} : vector<2x256xf32> to vector<2x64xf32>
    %409 = vector.extract_strided_slice %407 {offsets = [0, 64], sizes = [2, 64], strides = [1, 1]} : vector<2x256xf32> to vector<2x64xf32>
    %410 = vector.extract_strided_slice %407 {offsets = [0, 192], sizes = [2, 64], strides = [1, 1]} : vector<2x256xf32> to vector<2x64xf32>
    %411 = vector.extract_strided_slice %402 {offsets = [0, 128], sizes = [2, 64], strides = [1, 1]} : vector<2x256xf32> to vector<2x64xf32>
    %412 = math.tanh %411 : vector<2x64xf32>
    %413 = arith.mulf %409, %397 : vector<2x64xf32>
    %414 = arith.mulf %408, %412 : vector<2x64xf32>
    %415 = arith.addf %413, %414 : vector<2x64xf32>
    %416 = math.tanh %415 : vector<2x64xf32>
    %417 = arith.mulf %410, %416 : vector<2x64xf32>
    %418 = vector.extract_strided_slice %379 {offsets = [4, 0], sizes = [2, 256], strides = [1, 1]} : vector<16x256xf32> to vector<2x256xf32>
    %cst_82 = arith.constant dense<0.000000e+00> : vector<2x256xf32>
    %419 = tpu.matmul %417, %363, %cst_82 {dimension_numbers = #tpu.dot_dimension_numbers<[1], [0], [0], [1], [0, 0, 1, 1], [], []>} : vector<2x64xf32>, vector<64x256xf32>, vector<2x256xf32> -> vector<2x256xf32>
    %420 = arith.addf %418, %419 : vector<2x256xf32>
    %421 = arith.negf %420 : vector<2x256xf32>
    %422 = math.exp %421 : vector<2x256xf32>
    %cst_83 = arith.constant 1.000000e+00 : f32
    %423 = vector.broadcast %cst_83 : f32 to vector<2x256xf32>
    %424 = arith.addf %423, %422 : vector<2x256xf32>
    %425 = arith.divf %423, %424 : vector<2x256xf32>
    %426 = vector.extract_strided_slice %425 {offsets = [0, 0], sizes = [2, 64], strides = [1, 1]} : vector<2x256xf32> to vector<2x64xf32>
    %427 = vector.extract_strided_slice %425 {offsets = [0, 64], sizes = [2, 64], strides = [1, 1]} : vector<2x256xf32> to vector<2x64xf32>
    %428 = vector.extract_strided_slice %425 {offsets = [0, 192], sizes = [2, 64], strides = [1, 1]} : vector<2x256xf32> to vector<2x64xf32>
    %429 = vector.extract_strided_slice %420 {offsets = [0, 128], sizes = [2, 64], strides = [1, 1]} : vector<2x256xf32> to vector<2x64xf32>
    %430 = math.tanh %429 : vector<2x64xf32>
    %431 = arith.mulf %427, %415 : vector<2x64xf32>
    %432 = arith.mulf %426, %430 : vector<2x64xf32>
    %433 = arith.addf %431, %432 : vector<2x64xf32>
    %434 = math.tanh %433 : vector<2x64xf32>
    %435 = arith.mulf %428, %434 : vector<2x64xf32>
    %436 = vector.extract_strided_slice %379 {offsets = [6, 0], sizes = [2, 256], strides = [1, 1]} : vector<16x256xf32> to vector<2x256xf32>
    %cst_84 = arith.constant dense<0.000000e+00> : vector<2x256xf32>
    %437 = tpu.matmul %435, %363, %cst_84 {dimension_numbers = #tpu.dot_dimension_numbers<[1], [0], [0], [1], [0, 0, 1, 1], [], []>} : vector<2x64xf32>, vector<64x256xf32>, vector<2x256xf32> -> vector<2x256xf32>
    %438 = arith.addf %436, %437 : vector<2x256xf32>
    %439 = arith.negf %438 : vector<2x256xf32>
    %440 = math.exp %439 : vector<2x256xf32>
    %cst_85 = arith.constant 1.000000e+00 : f32
    %441 = vector.broadcast %cst_85 : f32 to vector<2x256xf32>
    %442 = arith.addf %441, %440 : vector<2x256xf32>
    %443 = arith.divf %441, %442 : vector<2x256xf32>
    %444 = vector.extract_strided_slice %443 {offsets = [0, 0], sizes = [2, 64], strides = [1, 1]} : vector<2x256xf32> to vector<2x64xf32>
    %445 = vector.extract_strided_slice %443 {offsets = [0, 64], sizes = [2, 64], strides = [1, 1]} : vector<2x256xf32> to vector<2x64xf32>
    %446 = vector.extract_strided_slice %443 {offsets = [0, 192], sizes = [2, 64], strides = [1, 1]} : vector<2x256xf32> to vector<2x64xf32>
    %447 = vector.extract_strided_slice %438 {offsets = [0, 128], sizes = [2, 64], strides = [1, 1]} : vector<2x256xf32> to vector<2x64xf32>
    %448 = math.tanh %447 : vector<2x64xf32>
    %449 = arith.mulf %445, %433 : vector<2x64xf32>
    %450 = arith.mulf %444, %448 : vector<2x64xf32>
    %451 = arith.addf %449, %450 : vector<2x64xf32>
    %452 = math.tanh %451 : vector<2x64xf32>
    %453 = arith.mulf %446, %452 : vector<2x64xf32>
    %454 = vector.extract_strided_slice %379 {offsets = [8, 0], sizes = [2, 256], strides = [1, 1]} : vector<16x256xf32> to vector<2x256xf32>
    %cst_86 = arith.constant dense<0.000000e+00> : vector<2x256xf32>
    %455 = tpu.matmul %453, %363, %cst_86 {dimension_numbers = #tpu.dot_dimension_numbers<[1], [0], [0], [1], [0, 0, 1, 1], [], []>} : vector<2x64xf32>, vector<64x256xf32>, vector<2x256xf32> -> vector<2x256xf32>
    %456 = arith.addf %454, %455 : vector<2x256xf32>
    %457 = arith.negf %456 : vector<2x256xf32>
    %458 = math.exp %457 : vector<2x256xf32>
    %cst_87 = arith.constant 1.000000e+00 : f32
    %459 = vector.broadcast %cst_87 : f32 to vector<2x256xf32>
    %460 = arith.addf %459, %458 : vector<2x256xf32>
    %461 = arith.divf %459, %460 : vector<2x256xf32>
    %462 = vector.extract_strided_slice %461 {offsets = [0, 0], sizes = [2, 64], strides = [1, 1]} : vector<2x256xf32> to vector<2x64xf32>
    %463 = vector.extract_strided_slice %461 {offsets = [0, 64], sizes = [2, 64], strides = [1, 1]} : vector<2x256xf32> to vector<2x64xf32>
    %464 = vector.extract_strided_slice %461 {offsets = [0, 192], sizes = [2, 64], strides = [1, 1]} : vector<2x256xf32> to vector<2x64xf32>
    %465 = vector.extract_strided_slice %456 {offsets = [0, 128], sizes = [2, 64], strides = [1, 1]} : vector<2x256xf32> to vector<2x64xf32>
    %466 = math.tanh %465 : vector<2x64xf32>
    %467 = arith.mulf %463, %451 : vector<2x64xf32>
    %468 = arith.mulf %462, %466 : vector<2x64xf32>
    %469 = arith.addf %467, %468 : vector<2x64xf32>
    %470 = math.tanh %469 : vector<2x64xf32>
    %471 = arith.mulf %464, %470 : vector<2x64xf32>
    %472 = vector.extract_strided_slice %379 {offsets = [10, 0], sizes = [2, 256], strides = [1, 1]} : vector<16x256xf32> to vector<2x256xf32>
    %cst_88 = arith.constant dense<0.000000e+00> : vector<2x256xf32>
    %473 = tpu.matmul %471, %363, %cst_88 {dimension_numbers = #tpu.dot_dimension_numbers<[1], [0], [0], [1], [0, 0, 1, 1], [], []>} : vector<2x64xf32>, vector<64x256xf32>, vector<2x256xf32> -> vector<2x256xf32>
    %474 = arith.addf %472, %473 : vector<2x256xf32>
    %475 = arith.negf %474 : vector<2x256xf32>
    %476 = math.exp %475 : vector<2x256xf32>
    %cst_89 = arith.constant 1.000000e+00 : f32
    %477 = vector.broadcast %cst_89 : f32 to vector<2x256xf32>
    %478 = arith.addf %477, %476 : vector<2x256xf32>
    %479 = arith.divf %477, %478 : vector<2x256xf32>
    %480 = vector.extract_strided_slice %479 {offsets = [0, 0], sizes = [2, 64], strides = [1, 1]} : vector<2x256xf32> to vector<2x64xf32>
    %481 = vector.extract_strided_slice %479 {offsets = [0, 64], sizes = [2, 64], strides = [1, 1]} : vector<2x256xf32> to vector<2x64xf32>
    %482 = vector.extract_strided_slice %479 {offsets = [0, 192], sizes = [2, 64], strides = [1, 1]} : vector<2x256xf32> to vector<2x64xf32>
    %483 = vector.extract_strided_slice %474 {offsets = [0, 128], sizes = [2, 64], strides = [1, 1]} : vector<2x256xf32> to vector<2x64xf32>
    %484 = math.tanh %483 : vector<2x64xf32>
    %485 = arith.mulf %481, %469 : vector<2x64xf32>
    %486 = arith.mulf %480, %484 : vector<2x64xf32>
    %487 = arith.addf %485, %486 : vector<2x64xf32>
    %488 = math.tanh %487 : vector<2x64xf32>
    %489 = arith.mulf %482, %488 : vector<2x64xf32>
    %490 = vector.extract_strided_slice %379 {offsets = [12, 0], sizes = [2, 256], strides = [1, 1]} : vector<16x256xf32> to vector<2x256xf32>
    %cst_90 = arith.constant dense<0.000000e+00> : vector<2x256xf32>
    %491 = tpu.matmul %489, %363, %cst_90 {dimension_numbers = #tpu.dot_dimension_numbers<[1], [0], [0], [1], [0, 0, 1, 1], [], []>} : vector<2x64xf32>, vector<64x256xf32>, vector<2x256xf32> -> vector<2x256xf32>
    %492 = arith.addf %490, %491 : vector<2x256xf32>
    %493 = arith.negf %492 : vector<2x256xf32>
    %494 = math.exp %493 : vector<2x256xf32>
    %cst_91 = arith.constant 1.000000e+00 : f32
    %495 = vector.broadcast %cst_91 : f32 to vector<2x256xf32>
    %496 = arith.addf %495, %494 : vector<2x256xf32>
    %497 = arith.divf %495, %496 : vector<2x256xf32>
    %498 = vector.extract_strided_slice %497 {offsets = [0, 0], sizes = [2, 64], strides = [1, 1]} : vector<2x256xf32> to vector<2x64xf32>
    %499 = vector.extract_strided_slice %497 {offsets = [0, 64], sizes = [2, 64], strides = [1, 1]} : vector<2x256xf32> to vector<2x64xf32>
    %500 = vector.extract_strided_slice %497 {offsets = [0, 192], sizes = [2, 64], strides = [1, 1]} : vector<2x256xf32> to vector<2x64xf32>
    %501 = vector.extract_strided_slice %492 {offsets = [0, 128], sizes = [2, 64], strides = [1, 1]} : vector<2x256xf32> to vector<2x64xf32>
    %502 = math.tanh %501 : vector<2x64xf32>
    %503 = arith.mulf %499, %487 : vector<2x64xf32>
    %504 = arith.mulf %498, %502 : vector<2x64xf32>
    %505 = arith.addf %503, %504 : vector<2x64xf32>
    %506 = math.tanh %505 : vector<2x64xf32>
    %507 = arith.mulf %500, %506 : vector<2x64xf32>
    %508 = vector.extract_strided_slice %379 {offsets = [14, 0], sizes = [2, 256], strides = [1, 1]} : vector<16x256xf32> to vector<2x256xf32>
    %cst_92 = arith.constant dense<0.000000e+00> : vector<2x256xf32>
    %509 = tpu.matmul %507, %363, %cst_92 {dimension_numbers = #tpu.dot_dimension_numbers<[1], [0], [0], [1], [0, 0, 1, 1], [], []>} : vector<2x64xf32>, vector<64x256xf32>, vector<2x256xf32> -> vector<2x256xf32>
    %510 = arith.addf %508, %509 : vector<2x256xf32>
    %511 = arith.negf %510 : vector<2x256xf32>
    %512 = math.exp %511 : vector<2x256xf32>
    %cst_93 = arith.constant 1.000000e+00 : f32
    %513 = vector.broadcast %cst_93 : f32 to vector<2x256xf32>
    %514 = arith.addf %513, %512 : vector<2x256xf32>
    %515 = arith.divf %513, %514 : vector<2x256xf32>
    %516 = vector.extract_strided_slice %515 {offsets = [0, 0], sizes = [2, 64], strides = [1, 1]} : vector<2x256xf32> to vector<2x64xf32>
    %517 = vector.extract_strided_slice %515 {offsets = [0, 64], sizes = [2, 64], strides = [1, 1]} : vector<2x256xf32> to vector<2x64xf32>
    %518 = vector.extract_strided_slice %515 {offsets = [0, 192], sizes = [2, 64], strides = [1, 1]} : vector<2x256xf32> to vector<2x64xf32>
    %519 = vector.extract_strided_slice %510 {offsets = [0, 128], sizes = [2, 64], strides = [1, 1]} : vector<2x256xf32> to vector<2x64xf32>
    %520 = math.tanh %519 : vector<2x64xf32>
    %521 = arith.mulf %517, %505 : vector<2x64xf32>
    %522 = arith.mulf %516, %520 : vector<2x64xf32>
    %523 = arith.addf %521, %522 : vector<2x64xf32>
    %524 = math.tanh %523 : vector<2x64xf32>
    %525 = arith.mulf %518, %524 : vector<2x64xf32>
    %526 = arith.select %3, %399, %525 : vector<2x64xi1>, vector<2x64xf32>
    %527 = arith.select %3, %417, %507 : vector<2x64xi1>, vector<2x64xf32>
    %528 = arith.select %3, %435, %489 : vector<2x64xi1>, vector<2x64xf32>
    %529 = arith.select %3, %453, %471 : vector<2x64xi1>, vector<2x64xf32>
    %530 = arith.select %3, %471, %453 : vector<2x64xi1>, vector<2x64xf32>
    %531 = arith.select %3, %489, %435 : vector<2x64xi1>, vector<2x64xf32>
    %532 = arith.select %3, %507, %417 : vector<2x64xi1>, vector<2x64xf32>
    %533 = arith.select %3, %525, %399 : vector<2x64xi1>, vector<2x64xf32>
    %534 = tpu.concatenate %526, %527, %528, %529, %530, %531, %532, %533 in 0 : vector<2x64xf32>, vector<2x64xf32>, vector<2x64xf32>, vector<2x64xf32>, vector<2x64xf32>, vector<2x64xf32>, vector<2x64xf32>, vector<2x64xf32> -> vector<16x64xf32>
    %c0_94 = arith.constant 0 : index
    %c0_95 = arith.constant 0 : index
    %535 = vector.load %arg6[%c0_94, %c0_95] : memref<64x192xf32, #tpu.memory_space<vmem>>, vector<64x192xf32>
    %cst_96 = arith.constant dense<0.000000e+00> : vector<16x192xf32>
    %536 = tpu.matmul %534, %535, %cst_96 {dimension_numbers = #tpu.dot_dimension_numbers<[1], [0], [0], [1], [0, 0, 1, 1], [], []>} : vector<16x64xf32>, vector<64x192xf32>, vector<16x192xf32> -> vector<16x192xf32>
    %c0_97 = arith.constant 0 : index
    %c0_98 = arith.constant 0 : index
    %537 = vector.load %arg7[%c0_97, %c0_98] : memref<1x192xf32, #tpu.memory_space<vmem>>, vector<1x192xf32>
    %538 = vector.broadcast %537 : vector<1x192xf32> to vector<16x192xf32>
    %539 = arith.addf %536, %538 : vector<16x192xf32>
    %540 = vector.extract_strided_slice %539 {offsets = [0, 0], sizes = [16, 64], strides = [1, 1]} : vector<16x192xf32> to vector<16x64xf32>
    %cst_99 = arith.constant 0.353553385 : f32
    %541 = vector.broadcast %cst_99 : f32 to vector<16x64xf32>
    %542 = arith.mulf %540, %541 : vector<16x64xf32>
    %543 = vector.extract_strided_slice %539 {offsets = [0, 64], sizes = [16, 64], strides = [1, 1]} : vector<16x192xf32> to vector<16x64xf32>
    %544 = vector.extract_strided_slice %539 {offsets = [0, 128], sizes = [16, 64], strides = [1, 1]} : vector<16x192xf32> to vector<16x64xf32>
    %545 = tpu.iota {dimensions = array<i32: 0>} : vector<16x16xi32>
    %546 = tpu.iota {dimensions = array<i32: 1>} : vector<16x16xi32>
    %c2_i32 = arith.constant 2 : i32
    %c0_i32 = arith.constant 0 : i32
    %547 = arith.cmpi eq, %c2_i32, %c0_i32 : i32
    %c1_i32 = arith.constant 1 : i32
    %548 = arith.select %547, %c1_i32, %c2_i32 : i32
    %549 = vector.broadcast %548 : i32 to vector<16x16xi32>
    %550 = arith.remsi %545, %549 : vector<16x16xi32>
    %c0_i32_100 = arith.constant 0 : i32
    %551 = vector.broadcast %c0_i32_100 : i32 to vector<16x16xi32>
    %552 = arith.cmpi ne, %550, %551 : vector<16x16xi32>
    %c0_i32_101 = arith.constant 0 : i32
    %553 = vector.broadcast %c0_i32_101 : i32 to vector<16x16xi32>
    %554 = arith.cmpi slt, %550, %553 : vector<16x16xi32>
    %c0_i32_102 = arith.constant 0 : i32
    %555 = arith.cmpi slt, %548, %c0_i32_102 : i32
    %556 = vector.broadcast %555 : i1 to vector<16x16xi1>
    %557 = vector.broadcast %556 : vector<16x16xi1> to vector<16x16xi1>
    %558 = arith.xori %554, %557 : vector<16x16xi1>
    %559 = arith.andi %558, %552 : vector<16x16xi1>
    %560 = vector.broadcast %548 : i32 to vector<16x16xi32>
    %561 = arith.addi %550, %560 : vector<16x16xi32>
    %562 = arith.select %559, %561, %550 : vector<16x16xi1>, vector<16x16xi32>
    %c2_i32_103 = arith.constant 2 : i32
    %c0_i32_104 = arith.constant 0 : i32
    %563 = arith.cmpi eq, %c2_i32_103, %c0_i32_104 : i32
    %c1_i32_105 = arith.constant 1 : i32
    %564 = arith.select %563, %c1_i32_105, %c2_i32_103 : i32
    %565 = vector.broadcast %564 : i32 to vector<16x16xi32>
    %566 = arith.remsi %546, %565 : vector<16x16xi32>
    %c0_i32_106 = arith.constant 0 : i32
    %567 = vector.broadcast %c0_i32_106 : i32 to vector<16x16xi32>
    %568 = arith.cmpi ne, %566, %567 : vector<16x16xi32>
    %c0_i32_107 = arith.constant 0 : i32
    %569 = vector.broadcast %c0_i32_107 : i32 to vector<16x16xi32>
    %570 = arith.cmpi slt, %566, %569 : vector<16x16xi32>
    %c0_i32_108 = arith.constant 0 : i32
    %571 = arith.cmpi slt, %564, %c0_i32_108 : i32
    %572 = vector.broadcast %571 : i1 to vector<16x16xi1>
    %573 = vector.broadcast %572 : vector<16x16xi1> to vector<16x16xi1>
    %574 = arith.xori %570, %573 : vector<16x16xi1>
    %575 = arith.andi %574, %568 : vector<16x16xi1>
    %576 = vector.broadcast %564 : i32 to vector<16x16xi32>
    %577 = arith.addi %566, %576 : vector<16x16xi32>
    %578 = arith.select %575, %577, %566 : vector<16x16xi1>, vector<16x16xi32>
    %579 = arith.cmpi eq, %562, %578 : vector<16x16xi32>
    %580 = vector.extract_strided_slice %542 {offsets = [0, 0], sizes = [16, 8], strides = [1, 1]} : vector<16x64xf32> to vector<16x8xf32>
    %581 = vector.extract_strided_slice %543 {offsets = [0, 0], sizes = [16, 8], strides = [1, 1]} : vector<16x64xf32> to vector<16x8xf32>
    %582 = vector.extract_strided_slice %544 {offsets = [0, 0], sizes = [16, 8], strides = [1, 1]} : vector<16x64xf32> to vector<16x8xf32>
    %cst_109 = arith.constant dense<0.000000e+00> : vector<16x16xf32>
    %583 = tpu.matmul %580, %581, %cst_109 {dimension_numbers = #tpu.dot_dimension_numbers<[1], [1], [0], [0], [0, 0, 1, 0], [], []>} : vector<16x8xf32>, vector<16x8xf32>, vector<16x16xf32> -> vector<16x16xf32>
    %cst_110 = arith.constant -1.000000e+30 : f32
    %584 = vector.broadcast %cst_110 : f32 to vector<16x16xf32>
    %585 = arith.select %579, %583, %584 : vector<16x16xi1>, vector<16x16xf32>
    %cst_111 = arith.constant dense<0xFF800000> : vector<16xf32>
    %586 = vector.multi_reduction <maximumf>, %585, %cst_111 [1] : vector<16x16xf32> to vector<16xf32>
    %587 = vector.shape_cast %586 : vector<16xf32> to vector<16x1xf32>
    %588 = vector.broadcast %587 : vector<16x1xf32> to vector<16x16xf32>
    %589 = arith.subf %585, %588 : vector<16x16xf32>
    %590 = math.exp %589 : vector<16x16xf32>
    %cst_112 = arith.constant dense<0.000000e+00> : vector<16xf32>
    %591 = vector.multi_reduction <add>, %590, %cst_112 [1] : vector<16x16xf32> to vector<16xf32>
    %592 = vector.shape_cast %591 : vector<16xf32> to vector<16x1xf32>
    %593 = vector.broadcast %592 : vector<16x1xf32> to vector<16x16xf32>
    %594 = arith.divf %590, %593 : vector<16x16xf32>
    %cst_113 = arith.constant dense<0.000000e+00> : vector<16x8xf32>
    %595 = tpu.matmul %594, %582, %cst_113 {dimension_numbers = #tpu.dot_dimension_numbers<[1], [0], [0], [1], [0, 0, 1, 1], [], []>} : vector<16x16xf32>, vector<16x8xf32>, vector<16x8xf32> -> vector<16x8xf32>
    %596 = vector.extract_strided_slice %542 {offsets = [0, 8], sizes = [16, 8], strides = [1, 1]} : vector<16x64xf32> to vector<16x8xf32>
    %597 = vector.extract_strided_slice %543 {offsets = [0, 8], sizes = [16, 8], strides = [1, 1]} : vector<16x64xf32> to vector<16x8xf32>
    %598 = vector.extract_strided_slice %544 {offsets = [0, 8], sizes = [16, 8], strides = [1, 1]} : vector<16x64xf32> to vector<16x8xf32>
    %cst_114 = arith.constant dense<0.000000e+00> : vector<16x16xf32>
    %599 = tpu.matmul %596, %597, %cst_114 {dimension_numbers = #tpu.dot_dimension_numbers<[1], [1], [0], [0], [0, 0, 1, 0], [], []>} : vector<16x8xf32>, vector<16x8xf32>, vector<16x16xf32> -> vector<16x16xf32>
    %cst_115 = arith.constant -1.000000e+30 : f32
    %600 = vector.broadcast %cst_115 : f32 to vector<16x16xf32>
    %601 = arith.select %579, %599, %600 : vector<16x16xi1>, vector<16x16xf32>
    %cst_116 = arith.constant dense<0xFF800000> : vector<16xf32>
    %602 = vector.multi_reduction <maximumf>, %601, %cst_116 [1] : vector<16x16xf32> to vector<16xf32>
    %603 = vector.shape_cast %602 : vector<16xf32> to vector<16x1xf32>
    %604 = vector.broadcast %603 : vector<16x1xf32> to vector<16x16xf32>
    %605 = arith.subf %601, %604 : vector<16x16xf32>
    %606 = math.exp %605 : vector<16x16xf32>
    %cst_117 = arith.constant dense<0.000000e+00> : vector<16xf32>
    %607 = vector.multi_reduction <add>, %606, %cst_117 [1] : vector<16x16xf32> to vector<16xf32>
    %608 = vector.shape_cast %607 : vector<16xf32> to vector<16x1xf32>
    %609 = vector.broadcast %608 : vector<16x1xf32> to vector<16x16xf32>
    %610 = arith.divf %606, %609 : vector<16x16xf32>
    %cst_118 = arith.constant dense<0.000000e+00> : vector<16x8xf32>
    %611 = tpu.matmul %610, %598, %cst_118 {dimension_numbers = #tpu.dot_dimension_numbers<[1], [0], [0], [1], [0, 0, 1, 1], [], []>} : vector<16x16xf32>, vector<16x8xf32>, vector<16x8xf32> -> vector<16x8xf32>
    %612 = vector.extract_strided_slice %542 {offsets = [0, 16], sizes = [16, 8], strides = [1, 1]} : vector<16x64xf32> to vector<16x8xf32>
    %613 = vector.extract_strided_slice %543 {offsets = [0, 16], sizes = [16, 8], strides = [1, 1]} : vector<16x64xf32> to vector<16x8xf32>
    %614 = vector.extract_strided_slice %544 {offsets = [0, 16], sizes = [16, 8], strides = [1, 1]} : vector<16x64xf32> to vector<16x8xf32>
    %cst_119 = arith.constant dense<0.000000e+00> : vector<16x16xf32>
    %615 = tpu.matmul %612, %613, %cst_119 {dimension_numbers = #tpu.dot_dimension_numbers<[1], [1], [0], [0], [0, 0, 1, 0], [], []>} : vector<16x8xf32>, vector<16x8xf32>, vector<16x16xf32> -> vector<16x16xf32>
    %cst_120 = arith.constant -1.000000e+30 : f32
    %616 = vector.broadcast %cst_120 : f32 to vector<16x16xf32>
    %617 = arith.select %579, %615, %616 : vector<16x16xi1>, vector<16x16xf32>
    %cst_121 = arith.constant dense<0xFF800000> : vector<16xf32>
    %618 = vector.multi_reduction <maximumf>, %617, %cst_121 [1] : vector<16x16xf32> to vector<16xf32>
    %619 = vector.shape_cast %618 : vector<16xf32> to vector<16x1xf32>
    %620 = vector.broadcast %619 : vector<16x1xf32> to vector<16x16xf32>
    %621 = arith.subf %617, %620 : vector<16x16xf32>
    %622 = math.exp %621 : vector<16x16xf32>
    %cst_122 = arith.constant dense<0.000000e+00> : vector<16xf32>
    %623 = vector.multi_reduction <add>, %622, %cst_122 [1] : vector<16x16xf32> to vector<16xf32>
    %624 = vector.shape_cast %623 : vector<16xf32> to vector<16x1xf32>
    %625 = vector.broadcast %624 : vector<16x1xf32> to vector<16x16xf32>
    %626 = arith.divf %622, %625 : vector<16x16xf32>
    %cst_123 = arith.constant dense<0.000000e+00> : vector<16x8xf32>
    %627 = tpu.matmul %626, %614, %cst_123 {dimension_numbers = #tpu.dot_dimension_numbers<[1], [0], [0], [1], [0, 0, 1, 1], [], []>} : vector<16x16xf32>, vector<16x8xf32>, vector<16x8xf32> -> vector<16x8xf32>
    %628 = vector.extract_strided_slice %542 {offsets = [0, 24], sizes = [16, 8], strides = [1, 1]} : vector<16x64xf32> to vector<16x8xf32>
    %629 = vector.extract_strided_slice %543 {offsets = [0, 24], sizes = [16, 8], strides = [1, 1]} : vector<16x64xf32> to vector<16x8xf32>
    %630 = vector.extract_strided_slice %544 {offsets = [0, 24], sizes = [16, 8], strides = [1, 1]} : vector<16x64xf32> to vector<16x8xf32>
    %cst_124 = arith.constant dense<0.000000e+00> : vector<16x16xf32>
    %631 = tpu.matmul %628, %629, %cst_124 {dimension_numbers = #tpu.dot_dimension_numbers<[1], [1], [0], [0], [0, 0, 1, 0], [], []>} : vector<16x8xf32>, vector<16x8xf32>, vector<16x16xf32> -> vector<16x16xf32>
    %cst_125 = arith.constant -1.000000e+30 : f32
    %632 = vector.broadcast %cst_125 : f32 to vector<16x16xf32>
    %633 = arith.select %579, %631, %632 : vector<16x16xi1>, vector<16x16xf32>
    %cst_126 = arith.constant dense<0xFF800000> : vector<16xf32>
    %634 = vector.multi_reduction <maximumf>, %633, %cst_126 [1] : vector<16x16xf32> to vector<16xf32>
    %635 = vector.shape_cast %634 : vector<16xf32> to vector<16x1xf32>
    %636 = vector.broadcast %635 : vector<16x1xf32> to vector<16x16xf32>
    %637 = arith.subf %633, %636 : vector<16x16xf32>
    %638 = math.exp %637 : vector<16x16xf32>
    %cst_127 = arith.constant dense<0.000000e+00> : vector<16xf32>
    %639 = vector.multi_reduction <add>, %638, %cst_127 [1] : vector<16x16xf32> to vector<16xf32>
    %640 = vector.shape_cast %639 : vector<16xf32> to vector<16x1xf32>
    %641 = vector.broadcast %640 : vector<16x1xf32> to vector<16x16xf32>
    %642 = arith.divf %638, %641 : vector<16x16xf32>
    %cst_128 = arith.constant dense<0.000000e+00> : vector<16x8xf32>
    %643 = tpu.matmul %642, %630, %cst_128 {dimension_numbers = #tpu.dot_dimension_numbers<[1], [0], [0], [1], [0, 0, 1, 1], [], []>} : vector<16x16xf32>, vector<16x8xf32>, vector<16x8xf32> -> vector<16x8xf32>
    %644 = vector.extract_strided_slice %542 {offsets = [0, 32], sizes = [16, 8], strides = [1, 1]} : vector<16x64xf32> to vector<16x8xf32>
    %645 = vector.extract_strided_slice %543 {offsets = [0, 32], sizes = [16, 8], strides = [1, 1]} : vector<16x64xf32> to vector<16x8xf32>
    %646 = vector.extract_strided_slice %544 {offsets = [0, 32], sizes = [16, 8], strides = [1, 1]} : vector<16x64xf32> to vector<16x8xf32>
    %cst_129 = arith.constant dense<0.000000e+00> : vector<16x16xf32>
    %647 = tpu.matmul %644, %645, %cst_129 {dimension_numbers = #tpu.dot_dimension_numbers<[1], [1], [0], [0], [0, 0, 1, 0], [], []>} : vector<16x8xf32>, vector<16x8xf32>, vector<16x16xf32> -> vector<16x16xf32>
    %cst_130 = arith.constant -1.000000e+30 : f32
    %648 = vector.broadcast %cst_130 : f32 to vector<16x16xf32>
    %649 = arith.select %579, %647, %648 : vector<16x16xi1>, vector<16x16xf32>
    %cst_131 = arith.constant dense<0xFF800000> : vector<16xf32>
    %650 = vector.multi_reduction <maximumf>, %649, %cst_131 [1] : vector<16x16xf32> to vector<16xf32>
    %651 = vector.shape_cast %650 : vector<16xf32> to vector<16x1xf32>
    %652 = vector.broadcast %651 : vector<16x1xf32> to vector<16x16xf32>
    %653 = arith.subf %649, %652 : vector<16x16xf32>
    %654 = math.exp %653 : vector<16x16xf32>
    %cst_132 = arith.constant dense<0.000000e+00> : vector<16xf32>
    %655 = vector.multi_reduction <add>, %654, %cst_132 [1] : vector<16x16xf32> to vector<16xf32>
    %656 = vector.shape_cast %655 : vector<16xf32> to vector<16x1xf32>
    %657 = vector.broadcast %656 : vector<16x1xf32> to vector<16x16xf32>
    %658 = arith.divf %654, %657 : vector<16x16xf32>
    %cst_133 = arith.constant dense<0.000000e+00> : vector<16x8xf32>
    %659 = tpu.matmul %658, %646, %cst_133 {dimension_numbers = #tpu.dot_dimension_numbers<[1], [0], [0], [1], [0, 0, 1, 1], [], []>} : vector<16x16xf32>, vector<16x8xf32>, vector<16x8xf32> -> vector<16x8xf32>
    %660 = vector.extract_strided_slice %542 {offsets = [0, 40], sizes = [16, 8], strides = [1, 1]} : vector<16x64xf32> to vector<16x8xf32>
    %661 = vector.extract_strided_slice %543 {offsets = [0, 40], sizes = [16, 8], strides = [1, 1]} : vector<16x64xf32> to vector<16x8xf32>
    %662 = vector.extract_strided_slice %544 {offsets = [0, 40], sizes = [16, 8], strides = [1, 1]} : vector<16x64xf32> to vector<16x8xf32>
    %cst_134 = arith.constant dense<0.000000e+00> : vector<16x16xf32>
    %663 = tpu.matmul %660, %661, %cst_134 {dimension_numbers = #tpu.dot_dimension_numbers<[1], [1], [0], [0], [0, 0, 1, 0], [], []>} : vector<16x8xf32>, vector<16x8xf32>, vector<16x16xf32> -> vector<16x16xf32>
    %cst_135 = arith.constant -1.000000e+30 : f32
    %664 = vector.broadcast %cst_135 : f32 to vector<16x16xf32>
    %665 = arith.select %579, %663, %664 : vector<16x16xi1>, vector<16x16xf32>
    %cst_136 = arith.constant dense<0xFF800000> : vector<16xf32>
    %666 = vector.multi_reduction <maximumf>, %665, %cst_136 [1] : vector<16x16xf32> to vector<16xf32>
    %667 = vector.shape_cast %666 : vector<16xf32> to vector<16x1xf32>
    %668 = vector.broadcast %667 : vector<16x1xf32> to vector<16x16xf32>
    %669 = arith.subf %665, %668 : vector<16x16xf32>
    %670 = math.exp %669 : vector<16x16xf32>
    %cst_137 = arith.constant dense<0.000000e+00> : vector<16xf32>
    %671 = vector.multi_reduction <add>, %670, %cst_137 [1] : vector<16x16xf32> to vector<16xf32>
    %672 = vector.shape_cast %671 : vector<16xf32> to vector<16x1xf32>
    %673 = vector.broadcast %672 : vector<16x1xf32> to vector<16x16xf32>
    %674 = arith.divf %670, %673 : vector<16x16xf32>
    %cst_138 = arith.constant dense<0.000000e+00> : vector<16x8xf32>
    %675 = tpu.matmul %674, %662, %cst_138 {dimension_numbers = #tpu.dot_dimension_numbers<[1], [0], [0], [1], [0, 0, 1, 1], [], []>} : vector<16x16xf32>, vector<16x8xf32>, vector<16x8xf32> -> vector<16x8xf32>
    %676 = vector.extract_strided_slice %542 {offsets = [0, 48], sizes = [16, 8], strides = [1, 1]} : vector<16x64xf32> to vector<16x8xf32>
    %677 = vector.extract_strided_slice %543 {offsets = [0, 48], sizes = [16, 8], strides = [1, 1]} : vector<16x64xf32> to vector<16x8xf32>
    %678 = vector.extract_strided_slice %544 {offsets = [0, 48], sizes = [16, 8], strides = [1, 1]} : vector<16x64xf32> to vector<16x8xf32>
    %cst_139 = arith.constant dense<0.000000e+00> : vector<16x16xf32>
    %679 = tpu.matmul %676, %677, %cst_139 {dimension_numbers = #tpu.dot_dimension_numbers<[1], [1], [0], [0], [0, 0, 1, 0], [], []>} : vector<16x8xf32>, vector<16x8xf32>, vector<16x16xf32> -> vector<16x16xf32>
    %cst_140 = arith.constant -1.000000e+30 : f32
    %680 = vector.broadcast %cst_140 : f32 to vector<16x16xf32>
    %681 = arith.select %579, %679, %680 : vector<16x16xi1>, vector<16x16xf32>
    %cst_141 = arith.constant dense<0xFF800000> : vector<16xf32>
    %682 = vector.multi_reduction <maximumf>, %681, %cst_141 [1] : vector<16x16xf32> to vector<16xf32>
    %683 = vector.shape_cast %682 : vector<16xf32> to vector<16x1xf32>
    %684 = vector.broadcast %683 : vector<16x1xf32> to vector<16x16xf32>
    %685 = arith.subf %681, %684 : vector<16x16xf32>
    %686 = math.exp %685 : vector<16x16xf32>
    %cst_142 = arith.constant dense<0.000000e+00> : vector<16xf32>
    %687 = vector.multi_reduction <add>, %686, %cst_142 [1] : vector<16x16xf32> to vector<16xf32>
    %688 = vector.shape_cast %687 : vector<16xf32> to vector<16x1xf32>
    %689 = vector.broadcast %688 : vector<16x1xf32> to vector<16x16xf32>
    %690 = arith.divf %686, %689 : vector<16x16xf32>
    %cst_143 = arith.constant dense<0.000000e+00> : vector<16x8xf32>
    %691 = tpu.matmul %690, %678, %cst_143 {dimension_numbers = #tpu.dot_dimension_numbers<[1], [0], [0], [1], [0, 0, 1, 1], [], []>} : vector<16x16xf32>, vector<16x8xf32>, vector<16x8xf32> -> vector<16x8xf32>
    %692 = vector.extract_strided_slice %542 {offsets = [0, 56], sizes = [16, 8], strides = [1, 1]} : vector<16x64xf32> to vector<16x8xf32>
    %693 = vector.extract_strided_slice %543 {offsets = [0, 56], sizes = [16, 8], strides = [1, 1]} : vector<16x64xf32> to vector<16x8xf32>
    %694 = vector.extract_strided_slice %544 {offsets = [0, 56], sizes = [16, 8], strides = [1, 1]} : vector<16x64xf32> to vector<16x8xf32>
    %cst_144 = arith.constant dense<0.000000e+00> : vector<16x16xf32>
    %695 = tpu.matmul %692, %693, %cst_144 {dimension_numbers = #tpu.dot_dimension_numbers<[1], [1], [0], [0], [0, 0, 1, 0], [], []>} : vector<16x8xf32>, vector<16x8xf32>, vector<16x16xf32> -> vector<16x16xf32>
    %cst_145 = arith.constant -1.000000e+30 : f32
    %696 = vector.broadcast %cst_145 : f32 to vector<16x16xf32>
    %697 = arith.select %579, %695, %696 : vector<16x16xi1>, vector<16x16xf32>
    %cst_146 = arith.constant dense<0xFF800000> : vector<16xf32>
    %698 = vector.multi_reduction <maximumf>, %697, %cst_146 [1] : vector<16x16xf32> to vector<16xf32>
    %699 = vector.shape_cast %698 : vector<16xf32> to vector<16x1xf32>
    %700 = vector.broadcast %699 : vector<16x1xf32> to vector<16x16xf32>
    %701 = arith.subf %697, %700 : vector<16x16xf32>
    %702 = math.exp %701 : vector<16x16xf32>
    %cst_147 = arith.constant dense<0.000000e+00> : vector<16xf32>
    %703 = vector.multi_reduction <add>, %702, %cst_147 [1] : vector<16x16xf32> to vector<16xf32>
    %704 = vector.shape_cast %703 : vector<16xf32> to vector<16x1xf32>
    %705 = vector.broadcast %704 : vector<16x1xf32> to vector<16x16xf32>
    %706 = arith.divf %702, %705 : vector<16x16xf32>
    %cst_148 = arith.constant dense<0.000000e+00> : vector<16x8xf32>
    %707 = tpu.matmul %706, %694, %cst_148 {dimension_numbers = #tpu.dot_dimension_numbers<[1], [0], [0], [1], [0, 0, 1, 1], [], []>} : vector<16x16xf32>, vector<16x8xf32>, vector<16x8xf32> -> vector<16x8xf32>
    %708 = tpu.concatenate %595, %611, %627, %643, %659, %675, %691, %707 in 1 : vector<16x8xf32>, vector<16x8xf32>, vector<16x8xf32>, vector<16x8xf32>, vector<16x8xf32>, vector<16x8xf32>, vector<16x8xf32>, vector<16x8xf32> -> vector<16x64xf32>
    %c0_149 = arith.constant 0 : index
    %c0_150 = arith.constant 0 : index
    %709 = vector.load %arg8[%c0_149, %c0_150] : memref<64x64xf32, #tpu.memory_space<vmem>>, vector<64x64xf32>
    %cst_151 = arith.constant dense<0.000000e+00> : vector<16x64xf32>
    %710 = tpu.matmul %708, %709, %cst_151 {dimension_numbers = #tpu.dot_dimension_numbers<[1], [0], [0], [1], [0, 0, 1, 1], [], []>} : vector<16x64xf32>, vector<64x64xf32>, vector<16x64xf32> -> vector<16x64xf32>
    %c0_152 = arith.constant 0 : index
    %c0_153 = arith.constant 0 : index
    %711 = vector.load %arg9[%c0_152, %c0_153] : memref<1x64xf32, #tpu.memory_space<vmem>>, vector<1x64xf32>
    %712 = vector.broadcast %711 : vector<1x64xf32> to vector<16x64xf32>
    %713 = arith.addf %710, %712 : vector<16x64xf32>
    %c0_154 = arith.constant 0 : index
    %c0_155 = arith.constant 0 : index
    %714 = vector.load %arg10[%c0_154, %c0_155] : memref<512x32xf32, #tpu.memory_space<vmem>>, vector<512x32xf32>
    %cst_156 = arith.constant 0.000000e+00 : f32
    %715 = vector.broadcast %cst_156 : f32 to vector<2x32xf32>
    %716 = vector.extract_strided_slice %713 {offsets = [0, 0], sizes = [2, 64], strides = [1, 1]} : vector<16x64xf32> to vector<2x64xf32>
    %717 = vector.extract_strided_slice %714 {offsets = [0, 0], sizes = [64, 32], strides = [1, 1]} : vector<512x32xf32> to vector<64x32xf32>
    %cst_157 = arith.constant dense<0.000000e+00> : vector<2x32xf32>
    %718 = tpu.matmul %716, %717, %cst_157 {dimension_numbers = #tpu.dot_dimension_numbers<[1], [0], [0], [1], [0, 0, 1, 1], [], []>} : vector<2x64xf32>, vector<64x32xf32>, vector<2x32xf32> -> vector<2x32xf32>
    %719 = arith.addf %715, %718 : vector<2x32xf32>
    %720 = vector.extract_strided_slice %713 {offsets = [2, 0], sizes = [2, 64], strides = [1, 1]} : vector<16x64xf32> to vector<2x64xf32>
    %721 = vector.extract_strided_slice %714 {offsets = [64, 0], sizes = [64, 32], strides = [1, 1]} : vector<512x32xf32> to vector<64x32xf32>
    %cst_158 = arith.constant dense<0.000000e+00> : vector<2x32xf32>
    %722 = tpu.matmul %720, %721, %cst_158 {dimension_numbers = #tpu.dot_dimension_numbers<[1], [0], [0], [1], [0, 0, 1, 1], [], []>} : vector<2x64xf32>, vector<64x32xf32>, vector<2x32xf32> -> vector<2x32xf32>
    %723 = arith.addf %719, %722 : vector<2x32xf32>
    %724 = vector.extract_strided_slice %713 {offsets = [4, 0], sizes = [2, 64], strides = [1, 1]} : vector<16x64xf32> to vector<2x64xf32>
    %725 = vector.extract_strided_slice %714 {offsets = [128, 0], sizes = [64, 32], strides = [1, 1]} : vector<512x32xf32> to vector<64x32xf32>
    %cst_159 = arith.constant dense<0.000000e+00> : vector<2x32xf32>
    %726 = tpu.matmul %724, %725, %cst_159 {dimension_numbers = #tpu.dot_dimension_numbers<[1], [0], [0], [1], [0, 0, 1, 1], [], []>} : vector<2x64xf32>, vector<64x32xf32>, vector<2x32xf32> -> vector<2x32xf32>
    %727 = arith.addf %723, %726 : vector<2x32xf32>
    %728 = vector.extract_strided_slice %713 {offsets = [6, 0], sizes = [2, 64], strides = [1, 1]} : vector<16x64xf32> to vector<2x64xf32>
    %729 = vector.extract_strided_slice %714 {offsets = [192, 0], sizes = [64, 32], strides = [1, 1]} : vector<512x32xf32> to vector<64x32xf32>
    %cst_160 = arith.constant dense<0.000000e+00> : vector<2x32xf32>
    %730 = tpu.matmul %728, %729, %cst_160 {dimension_numbers = #tpu.dot_dimension_numbers<[1], [0], [0], [1], [0, 0, 1, 1], [], []>} : vector<2x64xf32>, vector<64x32xf32>, vector<2x32xf32> -> vector<2x32xf32>
    %731 = arith.addf %727, %730 : vector<2x32xf32>
    %732 = vector.extract_strided_slice %713 {offsets = [8, 0], sizes = [2, 64], strides = [1, 1]} : vector<16x64xf32> to vector<2x64xf32>
    %733 = vector.extract_strided_slice %714 {offsets = [256, 0], sizes = [64, 32], strides = [1, 1]} : vector<512x32xf32> to vector<64x32xf32>
    %cst_161 = arith.constant dense<0.000000e+00> : vector<2x32xf32>
    %734 = tpu.matmul %732, %733, %cst_161 {dimension_numbers = #tpu.dot_dimension_numbers<[1], [0], [0], [1], [0, 0, 1, 1], [], []>} : vector<2x64xf32>, vector<64x32xf32>, vector<2x32xf32> -> vector<2x32xf32>
    %735 = arith.addf %731, %734 : vector<2x32xf32>
    %736 = vector.extract_strided_slice %713 {offsets = [10, 0], sizes = [2, 64], strides = [1, 1]} : vector<16x64xf32> to vector<2x64xf32>
    %737 = vector.extract_strided_slice %714 {offsets = [320, 0], sizes = [64, 32], strides = [1, 1]} : vector<512x32xf32> to vector<64x32xf32>
    %cst_162 = arith.constant dense<0.000000e+00> : vector<2x32xf32>
    %738 = tpu.matmul %736, %737, %cst_162 {dimension_numbers = #tpu.dot_dimension_numbers<[1], [0], [0], [1], [0, 0, 1, 1], [], []>} : vector<2x64xf32>, vector<64x32xf32>, vector<2x32xf32> -> vector<2x32xf32>
    %739 = arith.addf %735, %738 : vector<2x32xf32>
    %740 = vector.extract_strided_slice %713 {offsets = [12, 0], sizes = [2, 64], strides = [1, 1]} : vector<16x64xf32> to vector<2x64xf32>
    %741 = vector.extract_strided_slice %714 {offsets = [384, 0], sizes = [64, 32], strides = [1, 1]} : vector<512x32xf32> to vector<64x32xf32>
    %cst_163 = arith.constant dense<0.000000e+00> : vector<2x32xf32>
    %742 = tpu.matmul %740, %741, %cst_163 {dimension_numbers = #tpu.dot_dimension_numbers<[1], [0], [0], [1], [0, 0, 1, 1], [], []>} : vector<2x64xf32>, vector<64x32xf32>, vector<2x32xf32> -> vector<2x32xf32>
    %743 = arith.addf %739, %742 : vector<2x32xf32>
    %744 = vector.extract_strided_slice %713 {offsets = [14, 0], sizes = [2, 64], strides = [1, 1]} : vector<16x64xf32> to vector<2x64xf32>
    %745 = vector.extract_strided_slice %714 {offsets = [448, 0], sizes = [64, 32], strides = [1, 1]} : vector<512x32xf32> to vector<64x32xf32>
    %cst_164 = arith.constant dense<0.000000e+00> : vector<2x32xf32>
    %746 = tpu.matmul %744, %745, %cst_164 {dimension_numbers = #tpu.dot_dimension_numbers<[1], [0], [0], [1], [0, 0, 1, 1], [], []>} : vector<2x64xf32>, vector<64x32xf32>, vector<2x32xf32> -> vector<2x32xf32>
    %747 = arith.addf %743, %746 : vector<2x32xf32>
    %c0_165 = arith.constant 0 : index
    %c0_166 = arith.constant 0 : index
    %748 = vector.load %arg11[%c0_165, %c0_166] : memref<1x32xf32, #tpu.memory_space<vmem>>, vector<1x32xf32>
    %749 = vector.broadcast %748 : vector<1x32xf32> to vector<2x32xf32>
    %750 = arith.addf %747, %749 : vector<2x32xf32>
    %cst_167 = arith.constant 3.000000e+00 : f32
    %751 = vector.broadcast %cst_167 : f32 to vector<2x32xf32>
    %752 = arith.addf %750, %751 : vector<2x32xf32>
    %cst_168 = arith.constant 0.000000e+00 : f32
    %cst_169 = arith.constant 6.000000e+00 : f32
    %753 = vector.broadcast %cst_168 : f32 to vector<2x32xf32>
    %754 = arith.maximumf %753, %752 : vector<2x32xf32>
    %755 = vector.broadcast %cst_169 : f32 to vector<2x32xf32>
    %756 = arith.minimumf %755, %754 : vector<2x32xf32>
    %757 = arith.mulf %750, %756 : vector<2x32xf32>
    %cst_170 = arith.constant 0.166666672 : f32
    %758 = vector.broadcast %cst_170 : f32 to vector<2x32xf32>
    %759 = arith.mulf %757, %758 : vector<2x32xf32>
    %c0_171 = arith.constant 0 : index
    %c0_172 = arith.constant 0 : index
    %760 = vector.load %arg12[%c0_171, %c0_172] : memref<32x32xf32, #tpu.memory_space<vmem>>, vector<32x32xf32>
    %cst_173 = arith.constant dense<0.000000e+00> : vector<2x32xf32>
    %761 = tpu.matmul %759, %760, %cst_173 {dimension_numbers = #tpu.dot_dimension_numbers<[1], [0], [0], [1], [0, 0, 1, 1], [], []>} : vector<2x32xf32>, vector<32x32xf32>, vector<2x32xf32> -> vector<2x32xf32>
    %c0_174 = arith.constant 0 : index
    %c0_175 = arith.constant 0 : index
    %762 = vector.load %arg13[%c0_174, %c0_175] : memref<1x32xf32, #tpu.memory_space<vmem>>, vector<1x32xf32>
    %763 = vector.broadcast %762 : vector<1x32xf32> to vector<2x32xf32>
    %764 = arith.addf %761, %763 : vector<2x32xf32>
    %cst_176 = arith.constant 3.000000e+00 : f32
    %765 = vector.broadcast %cst_176 : f32 to vector<2x32xf32>
    %766 = arith.addf %764, %765 : vector<2x32xf32>
    %cst_177 = arith.constant 0.000000e+00 : f32
    %cst_178 = arith.constant 6.000000e+00 : f32
    %767 = vector.broadcast %cst_177 : f32 to vector<2x32xf32>
    %768 = arith.maximumf %767, %766 : vector<2x32xf32>
    %769 = vector.broadcast %cst_178 : f32 to vector<2x32xf32>
    %770 = arith.minimumf %769, %768 : vector<2x32xf32>
    %771 = arith.mulf %764, %770 : vector<2x32xf32>
    %cst_179 = arith.constant 0.166666672 : f32
    %772 = vector.broadcast %cst_179 : f32 to vector<2x32xf32>
    %773 = arith.mulf %771, %772 : vector<2x32xf32>
    %c0_180 = arith.constant 0 : index
    %c0_181 = arith.constant 0 : index
    %774 = vector.load %arg14[%c0_180, %c0_181] : memref<32x32xf32, #tpu.memory_space<vmem>>, vector<32x32xf32>
    %cst_182 = arith.constant dense<0.000000e+00> : vector<2x32xf32>
    %775 = tpu.matmul %773, %774, %cst_182 {dimension_numbers = #tpu.dot_dimension_numbers<[1], [0], [0], [1], [0, 0, 1, 1], [], []>} : vector<2x32xf32>, vector<32x32xf32>, vector<2x32xf32> -> vector<2x32xf32>
    %c0_183 = arith.constant 0 : index
    %c0_184 = arith.constant 0 : index
    %776 = vector.load %arg15[%c0_183, %c0_184] : memref<1x32xf32, #tpu.memory_space<vmem>>, vector<1x32xf32>
    %777 = vector.broadcast %776 : vector<1x32xf32> to vector<2x32xf32>
    %778 = arith.addf %775, %777 : vector<2x32xf32>
    %cst_185 = arith.constant 3.000000e+00 : f32
    %779 = vector.broadcast %cst_185 : f32 to vector<2x32xf32>
    %780 = arith.addf %778, %779 : vector<2x32xf32>
    %cst_186 = arith.constant 0.000000e+00 : f32
    %cst_187 = arith.constant 6.000000e+00 : f32
    %781 = vector.broadcast %cst_186 : f32 to vector<2x32xf32>
    %782 = arith.maximumf %781, %780 : vector<2x32xf32>
    %783 = vector.broadcast %cst_187 : f32 to vector<2x32xf32>
    %784 = arith.minimumf %783, %782 : vector<2x32xf32>
    %785 = arith.mulf %778, %784 : vector<2x32xf32>
    %cst_188 = arith.constant 0.166666672 : f32
    %786 = vector.broadcast %cst_188 : f32 to vector<2x32xf32>
    %787 = arith.mulf %785, %786 : vector<2x32xf32>
    %c0_189 = arith.constant 0 : index
    %c0_190 = arith.constant 0 : index
    %788 = vector.load %arg16[%c0_189, %c0_190] : memref<32x2xf32, #tpu.memory_space<vmem>>, vector<32x2xf32>
    %cst_191 = arith.constant dense<0.000000e+00> : vector<2x2xf32>
    %789 = tpu.matmul %787, %788, %cst_191 {dimension_numbers = #tpu.dot_dimension_numbers<[1], [0], [0], [1], [0, 0, 1, 1], [], []>} : vector<2x32xf32>, vector<32x2xf32>, vector<2x2xf32> -> vector<2x2xf32>
    %c0_192 = arith.constant 0 : index
    %c0_193 = arith.constant 0 : index
    %790 = vector.load %arg17[%c0_192, %c0_193] : memref<1x2xf32, #tpu.memory_space<vmem>>, vector<1x2xf32>
    %791 = vector.broadcast %790 : vector<1x2xf32> to vector<2x2xf32>
    %792 = arith.addf %789, %791 : vector<2x2xf32>
    %c0_194 = arith.constant 0 : index
    %c0_195 = arith.constant 0 : index
    %793 = vector.load %arg18[%c0_194, %c0_195] : memref<2x2xf32, #tpu.memory_space<vmem>>, vector<2x2xf32>
    tpu.vector_store %arg18[%c0_194, %c0_195], %792 {strides = array<i32>} : memref<2x2xf32, #tpu.memory_space<vmem>>, vector<2x2xf32>,
    return
  }
  func.func @transform_0(%arg0: i32) -> (i32, i32) {
    %c0_i32 = arith.constant 0 : i32
    %c0_i32_0 = arith.constant 0 : i32
    %c0_i32_1 = arith.constant 0 : i32
    return %c0_i32, %c0_i32_0 : i32, i32
  }
  func.func @transform_1(%arg0: i32) -> (i32, i32, i32) {
    %c0_i32 = arith.constant 0 : i32
    %c0_i32_0 = arith.constant 0 : i32
    %c0_i32_1 = arith.constant 0 : i32
    %c0_i32_2 = arith.constant 0 : i32
    return %c0_i32, %c0_i32_0, %c0_i32_1 : i32, i32, i32
  }
  func.func @transform_2(%arg0: i32) -> (i32, i32, i32) {
    %c0_i32 = arith.constant 0 : i32
    %c0_i32_0 = arith.constant 0 : i32
    %c0_i32_1 = arith.constant 0 : i32
    %c0_i32_2 = arith.constant 0 : i32
    return %c0_i32, %c0_i32_0, %c0_i32_1 : i32, i32, i32
  }
  func.func @transform_3(%arg0: i32) -> (i32, i32, i32) {
    %c0_i32 = arith.constant 0 : i32
    %c0_i32_0 = arith.constant 0 : i32
    %c0_i32_1 = arith.constant 0 : i32
    %c0_i32_2 = arith.constant 0 : i32
    return %c0_i32, %c0_i32_0, %c0_i32_1 : i32, i32, i32
  }
  func.func @transform_4(%arg0: i32) -> (i32, i32, i32) {
    %c0_i32 = arith.constant 0 : i32
    %c0_i32_0 = arith.constant 0 : i32
    %c0_i32_1 = arith.constant 0 : i32
    %c0_i32_2 = arith.constant 0 : i32
    return %c0_i32, %c0_i32_0, %c0_i32_1 : i32, i32, i32
  }
  func.func @transform_5(%arg0: i32) -> (i32, i32) {
    %c0_i32 = arith.constant 0 : i32
    %c0_i32_0 = arith.constant 0 : i32
    %c0_i32_1 = arith.constant 0 : i32
    return %c0_i32, %c0_i32_0 : i32, i32
  }
  func.func @transform_6(%arg0: i32) -> (i32, i32) {
    %c0_i32 = arith.constant 0 : i32
    %c0_i32_0 = arith.constant 0 : i32
    %c0_i32_1 = arith.constant 0 : i32
    return %c0_i32, %c0_i32_0 : i32, i32
  }
  func.func @transform_7(%arg0: i32) -> (i32, i32) {
    %c0_i32 = arith.constant 0 : i32
    %c0_i32_0 = arith.constant 0 : i32
    %c0_i32_1 = arith.constant 0 : i32
    return %c0_i32, %c0_i32_0 : i32, i32
  }
  func.func @transform_8(%arg0: i32) -> (i32, i32) {
    %c0_i32 = arith.constant 0 : i32
    %c0_i32_0 = arith.constant 0 : i32
    %c0_i32_1 = arith.constant 0 : i32
    return %c0_i32, %c0_i32_0 : i32, i32
  }
  func.func @transform_9(%arg0: i32) -> (i32, i32) {
    %c0_i32 = arith.constant 0 : i32
    %c0_i32_0 = arith.constant 0 : i32
    %c0_i32_1 = arith.constant 0 : i32
    return %c0_i32, %c0_i32_0 : i32, i32
  }
  func.func @transform_10(%arg0: i32) -> (i32, i32) {
    %c0_i32 = arith.constant 0 : i32
    %c0_i32_0 = arith.constant 0 : i32
    %c0_i32_1 = arith.constant 0 : i32
    return %c0_i32, %c0_i32_0 : i32, i32
  }
  func.func @transform_11(%arg0: i32) -> (i32, i32) {
    %c0_i32 = arith.constant 0 : i32
    %c0_i32_0 = arith.constant 0 : i32
    %c0_i32_1 = arith.constant 0 : i32
    return %c0_i32, %c0_i32_0 : i32, i32
  }
  func.func @transform_12(%arg0: i32) -> (i32, i32) {
    %c0_i32 = arith.constant 0 : i32
    %c0_i32_0 = arith.constant 0 : i32
    %c0_i32_1 = arith.constant 0 : i32
    return %c0_i32, %c0_i32_0 : i32, i32
  }
  func.func @transform_13(%arg0: i32) -> (i32, i32) {
    %c0_i32 = arith.constant 0 : i32
    %c0_i32_0 = arith.constant 0 : i32
    %c0_i32_1 = arith.constant 0 : i32
    return %c0_i32, %c0_i32_0 : i32, i32
  }
  func.func @transform_14(%arg0: i32) -> (i32, i32) {
    %c0_i32 = arith.constant 0 : i32
    %c0_i32_0 = arith.constant 0 : i32
    %c0_i32_1 = arith.constant 0 : i32
    return %c0_i32, %c0_i32_0 : i32, i32
  }
  func.func @transform_15(%arg0: i32) -> (i32, i32) {
    %c0_i32 = arith.constant 0 : i32
    %c0_i32_0 = arith.constant 0 : i32
    %c0_i32_1 = arith.constant 0 : i32
    return %c0_i32, %c0_i32_0 : i32, i32
  }
  func.func @transform_16(%arg0: i32) -> (i32, i32) {
    %c0_i32 = arith.constant 0 : i32
    %c0_i32_0 = arith.constant 0 : i32
    %c0_i32_1 = arith.constant 0 : i32
    return %c0_i32, %c0_i32_0 : i32, i32
  }
  func.func @transform_17(%arg0: i32) -> (i32, i32) {
    %c0_i32 = arith.constant 0 : i32
    %c0_i32_0 = arith.constant 0 : i32
    %c0_i32_1 = arith.constant 0 : i32
    return %c0_i32, %c0_i32_0 : i32, i32
  }
}

</mosaic_0001>

<llo_original>
// kernel: forward.1
$region0: #{forward.1}
  #allocation0 [shape = 'u32[]', space=smem, size = 0x4, offset = 0x4, fixed_abs, tag = 'smem constant byte address 0x4 - core index']
  #allocation1 [shape = 'u32[144,128]{1,0:T(1,128)}', space=vmem, size = 0x12000, scoped, tag = 'internal scratch']
  %s0 = inlined_call_operand.vmem [shape: f32[16,64], index: 0, kind: input, shape index: {}]
  %s1 = inlined_call_operand.vmem [shape: f32[3,64,256], index: 1, kind: input, shape index: {}]
  %s2 = inlined_call_operand.vmem [shape: f32[3,64,256], index: 2, kind: input, shape index: {}]
  %s3 = inlined_call_operand.hbm [shape: f32[3,64,256], index: 3, kind: input, shape index: {}]
  %s4 = inlined_call_operand.hbm [shape: f32[3,1,256], index: 4, kind: input, shape index: {}]
  %s5 = inlined_call_operand.hbm [shape: f32[64,192], index: 5, kind: input, shape index: {}]
  %s6 = inlined_call_operand.vmem [shape: f32[1,192], index: 6, kind: input, shape index: {}]
  %s7 = inlined_call_operand.hbm [shape: f32[64,64], index: 7, kind: input, shape index: {}]
  %s8 = inlined_call_operand.hbm [shape: f32[1,64], index: 8, kind: input, shape index: {}]
  %s9 = inlined_call_operand.vmem [shape: f32[512,32], index: 9, kind: input, shape index: {}]
  %s10 = inlined_call_operand.hbm [shape: f32[1,32], index: 10, kind: input, shape index: {}]
  %s11 = inlined_call_operand.hbm [shape: f32[32,32], index: 11, kind: input, shape index: {}]
  %s12 = inlined_call_operand.hbm [shape: f32[1,32], index: 12, kind: input, shape index: {}]
  %s13 = inlined_call_operand.hbm [shape: f32[32,32], index: 13, kind: input, shape index: {}]
  %s14 = inlined_call_operand.hbm [shape: f32[1,32], index: 14, kind: input, shape index: {}]
  %s15 = inlined_call_operand.vmem [shape: f32[32,2], index: 15, kind: input, shape index: {}]
  %s16 = inlined_call_operand.hbm [shape: f32[1,2], index: 16, kind: input, shape index: {}]
  %s17 = inlined_call_operand.hbm [shape: f32[2,2], index: 17, kind: output, shape index: {}]
  %s18 = sld [smem:[#allocation0]]
  $region122: #{forward.1} parent=0
    _
  %s20 = ssub.s32 1, %s18
  %s21 = scalar_select 0, %s20, %s18
  $region1: #{forward.1} parent=0
    #allocation2 [shape = 'u8[196608]{0}', space=vmem, size = 0x30000, scoped, tag = 'input window, operand 3, single buffered']
    #allocation3 [shape = 's32[1]{0}', space=sflag, size = 0x4, scoped, tag = 'scoped memory for forward.1']
    #allocation4 [shape = 's32[1]{0}', space=sflag, size = 0x4, scoped, tag = 'scoped memory for forward.1']
    #allocation5 [shape = 'u8[3072]{0}', space=vmem, size = 0xc00, scoped, tag = 'input window, operand 4, single buffered']
    #allocation6 [shape = 's32[1]{0}', space=sflag, size = 0x4, scoped, tag = 'scoped memory for forward.1']
    #allocation7 [shape = 'u8[65536]{0}', space=vmem, size = 0x10000, scoped, tag = 'input window, operand 5, single buffered']
    #allocation8 [shape = 'u8[32768]{0}', space=vmem, size = 0x8000, scoped, tag = 'input window, operand 7, single buffered']
    #allocation9 [shape = 's32[1]{0}', space=sflag, size = 0x4, scoped, tag = 'scoped memory for forward.1']
    #allocation10 [shape = 'u8[512]{0}', space=vmem, size = 0x400, scoped, tag = 'input window, operand 8, single buffered']
    #allocation11 [shape = 'u8[512]{0}', space=vmem, size = 0x400, scoped, tag = 'input window, operand 10, single buffered']
    #allocation12 [shape = 's32[1]{0}', space=sflag, size = 0x4, scoped, tag = 'scoped memory for forward.1']
    #allocation13 [shape = 'u8[16384]{0}', space=vmem, size = 0x4000, scoped, tag = 'input window, operand 11, single buffered']
    #allocation14 [shape = 'u8[512]{0}', space=vmem, size = 0x400, scoped, tag = 'input window, operand 12, single buffered']
    #allocation15 [shape = 's32[1]{0}', space=sflag, size = 0x4, scoped, tag = 'scoped memory for forward.1']
    #allocation16 [shape = 'u8[16384]{0}', space=vmem, size = 0x4000, scoped, tag = 'input window, operand 13, single buffered']
    #allocation17 [shape = 'u8[512]{0}', space=vmem, size = 0x400, scoped, tag = 'input window, operand 14, single buffered']
    #allocation18 [shape = 's32[1]{0}', space=sflag, size = 0x4, scoped, tag = 'scoped memory for forward.1']
    #allocation19 [shape = 'u8[512]{0}', space=vmem, size = 0x400, scoped, tag = 'input window, operand 16, single buffered']
    #allocation20 [shape = 'u8[1024]{0}', space=vmem, size = 0x400, scoped, tag = 'output window, operand 0, single buffered']
    %22 = vsyncpa [#allocation3], 0
    %23 = vsyncpa [#allocation6], 0
    %24 = vsyncpa [#allocation9], 0
    %25 = vsyncpa [#allocation12], 0
    %26 = vsyncpa [#allocation15], 0
    %27 = vsyncpa [#allocation18], 0
    %28 = vsyncpa [#allocation4], 0
    // Predicated region
    $region2: #{forward.1} parent=1 // pred_check
      _
    $region3: #{forward.1} parent=1 // pred_check_branch
      %30 = sbr.rel (0) target = $region5
    $region4: #{forward.1} parent=1 // pred_region
      _
    $region5: #{forward.1} parent=1 // pred_fallthru
      _
    // Predicated region
    $region6: #{forward.1} parent=1 // pred_check
      _
    $region7: #{forward.1} parent=1 // pred_check_branch
      %32 = sbr.rel (0) target = $region9
    $region8: #{forward.1} parent=1 // pred_region
      _
    $region9: #{forward.1} parent=1 // pred_fallthru
      _
    // Predicated region
    $region10: #{forward.1} parent=1 // pred_check
      _
    $region11: #{forward.1} parent=1 // pred_check_branch
      %34 = sbr.rel (0) target = $region13
    $region12: #{forward.1} parent=1 // pred_region
      _
    $region13: #{forward.1} parent=1 // pred_fallthru
      _
    // Predicated region
    $region14: #{forward.1} parent=1 // pred_check
      _
    $region15: #{forward.1} parent=1 // pred_check_branch
      %36 = sbr.rel (0) target = $region17
    $region16: #{forward.1} parent=1 // pred_region
      %s38 = ssub.s32 6144, 6144
      %39 = vsyncadd [#allocation3], %s38
      %s40 = sshll.u32 [#allocation2], 4
      %s41 = int_to_ptr.vmem [resolvable:$true] %s40
      %46 = dma.hbm_to_vmem [thread:$0]  %s3, 6144, %s41, [#allocation3], 256, 256, 16
    $region17: #{forward.1} parent=1 // pred_fallthru
      _
    // Predicated region
    $region18: #{forward.1} parent=1 // pred_check
      _
    $region19: #{forward.1} parent=1 // pred_check_branch
      %48 = sbr.rel (0) target = $region21
    $region20: #{forward.1} parent=1 // pred_region
      %s50 = ssub.s32 96, 96
      %51 = vsyncadd [#allocation6], %s50
      %s52 = sshll.u32 [#allocation5], 4
      %s53 = int_to_ptr.vmem [resolvable:$true] %s52
      %58 = dma.hbm_to_vmem [thread:$0]  %s4, 96, %s53, [#allocation6], 32, 32, 2
    $region21: #{forward.1} parent=1 // pred_fallthru
      _
    // Predicated region
    $region22: #{forward.1} parent=1 // pred_check
      _
    $region23: #{forward.1} parent=1 // pred_check_branch
      %60 = sbr.rel (0) target = $region25
    $region24: #{forward.1} parent=1 // pred_region
      %s62 = ssub.s32 2048, 2048
      %63 = vsyncadd [#allocation6], %s62
      %s64 = sshll.u32 [#allocation7], 4
      %s65 = int_to_ptr.vmem [resolvable:$true] %s64
      %70 = dma.hbm_to_vmem [thread:$0]  %s5, 2048, %s65, [#allocation6], 256, 256, 16
    $region25: #{forward.1} parent=1 // pred_fallthru
      _
    // Predicated region
    $region26: #{forward.1} parent=1 // pred_check
      _
    $region27: #{forward.1} parent=1 // pred_check_branch
      %72 = sbr.rel (0) target = $region29
    $region28: #{forward.1} parent=1 // pred_region
      _
    $region29: #{forward.1} parent=1 // pred_fallthru
      _
    // Predicated region
    $region30: #{forward.1} parent=1 // pred_check
      _
    $region31: #{forward.1} parent=1 // pred_check_branch
      %74 = sbr.rel (0) target = $region33
    $region32: #{forward.1} parent=1 // pred_region
      %s76 = ssub.s32 1024, 1024
      %77 = vsyncadd [#allocation9], %s76
      %s78 = sshll.u32 [#allocation8], 4
      %s79 = int_to_ptr.vmem [resolvable:$true] %s78
      %84 = dma.hbm_to_vmem [thread:$0]  %s7, 1024, %s79, [#allocation9], 128, 128, 8
    $region33: #{forward.1} parent=1 // pred_fallthru
      _
    // Predicated region
    $region34: #{forward.1} parent=1 // pred_check
      _
    $region35: #{forward.1} parent=1 // pred_check_branch
      %86 = sbr.rel (0) target = $region37
    $region36: #{forward.1} parent=1 // pred_region
      %s88 = ssub.s32 16, 16
      %89 = vsyncadd [#allocation9], %s88
      %s91 = sshll.u32 [#allocation10], 4
      %s92 = int_to_ptr.vmem [resolvable:$true] %s91
      %94 = dma.hbm_to_vmem [thread:$0]  %s8, 16, %s92, [#allocation9]
    $region37: #{forward.1} parent=1 // pred_fallthru
      _
    // Predicated region
    $region38: #{forward.1} parent=1 // pred_check
      _
    $region39: #{forward.1} parent=1 // pred_check_branch
      %96 = sbr.rel (0) target = $region41
    $region40: #{forward.1} parent=1 // pred_region
      _
    $region41: #{forward.1} parent=1 // pred_fallthru
      _
    // Predicated region
    $region42: #{forward.1} parent=1 // pred_check
      _
    $region43: #{forward.1} parent=1 // pred_check_branch
      %98 = sbr.rel (0) target = $region45
    $region44: #{forward.1} parent=1 // pred_region
      %s100 = ssub.s32 16, 16
      %101 = vsyncadd [#allocation12], %s100
      %s103 = sshll.u32 [#allocation11], 4
      %s104 = int_to_ptr.vmem [resolvable:$true] %s103
      %106 = dma.hbm_to_vmem [thread:$0]  %s10, 16, %s104, [#allocation12]
    $region45: #{forward.1} parent=1 // pred_fallthru
      _
    // Predicated region
    $region46: #{forward.1} parent=1 // pred_check
      _
    $region47: #{forward.1} parent=1 // pred_check_branch
      %108 = sbr.rel (0) target = $region49
    $region48: #{forward.1} parent=1 // pred_region
      %s110 = ssub.s32 512, 512
      %111 = vsyncadd [#allocation12], %s110
      %s112 = sshll.u32 [#allocation13], 4
      %s113 = int_to_ptr.vmem [resolvable:$true] %s112
      %118 = dma.hbm_to_vmem [thread:$0]  %s11, 512, %s113, [#allocation12], 128, 128, 8
    $region49: #{forward.1} parent=1 // pred_fallthru
      _
    // Predicated region
    $region50: #{forward.1} parent=1 // pred_check
      _
    $region51: #{forward.1} parent=1 // pred_check_branch
      %120 = sbr.rel (0) target = $region53
    $region52: #{forward.1} parent=1 // pred_region
      %s122 = ssub.s32 16, 16
      %123 = vsyncadd [#allocation15], %s122
      %s125 = sshll.u32 [#allocation14], 4
      %s126 = int_to_ptr.vmem [resolvable:$true] %s125
      %128 = dma.hbm_to_vmem [thread:$0]  %s12, 16, %s126, [#allocation15]
    $region53: #{forward.1} parent=1 // pred_fallthru
      _
    // Predicated region
    $region54: #{forward.1} parent=1 // pred_check
      _
    $region55: #{forward.1} parent=1 // pred_check_branch
      %130 = sbr.rel (0) target = $region57
    $region56: #{forward.1} parent=1 // pred_region
      %s132 = ssub.s32 512, 512
      %133 = vsyncadd [#allocation15], %s132
      %s134 = sshll.u32 [#allocation16], 4
      %s135 = int_to_ptr.vmem [resolvable:$true] %s134
      %140 = dma.hbm_to_vmem [thread:$0]  %s13, 512, %s135, [#allocation15], 128, 128, 8
    $region57: #{forward.1} parent=1 // pred_fallthru
      _
    // Predicated region
    $region58: #{forward.1} parent=1 // pred_check
      _
    $region59: #{forward.1} parent=1 // pred_check_branch
      %142 = sbr.rel (0) target = $region61
    $region60: #{forward.1} parent=1 // pred_region
      %s144 = ssub.s32 16, 16
      %145 = vsyncadd [#allocation18], %s144
      %s147 = sshll.u32 [#allocation17], 4
      %s148 = int_to_ptr.vmem [resolvable:$true] %s147
      %150 = dma.hbm_to_vmem [thread:$0]  %s14, 16, %s148, [#allocation18]
    $region61: #{forward.1} parent=1 // pred_fallthru
      _
    // Predicated region
    $region62: #{forward.1} parent=1 // pred_check
      _
    $region63: #{forward.1} parent=1 // pred_check_branch
      %152 = sbr.rel (0) target = $region65
    $region64: #{forward.1} parent=1 // pred_region
      _
    $region65: #{forward.1} parent=1 // pred_fallthru
      _
    // Predicated region
    $region66: #{forward.1} parent=1 // pred_check
      _
    $region67: #{forward.1} parent=1 // pred_check_branch
      %154 = sbr.rel (0) target = $region69
    $region68: #{forward.1} parent=1 // pred_region
      %s156 = ssub.s32 16, 16
      %157 = vsyncadd [#allocation18], %s156
      %s159 = sshll.u32 [#allocation19], 4
      %s160 = int_to_ptr.vmem [resolvable:$true] %s159
      %162 = dma.hbm_to_vmem [thread:$0]  %s16, 16, %s160, [#allocation18]
    $region69: #{forward.1} parent=1 // pred_fallthru
      _
    // Predicated region
    $region70: #{forward.1} parent=1 // pred_check
      _
    $region71: #{forward.1} parent=1 // pred_check_branch
      %164 = sbr.rel (0) target = $region73
    $region72: #{forward.1} parent=1 // pred_region
      %165 = dma.done [#allocation3], 6144
    $region73: #{forward.1} parent=1 // pred_fallthru
      _
    // Predicated region
    $region74: #{forward.1} parent=1 // pred_check
      _
    $region75: #{forward.1} parent=1 // pred_check_branch
      %167 = sbr.rel (0) target = $region77
    $region76: #{forward.1} parent=1 // pred_region
      %168 = dma.done [#allocation6], 96
    $region77: #{forward.1} parent=1 // pred_fallthru
      _
    // Predicated region
    $region78: #{forward.1} parent=1 // pred_check
      _
    $region79: #{forward.1} parent=1 // pred_check_branch
      %170 = sbr.rel (0) target = $region81
    $region80: #{forward.1} parent=1 // pred_region
      %171 = dma.done [#allocation6], 2048
    $region81: #{forward.1} parent=1 // pred_fallthru
      _
    // Predicated region
    $region82: #{forward.1} parent=1 // pred_check
      _
    $region83: #{forward.1} parent=1 // pred_check_branch
      %173 = sbr.rel (0) target = $region85
    $region84: #{forward.1} parent=1 // pred_region
      %174 = dma.done [#allocation9], 1024
    $region85: #{forward.1} parent=1 // pred_fallthru
      _
    // Predicated region
    $region86: #{forward.1} parent=1 // pred_check
      _
    $region87: #{forward.1} parent=1 // pred_check_branch
      %176 = sbr.rel (0) target = $region89
    $region88: #{forward.1} parent=1 // pred_region
      %177 = dma.done [#allocation9], 16
    $region89: #{forward.1} parent=1 // pred_fallthru
      _
    // Predicated region
    $region90: #{forward.1} parent=1 // pred_check
      _
    $region91: #{forward.1} parent=1 // pred_check_branch
      %179 = sbr.rel (0) target = $region93
    $region92: #{forward.1} parent=1 // pred_region
      %180 = dma.done [#allocation12], 16
    $region93: #{forward.1} parent=1 // pred_fallthru
      _
    // Predicated region
    $region94: #{forward.1} parent=1 // pred_check
      _
    $region95: #{forward.1} parent=1 // pred_check_branch
      %182 = sbr.rel (0) target = $region97
    $region96: #{forward.1} parent=1 // pred_region
      %183 = dma.done [#allocation12], 512
    $region97: #{forward.1} parent=1 // pred_fallthru
      _
    // Predicated region
    $region98: #{forward.1} parent=1 // pred_check
      _
    $region99: #{forward.1} parent=1 // pred_check_branch
      %185 = sbr.rel (0) target = $region101
    $region100: #{forward.1} parent=1 // pred_region
      %186 = dma.done [#allocation15], 16
    $region101: #{forward.1} parent=1 // pred_fallthru
      _
    // Predicated region
    $region102: #{forward.1} parent=1 // pred_check
      _
    $region103: #{forward.1} parent=1 // pred_check_branch
      %188 = sbr.rel (0) target = $region105
    $region104: #{forward.1} parent=1 // pred_region
      %189 = dma.done [#allocation15], 512
    $region105: #{forward.1} parent=1 // pred_fallthru
      _
    // Predicated region
    $region106: #{forward.1} parent=1 // pred_check
      _
    $region107: #{forward.1} parent=1 // pred_check_branch
      %191 = sbr.rel (0) target = $region109
    $region108: #{forward.1} parent=1 // pred_region
      %192 = dma.done [#allocation18], 16
    $region109: #{forward.1} parent=1 // pred_fallthru
      _
    // Predicated region
    $region110: #{forward.1} parent=1 // pred_check
      _
    $region111: #{forward.1} parent=1 // pred_check_branch
      %194 = sbr.rel (0) target = $region113
    $region112: #{forward.1} parent=1 // pred_region
      %195 = dma.done [#allocation18], 16
    $region113: #{forward.1} parent=1 // pred_fallthru
      _
    %v196 = vld [vmem:[%s0] sm:$0xff]
    %v197 = vld [vmem:[%s0 + $0x8] sm:$0xff]
    %v198 = vlaneseq
    %v199 = vand.u32 %v198, 127
    %vm200 = vcmp.lt.s32.totalorder %v199, 32
    %v201 = vld [vmem:[%s1] sm:$0xff]
    %v202 = vld [vmem:[%s1 + $0x8] sm:$0xff]
    %v203 = vld [vmem:[%s1 + $0x10] sm:$0xff]
    %v204 = vld [vmem:[%s1 + $0x18] sm:$0xff]
    %v205 = vld [vmem:[%s1 + $0x20] sm:$0xff]
    %v206 = vld [vmem:[%s1 + $0x28] sm:$0xff]
    %v207 = vld [vmem:[%s1 + $0x30] sm:$0xff]
    %v208 = vld [vmem:[%s1 + $0x38] sm:$0xff]
    %v209 = vld [vmem:[%s1 + $0x40] sm:$0xff]
    %v210 = vld [vmem:[%s1 + $0x48] sm:$0xff]
    %v211 = vld [vmem:[%s1 + $0x50] sm:$0xff]
    %v212 = vld [vmem:[%s1 + $0x58] sm:$0xff]
    %v213 = vld [vmem:[%s1 + $0x60] sm:$0xff]
    %v214 = vld [vmem:[%s1 + $0x68] sm:$0xff]
    %v215 = vld [vmem:[%s1 + $0x70] sm:$0xff]
    %v216 = vld [vmem:[%s1 + $0x78] sm:$0xff]
    %v217 = vld [vmem:[%s2] sm:$0xff]
    %v218 = vld [vmem:[%s2 + $0x8] sm:$0xff]
    %v219 = vld [vmem:[%s2 + $0x10] sm:$0xff]
    %v220 = vld [vmem:[%s2 + $0x18] sm:$0xff]
    %v221 = vld [vmem:[%s2 + $0x20] sm:$0xff]
    %v222 = vld [vmem:[%s2 + $0x28] sm:$0xff]
    %v223 = vld [vmem:[%s2 + $0x30] sm:$0xff]
    %v224 = vld [vmem:[%s2 + $0x38] sm:$0xff]
    %v225 = vld [vmem:[%s2 + $0x40] sm:$0xff]
    %v226 = vld [vmem:[%s2 + $0x48] sm:$0xff]
    %v227 = vld [vmem:[%s2 + $0x50] sm:$0xff]
    %v228 = vld [vmem:[%s2 + $0x58] sm:$0xff]
    %v229 = vld [vmem:[%s2 + $0x60] sm:$0xff]
    %v230 = vld [vmem:[%s2 + $0x68] sm:$0xff]
    %v231 = vld [vmem:[%s2 + $0x70] sm:$0xff]
    %v232 = vld [vmem:[%s2 + $0x78] sm:$0xff]
    %v233 = vld [vmem:[#allocation2] sm:$0xff]
    %v234 = vld [vmem:[#allocation2 + $0x8] sm:$0xff]
    %v235 = vld [vmem:[#allocation2 + $0x10] sm:$0xff]
    %v236 = vld [vmem:[#allocation2 + $0x18] sm:$0xff]
    %v237 = vld [vmem:[#allocation2 + $0x20] sm:$0xff]
    %v238 = vld [vmem:[#allocation2 + $0x28] sm:$0xff]
    %v239 = vld [vmem:[#allocation2 + $0x30] sm:$0xff]
    %v240 = vld [vmem:[#allocation2 + $0x38] sm:$0xff]
    %v241 = vld [vmem:[#allocation2 + $0x40] sm:$0xff]
    %v242 = vld [vmem:[#allocation2 + $0x48] sm:$0xff]
    %v243 = vld [vmem:[#allocation2 + $0x50] sm:$0xff]
    %v244 = vld [vmem:[#allocation2 + $0x58] sm:$0xff]
    %v245 = vld [vmem:[#allocation2 + $0x60] sm:$0xff]
    %v246 = vld [vmem:[#allocation2 + $0x68] sm:$0xff]
    %v247 = vld [vmem:[#allocation2 + $0x70] sm:$0xff]
    %v248 = vld [vmem:[#allocation2 + $0x78] sm:$0xff]
    %v249 = vld [vmem:[#allocation5] sm:$0x3]
    %v251 = vrot.slane %v197, 6
    %v253 = vrot.slane %v197, 2
    %v256 = vrot.slane %v196, 6
    %v258 = vrot.slane %v196, 2
    %vm260 = vcmask 1041408
    %v261 = vsel %vm260, %v251, %v253
    %vm262 = vcmask 1043456
    %v263 = vsel %vm262, %v261, %v251
    %vm264 = vcmask 1045504
    %v265 = vsel %vm264, %v263, %v253
    %v266 = vsel %vm260, %v256, %v258
    %v267 = vsel %vm262, %v266, %v256
    %v268 = vsel %vm264, %v267, %v258
    %vm269 = vcmask 523264
    %v271 = vsel %vm269, %v265, 0
    %v274 = vsel %vm269, %v268, 0
    %276 = vmatprep.subr.mxu0 %v218
    %277 = vmatpush1.msra.mxu0 %v217
    %278 = vmatprep.subr.mxu0 %v220
    %279 = vmatpush1.msra.mxu0 %v219
    %280 = vmatprep.subr.mxu0 %v222
    %281 = vmatpush1.msra.mxu0 %v221
    %282 = vmatprep.subr.mxu0 %v224
    %283 = vmatpush1.msra.mxu0 %v223
    %284 = vmatprep.subr.mxu0 %v226
    %285 = vmatpush1.msra.mxu0 %v225
    %286 = vmatprep.subr.mxu0 %v228
    %287 = vmatpush1.msra.mxu0 %v227
    %288 = vmatprep.subr.mxu0 %v230
    %289 = vmatpush1.msra.mxu0 %v229
    %290 = vmatprep.subr.mxu0 %v232
    %291 = vmatpush1.msra.mxu0 %v231
    %292 = vmatprep.subr.mxu0 0.0
    %293 = vmatpush1.msra.mxu0 0.0
    %294 = vmatprep.subr.mxu0 0.0
    %295 = vmatpush1.msra.mxu0 0.0
    %296 = vmatprep.subr.mxu0 0.0
    %297 = vmatpush1.msra.mxu0 0.0
    %298 = vmatprep.subr.mxu0 0.0
    %299 = vmatpush1.msra.mxu0 0.0
    %300 = vmatprep.subr.mxu0 0.0
    %301 = vmatpush1.msra.mxu0 0.0
    %302 = vmatprep.subr.mxu0 0.0
    %303 = vmatpush1.msra.mxu0 0.0
    %304 = vmatprep.subr.mxu0 0.0
    %305 = vmatpush1.msra.mxu0 0.0
    %306 = vmatprep.subr.mxu0 0.0
    %307 = vmatpush1.msra.mxu0 0.0
    %308 = vmatprep.subr.mxu0 0.0
    %309 = vmatpush1.msra.mxu0 0.0
    %310 = vmatprep.subr.mxu0 0.0
    %311 = vmatpush1.msra.mxu0 0.0
    %312 = vmatprep.subr.mxu0 0.0
    %313 = vmatpush1.msra.mxu0 0.0
    %314 = vmatprep.subr.mxu0 0.0
    %315 = vmatpush1.msra.mxu0 0.0
    %316 = vmatprep.subr.mxu0 0.0
    %317 = vmatpush1.msra.mxu0 0.0
    %318 = vmatprep.subr.mxu0 0.0
    %319 = vmatpush1.msra.mxu0 0.0
    %320 = vmatprep.subr.mxu0 0.0
    %321 = vmatpush1.msra.mxu0 0.0
    %322 = vmatprep.subr.mxu0 0.0
    %323 = vmatpush1.msra.mxu0 0.0
    %324 = vmatprep.subr.mxu0 0.0
    %325 = vmatpush1.msra.mxu0 0.0
    %326 = vmatprep.subr.mxu0 0.0
    %327 = vmatpush1.msra.mxu0 0.0
    %328 = vmatprep.subr.mxu0 0.0
    %329 = vmatpush1.msra.mxu0 0.0
    %330 = vmatprep.subr.mxu0 0.0
    %331 = vmatpush1.msra.mxu0 0.0
    %332 = vmatprep.subr.mxu0 0.0
    %333 = vmatpush1.msra.mxu0 0.0
    %334 = vmatprep.subr.mxu0 0.0
    %335 = vmatpush1.msra.mxu0 0.0
    %336 = vmatprep.subr.mxu0 0.0
    %337 = vmatpush1.msra.mxu0 0.0
    %338 = vmatprep.subr.mxu0 0.0
    %339 = vmatpush1.msra.mxu0 0.0
    %340 = vmatprep.mubr.f32.mxu0 0.0
    %341 = vmatmul.mubr.f32.gmra.mrb[0].mxu0 %v271
    %v342 = vpop.f32.mrb[0].mxu0
    %v343 = vadd.f32 0.0, %v342
    %v344 = vpop.f32.mrb[0].mxu0
    %v345 = vadd.f32 0.0, %v344
    %346 = vmatprep.mubr.f32.mxu0 0.0
    %347 = vmatmul.mubr.f32.gmra.mrb[0].mxu0 %v274
    %v348 = vpop.f32.mrb[0].mxu0
    %v349 = vadd.f32 0.0, %v348
    %v350 = vpop.f32.mrb[0].mxu0
    %v351 = vadd.f32 0.0, %v350
    %352 = vdwg.mxu0
    %v353 = vsel %vm269, %v196, 0
    %v355 = vsel %vm269, %v197, 0
    %357 = vmatprep.subr.mxu0 %v202
    %358 = vmatpush1.msra.mxu0 %v201
    %359 = vmatprep.subr.mxu0 %v204
    %360 = vmatpush1.msra.mxu0 %v203
    %361 = vmatprep.subr.mxu0 %v206
    %362 = vmatpush1.msra.mxu0 %v205
    %363 = vmatprep.subr.mxu0 %v208
    %364 = vmatpush1.msra.mxu0 %v207
    %365 = vmatprep.subr.mxu0 %v210
    %366 = vmatpush1.msra.mxu0 %v209
    %367 = vmatprep.subr.mxu0 %v212
    %368 = vmatpush1.msra.mxu0 %v211
    %369 = vmatprep.subr.mxu0 %v214
    %370 = vmatpush1.msra.mxu0 %v213
    %371 = vmatprep.subr.mxu0 %v216
    %372 = vmatpush1.msra.mxu0 %v215
    %373 = vmatprep.subr.mxu0 0.0
    %374 = vmatpush1.msra.mxu0 0.0
    %375 = vmatprep.subr.mxu0 0.0
    %376 = vmatpush1.msra.mxu0 0.0
    %377 = vmatprep.subr.mxu0 0.0
    %378 = vmatpush1.msra.mxu0 0.0
    %379 = vmatprep.subr.mxu0 0.0
    %380 = vmatpush1.msra.mxu0 0.0
    %381 = vmatprep.subr.mxu0 0.0
    %382 = vmatpush1.msra.mxu0 0.0
    %383 = vmatprep.subr.mxu0 0.0
    %384 = vmatpush1.msra.mxu0 0.0
    %385 = vmatprep.subr.mxu0 0.0
    %386 = vmatpush1.msra.mxu0 0.0
    %387 = vmatprep.subr.mxu0 0.0
    %388 = vmatpush1.msra.mxu0 0.0
    %389 = vmatprep.subr.mxu0 0.0
    %390 = vmatpush1.msra.mxu0 0.0
    %391 = vmatprep.subr.mxu0 0.0
    %392 = vmatpush1.msra.mxu0 0.0
    %393 = vmatprep.subr.mxu0 0.0
    %394 = vmatpush1.msra.mxu0 0.0
    %395 = vmatprep.subr.mxu0 0.0
    %396 = vmatpush1.msra.mxu0 0.0
    %397 = vmatprep.subr.mxu0 0.0
    %398 = vmatpush1.msra.mxu0 0.0
    %399 = vmatprep.subr.mxu0 0.0
    %400 = vmatpush1.msra.mxu0 0.0
    %401 = vmatprep.subr.mxu0 0.0
    %402 = vmatpush1.msra.mxu0 0.0
    %403 = vmatprep.subr.mxu0 0.0
    %404 = vmatpush1.msra.mxu0 0.0
    %405 = vmatprep.subr.mxu0 0.0
    %406 = vmatpush1.msra.mxu0 0.0
    %407 = vmatprep.subr.mxu0 0.0
    %408 = vmatpush1.msra.mxu0 0.0
    %409 = vmatprep.subr.mxu0 0.0
    %410 = vmatpush1.msra.mxu0 0.0
    %411 = vmatprep.subr.mxu0 0.0
    %412 = vmatpush1.msra.mxu0 0.0
    %413 = vmatprep.subr.mxu0 0.0
    %414 = vmatpush1.msra.mxu0 0.0
    %415 = vmatprep.subr.mxu0 0.0
    %416 = vmatpush1.msra.mxu0 0.0
    %417 = vmatprep.subr.mxu0 0.0
    %418 = vmatpush1.msra.mxu0 0.0
    %419 = vmatprep.subr.mxu0 0.0
    %420 = vmatpush1.msra.mxu0 0.0
    %421 = vmatprep.mubr.f32.mxu0 0.0
    %422 = vmatmul.mubr.f32.gmra.mrb[0].mxu0 %v353
    %v423 = vpop.f32.mrb[0].mxu0
    %v424 = vadd.f32 %v343, %v423
    %v425 = vpop.f32.mrb[0].mxu0
    %v426 = vadd.f32 %v345, %v425
    %427 = vmatprep.mubr.f32.mxu0 0.0
    %428 = vmatmul.mubr.f32.gmra.mrb[0].mxu0 %v355
    %v429 = vpop.f32.mrb[0].mxu0
    %v430 = vadd.f32 %v349, %v429
    %v431 = vpop.f32.mrb[0].mxu0
    %v432 = vadd.f32 %v351, %v431
    %433 = vdwg.mxu0
    %v435 = vlaneseq
    %v436 = vshrl.u32 %v435, 7
    %v437 = vsub.s32 0, %v436
    %v438 = vrot.slane %v249, %v437
    %v439 = vlaneseq
    %v440 = vshrl.u32 %v439, 7
    %v441 = vsub.s32 1, %v440
    %v442 = vrot.slane %v249, %v441
    %v445 = vadd.f32 %v424, %v438
    %v446 = vadd.f32 %v426, %v442
    %v447 = vadd.f32 %v430, %v438
    %v448 = vadd.f32 %v432, %v442
    %v450 = vsel %vm269, 0.0, 0
    %452 = vmatprep.subr.mxu0 %v234
    %453 = vmatpush1.msra.mxu0 %v233
    %454 = vmatprep.subr.mxu0 %v236
    %455 = vmatpush1.msra.mxu0 %v235
    %456 = vmatprep.subr.mxu0 %v238
    %457 = vmatpush1.msra.mxu0 %v237
    %458 = vmatprep.subr.mxu0 %v240
    %459 = vmatpush1.msra.mxu0 %v239
    %460 = vmatprep.subr.mxu0 %v242
    %461 = vmatpush1.msra.mxu0 %v241
    %462 = vmatprep.subr.mxu0 %v244
    %463 = vmatpush1.msra.mxu0 %v243
    %464 = vmatprep.subr.mxu0 %v246
    %465 = vmatpush1.msra.mxu0 %v245
    %466 = vmatprep.subr.mxu0 %v248
    %467 = vmatpush1.msra.mxu0 %v247
    %468 = vmatprep.subr.mxu0 0.0
    %469 = vmatpush1.msra.mxu0 0.0
    %470 = vmatprep.subr.mxu0 0.0
    %471 = vmatpush1.msra.mxu0 0.0
    %472 = vmatprep.subr.mxu0 0.0
    %473 = vmatpush1.msra.mxu0 0.0
    %474 = vmatprep.subr.mxu0 0.0
    %475 = vmatpush1.msra.mxu0 0.0
    %476 = vmatprep.subr.mxu0 0.0
    %477 = vmatpush1.msra.mxu0 0.0
    %478 = vmatprep.subr.mxu0 0.0
    %479 = vmatpush1.msra.mxu0 0.0
    %480 = vmatprep.subr.mxu0 0.0
    %481 = vmatpush1.msra.mxu0 0.0
    %482 = vmatprep.subr.mxu0 0.0
    %483 = vmatpush1.msra.mxu0 0.0
    %484 = vmatprep.subr.mxu0 0.0
    %485 = vmatpush1.msra.mxu0 0.0
    %486 = vmatprep.subr.mxu0 0.0
    %487 = vmatpush1.msra.mxu0 0.0
    %488 = vmatprep.subr.mxu0 0.0
    %489 = vmatpush1.msra.mxu0 0.0
    %490 = vmatprep.subr.mxu0 0.0
    %491 = vmatpush1.msra.mxu0 0.0
    %492 = vmatprep.subr.mxu0 0.0
    %493 = vmatpush1.msra.mxu0 0.0
    %494 = vmatprep.subr.mxu0 0.0
    %495 = vmatpush1.msra.mxu0 0.0
    %496 = vmatprep.subr.mxu0 0.0
    %497 = vmatpush1.msra.mxu0 0.0
    %498 = vmatprep.subr.mxu0 0.0
    %499 = vmatpush1.msra.mxu0 0.0
    %500 = vmatprep.subr.mxu0 0.0
    %501 = vmatpush1.msra.mxu0 0.0
    %502 = vmatprep.subr.mxu0 0.0
    %503 = vmatpush1.msra.mxu0 0.0
    %504 = vmatprep.subr.mxu0 0.0
    %505 = vmatpush1.msra.mxu0 0.0
    %506 = vmatprep.subr.mxu0 0.0
    %507 = vmatpush1.msra.mxu0 0.0
    %508 = vmatprep.subr.mxu0 0.0
    %509 = vmatpush1.msra.mxu0 0.0
    %510 = vmatprep.subr.mxu0 0.0
    %511 = vmatpush1.msra.mxu0 0.0
    %512 = vmatprep.subr.mxu0 0.0
    %513 = vmatpush1.msra.mxu0 0.0
    %514 = vmatprep.subr.mxu0 0.0
    %515 = vmatpush1.msra.mxu0 0.0
    %516 = vmatprep.mubr.f32.mxu0 0.0
    %517 = vmatmul.mubr.f32.gmra.mrb[0].mxu0 %v450
    %v518 = vpop.f32.mrb[0].mxu0
    %v519 = vadd.f32 0.0, %v518
    %v520 = vpop.f32.mrb[0].mxu0
    %v521 = vadd.f32 0.0, %v520
    %522 = vdwg.mxu0
    %v523 = vadd.f32 %v445, %v519
    %v524 = vadd.f32 %v446, %v521
    %v525 = vxor.u32 %v523, 2147483648
    %v526 = vxor.u32 %v524, 2147483648
    %v527 = vmul.f32 %v525, 1.442695
    %v528 = vpow.pop %v527
    %v529 = vmul.f32 %v526, 1.442695
    %v530 = vpow.pop %v529
    %v531 = vadd.f32 %v528, 1.0
    %v532 = vadd.f32 %v530, 1.0
    %v533 = vrcp.pop %v531
    %v534 = vmul.f32 1.0, %v533
    %v535 = vrcp.pop %v532
    %v536 = vmul.f32 1.0, %v535
    %v537 = vtanh.pop %v524
    %v538 = vmul.f32 %v534, 0.0
    %v539 = vmul.f32 %v534, %v537
    %541 = vrot.lane.b32.xlu0 %v539, 64
    %v542 = vpop.permute.xlu0 %541
    %v544 = vadd.f32 %v538, %v542
    %v545 = vtanh.pop %v544
    %v546 = vmul.f32 %v536, %v545
    %548 = vrot.lane.b32.xlu0 %v546, 64
    %v549 = vpop.permute.xlu0 %548
    %v550 = vsel %vm269, %v549, 0
    %552 = vmatprep.subr.mxu0 %v234
    %553 = vmatpush1.msra.mxu0 %v233
    %554 = vmatprep.subr.mxu0 %v236
    %555 = vmatpush1.msra.mxu0 %v235
    %556 = vmatprep.subr.mxu0 %v238
    %557 = vmatpush1.msra.mxu0 %v237
    %558 = vmatprep.subr.mxu0 %v240
    %559 = vmatpush1.msra.mxu0 %v239
    %560 = vmatprep.subr.mxu0 %v242
    %561 = vmatpush1.msra.mxu0 %v241
    %562 = vmatprep.subr.mxu0 %v244
    %563 = vmatpush1.msra.mxu0 %v243
    %564 = vmatprep.subr.mxu0 %v246
    %565 = vmatpush1.msra.mxu0 %v245
    %566 = vmatprep.subr.mxu0 %v248
    %567 = vmatpush1.msra.mxu0 %v247
    %568 = vmatprep.subr.mxu0 0.0
    %569 = vmatpush1.msra.mxu0 0.0
    %570 = vmatprep.subr.mxu0 0.0
    %571 = vmatpush1.msra.mxu0 0.0
    %572 = vmatprep.subr.mxu0 0.0
    %573 = vmatpush1.msra.mxu0 0.0
    %574 = vmatprep.subr.mxu0 0.0
    %575 = vmatpush1.msra.mxu0 0.0
    %576 = vmatprep.subr.mxu0 0.0
    %577 = vmatpush1.msra.mxu0 0.0
    %578 = vmatprep.subr.mxu0 0.0
    %579 = vmatpush1.msra.mxu0 0.0
    %580 = vmatprep.subr.mxu0 0.0
    %581 = vmatpush1.msra.mxu0 0.0
    %582 = vmatprep.subr.mxu0 0.0
    %583 = vmatpush1.msra.mxu0 0.0
    %584 = vmatprep.subr.mxu0 0.0
    %585 = vmatpush1.msra.mxu0 0.0
    %586 = vmatprep.subr.mxu0 0.0
    %587 = vmatpush1.msra.mxu0 0.0
    %588 = vmatprep.subr.mxu0 0.0
    %589 = vmatpush1.msra.mxu0 0.0
    %590 = vmatprep.subr.mxu0 0.0
    %591 = vmatpush1.msra.mxu0 0.0
    %592 = vmatprep.subr.mxu0 0.0
    %593 = vmatpush1.msra.mxu0 0.0
    %594 = vmatprep.subr.mxu0 0.0
    %595 = vmatpush1.msra.mxu0 0.0
    %596 = vmatprep.subr.mxu0 0.0
    %597 = vmatpush1.msra.mxu0 0.0
    %598 = vmatprep.subr.mxu0 0.0
    %599 = vmatpush1.msra.mxu0 0.0
    %600 = vmatprep.subr.mxu0 0.0
    %601 = vmatpush1.msra.mxu0 0.0
    %602 = vmatprep.subr.mxu0 0.0
    %603 = vmatpush1.msra.mxu0 0.0
    %604 = vmatprep.subr.mxu0 0.0
    %605 = vmatpush1.msra.mxu0 0.0
    %606 = vmatprep.subr.mxu0 0.0
    %607 = vmatpush1.msra.mxu0 0.0
    %608 = vmatprep.subr.mxu0 0.0
    %609 = vmatpush1.msra.mxu0 0.0
    %610 = vmatprep.subr.mxu0 0.0
    %611 = vmatpush1.msra.mxu0 0.0
    %612 = vmatprep.subr.mxu0 0.0
    %613 = vmatpush1.msra.mxu0 0.0
    %614 = vmatprep.subr.mxu0 0.0
    %615 = vmatpush1.msra.mxu0 0.0
    %616 = vmatprep.mubr.f32.mxu0 0.0
    %617 = vmatmul.mubr.f32.gmra.mrb[0].mxu0 %v550
    %v618 = vpop.f32.mrb[0].mxu0
    %v619 = vadd.f32 0.0, %v618
    %v620 = vpop.f32.mrb[0].mxu0
    %v621 = vadd.f32 0.0, %v620
    %622 = vdwg.mxu0
    %v625 = vrot.slane %v619, 6
    %v626 = vrot.slane %v621, 6
    %v629 = vadd.f32 %v445, %v625
    %v630 = vadd.f32 %v446, %v626
    %v631 = vxor.u32 %v629, 2147483648
    %v632 = vxor.u32 %v630, 2147483648
    %v633 = vmul.f32 %v631, 1.442695
    %v634 = vpow.pop %v633
    %v635 = vmul.f32 %v632, 1.442695
    %v636 = vpow.pop %v635
    %v637 = vadd.f32 %v634, 1.0
    %v638 = vadd.f32 %v636, 1.0
    %v639 = vrcp.pop %v637
    %v640 = vmul.f32 1.0, %v639
    %v641 = vrcp.pop %v638
    %v642 = vmul.f32 1.0, %v641
    %v643 = vtanh.pop %v630
    %v645 = vrot.slane %v544, 6
    %v647 = vmul.f32 %v640, %v645
    %v648 = vmul.f32 %v640, %v643
    %650 = vrot.lane.b32.xlu0 %v648, 64
    %v651 = vpop.permute.xlu0 %650
    %v653 = vadd.f32 %v647, %v651
    %v654 = vtanh.pop %v653
    %v655 = vmul.f32 %v642, %v654
    %v657 = vrot.slane %v655, 2
    %658 = vrot.lane.b32.xlu0 %v657, 64
    %v659 = vpop.permute.xlu0 %658
    %v660 = vsel %vm269, %v659, 0
    %662 = vmatprep.subr.mxu0 %v234
    %663 = vmatpush1.msra.mxu0 %v233
    %664 = vmatprep.subr.mxu0 %v236
    %665 = vmatpush1.msra.mxu0 %v235
    %666 = vmatprep.subr.mxu0 %v238
    %667 = vmatpush1.msra.mxu0 %v237
    %668 = vmatprep.subr.mxu0 %v240
    %669 = vmatpush1.msra.mxu0 %v239
    %670 = vmatprep.subr.mxu0 %v242
    %671 = vmatpush1.msra.mxu0 %v241
    %672 = vmatprep.subr.mxu0 %v244
    %673 = vmatpush1.msra.mxu0 %v243
    %674 = vmatprep.subr.mxu0 %v246
    %675 = vmatpush1.msra.mxu0 %v245
    %676 = vmatprep.subr.mxu0 %v248
    %677 = vmatpush1.msra.mxu0 %v247
    %678 = vmatprep.subr.mxu0 0.0
    %679 = vmatpush1.msra.mxu0 0.0
    %680 = vmatprep.subr.mxu0 0.0
    %681 = vmatpush1.msra.mxu0 0.0
    %682 = vmatprep.subr.mxu0 0.0
    %683 = vmatpush1.msra.mxu0 0.0
    %684 = vmatprep.subr.mxu0 0.0
    %685 = vmatpush1.msra.mxu0 0.0
    %686 = vmatprep.subr.mxu0 0.0
    %687 = vmatpush1.msra.mxu0 0.0
    %688 = vmatprep.subr.mxu0 0.0
    %689 = vmatpush1.msra.mxu0 0.0
    %690 = vmatprep.subr.mxu0 0.0
    %691 = vmatpush1.msra.mxu0 0.0
    %692 = vmatprep.subr.mxu0 0.0
    %693 = vmatpush1.msra.mxu0 0.0
    %694 = vmatprep.subr.mxu0 0.0
    %695 = vmatpush1.msra.mxu0 0.0
    %696 = vmatprep.subr.mxu0 0.0
    %697 = vmatpush1.msra.mxu0 0.0
    %698 = vmatprep.subr.mxu0 0.0
    %699 = vmatpush1.msra.mxu0 0.0
    %700 = vmatprep.subr.mxu0 0.0
    %701 = vmatpush1.msra.mxu0 0.0
    %702 = vmatprep.subr.mxu0 0.0
    %703 = vmatpush1.msra.mxu0 0.0
    %704 = vmatprep.subr.mxu0 0.0
    %705 = vmatpush1.msra.mxu0 0.0
    %706 = vmatprep.subr.mxu0 0.0
    %707 = vmatpush1.msra.mxu0 0.0
    %708 = vmatprep.subr.mxu0 0.0
    %709 = vmatpush1.msra.mxu0 0.0
    %710 = vmatprep.subr.mxu0 0.0
    %711 = vmatpush1.msra.mxu0 0.0
    %712 = vmatprep.subr.mxu0 0.0
    %713 = vmatpush1.msra.mxu0 0.0
    %714 = vmatprep.subr.mxu0 0.0
    %715 = vmatpush1.msra.mxu0 0.0
    %716 = vmatprep.subr.mxu0 0.0
    %717 = vmatpush1.msra.mxu0 0.0
    %718 = vmatprep.subr.mxu0 0.0
    %719 = vmatpush1.msra.mxu0 0.0
    %720 = vmatprep.subr.mxu0 0.0
    %721 = vmatpush1.msra.mxu0 0.0
    %722 = vmatprep.subr.mxu0 0.0
    %723 = vmatpush1.msra.mxu0 0.0
    %724 = vmatprep.subr.mxu0 0.0
    %725 = vmatpush1.msra.mxu0 0.0
    %726 = vmatprep.mubr.f32.mxu0 0.0
    %727 = vmatmul.mubr.f32.gmra.mrb[0].mxu0 %v660
    %v728 = vpop.f32.mrb[0].mxu0
    %v729 = vadd.f32 0.0, %v728
    %v730 = vpop.f32.mrb[0].mxu0
    %v731 = vadd.f32 0.0, %v730
    %732 = vdwg.mxu0
    %v735 = vrot.slane %v729, 4
    %v736 = vrot.slane %v731, 4
    %v739 = vadd.f32 %v445, %v735
    %v740 = vadd.f32 %v446, %v736
    %v741 = vxor.u32 %v739, 2147483648
    %v742 = vxor.u32 %v740, 2147483648
    %v743 = vmul.f32 %v741, 1.442695
    %v744 = vpow.pop %v743
    %v745 = vmul.f32 %v742, 1.442695
    %v746 = vpow.pop %v745
    %v747 = vadd.f32 %v744, 1.0
    %v748 = vadd.f32 %v746, 1.0
    %v749 = vrcp.pop %v747
    %v750 = vmul.f32 1.0, %v749
    %v751 = vrcp.pop %v748
    %v752 = vmul.f32 1.0, %v751
    %v753 = vtanh.pop %v740
    %v755 = vrot.slane %v653, 6
    %v757 = vmul.f32 %v750, %v755
    %v758 = vmul.f32 %v750, %v753
    %760 = vrot.lane.b32.xlu0 %v758, 64
    %v761 = vpop.permute.xlu0 %760
    %v763 = vadd.f32 %v757, %v761
    %v764 = vtanh.pop %v763
    %v765 = vmul.f32 %v752, %v764
    %v767 = vrot.slane %v765, 4
    %768 = vrot.lane.b32.xlu0 %v767, 64
    %v769 = vpop.permute.xlu0 %768
    %v770 = vsel %vm269, %v769, 0
    %772 = vmatprep.subr.mxu0 %v234
    %773 = vmatpush1.msra.mxu0 %v233
    %774 = vmatprep.subr.mxu0 %v236
    %775 = vmatpush1.msra.mxu0 %v235
    %776 = vmatprep.subr.mxu0 %v238
    %777 = vmatpush1.msra.mxu0 %v237
    %778 = vmatprep.subr.mxu0 %v240
    %779 = vmatpush1.msra.mxu0 %v239
    %780 = vmatprep.subr.mxu0 %v242
    %781 = vmatpush1.msra.mxu0 %v241
    %782 = vmatprep.subr.mxu0 %v244
    %783 = vmatpush1.msra.mxu0 %v243
    %784 = vmatprep.subr.mxu0 %v246
    %785 = vmatpush1.msra.mxu0 %v245
    %786 = vmatprep.subr.mxu0 %v248
    %787 = vmatpush1.msra.mxu0 %v247
    %788 = vmatprep.subr.mxu0 0.0
    %789 = vmatpush1.msra.mxu0 0.0
    %790 = vmatprep.subr.mxu0 0.0
    %791 = vmatpush1.msra.mxu0 0.0
    %792 = vmatprep.subr.mxu0 0.0
    %793 = vmatpush1.msra.mxu0 0.0
    %794 = vmatprep.subr.mxu0 0.0
    %795 = vmatpush1.msra.mxu0 0.0
    %796 = vmatprep.subr.mxu0 0.0
    %797 = vmatpush1.msra.mxu0 0.0
    %798 = vmatprep.subr.mxu0 0.0
    %799 = vmatpush1.msra.mxu0 0.0
    %800 = vmatprep.subr.mxu0 0.0
    %801 = vmatpush1.msra.mxu0 0.0
    %802 = vmatprep.subr.mxu0 0.0
    %803 = vmatpush1.msra.mxu0 0.0
    %804 = vmatprep.subr.mxu0 0.0
    %805 = vmatpush1.msra.mxu0 0.0
    %806 = vmatprep.subr.mxu0 0.0
    %807 = vmatpush1.msra.mxu0 0.0
    %808 = vmatprep.subr.mxu0 0.0
    %809 = vmatpush1.msra.mxu0 0.0
    %810 = vmatprep.subr.mxu0 0.0
    %811 = vmatpush1.msra.mxu0 0.0
    %812 = vmatprep.subr.mxu0 0.0
    %813 = vmatpush1.msra.mxu0 0.0
    %814 = vmatprep.subr.mxu0 0.0
    %815 = vmatpush1.msra.mxu0 0.0
    %816 = vmatprep.subr.mxu0 0.0
    %817 = vmatpush1.msra.mxu0 0.0
    %818 = vmatprep.subr.mxu0 0.0
    %819 = vmatpush1.msra.mxu0 0.0
    %820 = vmatprep.subr.mxu0 0.0
    %821 = vmatpush1.msra.mxu0 0.0
    %822 = vmatprep.subr.mxu0 0.0
    %823 = vmatpush1.msra.mxu0 0.0
    %824 = vmatprep.subr.mxu0 0.0
    %825 = vmatpush1.msra.mxu0 0.0
    %826 = vmatprep.subr.mxu0 0.0
    %827 = vmatpush1.msra.mxu0 0.0
    %828 = vmatprep.subr.mxu0 0.0
    %829 = vmatpush1.msra.mxu0 0.0
    %830 = vmatprep.subr.mxu0 0.0
    %831 = vmatpush1.msra.mxu0 0.0
    %832 = vmatprep.subr.mxu0 0.0
    %833 = vmatpush1.msra.mxu0 0.0
    %834 = vmatprep.subr.mxu0 0.0
    %835 = vmatpush1.msra.mxu0 0.0
    %836 = vmatprep.mubr.f32.mxu0 0.0
    %837 = vmatmul.mubr.f32.gmra.mrb[0].mxu0 %v770
    %v838 = vpop.f32.mrb[0].mxu0
    %v839 = vadd.f32 0.0, %v838
    %v840 = vpop.f32.mrb[0].mxu0
    %v841 = vadd.f32 0.0, %v840
    %842 = vdwg.mxu0
    %v845 = vrot.slane %v839, 2
    %v846 = vrot.slane %v841, 2
    %v849 = vadd.f32 %v445, %v845
    %v850 = vadd.f32 %v446, %v846
    %v851 = vxor.u32 %v849, 2147483648
    %v852 = vxor.u32 %v850, 2147483648
    %v853 = vmul.f32 %v851, 1.442695
    %v854 = vpow.pop %v853
    %v855 = vmul.f32 %v852, 1.442695
    %v856 = vpow.pop %v855
    %v857 = vadd.f32 %v854, 1.0
    %v858 = vadd.f32 %v856, 1.0
    %v859 = vrcp.pop %v857
    %v860 = vmul.f32 1.0, %v859
    %v861 = vrcp.pop %v858
    %v862 = vmul.f32 1.0, %v861
    %v863 = vtanh.pop %v850
    %v865 = vrot.slane %v763, 6
    %v867 = vmul.f32 %v860, %v865
    %v868 = vmul.f32 %v860, %v863
    %870 = vrot.lane.b32.xlu0 %v868, 64
    %v871 = vpop.permute.xlu0 %870
    %v873 = vadd.f32 %v867, %v871
    %v874 = vtanh.pop %v873
    %v875 = vmul.f32 %v862, %v874
    %v877 = vrot.slane %v875, 6
    %878 = vrot.lane.b32.xlu0 %v877, 64
    %v879 = vpop.permute.xlu0 %878
    %v880 = vsel %vm269, %v879, 0
    %882 = vmatprep.subr.mxu0 %v234
    %883 = vmatpush1.msra.mxu0 %v233
    %884 = vmatprep.subr.mxu0 %v236
    %885 = vmatpush1.msra.mxu0 %v235
    %886 = vmatprep.subr.mxu0 %v238
    %887 = vmatpush1.msra.mxu0 %v237
    %888 = vmatprep.subr.mxu0 %v240
    %889 = vmatpush1.msra.mxu0 %v239
    %890 = vmatprep.subr.mxu0 %v242
    %891 = vmatpush1.msra.mxu0 %v241
    %892 = vmatprep.subr.mxu0 %v244
    %893 = vmatpush1.msra.mxu0 %v243
    %894 = vmatprep.subr.mxu0 %v246
    %895 = vmatpush1.msra.mxu0 %v245
    %896 = vmatprep.subr.mxu0 %v248
    %897 = vmatpush1.msra.mxu0 %v247
    %898 = vmatprep.subr.mxu0 0.0
    %899 = vmatpush1.msra.mxu0 0.0
    %900 = vmatprep.subr.mxu0 0.0
    %901 = vmatpush1.msra.mxu0 0.0
    %902 = vmatprep.subr.mxu0 0.0
    %903 = vmatpush1.msra.mxu0 0.0
    %904 = vmatprep.subr.mxu0 0.0
    %905 = vmatpush1.msra.mxu0 0.0
    %906 = vmatprep.subr.mxu0 0.0
    %907 = vmatpush1.msra.mxu0 0.0
    %908 = vmatprep.subr.mxu0 0.0
    %909 = vmatpush1.msra.mxu0 0.0
    %910 = vmatprep.subr.mxu0 0.0
    %911 = vmatpush1.msra.mxu0 0.0
    %912 = vmatprep.subr.mxu0 0.0
    %913 = vmatpush1.msra.mxu0 0.0
    %914 = vmatprep.subr.mxu0 0.0
    %915 = vmatpush1.msra.mxu0 0.0
    %916 = vmatprep.subr.mxu0 0.0
    %917 = vmatpush1.msra.mxu0 0.0
    %918 = vmatprep.subr.mxu0 0.0
    %919 = vmatpush1.msra.mxu0 0.0
    %920 = vmatprep.subr.mxu0 0.0
    %921 = vmatpush1.msra.mxu0 0.0
    %922 = vmatprep.subr.mxu0 0.0
    %923 = vmatpush1.msra.mxu0 0.0
    %924 = vmatprep.subr.mxu0 0.0
    %925 = vmatpush1.msra.mxu0 0.0
    %926 = vmatprep.subr.mxu0 0.0
    %927 = vmatpush1.msra.mxu0 0.0
    %928 = vmatprep.subr.mxu0 0.0
    %929 = vmatpush1.msra.mxu0 0.0
    %930 = vmatprep.subr.mxu0 0.0
    %931 = vmatpush1.msra.mxu0 0.0
    %932 = vmatprep.subr.mxu0 0.0
    %933 = vmatpush1.msra.mxu0 0.0
    %934 = vmatprep.subr.mxu0 0.0
    %935 = vmatpush1.msra.mxu0 0.0
    %936 = vmatprep.subr.mxu0 0.0
    %937 = vmatpush1.msra.mxu0 0.0
    %938 = vmatprep.subr.mxu0 0.0
    %939 = vmatpush1.msra.mxu0 0.0
    %940 = vmatprep.subr.mxu0 0.0
    %941 = vmatpush1.msra.mxu0 0.0
    %942 = vmatprep.subr.mxu0 0.0
    %943 = vmatpush1.msra.mxu0 0.0
    %944 = vmatprep.subr.mxu0 0.0
    %945 = vmatpush1.msra.mxu0 0.0
    %946 = vmatprep.mubr.f32.mxu0 0.0
    %947 = vmatmul.mubr.f32.gmra.mrb[0].mxu0 %v880
    %v948 = vpop.f32.mrb[0].mxu0
    %v949 = vadd.f32 0.0, %v948
    %v950 = vpop.f32.mrb[0].mxu0
    %v951 = vadd.f32 0.0, %v950
    %952 = vdwg.mxu0
    %v953 = vadd.f32 %v447, %v949
    %v954 = vadd.f32 %v448, %v951
    %v955 = vxor.u32 %v953, 2147483648
    %v956 = vxor.u32 %v954, 2147483648
    %v957 = vmul.f32 %v955, 1.442695
    %v958 = vpow.pop %v957
    %v959 = vmul.f32 %v956, 1.442695
    %v960 = vpow.pop %v959
    %v961 = vadd.f32 %v958, 1.0
    %v962 = vadd.f32 %v960, 1.0
    %v963 = vrcp.pop %v961
    %v964 = vmul.f32 1.0, %v963
    %v965 = vrcp.pop %v962
    %v966 = vmul.f32 1.0, %v965
    %v967 = vtanh.pop %v954
    %v969 = vrot.slane %v873, 6
    %v971 = vmul.f32 %v964, %v969
    %v972 = vmul.f32 %v964, %v967
    %974 = vrot.lane.b32.xlu0 %v972, 64
    %v975 = vpop.permute.xlu0 %974
    %v977 = vadd.f32 %v971, %v975
    %v978 = vtanh.pop %v977
    %v979 = vmul.f32 %v966, %v978
    %981 = vrot.lane.b32.xlu0 %v979, 64
    %v982 = vpop.permute.xlu0 %981
    %v983 = vsel %vm269, %v982, 0
    %985 = vmatprep.subr.mxu0 %v234
    %986 = vmatpush1.msra.mxu0 %v233
    %987 = vmatprep.subr.mxu0 %v236
    %988 = vmatpush1.msra.mxu0 %v235
    %989 = vmatprep.subr.mxu0 %v238
    %990 = vmatpush1.msra.mxu0 %v237
    %991 = vmatprep.subr.mxu0 %v240
    %992 = vmatpush1.msra.mxu0 %v239
    %993 = vmatprep.subr.mxu0 %v242
    %994 = vmatpush1.msra.mxu0 %v241
    %995 = vmatprep.subr.mxu0 %v244
    %996 = vmatpush1.msra.mxu0 %v243
    %997 = vmatprep.subr.mxu0 %v246
    %998 = vmatpush1.msra.mxu0 %v245
    %999 = vmatprep.subr.mxu0 %v248
    %1000 = vmatpush1.msra.mxu0 %v247
    %1001 = vmatprep.subr.mxu0 0.0
    %1002 = vmatpush1.msra.mxu0 0.0
    %1003 = vmatprep.subr.mxu0 0.0
    %1004 = vmatpush1.msra.mxu0 0.0
    %1005 = vmatprep.subr.mxu0 0.0
    %1006 = vmatpush1.msra.mxu0 0.0
    %1007 = vmatprep.subr.mxu0 0.0
    %1008 = vmatpush1.msra.mxu0 0.0
    %1009 = vmatprep.subr.mxu0 0.0
    %1010 = vmatpush1.msra.mxu0 0.0
    %1011 = vmatprep.subr.mxu0 0.0
    %1012 = vmatpush1.msra.mxu0 0.0
    %1013 = vmatprep.subr.mxu0 0.0
    %1014 = vmatpush1.msra.mxu0 0.0
    %1015 = vmatprep.subr.mxu0 0.0
    %1016 = vmatpush1.msra.mxu0 0.0
    %1017 = vmatprep.subr.mxu0 0.0
    %1018 = vmatpush1.msra.mxu0 0.0
    %1019 = vmatprep.subr.mxu0 0.0
    %1020 = vmatpush1.msra.mxu0 0.0
    %1021 = vmatprep.subr.mxu0 0.0
    %1022 = vmatpush1.msra.mxu0 0.0
    %1023 = vmatprep.subr.mxu0 0.0
    %1024 = vmatpush1.msra.mxu0 0.0
    %1025 = vmatprep.subr.mxu0 0.0
    %1026 = vmatpush1.msra.mxu0 0.0
    %1027 = vmatprep.subr.mxu0 0.0
    %1028 = vmatpush1.msra.mxu0 0.0
    %1029 = vmatprep.subr.mxu0 0.0
    %1030 = vmatpush1.msra.mxu0 0.0
    %1031 = vmatprep.subr.mxu0 0.0
    %1032 = vmatpush1.msra.mxu0 0.0
    %1033 = vmatprep.subr.mxu0 0.0
    %1034 = vmatpush1.msra.mxu0 0.0
    %1035 = vmatprep.subr.mxu0 0.0
    %1036 = vmatpush1.msra.mxu0 0.0
    %1037 = vmatprep.subr.mxu0 0.0
    %1038 = vmatpush1.msra.mxu0 0.0
    %1039 = vmatprep.subr.mxu0 0.0
    %1040 = vmatpush1.msra.mxu0 0.0
    %1041 = vmatprep.subr.mxu0 0.0
    %1042 = vmatpush1.msra.mxu0 0.0
    %1043 = vmatprep.subr.mxu0 0.0
    %1044 = vmatpush1.msra.mxu0 0.0
    %1045 = vmatprep.subr.mxu0 0.0
    %1046 = vmatpush1.msra.mxu0 0.0
    %1047 = vmatprep.subr.mxu0 0.0
    %1048 = vmatpush1.msra.mxu0 0.0
    %1049 = vmatprep.mubr.f32.mxu0 0.0
    %1050 = vmatmul.mubr.f32.gmra.mrb[0].mxu0 %v983
    %v1051 = vpop.f32.mrb[0].mxu0
    %v1052 = vadd.f32 0.0, %v1051
    %v1053 = vpop.f32.mrb[0].mxu0
    %v1054 = vadd.f32 0.0, %v1053
    %1055 = vdwg.mxu0
    %v1058 = vrot.slane %v1052, 6
    %v1059 = vrot.slane %v1054, 6
    %v1062 = vadd.f32 %v447, %v1058
    %v1063 = vadd.f32 %v448, %v1059
    %v1064 = vxor.u32 %v1062, 2147483648
    %v1065 = vxor.u32 %v1063, 2147483648
    %v1066 = vmul.f32 %v1064, 1.442695
    %v1067 = vpow.pop %v1066
    %v1068 = vmul.f32 %v1065, 1.442695
    %v1069 = vpow.pop %v1068
    %v1070 = vadd.f32 %v1067, 1.0
    %v1071 = vadd.f32 %v1069, 1.0
    %v1072 = vrcp.pop %v1070
    %v1073 = vmul.f32 1.0, %v1072
    %v1074 = vrcp.pop %v1071
    %v1075 = vmul.f32 1.0, %v1074
    %v1076 = vtanh.pop %v1063
    %v1078 = vrot.slane %v977, 6
    %v1080 = vmul.f32 %v1073, %v1078
    %v1081 = vmul.f32 %v1073, %v1076
    %1083 = vrot.lane.b32.xlu0 %v1081, 64
    %v1084 = vpop.permute.xlu0 %1083
    %v1086 = vadd.f32 %v1080, %v1084
    %v1087 = vtanh.pop %v1086
    %v1088 = vmul.f32 %v1075, %v1087
    %v1090 = vrot.slane %v1088, 2
    %1091 = vrot.lane.b32.xlu0 %v1090, 64
    %v1092 = vpop.permute.xlu0 %1091
    %v1093 = vsel %vm269, %v1092, 0
    %1095 = vmatprep.subr.mxu0 %v234
    %1096 = vmatpush1.msra.mxu0 %v233
    %1097 = vmatprep.subr.mxu0 %v236
    %1098 = vmatpush1.msra.mxu0 %v235
    %1099 = vmatprep.subr.mxu0 %v238
    %1100 = vmatpush1.msra.mxu0 %v237
    %1101 = vmatprep.subr.mxu0 %v240
    %1102 = vmatpush1.msra.mxu0 %v239
    %1103 = vmatprep.subr.mxu0 %v242
    %1104 = vmatpush1.msra.mxu0 %v241
    %1105 = vmatprep.subr.mxu0 %v244
    %1106 = vmatpush1.msra.mxu0 %v243
    %1107 = vmatprep.subr.mxu0 %v246
    %1108 = vmatpush1.msra.mxu0 %v245
    %1109 = vmatprep.subr.mxu0 %v248
    %1110 = vmatpush1.msra.mxu0 %v247
    %1111 = vmatprep.subr.mxu0 0.0
    %1112 = vmatpush1.msra.mxu0 0.0
    %1113 = vmatprep.subr.mxu0 0.0
    %1114 = vmatpush1.msra.mxu0 0.0
    %1115 = vmatprep.subr.mxu0 0.0
    %1116 = vmatpush1.msra.mxu0 0.0
    %1117 = vmatprep.subr.mxu0 0.0
    %1118 = vmatpush1.msra.mxu0 0.0
    %1119 = vmatprep.subr.mxu0 0.0
    %1120 = vmatpush1.msra.mxu0 0.0
    %1121 = vmatprep.subr.mxu0 0.0
    %1122 = vmatpush1.msra.mxu0 0.0
    %1123 = vmatprep.subr.mxu0 0.0
    %1124 = vmatpush1.msra.mxu0 0.0
    %1125 = vmatprep.subr.mxu0 0.0
    %1126 = vmatpush1.msra.mxu0 0.0
    %1127 = vmatprep.subr.mxu0 0.0
    %1128 = vmatpush1.msra.mxu0 0.0
    %1129 = vmatprep.subr.mxu0 0.0
    %1130 = vmatpush1.msra.mxu0 0.0
    %1131 = vmatprep.subr.mxu0 0.0
    %1132 = vmatpush1.msra.mxu0 0.0
    %1133 = vmatprep.subr.mxu0 0.0
    %1134 = vmatpush1.msra.mxu0 0.0
    %1135 = vmatprep.subr.mxu0 0.0
    %1136 = vmatpush1.msra.mxu0 0.0
    %1137 = vmatprep.subr.mxu0 0.0
    %1138 = vmatpush1.msra.mxu0 0.0
    %1139 = vmatprep.subr.mxu0 0.0
    %1140 = vmatpush1.msra.mxu0 0.0
    %1141 = vmatprep.subr.mxu0 0.0
    %1142 = vmatpush1.msra.mxu0 0.0
    %1143 = vmatprep.subr.mxu0 0.0
    %1144 = vmatpush1.msra.mxu0 0.0
    %1145 = vmatprep.subr.mxu0 0.0
    %1146 = vmatpush1.msra.mxu0 0.0
    %1147 = vmatprep.subr.mxu0 0.0
    %1148 = vmatpush1.msra.mxu0 0.0
    %1149 = vmatprep.subr.mxu0 0.0
    %1150 = vmatpush1.msra.mxu0 0.0
    %1151 = vmatprep.subr.mxu0 0.0
    %1152 = vmatpush1.msra.mxu0 0.0
    %1153 = vmatprep.subr.mxu0 0.0
    %1154 = vmatpush1.msra.mxu0 0.0
    %1155 = vmatprep.subr.mxu0 0.0
    %1156 = vmatpush1.msra.mxu0 0.0
    %1157 = vmatprep.subr.mxu0 0.0
    %1158 = vmatpush1.msra.mxu0 0.0
    %1159 = vmatprep.mubr.f32.mxu0 0.0
    %1160 = vmatmul.mubr.f32.gmra.mrb[0].mxu0 %v1093
    %v1161 = vpop.f32.mrb[0].mxu0
    %v1162 = vadd.f32 0.0, %v1161
    %v1163 = vpop.f32.mrb[0].mxu0
    %v1164 = vadd.f32 0.0, %v1163
    %1165 = vdwg.mxu0
    %v1168 = vrot.slane %v1162, 4
    %v1169 = vrot.slane %v1164, 4
    %v1172 = vadd.f32 %v447, %v1168
    %v1173 = vadd.f32 %v448, %v1169
    %v1174 = vxor.u32 %v1172, 2147483648
    %v1175 = vxor.u32 %v1173, 2147483648
    %v1176 = vmul.f32 %v1174, 1.442695
    %v1177 = vpow.pop %v1176
    %v1178 = vmul.f32 %v1175, 1.442695
    %v1179 = vpow.pop %v1178
    %v1180 = vadd.f32 %v1177, 1.0
    %v1181 = vadd.f32 %v1179, 1.0
    %v1182 = vrcp.pop %v1180
    %v1183 = vmul.f32 1.0, %v1182
    %v1184 = vrcp.pop %v1181
    %v1185 = vmul.f32 1.0, %v1184
    %v1186 = vtanh.pop %v1173
    %v1188 = vrot.slane %v1086, 6
    %v1190 = vmul.f32 %v1183, %v1188
    %v1191 = vmul.f32 %v1183, %v1186
    %1193 = vrot.lane.b32.xlu0 %v1191, 64
    %v1194 = vpop.permute.xlu0 %1193
    %v1196 = vadd.f32 %v1190, %v1194
    %v1197 = vtanh.pop %v1196
    %v1198 = vmul.f32 %v1185, %v1197
    %v1200 = vrot.slane %v1198, 4
    %1201 = vrot.lane.b32.xlu0 %v1200, 64
    %v1202 = vpop.permute.xlu0 %1201
    %v1203 = vsel %vm269, %v1202, 0
    %1205 = vmatprep.subr.mxu0 %v234
    %1206 = vmatpush1.msra.mxu0 %v233
    %1207 = vmatprep.subr.mxu0 %v236
    %1208 = vmatpush1.msra.mxu0 %v235
    %1209 = vmatprep.subr.mxu0 %v238
    %1210 = vmatpush1.msra.mxu0 %v237
    %1211 = vmatprep.subr.mxu0 %v240
    %1212 = vmatpush1.msra.mxu0 %v239
    %1213 = vmatprep.subr.mxu0 %v242
    %1214 = vmatpush1.msra.mxu0 %v241
    %1215 = vmatprep.subr.mxu0 %v244
    %1216 = vmatpush1.msra.mxu0 %v243
    %1217 = vmatprep.subr.mxu0 %v246
    %1218 = vmatpush1.msra.mxu0 %v245
    %1219 = vmatprep.subr.mxu0 %v248
    %1220 = vmatpush1.msra.mxu0 %v247
    %1221 = vmatprep.subr.mxu0 0.0
    %1222 = vmatpush1.msra.mxu0 0.0
    %1223 = vmatprep.subr.mxu0 0.0
    %1224 = vmatpush1.msra.mxu0 0.0
    %1225 = vmatprep.subr.mxu0 0.0
    %1226 = vmatpush1.msra.mxu0 0.0
    %1227 = vmatprep.subr.mxu0 0.0
    %1228 = vmatpush1.msra.mxu0 0.0
    %1229 = vmatprep.subr.mxu0 0.0
    %1230 = vmatpush1.msra.mxu0 0.0
    %1231 = vmatprep.subr.mxu0 0.0
    %1232 = vmatpush1.msra.mxu0 0.0
    %1233 = vmatprep.subr.mxu0 0.0
    %1234 = vmatpush1.msra.mxu0 0.0
    %1235 = vmatprep.subr.mxu0 0.0
    %1236 = vmatpush1.msra.mxu0 0.0
    %1237 = vmatprep.subr.mxu0 0.0
    %1238 = vmatpush1.msra.mxu0 0.0
    %1239 = vmatprep.subr.mxu0 0.0
    %1240 = vmatpush1.msra.mxu0 0.0
    %1241 = vmatprep.subr.mxu0 0.0
    %1242 = vmatpush1.msra.mxu0 0.0
    %1243 = vmatprep.subr.mxu0 0.0
    %1244 = vmatpush1.msra.mxu0 0.0
    %1245 = vmatprep.subr.mxu0 0.0
    %1246 = vmatpush1.msra.mxu0 0.0
    %1247 = vmatprep.subr.mxu0 0.0
    %1248 = vmatpush1.msra.mxu0 0.0
    %1249 = vmatprep.subr.mxu0 0.0
    %1250 = vmatpush1.msra.mxu0 0.0
    %1251 = vmatprep.subr.mxu0 0.0
    %1252 = vmatpush1.msra.mxu0 0.0
    %1253 = vmatprep.subr.mxu0 0.0
    %1254 = vmatpush1.msra.mxu0 0.0
    %1255 = vmatprep.subr.mxu0 0.0
    %1256 = vmatpush1.msra.mxu0 0.0
    %1257 = vmatprep.subr.mxu0 0.0
    %1258 = vmatpush1.msra.mxu0 0.0
    %1259 = vmatprep.subr.mxu0 0.0
    %1260 = vmatpush1.msra.mxu0 0.0
    %1261 = vmatprep.subr.mxu0 0.0
    %1262 = vmatpush1.msra.mxu0 0.0
    %1263 = vmatprep.subr.mxu0 0.0
    %1264 = vmatpush1.msra.mxu0 0.0
    %1265 = vmatprep.subr.mxu0 0.0
    %1266 = vmatpush1.msra.mxu0 0.0
    %1267 = vmatprep.subr.mxu0 0.0
    %1268 = vmatpush1.msra.mxu0 0.0
    %1269 = vmatprep.mubr.f32.mxu0 0.0
    %1270 = vmatmul.mubr.f32.gmra.mrb[0].mxu0 %v1203
    %v1271 = vpop.f32.mrb[0].mxu0
    %v1272 = vadd.f32 0.0, %v1271
    %v1273 = vpop.f32.mrb[0].mxu0
    %v1274 = vadd.f32 0.0, %v1273
    %1275 = vdwg.mxu0
    %v1278 = vrot.slane %v1272, 2
    %v1279 = vrot.slane %v1274, 2
    %v1282 = vadd.f32 %v447, %v1278
    %v1283 = vadd.f32 %v448, %v1279
    %v1284 = vxor.u32 %v1282, 2147483648
    %v1285 = vxor.u32 %v1283, 2147483648
    %v1286 = vmul.f32 %v1284, 1.442695
    %v1287 = vpow.pop %v1286
    %v1288 = vmul.f32 %v1285, 1.442695
    %v1289 = vpow.pop %v1288
    %v1290 = vadd.f32 %v1287, 1.0
    %v1291 = vadd.f32 %v1289, 1.0
    %v1292 = vrcp.pop %v1290
    %v1293 = vmul.f32 1.0, %v1292
    %v1294 = vrcp.pop %v1291
    %v1295 = vmul.f32 1.0, %v1294
    %v1296 = vtanh.pop %v1283
    %v1298 = vrot.slane %v1196, 6
    %v1300 = vmul.f32 %v1293, %v1298
    %v1301 = vmul.f32 %v1293, %v1296
    %1303 = vrot.lane.b32.xlu0 %v1301, 64
    %v1304 = vpop.permute.xlu0 %1303
    %v1306 = vadd.f32 %v1300, %v1304
    %v1307 = vtanh.pop %v1306
    %v1308 = vmul.f32 %v1295, %v1307
    %v1311 = vrot.slane %v1308, 6
    %1312 = vrot.lane.b32.xlu0 %v1311, 64
    %v1313 = vpop.permute.xlu0 %1312
    %v1315 = vsel %vm200, %v549, %v1313
    %v1318 = vsel %vm200, %v659, %v1202
    %v1321 = vsel %vm200, %v769, %v1092
    %v1324 = vsel %vm200, %v879, %v982
    %v1325 = vsel %vm200, %v982, %v879
    %v1326 = vsel %vm200, %v1092, %v769
    %v1327 = vsel %vm200, %v1202, %v659
    %v1328 = vsel %vm200, %v1313, %v549
    %v1330 = vrot.slane %v1318, 6
    %v1333 = vrot.slane %v1321, 4
    %v1336 = vrot.slane %v1324, 2
    %v1339 = vrot.slane %v1326, 6
    %v1342 = vrot.slane %v1327, 4
    %v1345 = vrot.slane %v1328, 2
    %v1347 = vsel %vm260, %v1315, %v1330
    %v1348 = vsel %vm262, %v1347, %v1333
    %v1349 = vsel %vm264, %v1348, %v1336
    %v1350 = vsel %vm260, %v1325, %v1339
    %v1351 = vsel %vm262, %v1350, %v1342
    %v1352 = vsel %vm264, %v1351, %v1345
    %s1353 = scalar_lea.vmem %s1, 128
    %v1354 = vld [vmem:[%s1353] sm:$0xff]
    %v1355 = vld [vmem:[%s1353 + $0x8] sm:$0xff]
    %v1356 = vld [vmem:[%s1353 + $0x10] sm:$0xff]
    %v1357 = vld [vmem:[%s1353 + $0x18] sm:$0xff]
    %v1358 = vld [vmem:[%s1353 + $0x20] sm:$0xff]
    %v1359 = vld [vmem:[%s1353 + $0x28] sm:$0xff]
    %v1360 = vld [vmem:[%s1353 + $0x30] sm:$0xff]
    %v1361 = vld [vmem:[%s1353 + $0x38] sm:$0xff]
    %v1362 = vld [vmem:[%s1353 + $0x40] sm:$0xff]
    %v1363 = vld [vmem:[%s1353 + $0x48] sm:$0xff]
    %v1364 = vld [vmem:[%s1353 + $0x50] sm:$0xff]
    %v1365 = vld [vmem:[%s1353 + $0x58] sm:$0xff]
    %v1366 = vld [vmem:[%s1353 + $0x60] sm:$0xff]
    %v1367 = vld [vmem:[%s1353 + $0x68] sm:$0xff]
    %v1368 = vld [vmem:[%s1353 + $0x70] sm:$0xff]
    %v1369 = vld [vmem:[%s1353 + $0x78] sm:$0xff]
    %s1370 = scalar_lea.vmem %s2, 128
    %v1371 = vld [vmem:[%s1370] sm:$0xff]
    %v1372 = vld [vmem:[%s1370 + $0x8] sm:$0xff]
    %v1373 = vld [vmem:[%s1370 + $0x10] sm:$0xff]
    %v1374 = vld [vmem:[%s1370 + $0x18] sm:$0xff]
    %v1375 = vld [vmem:[%s1370 + $0x20] sm:$0xff]
    %v1376 = vld [vmem:[%s1370 + $0x28] sm:$0xff]
    %v1377 = vld [vmem:[%s1370 + $0x30] sm:$0xff]
    %v1378 = vld [vmem:[%s1370 + $0x38] sm:$0xff]
    %v1379 = vld [vmem:[%s1370 + $0x40] sm:$0xff]
    %v1380 = vld [vmem:[%s1370 + $0x48] sm:$0xff]
    %v1381 = vld [vmem:[%s1370 + $0x50] sm:$0xff]
    %v1382 = vld [vmem:[%s1370 + $0x58] sm:$0xff]
    %v1383 = vld [vmem:[%s1370 + $0x60] sm:$0xff]
    %v1384 = vld [vmem:[%s1370 + $0x68] sm:$0xff]
    %v1385 = vld [vmem:[%s1370 + $0x70] sm:$0xff]
    %v1386 = vld [vmem:[%s1370 + $0x78] sm:$0xff]
    %s1387 = scalar_lea.vmem [#allocation2], 128
    %v1388 = vld [vmem:[%s1387] sm:$0xff]
    %v1389 = vld [vmem:[%s1387 + $0x8] sm:$0xff]
    %v1390 = vld [vmem:[%s1387 + $0x10] sm:$0xff]
    %v1391 = vld [vmem:[%s1387 + $0x18] sm:$0xff]
    %v1392 = vld [vmem:[%s1387 + $0x20] sm:$0xff]
    %v1393 = vld [vmem:[%s1387 + $0x28] sm:$0xff]
    %v1394 = vld [vmem:[%s1387 + $0x30] sm:$0xff]
    %v1395 = vld [vmem:[%s1387 + $0x38] sm:$0xff]
    %v1396 = vld [vmem:[%s1387 + $0x40] sm:$0xff]
    %v1397 = vld [vmem:[%s1387 + $0x48] sm:$0xff]
    %v1398 = vld [vmem:[%s1387 + $0x50] sm:$0xff]
    %v1399 = vld [vmem:[%s1387 + $0x58] sm:$0xff]
    %v1400 = vld [vmem:[%s1387 + $0x60] sm:$0xff]
    %v1401 = vld [vmem:[%s1387 + $0x68] sm:$0xff]
    %v1402 = vld [vmem:[%s1387 + $0x70] sm:$0xff]
    %v1403 = vld [vmem:[%s1387 + $0x78] sm:$0xff]
    %s1404 = scalar_lea.vmem [#allocation5], 2
    %v1405 = vld [vmem:[%s1404] sm:$0x3]
    %v1407 = vrot.slane %v1352, 6
    %v1409 = vrot.slane %v1352, 2
    %v1412 = vrot.slane %v1349, 6
    %v1414 = vrot.slane %v1349, 2
    %v1416 = vsel %vm260, %v1407, %v1409
    %v1417 = vsel %vm262, %v1416, %v1407
    %v1418 = vsel %vm264, %v1417, %v1409
    %v1419 = vsel %vm260, %v1412, %v1414
    %v1420 = vsel %vm262, %v1419, %v1412
    %v1421 = vsel %vm264, %v1420, %v1414
    %v1423 = vsel %vm269, %v1418, 0
    %v1426 = vsel %vm269, %v1421, 0
    %1428 = vmatprep.subr.mxu0 %v1372
    %1429 = vmatpush1.msra.mxu0 %v1371
    %1430 = vmatprep.subr.mxu0 %v1374
    %1431 = vmatpush1.msra.mxu0 %v1373
    %1432 = vmatprep.subr.mxu0 %v1376
    %1433 = vmatpush1.msra.mxu0 %v1375
    %1434 = vmatprep.subr.mxu0 %v1378
    %1435 = vmatpush1.msra.mxu0 %v1377
    %1436 = vmatprep.subr.mxu0 %v1380
    %1437 = vmatpush1.msra.mxu0 %v1379
    %1438 = vmatprep.subr.mxu0 %v1382
    %1439 = vmatpush1.msra.mxu0 %v1381
    %1440 = vmatprep.subr.mxu0 %v1384
    %1441 = vmatpush1.msra.mxu0 %v1383
    %1442 = vmatprep.subr.mxu0 %v1386
    %1443 = vmatpush1.msra.mxu0 %v1385
    %1444 = vmatprep.subr.mxu0 0.0
    %1445 = vmatpush1.msra.mxu0 0.0
    %1446 = vmatprep.subr.mxu0 0.0
    %1447 = vmatpush1.msra.mxu0 0.0
    %1448 = vmatprep.subr.mxu0 0.0
    %1449 = vmatpush1.msra.mxu0 0.0
    %1450 = vmatprep.subr.mxu0 0.0
    %1451 = vmatpush1.msra.mxu0 0.0
    %1452 = vmatprep.subr.mxu0 0.0
    %1453 = vmatpush1.msra.mxu0 0.0
    %1454 = vmatprep.subr.mxu0 0.0
    %1455 = vmatpush1.msra.mxu0 0.0
    %1456 = vmatprep.subr.mxu0 0.0
    %1457 = vmatpush1.msra.mxu0 0.0
    %1458 = vmatprep.subr.mxu0 0.0
    %1459 = vmatpush1.msra.mxu0 0.0
    %1460 = vmatprep.subr.mxu0 0.0
    %1461 = vmatpush1.msra.mxu0 0.0
    %1462 = vmatprep.subr.mxu0 0.0
    %1463 = vmatpush1.msra.mxu0 0.0
    %1464 = vmatprep.subr.mxu0 0.0
    %1465 = vmatpush1.msra.mxu0 0.0
    %1466 = vmatprep.subr.mxu0 0.0
    %1467 = vmatpush1.msra.mxu0 0.0
    %1468 = vmatprep.subr.mxu0 0.0
    %1469 = vmatpush1.msra.mxu0 0.0
    %1470 = vmatprep.subr.mxu0 0.0
    %1471 = vmatpush1.msra.mxu0 0.0
    %1472 = vmatprep.subr.mxu0 0.0
    %1473 = vmatpush1.msra.mxu0 0.0
    %1474 = vmatprep.subr.mxu0 0.0
    %1475 = vmatpush1.msra.mxu0 0.0
    %1476 = vmatprep.subr.mxu0 0.0
    %1477 = vmatpush1.msra.mxu0 0.0
    %1478 = vmatprep.subr.mxu0 0.0
    %1479 = vmatpush1.msra.mxu0 0.0
    %1480 = vmatprep.subr.mxu0 0.0
    %1481 = vmatpush1.msra.mxu0 0.0
    %1482 = vmatprep.subr.mxu0 0.0
    %1483 = vmatpush1.msra.mxu0 0.0
    %1484 = vmatprep.subr.mxu0 0.0
    %1485 = vmatpush1.msra.mxu0 0.0
    %1486 = vmatprep.subr.mxu0 0.0
    %1487 = vmatpush1.msra.mxu0 0.0
    %1488 = vmatprep.subr.mxu0 0.0
    %1489 = vmatpush1.msra.mxu0 0.0
    %1490 = vmatprep.subr.mxu0 0.0
    %1491 = vmatpush1.msra.mxu0 0.0
    %1492 = vmatprep.mubr.f32.mxu0 0.0
    %1493 = vmatmul.mubr.f32.gmra.mrb[0].mxu0 %v1423
    %v1494 = vpop.f32.mrb[0].mxu0
    %v1495 = vadd.f32 0.0, %v1494
    %v1496 = vpop.f32.mrb[0].mxu0
    %v1497 = vadd.f32 0.0, %v1496
    %1498 = vmatprep.mubr.f32.mxu0 0.0
    %1499 = vmatmul.mubr.f32.gmra.mrb[0].mxu0 %v1426
    %v1500 = vpop.f32.mrb[0].mxu0
    %v1501 = vadd.f32 0.0, %v1500
    %v1502 = vpop.f32.mrb[0].mxu0
    %v1503 = vadd.f32 0.0, %v1502
    %1504 = vdwg.mxu0
    %v1505 = vsel %vm269, %v1349, 0
    %v1507 = vsel %vm269, %v1352, 0
    %1509 = vmatprep.subr.mxu0 %v1355
    %1510 = vmatpush1.msra.mxu0 %v1354
    %1511 = vmatprep.subr.mxu0 %v1357
    %1512 = vmatpush1.msra.mxu0 %v1356
    %1513 = vmatprep.subr.mxu0 %v1359
    %1514 = vmatpush1.msra.mxu0 %v1358
    %1515 = vmatprep.subr.mxu0 %v1361
    %1516 = vmatpush1.msra.mxu0 %v1360
    %1517 = vmatprep.subr.mxu0 %v1363
    %1518 = vmatpush1.msra.mxu0 %v1362
    %1519 = vmatprep.subr.mxu0 %v1365
    %1520 = vmatpush1.msra.mxu0 %v1364
    %1521 = vmatprep.subr.mxu0 %v1367
    %1522 = vmatpush1.msra.mxu0 %v1366
    %1523 = vmatprep.subr.mxu0 %v1369
    %1524 = vmatpush1.msra.mxu0 %v1368
    %1525 = vmatprep.subr.mxu0 0.0
    %1526 = vmatpush1.msra.mxu0 0.0
    %1527 = vmatprep.subr.mxu0 0.0
    %1528 = vmatpush1.msra.mxu0 0.0
    %1529 = vmatprep.subr.mxu0 0.0
    %1530 = vmatpush1.msra.mxu0 0.0
    %1531 = vmatprep.subr.mxu0 0.0
    %1532 = vmatpush1.msra.mxu0 0.0
    %1533 = vmatprep.subr.mxu0 0.0
    %1534 = vmatpush1.msra.mxu0 0.0
    %1535 = vmatprep.subr.mxu0 0.0
    %1536 = vmatpush1.msra.mxu0 0.0
    %1537 = vmatprep.subr.mxu0 0.0
    %1538 = vmatpush1.msra.mxu0 0.0
    %1539 = vmatprep.subr.mxu0 0.0
    %1540 = vmatpush1.msra.mxu0 0.0
    %1541 = vmatprep.subr.mxu0 0.0
    %1542 = vmatpush1.msra.mxu0 0.0
    %1543 = vmatprep.subr.mxu0 0.0
    %1544 = vmatpush1.msra.mxu0 0.0
    %1545 = vmatprep.subr.mxu0 0.0
    %1546 = vmatpush1.msra.mxu0 0.0
    %1547 = vmatprep.subr.mxu0 0.0
    %1548 = vmatpush1.msra.mxu0 0.0
    %1549 = vmatprep.subr.mxu0 0.0
    %1550 = vmatpush1.msra.mxu0 0.0
    %1551 = vmatprep.subr.mxu0 0.0
    %1552 = vmatpush1.msra.mxu0 0.0
    %1553 = vmatprep.subr.mxu0 0.0
    %1554 = vmatpush1.msra.mxu0 0.0
    %1555 = vmatprep.subr.mxu0 0.0
    %1556 = vmatpush1.msra.mxu0 0.0
    %1557 = vmatprep.subr.mxu0 0.0
    %1558 = vmatpush1.msra.mxu0 0.0
    %1559 = vmatprep.subr.mxu0 0.0
    %1560 = vmatpush1.msra.mxu0 0.0
    %1561 = vmatprep.subr.mxu0 0.0
    %1562 = vmatpush1.msra.mxu0 0.0
    %1563 = vmatprep.subr.mxu0 0.0
    %1564 = vmatpush1.msra.mxu0 0.0
    %1565 = vmatprep.subr.mxu0 0.0
    %1566 = vmatpush1.msra.mxu0 0.0
    %1567 = vmatprep.subr.mxu0 0.0
    %1568 = vmatpush1.msra.mxu0 0.0
    %1569 = vmatprep.subr.mxu0 0.0
    %1570 = vmatpush1.msra.mxu0 0.0
    %1571 = vmatprep.subr.mxu0 0.0
    %1572 = vmatpush1.msra.mxu0 0.0
    %1573 = vmatprep.mubr.f32.mxu0 0.0
    %1574 = vmatmul.mubr.f32.gmra.mrb[0].mxu0 %v1505
    %v1575 = vpop.f32.mrb[0].mxu0
    %v1576 = vadd.f32 %v1495, %v1575
    %v1577 = vpop.f32.mrb[0].mxu0
    %v1578 = vadd.f32 %v1497, %v1577
    %1579 = vmatprep.mubr.f32.mxu0 0.0
    %1580 = vmatmul.mubr.f32.gmra.mrb[0].mxu0 %v1507
    %v1581 = vpop.f32.mrb[0].mxu0
    %v1582 = vadd.f32 %v1501, %v1581
    %v1583 = vpop.f32.mrb[0].mxu0
    %v1584 = vadd.f32 %v1503, %v1583
    %1585 = vdwg.mxu0
    %v1587 = vlaneseq
    %v1588 = vshrl.u32 %v1587, 7
    %v1589 = vsub.s32 0, %v1588
    %v1590 = vrot.slane %v1405, %v1589
    %v1591 = vlaneseq
    %v1592 = vshrl.u32 %v1591, 7
    %v1593 = vsub.s32 1, %v1592
    %v1594 = vrot.slane %v1405, %v1593
    %v1597 = vadd.f32 %v1576, %v1590
    %v1598 = vadd.f32 %v1578, %v1594
    %v1599 = vadd.f32 %v1582, %v1590
    %v1600 = vadd.f32 %v1584, %v1594
    %1601 = vmatprep.subr.mxu0 %v1389
    %1602 = vmatpush1.msra.mxu0 %v1388
    %1603 = vmatprep.subr.mxu0 %v1391
    %1604 = vmatpush1.msra.mxu0 %v1390
    %1605 = vmatprep.subr.mxu0 %v1393
    %1606 = vmatpush1.msra.mxu0 %v1392
    %1607 = vmatprep.subr.mxu0 %v1395
    %1608 = vmatpush1.msra.mxu0 %v1394
    %1609 = vmatprep.subr.mxu0 %v1397
    %1610 = vmatpush1.msra.mxu0 %v1396
    %1611 = vmatprep.subr.mxu0 %v1399
    %1612 = vmatpush1.msra.mxu0 %v1398
    %1613 = vmatprep.subr.mxu0 %v1401
    %1614 = vmatpush1.msra.mxu0 %v1400
    %1615 = vmatprep.subr.mxu0 %v1403
    %1616 = vmatpush1.msra.mxu0 %v1402
    %1617 = vmatprep.subr.mxu0 0.0
    %1618 = vmatpush1.msra.mxu0 0.0
    %1619 = vmatprep.subr.mxu0 0.0
    %1620 = vmatpush1.msra.mxu0 0.0
    %1621 = vmatprep.subr.mxu0 0.0
    %1622 = vmatpush1.msra.mxu0 0.0
    %1623 = vmatprep.subr.mxu0 0.0
    %1624 = vmatpush1.msra.mxu0 0.0
    %1625 = vmatprep.subr.mxu0 0.0
    %1626 = vmatpush1.msra.mxu0 0.0
    %1627 = vmatprep.subr.mxu0 0.0
    %1628 = vmatpush1.msra.mxu0 0.0
    %1629 = vmatprep.subr.mxu0 0.0
    %1630 = vmatpush1.msra.mxu0 0.0
    %1631 = vmatprep.subr.mxu0 0.0
    %1632 = vmatpush1.msra.mxu0 0.0
    %1633 = vmatprep.subr.mxu0 0.0
    %1634 = vmatpush1.msra.mxu0 0.0
    %1635 = vmatprep.subr.mxu0 0.0
    %1636 = vmatpush1.msra.mxu0 0.0
    %1637 = vmatprep.subr.mxu0 0.0
    %1638 = vmatpush1.msra.mxu0 0.0
    %1639 = vmatprep.subr.mxu0 0.0
    %1640 = vmatpush1.msra.mxu0 0.0
    %1641 = vmatprep.subr.mxu0 0.0
    %1642 = vmatpush1.msra.mxu0 0.0
    %1643 = vmatprep.subr.mxu0 0.0
    %1644 = vmatpush1.msra.mxu0 0.0
    %1645 = vmatprep.subr.mxu0 0.0
    %1646 = vmatpush1.msra.mxu0 0.0
    %1647 = vmatprep.subr.mxu0 0.0
    %1648 = vmatpush1.msra.mxu0 0.0
    %1649 = vmatprep.subr.mxu0 0.0
    %1650 = vmatpush1.msra.mxu0 0.0
    %1651 = vmatprep.subr.mxu0 0.0
    %1652 = vmatpush1.msra.mxu0 0.0
    %1653 = vmatprep.subr.mxu0 0.0
    %1654 = vmatpush1.msra.mxu0 0.0
    %1655 = vmatprep.subr.mxu0 0.0
    %1656 = vmatpush1.msra.mxu0 0.0
    %1657 = vmatprep.subr.mxu0 0.0
    %1658 = vmatpush1.msra.mxu0 0.0
    %1659 = vmatprep.subr.mxu0 0.0
    %1660 = vmatpush1.msra.mxu0 0.0
    %1661 = vmatprep.subr.mxu0 0.0
    %1662 = vmatpush1.msra.mxu0 0.0
    %1663 = vmatprep.subr.mxu0 0.0
    %1664 = vmatpush1.msra.mxu0 0.0
    %1665 = vmatprep.mubr.f32.mxu0 0.0
    %1666 = vmatmul.mubr.f32.gmra.mrb[0].mxu0 %v450
    %v1667 = vpop.f32.mrb[0].mxu0
    %v1668 = vadd.f32 0.0, %v1667
    %v1669 = vpop.f32.mrb[0].mxu0
    %v1670 = vadd.f32 0.0, %v1669
    %1671 = vdwg.mxu0
    %v1672 = vadd.f32 %v1597, %v1668
    %v1673 = vadd.f32 %v1598, %v1670
    %v1674 = vxor.u32 %v1672, 2147483648
    %v1675 = vxor.u32 %v1673, 2147483648
    %v1676 = vmul.f32 %v1674, 1.442695
    %v1677 = vpow.pop %v1676
    %v1678 = vmul.f32 %v1675, 1.442695
    %v1679 = vpow.pop %v1678
    %v1680 = vadd.f32 %v1677, 1.0
    %v1681 = vadd.f32 %v1679, 1.0
    %v1682 = vrcp.pop %v1680
    %v1683 = vmul.f32 1.0, %v1682
    %v1684 = vrcp.pop %v1681
    %v1685 = vmul.f32 1.0, %v1684
    %v1686 = vtanh.pop %v1673
    %v1687 = vmul.f32 %v1683, 0.0
    %v1688 = vmul.f32 %v1683, %v1686
    %1690 = vrot.lane.b32.xlu0 %v1688, 64
    %v1691 = vpop.permute.xlu0 %1690
    %v1693 = vadd.f32 %v1687, %v1691
    %v1694 = vtanh.pop %v1693
    %v1695 = vmul.f32 %v1685, %v1694
    %1697 = vrot.lane.b32.xlu0 %v1695, 64
    %v1698 = vpop.permute.xlu0 %1697
    %v1699 = vsel %vm269, %v1698, 0
    %1701 = vmatprep.subr.mxu0 %v1389
    %1702 = vmatpush1.msra.mxu0 %v1388
    %1703 = vmatprep.subr.mxu0 %v1391
    %1704 = vmatpush1.msra.mxu0 %v1390
    %1705 = vmatprep.subr.mxu0 %v1393
    %1706 = vmatpush1.msra.mxu0 %v1392
    %1707 = vmatprep.subr.mxu0 %v1395
    %1708 = vmatpush1.msra.mxu0 %v1394
    %1709 = vmatprep.subr.mxu0 %v1397
    %1710 = vmatpush1.msra.mxu0 %v1396
    %1711 = vmatprep.subr.mxu0 %v1399
    %1712 = vmatpush1.msra.mxu0 %v1398
    %1713 = vmatprep.subr.mxu0 %v1401
    %1714 = vmatpush1.msra.mxu0 %v1400
    %1715 = vmatprep.subr.mxu0 %v1403
    %1716 = vmatpush1.msra.mxu0 %v1402
    %1717 = vmatprep.subr.mxu0 0.0
    %1718 = vmatpush1.msra.mxu0 0.0
    %1719 = vmatprep.subr.mxu0 0.0
    %1720 = vmatpush1.msra.mxu0 0.0
    %1721 = vmatprep.subr.mxu0 0.0
    %1722 = vmatpush1.msra.mxu0 0.0
    %1723 = vmatprep.subr.mxu0 0.0
    %1724 = vmatpush1.msra.mxu0 0.0
    %1725 = vmatprep.subr.mxu0 0.0
    %1726 = vmatpush1.msra.mxu0 0.0
    %1727 = vmatprep.subr.mxu0 0.0
    %1728 = vmatpush1.msra.mxu0 0.0
    %1729 = vmatprep.subr.mxu0 0.0
    %1730 = vmatpush1.msra.mxu0 0.0
    %1731 = vmatprep.subr.mxu0 0.0
    %1732 = vmatpush1.msra.mxu0 0.0
    %1733 = vmatprep.subr.mxu0 0.0
    %1734 = vmatpush1.msra.mxu0 0.0
    %1735 = vmatprep.subr.mxu0 0.0
    %1736 = vmatpush1.msra.mxu0 0.0
    %1737 = vmatprep.subr.mxu0 0.0
    %1738 = vmatpush1.msra.mxu0 0.0
    %1739 = vmatprep.subr.mxu0 0.0
    %1740 = vmatpush1.msra.mxu0 0.0
    %1741 = vmatprep.subr.mxu0 0.0
    %1742 = vmatpush1.msra.mxu0 0.0
    %1743 = vmatprep.subr.mxu0 0.0
    %1744 = vmatpush1.msra.mxu0 0.0
    %1745 = vmatprep.subr.mxu0 0.0
    %1746 = vmatpush1.msra.mxu0 0.0
    %1747 = vmatprep.subr.mxu0 0.0
    %1748 = vmatpush1.msra.mxu0 0.0
    %1749 = vmatprep.subr.mxu0 0.0
    %1750 = vmatpush1.msra.mxu0 0.0
    %1751 = vmatprep.subr.mxu0 0.0
    %1752 = vmatpush1.msra.mxu0 0.0
    %1753 = vmatprep.subr.mxu0 0.0
    %1754 = vmatpush1.msra.mxu0 0.0
    %1755 = vmatprep.subr.mxu0 0.0
    %1756 = vmatpush1.msra.mxu0 0.0
    %1757 = vmatprep.subr.mxu0 0.0
    %1758 = vmatpush1.msra.mxu0 0.0
    %1759 = vmatprep.subr.mxu0 0.0
    %1760 = vmatpush1.msra.mxu0 0.0
    %1761 = vmatprep.subr.mxu0 0.0
    %1762 = vmatpush1.msra.mxu0 0.0
    %1763 = vmatprep.subr.mxu0 0.0
    %1764 = vmatpush1.msra.mxu0 0.0
    %1765 = vmatprep.mubr.f32.mxu0 0.0
    %1766 = vmatmul.mubr.f32.gmra.mrb[0].mxu0 %v1699
    %v1767 = vpop.f32.mrb[0].mxu0
    %v1768 = vadd.f32 0.0, %v1767
    %v1769 = vpop.f32.mrb[0].mxu0
    %v1770 = vadd.f32 0.0, %v1769
    %1771 = vdwg.mxu0
    %v1774 = vrot.slane %v1768, 6
    %v1775 = vrot.slane %v1770, 6
    %v1778 = vadd.f32 %v1597, %v1774
    %v1779 = vadd.f32 %v1598, %v1775
    %v1780 = vxor.u32 %v1778, 2147483648
    %v1781 = vxor.u32 %v1779, 2147483648
    %v1782 = vmul.f32 %v1780, 1.442695
    %v1783 = vpow.pop %v1782
    %v1784 = vmul.f32 %v1781, 1.442695
    %v1785 = vpow.pop %v1784
    %v1786 = vadd.f32 %v1783, 1.0
    %v1787 = vadd.f32 %v1785, 1.0
    %v1788 = vrcp.pop %v1786
    %v1789 = vmul.f32 1.0, %v1788
    %v1790 = vrcp.pop %v1787
    %v1791 = vmul.f32 1.0, %v1790
    %v1792 = vtanh.pop %v1779
    %v1794 = vrot.slane %v1693, 6
    %v1796 = vmul.f32 %v1789, %v1794
    %v1797 = vmul.f32 %v1789, %v1792
    %1799 = vrot.lane.b32.xlu0 %v1797, 64
    %v1800 = vpop.permute.xlu0 %1799
    %v1802 = vadd.f32 %v1796, %v1800
    %v1803 = vtanh.pop %v1802
    %v1804 = vmul.f32 %v1791, %v1803
    %v1806 = vrot.slane %v1804, 2
    %1807 = vrot.lane.b32.xlu0 %v1806, 64
    %v1808 = vpop.permute.xlu0 %1807
    %v1809 = vsel %vm269, %v1808, 0
    %1811 = vmatprep.subr.mxu0 %v1389
    %1812 = vmatpush1.msra.mxu0 %v1388
    %1813 = vmatprep.subr.mxu0 %v1391
    %1814 = vmatpush1.msra.mxu0 %v1390
    %1815 = vmatprep.subr.mxu0 %v1393
    %1816 = vmatpush1.msra.mxu0 %v1392
    %1817 = vmatprep.subr.mxu0 %v1395
    %1818 = vmatpush1.msra.mxu0 %v1394
    %1819 = vmatprep.subr.mxu0 %v1397
    %1820 = vmatpush1.msra.mxu0 %v1396
    %1821 = vmatprep.subr.mxu0 %v1399
    %1822 = vmatpush1.msra.mxu0 %v1398
    %1823 = vmatprep.subr.mxu0 %v1401
    %1824 = vmatpush1.msra.mxu0 %v1400
    %1825 = vmatprep.subr.mxu0 %v1403
    %1826 = vmatpush1.msra.mxu0 %v1402
    %1827 = vmatprep.subr.mxu0 0.0
    %1828 = vmatpush1.msra.mxu0 0.0
    %1829 = vmatprep.subr.mxu0 0.0
    %1830 = vmatpush1.msra.mxu0 0.0
    %1831 = vmatprep.subr.mxu0 0.0
    %1832 = vmatpush1.msra.mxu0 0.0
    %1833 = vmatprep.subr.mxu0 0.0
    %1834 = vmatpush1.msra.mxu0 0.0
    %1835 = vmatprep.subr.mxu0 0.0
    %1836 = vmatpush1.msra.mxu0 0.0
    %1837 = vmatprep.subr.mxu0 0.0
    %1838 = vmatpush1.msra.mxu0 0.0
    %1839 = vmatprep.subr.mxu0 0.0
    %1840 = vmatpush1.msra.mxu0 0.0
    %1841 = vmatprep.subr.mxu0 0.0
    %1842 = vmatpush1.msra.mxu0 0.0
    %1843 = vmatprep.subr.mxu0 0.0
    %1844 = vmatpush1.msra.mxu0 0.0
    %1845 = vmatprep.subr.mxu0 0.0
    %1846 = vmatpush1.msra.mxu0 0.0
    %1847 = vmatprep.subr.mxu0 0.0
    %1848 = vmatpush1.msra.mxu0 0.0
    %1849 = vmatprep.subr.mxu0 0.0
    %1850 = vmatpush1.msra.mxu0 0.0
    %1851 = vmatprep.subr.mxu0 0.0
    %1852 = vmatpush1.msra.mxu0 0.0
    %1853 = vmatprep.subr.mxu0 0.0
    %1854 = vmatpush1.msra.mxu0 0.0
    %1855 = vmatprep.subr.mxu0 0.0
    %1856 = vmatpush1.msra.mxu0 0.0
    %1857 = vmatprep.subr.mxu0 0.0
    %1858 = vmatpush1.msra.mxu0 0.0
    %1859 = vmatprep.subr.mxu0 0.0
    %1860 = vmatpush1.msra.mxu0 0.0
    %1861 = vmatprep.subr.mxu0 0.0
    %1862 = vmatpush1.msra.mxu0 0.0
    %1863 = vmatprep.subr.mxu0 0.0
    %1864 = vmatpush1.msra.mxu0 0.0
    %1865 = vmatprep.subr.mxu0 0.0
    %1866 = vmatpush1.msra.mxu0 0.0
    %1867 = vmatprep.subr.mxu0 0.0
    %1868 = vmatpush1.msra.mxu0 0.0
    %1869 = vmatprep.subr.mxu0 0.0
    %1870 = vmatpush1.msra.mxu0 0.0
    %1871 = vmatprep.subr.mxu0 0.0
    %1872 = vmatpush1.msra.mxu0 0.0
    %1873 = vmatprep.subr.mxu0 0.0
    %1874 = vmatpush1.msra.mxu0 0.0
    %1875 = vmatprep.mubr.f32.mxu0 0.0
    %1876 = vmatmul.mubr.f32.gmra.mrb[0].mxu0 %v1809
    %v1877 = vpop.f32.mrb[0].mxu0
    %v1878 = vadd.f32 0.0, %v1877
    %v1879 = vpop.f32.mrb[0].mxu0
    %v1880 = vadd.f32 0.0, %v1879
    %1881 = vdwg.mxu0
    %v1884 = vrot.slane %v1878, 4
    %v1885 = vrot.slane %v1880, 4
    %v1888 = vadd.f32 %v1597, %v1884
    %v1889 = vadd.f32 %v1598, %v1885
    %v1890 = vxor.u32 %v1888, 2147483648
    %v1891 = vxor.u32 %v1889, 2147483648
    %v1892 = vmul.f32 %v1890, 1.442695
    %v1893 = vpow.pop %v1892
    %v1894 = vmul.f32 %v1891, 1.442695
    %v1895 = vpow.pop %v1894
    %v1896 = vadd.f32 %v1893, 1.0
    %v1897 = vadd.f32 %v1895, 1.0
    %v1898 = vrcp.pop %v1896
    %v1899 = vmul.f32 1.0, %v1898
    %v1900 = vrcp.pop %v1897
    %v1901 = vmul.f32 1.0, %v1900
    %v1902 = vtanh.pop %v1889
    %v1904 = vrot.slane %v1802, 6
    %v1906 = vmul.f32 %v1899, %v1904
    %v1907 = vmul.f32 %v1899, %v1902
    %1909 = vrot.lane.b32.xlu0 %v1907, 64
    %v1910 = vpop.permute.xlu0 %1909
    %v1912 = vadd.f32 %v1906, %v1910
    %v1913 = vtanh.pop %v1912
    %v1914 = vmul.f32 %v1901, %v1913
    %v1916 = vrot.slane %v1914, 4
    %1917 = vrot.lane.b32.xlu0 %v1916, 64
    %v1918 = vpop.permute.xlu0 %1917
    %v1919 = vsel %vm269, %v1918, 0
    %1921 = vmatprep.subr.mxu0 %v1389
    %1922 = vmatpush1.msra.mxu0 %v1388
    %1923 = vmatprep.subr.mxu0 %v1391
    %1924 = vmatpush1.msra.mxu0 %v1390
    %1925 = vmatprep.subr.mxu0 %v1393
    %1926 = vmatpush1.msra.mxu0 %v1392
    %1927 = vmatprep.subr.mxu0 %v1395
    %1928 = vmatpush1.msra.mxu0 %v1394
    %1929 = vmatprep.subr.mxu0 %v1397
    %1930 = vmatpush1.msra.mxu0 %v1396
    %1931 = vmatprep.subr.mxu0 %v1399
    %1932 = vmatpush1.msra.mxu0 %v1398
    %1933 = vmatprep.subr.mxu0 %v1401
    %1934 = vmatpush1.msra.mxu0 %v1400
    %1935 = vmatprep.subr.mxu0 %v1403
    %1936 = vmatpush1.msra.mxu0 %v1402
    %1937 = vmatprep.subr.mxu0 0.0
    %1938 = vmatpush1.msra.mxu0 0.0
    %1939 = vmatprep.subr.mxu0 0.0
    %1940 = vmatpush1.msra.mxu0 0.0
    %1941 = vmatprep.subr.mxu0 0.0
    %1942 = vmatpush1.msra.mxu0 0.0
    %1943 = vmatprep.subr.mxu0 0.0
    %1944 = vmatpush1.msra.mxu0 0.0
    %1945 = vmatprep.subr.mxu0 0.0
    %1946 = vmatpush1.msra.mxu0 0.0
    %1947 = vmatprep.subr.mxu0 0.0
    %1948 = vmatpush1.msra.mxu0 0.0
    %1949 = vmatprep.subr.mxu0 0.0
    %1950 = vmatpush1.msra.mxu0 0.0
    %1951 = vmatprep.subr.mxu0 0.0
    %1952 = vmatpush1.msra.mxu0 0.0
    %1953 = vmatprep.subr.mxu0 0.0
    %1954 = vmatpush1.msra.mxu0 0.0
    %1955 = vmatprep.subr.mxu0 0.0
    %1956 = vmatpush1.msra.mxu0 0.0
    %1957 = vmatprep.subr.mxu0 0.0
    %1958 = vmatpush1.msra.mxu0 0.0
    %1959 = vmatprep.subr.mxu0 0.0
    %1960 = vmatpush1.msra.mxu0 0.0
    %1961 = vmatprep.subr.mxu0 0.0
    %1962 = vmatpush1.msra.mxu0 0.0
    %1963 = vmatprep.subr.mxu0 0.0
    %1964 = vmatpush1.msra.mxu0 0.0
    %1965 = vmatprep.subr.mxu0 0.0
    %1966 = vmatpush1.msra.mxu0 0.0
    %1967 = vmatprep.subr.mxu0 0.0
    %1968 = vmatpush1.msra.mxu0 0.0
    %1969 = vmatprep.subr.mxu0 0.0
    %1970 = vmatpush1.msra.mxu0 0.0
    %1971 = vmatprep.subr.mxu0 0.0
    %1972 = vmatpush1.msra.mxu0 0.0
    %1973 = vmatprep.subr.mxu0 0.0
    %1974 = vmatpush1.msra.mxu0 0.0
    %1975 = vmatprep.subr.mxu0 0.0
    %1976 = vmatpush1.msra.mxu0 0.0
    %1977 = vmatprep.subr.mxu0 0.0
    %1978 = vmatpush1.msra.mxu0 0.0
    %1979 = vmatprep.subr.mxu0 0.0
    %1980 = vmatpush1.msra.mxu0 0.0
    %1981 = vmatprep.subr.mxu0 0.0
    %1982 = vmatpush1.msra.mxu0 0.0
    %1983 = vmatprep.subr.mxu0 0.0
    %1984 = vmatpush1.msra.mxu0 0.0
    %1985 = vmatprep.mubr.f32.mxu0 0.0
    %1986 = vmatmul.mubr.f32.gmra.mrb[0].mxu0 %v1919
    %v1987 = vpop.f32.mrb[0].mxu0
    %v1988 = vadd.f32 0.0, %v1987
    %v1989 = vpop.f32.mrb[0].mxu0
    %v1990 = vadd.f32 0.0, %v1989
    %1991 = vdwg.mxu0
    %v1994 = vrot.slane %v1988, 2
    %v1995 = vrot.slane %v1990, 2
    %v1998 = vadd.f32 %v1597, %v1994
    %v1999 = vadd.f32 %v1598, %v1995
    %v2000 = vxor.u32 %v1998, 2147483648
    %v2001 = vxor.u32 %v1999, 2147483648
    %v2002 = vmul.f32 %v2000, 1.442695
    %v2003 = vpow.pop %v2002
    %v2004 = vmul.f32 %v2001, 1.442695
    %v2005 = vpow.pop %v2004
    %v2006 = vadd.f32 %v2003, 1.0
    %v2007 = vadd.f32 %v2005, 1.0
    %v2008 = vrcp.pop %v2006
    %v2009 = vmul.f32 1.0, %v2008
    %v2010 = vrcp.pop %v2007
    %v2011 = vmul.f32 1.0, %v2010
    %v2012 = vtanh.pop %v1999
    %v2014 = vrot.slane %v1912, 6
    %v2016 = vmul.f32 %v2009, %v2014
    %v2017 = vmul.f32 %v2009, %v2012
    %2019 = vrot.lane.b32.xlu0 %v2017, 64
    %v2020 = vpop.permute.xlu0 %2019
    %v2022 = vadd.f32 %v2016, %v2020
    %v2023 = vtanh.pop %v2022
    %v2024 = vmul.f32 %v2011, %v2023
    %v2026 = vrot.slane %v2024, 6
    %2027 = vrot.lane.b32.xlu0 %v2026, 64
    %v2028 = vpop.permute.xlu0 %2027
    %v2029 = vsel %vm269, %v2028, 0
    %2031 = vmatprep.subr.mxu0 %v1389
    %2032 = vmatpush1.msra.mxu0 %v1388
    %2033 = vmatprep.subr.mxu0 %v1391
    %2034 = vmatpush1.msra.mxu0 %v1390
    %2035 = vmatprep.subr.mxu0 %v1393
    %2036 = vmatpush1.msra.mxu0 %v1392
    %2037 = vmatprep.subr.mxu0 %v1395
    %2038 = vmatpush1.msra.mxu0 %v1394
    %2039 = vmatprep.subr.mxu0 %v1397
    %2040 = vmatpush1.msra.mxu0 %v1396
    %2041 = vmatprep.subr.mxu0 %v1399
    %2042 = vmatpush1.msra.mxu0 %v1398
    %2043 = vmatprep.subr.mxu0 %v1401
    %2044 = vmatpush1.msra.mxu0 %v1400
    %2045 = vmatprep.subr.mxu0 %v1403
    %2046 = vmatpush1.msra.mxu0 %v1402
    %2047 = vmatprep.subr.mxu0 0.0
    %2048 = vmatpush1.msra.mxu0 0.0
    %2049 = vmatprep.subr.mxu0 0.0
    %2050 = vmatpush1.msra.mxu0 0.0
    %2051 = vmatprep.subr.mxu0 0.0
    %2052 = vmatpush1.msra.mxu0 0.0
    %2053 = vmatprep.subr.mxu0 0.0
    %2054 = vmatpush1.msra.mxu0 0.0
    %2055 = vmatprep.subr.mxu0 0.0
    %2056 = vmatpush1.msra.mxu0 0.0
    %2057 = vmatprep.subr.mxu0 0.0
    %2058 = vmatpush1.msra.mxu0 0.0
    %2059 = vmatprep.subr.mxu0 0.0
    %2060 = vmatpush1.msra.mxu0 0.0
    %2061 = vmatprep.subr.mxu0 0.0
    %2062 = vmatpush1.msra.mxu0 0.0
    %2063 = vmatprep.subr.mxu0 0.0
    %2064 = vmatpush1.msra.mxu0 0.0
    %2065 = vmatprep.subr.mxu0 0.0
    %2066 = vmatpush1.msra.mxu0 0.0
    %2067 = vmatprep.subr.mxu0 0.0
    %2068 = vmatpush1.msra.mxu0 0.0
    %2069 = vmatprep.subr.mxu0 0.0
    %2070 = vmatpush1.msra.mxu0 0.0
    %2071 = vmatprep.subr.mxu0 0.0
    %2072 = vmatpush1.msra.mxu0 0.0
    %2073 = vmatprep.subr.mxu0 0.0
    %2074 = vmatpush1.msra.mxu0 0.0
    %2075 = vmatprep.subr.mxu0 0.0
    %2076 = vmatpush1.msra.mxu0 0.0
    %2077 = vmatprep.subr.mxu0 0.0
    %2078 = vmatpush1.msra.mxu0 0.0
    %2079 = vmatprep.subr.mxu0 0.0
    %2080 = vmatpush1.msra.mxu0 0.0
    %2081 = vmatprep.subr.mxu0 0.0
    %2082 = vmatpush1.msra.mxu0 0.0
    %2083 = vmatprep.subr.mxu0 0.0
    %2084 = vmatpush1.msra.mxu0 0.0
    %2085 = vmatprep.subr.mxu0 0.0
    %2086 = vmatpush1.msra.mxu0 0.0
    %2087 = vmatprep.subr.mxu0 0.0
    %2088 = vmatpush1.msra.mxu0 0.0
    %2089 = vmatprep.subr.mxu0 0.0
    %2090 = vmatpush1.msra.mxu0 0.0
    %2091 = vmatprep.subr.mxu0 0.0
    %2092 = vmatpush1.msra.mxu0 0.0
    %2093 = vmatprep.subr.mxu0 0.0
    %2094 = vmatpush1.msra.mxu0 0.0
    %2095 = vmatprep.mubr.f32.mxu0 0.0
    %2096 = vmatmul.mubr.f32.gmra.mrb[0].mxu0 %v2029
    %v2097 = vpop.f32.mrb[0].mxu0
    %v2098 = vadd.f32 0.0, %v2097
    %v2099 = vpop.f32.mrb[0].mxu0
    %v2100 = vadd.f32 0.0, %v2099
    %2101 = vdwg.mxu0
    %v2102 = vadd.f32 %v1599, %v2098
    %v2103 = vadd.f32 %v1600, %v2100
    %v2104 = vxor.u32 %v2102, 2147483648
    %v2105 = vxor.u32 %v2103, 2147483648
    %v2106 = vmul.f32 %v2104, 1.442695
    %v2107 = vpow.pop %v2106
    %v2108 = vmul.f32 %v2105, 1.442695
    %v2109 = vpow.pop %v2108
    %v2110 = vadd.f32 %v2107, 1.0
    %v2111 = vadd.f32 %v2109, 1.0
    %v2112 = vrcp.pop %v2110
    %v2113 = vmul.f32 1.0, %v2112
    %v2114 = vrcp.pop %v2111
    %v2115 = vmul.f32 1.0, %v2114
    %v2116 = vtanh.pop %v2103
    %v2118 = vrot.slane %v2022, 6
    %v2120 = vmul.f32 %v2113, %v2118
    %v2121 = vmul.f32 %v2113, %v2116
    %2123 = vrot.lane.b32.xlu0 %v2121, 64
    %v2124 = vpop.permute.xlu0 %2123
    %v2126 = vadd.f32 %v2120, %v2124
    %v2127 = vtanh.pop %v2126
    %v2128 = vmul.f32 %v2115, %v2127
    %2130 = vrot.lane.b32.xlu0 %v2128, 64
    %v2131 = vpop.permute.xlu0 %2130
    %v2132 = vsel %vm269, %v2131, 0
    %2134 = vmatprep.subr.mxu0 %v1389
    %2135 = vmatpush1.msra.mxu0 %v1388
    %2136 = vmatprep.subr.mxu0 %v1391
    %2137 = vmatpush1.msra.mxu0 %v1390
    %2138 = vmatprep.subr.mxu0 %v1393
    %2139 = vmatpush1.msra.mxu0 %v1392
    %2140 = vmatprep.subr.mxu0 %v1395
    %2141 = vmatpush1.msra.mxu0 %v1394
    %2142 = vmatprep.subr.mxu0 %v1397
    %2143 = vmatpush1.msra.mxu0 %v1396
    %2144 = vmatprep.subr.mxu0 %v1399
    %2145 = vmatpush1.msra.mxu0 %v1398
    %2146 = vmatprep.subr.mxu0 %v1401
    %2147 = vmatpush1.msra.mxu0 %v1400
    %2148 = vmatprep.subr.mxu0 %v1403
    %2149 = vmatpush1.msra.mxu0 %v1402
    %2150 = vmatprep.subr.mxu0 0.0
    %2151 = vmatpush1.msra.mxu0 0.0
    %2152 = vmatprep.subr.mxu0 0.0
    %2153 = vmatpush1.msra.mxu0 0.0
    %2154 = vmatprep.subr.mxu0 0.0
    %2155 = vmatpush1.msra.mxu0 0.0
    %2156 = vmatprep.subr.mxu0 0.0
    %2157 = vmatpush1.msra.mxu0 0.0
    %2158 = vmatprep.subr.mxu0 0.0
    %2159 = vmatpush1.msra.mxu0 0.0
    %2160 = vmatprep.subr.mxu0 0.0
    %2161 = vmatpush1.msra.mxu0 0.0
    %2162 = vmatprep.subr.mxu0 0.0
    %2163 = vmatpush1.msra.mxu0 0.0
    %2164 = vmatprep.subr.mxu0 0.0
    %2165 = vmatpush1.msra.mxu0 0.0
    %2166 = vmatprep.subr.mxu0 0.0
    %2167 = vmatpush1.msra.mxu0 0.0
    %2168 = vmatprep.subr.mxu0 0.0
    %2169 = vmatpush1.msra.mxu0 0.0
    %2170 = vmatprep.subr.mxu0 0.0
    %2171 = vmatpush1.msra.mxu0 0.0
    %2172 = vmatprep.subr.mxu0 0.0
    %2173 = vmatpush1.msra.mxu0 0.0
    %2174 = vmatprep.subr.mxu0 0.0
    %2175 = vmatpush1.msra.mxu0 0.0
    %2176 = vmatprep.subr.mxu0 0.0
    %2177 = vmatpush1.msra.mxu0 0.0
    %2178 = vmatprep.subr.mxu0 0.0
    %2179 = vmatpush1.msra.mxu0 0.0
    %2180 = vmatprep.subr.mxu0 0.0
    %2181 = vmatpush1.msra.mxu0 0.0
    %2182 = vmatprep.subr.mxu0 0.0
    %2183 = vmatpush1.msra.mxu0 0.0
    %2184 = vmatprep.subr.mxu0 0.0
    %2185 = vmatpush1.msra.mxu0 0.0
    %2186 = vmatprep.subr.mxu0 0.0
    %2187 = vmatpush1.msra.mxu0 0.0
    %2188 = vmatprep.subr.mxu0 0.0
    %2189 = vmatpush1.msra.mxu0 0.0
    %2190 = vmatprep.subr.mxu0 0.0
    %2191 = vmatpush1.msra.mxu0 0.0
    %2192 = vmatprep.subr.mxu0 0.0
    %2193 = vmatpush1.msra.mxu0 0.0
    %2194 = vmatprep.subr.mxu0 0.0
    %2195 = vmatpush1.msra.mxu0 0.0
    %2196 = vmatprep.subr.mxu0 0.0
    %2197 = vmatpush1.msra.mxu0 0.0
    %2198 = vmatprep.mubr.f32.mxu0 0.0
    %2199 = vmatmul.mubr.f32.gmra.mrb[0].mxu0 %v2132
    %v2200 = vpop.f32.mrb[0].mxu0
    %v2201 = vadd.f32 0.0, %v2200
    %v2202 = vpop.f32.mrb[0].mxu0
    %v2203 = vadd.f32 0.0, %v2202
    %2204 = vdwg.mxu0
    %v2207 = vrot.slane %v2201, 6
    %v2208 = vrot.slane %v2203, 6
    %v2211 = vadd.f32 %v1599, %v2207
    %v2212 = vadd.f32 %v1600, %v2208
    %v2213 = vxor.u32 %v2211, 2147483648
    %v2214 = vxor.u32 %v2212, 2147483648
    %v2215 = vmul.f32 %v2213, 1.442695
    %v2216 = vpow.pop %v2215
    %v2217 = vmul.f32 %v2214, 1.442695
    %v2218 = vpow.pop %v2217
    %v2219 = vadd.f32 %v2216, 1.0
    %v2220 = vadd.f32 %v2218, 1.0
    %v2221 = vrcp.pop %v2219
    %v2222 = vmul.f32 1.0, %v2221
    %v2223 = vrcp.pop %v2220
    %v2224 = vmul.f32 1.0, %v2223
    %v2225 = vtanh.pop %v2212
    %v2227 = vrot.slane %v2126, 6
    %v2229 = vmul.f32 %v2222, %v2227
    %v2230 = vmul.f32 %v2222, %v2225
    %2232 = vrot.lane.b32.xlu0 %v2230, 64
    %v2233 = vpop.permute.xlu0 %2232
    %v2235 = vadd.f32 %v2229, %v2233
    %v2236 = vtanh.pop %v2235
    %v2237 = vmul.f32 %v2224, %v2236
    %v2239 = vrot.slane %v2237, 2
    %2240 = vrot.lane.b32.xlu0 %v2239, 64
    %v2241 = vpop.permute.xlu0 %2240
    %v2242 = vsel %vm269, %v2241, 0
    %2244 = vmatprep.subr.mxu0 %v1389
    %2245 = vmatpush1.msra.mxu0 %v1388
    %2246 = vmatprep.subr.mxu0 %v1391
    %2247 = vmatpush1.msra.mxu0 %v1390
    %2248 = vmatprep.subr.mxu0 %v1393
    %2249 = vmatpush1.msra.mxu0 %v1392
    %2250 = vmatprep.subr.mxu0 %v1395
    %2251 = vmatpush1.msra.mxu0 %v1394
    %2252 = vmatprep.subr.mxu0 %v1397
    %2253 = vmatpush1.msra.mxu0 %v1396
    %2254 = vmatprep.subr.mxu0 %v1399
    %2255 = vmatpush1.msra.mxu0 %v1398
    %2256 = vmatprep.subr.mxu0 %v1401
    %2257 = vmatpush1.msra.mxu0 %v1400
    %2258 = vmatprep.subr.mxu0 %v1403
    %2259 = vmatpush1.msra.mxu0 %v1402
    %2260 = vmatprep.subr.mxu0 0.0
    %2261 = vmatpush1.msra.mxu0 0.0
    %2262 = vmatprep.subr.mxu0 0.0
    %2263 = vmatpush1.msra.mxu0 0.0
    %2264 = vmatprep.subr.mxu0 0.0
    %2265 = vmatpush1.msra.mxu0 0.0
    %2266 = vmatprep.subr.mxu0 0.0
    %2267 = vmatpush1.msra.mxu0 0.0
    %2268 = vmatprep.subr.mxu0 0.0
    %2269 = vmatpush1.msra.mxu0 0.0
    %2270 = vmatprep.subr.mxu0 0.0
    %2271 = vmatpush1.msra.mxu0 0.0
    %2272 = vmatprep.subr.mxu0 0.0
    %2273 = vmatpush1.msra.mxu0 0.0
    %2274 = vmatprep.subr.mxu0 0.0
    %2275 = vmatpush1.msra.mxu0 0.0
    %2276 = vmatprep.subr.mxu0 0.0
    %2277 = vmatpush1.msra.mxu0 0.0
    %2278 = vmatprep.subr.mxu0 0.0
    %2279 = vmatpush1.msra.mxu0 0.0
    %2280 = vmatprep.subr.mxu0 0.0
    %2281 = vmatpush1.msra.mxu0 0.0
    %2282 = vmatprep.subr.mxu0 0.0
    %2283 = vmatpush1.msra.mxu0 0.0
    %2284 = vmatprep.subr.mxu0 0.0
    %2285 = vmatpush1.msra.mxu0 0.0
    %2286 = vmatprep.subr.mxu0 0.0
    %2287 = vmatpush1.msra.mxu0 0.0
    %2288 = vmatprep.subr.mxu0 0.0
    %2289 = vmatpush1.msra.mxu0 0.0
    %2290 = vmatprep.subr.mxu0 0.0
    %2291 = vmatpush1.msra.mxu0 0.0
    %2292 = vmatprep.subr.mxu0 0.0
    %2293 = vmatpush1.msra.mxu0 0.0
    %2294 = vmatprep.subr.mxu0 0.0
    %2295 = vmatpush1.msra.mxu0 0.0
    %2296 = vmatprep.subr.mxu0 0.0
    %2297 = vmatpush1.msra.mxu0 0.0
    %2298 = vmatprep.subr.mxu0 0.0
    %2299 = vmatpush1.msra.mxu0 0.0
    %2300 = vmatprep.subr.mxu0 0.0
    %2301 = vmatpush1.msra.mxu0 0.0
    %2302 = vmatprep.subr.mxu0 0.0
    %2303 = vmatpush1.msra.mxu0 0.0
    %2304 = vmatprep.subr.mxu0 0.0
    %2305 = vmatpush1.msra.mxu0 0.0
    %2306 = vmatprep.subr.mxu0 0.0
    %2307 = vmatpush1.msra.mxu0 0.0
    %2308 = vmatprep.mubr.f32.mxu0 0.0
    %2309 = vmatmul.mubr.f32.gmra.mrb[0].mxu0 %v2242
    %v2310 = vpop.f32.mrb[0].mxu0
    %v2311 = vadd.f32 0.0, %v2310
    %v2312 = vpop.f32.mrb[0].mxu0
    %v2313 = vadd.f32 0.0, %v2312
    %2314 = vdwg.mxu0
    %v2317 = vrot.slane %v2311, 4
    %v2318 = vrot.slane %v2313, 4
    %v2321 = vadd.f32 %v1599, %v2317
    %v2322 = vadd.f32 %v1600, %v2318
    %v2323 = vxor.u32 %v2321, 2147483648
    %v2324 = vxor.u32 %v2322, 2147483648
    %v2325 = vmul.f32 %v2323, 1.442695
    %v2326 = vpow.pop %v2325
    %v2327 = vmul.f32 %v2324, 1.442695
    %v2328 = vpow.pop %v2327
    %v2329 = vadd.f32 %v2326, 1.0
    %v2330 = vadd.f32 %v2328, 1.0
    %v2331 = vrcp.pop %v2329
    %v2332 = vmul.f32 1.0, %v2331
    %v2333 = vrcp.pop %v2330
    %v2334 = vmul.f32 1.0, %v2333
    %v2335 = vtanh.pop %v2322
    %v2337 = vrot.slane %v2235, 6
    %v2339 = vmul.f32 %v2332, %v2337
    %v2340 = vmul.f32 %v2332, %v2335
    %2342 = vrot.lane.b32.xlu0 %v2340, 64
    %v2343 = vpop.permute.xlu0 %2342
    %v2345 = vadd.f32 %v2339, %v2343
    %v2346 = vtanh.pop %v2345
    %v2347 = vmul.f32 %v2334, %v2346
    %v2349 = vrot.slane %v2347, 4
    %2350 = vrot.lane.b32.xlu0 %v2349, 64
    %v2351 = vpop.permute.xlu0 %2350
    %v2352 = vsel %vm269, %v2351, 0
    %2354 = vmatprep.subr.mxu0 %v1389
    %2355 = vmatpush1.msra.mxu0 %v1388
    %2356 = vmatprep.subr.mxu0 %v1391
    %2357 = vmatpush1.msra.mxu0 %v1390
    %2358 = vmatprep.subr.mxu0 %v1393
    %2359 = vmatpush1.msra.mxu0 %v1392
    %2360 = vmatprep.subr.mxu0 %v1395
    %2361 = vmatpush1.msra.mxu0 %v1394
    %2362 = vmatprep.subr.mxu0 %v1397
    %2363 = vmatpush1.msra.mxu0 %v1396
    %2364 = vmatprep.subr.mxu0 %v1399
    %2365 = vmatpush1.msra.mxu0 %v1398
    %2366 = vmatprep.subr.mxu0 %v1401
    %2367 = vmatpush1.msra.mxu0 %v1400
    %2368 = vmatprep.subr.mxu0 %v1403
    %2369 = vmatpush1.msra.mxu0 %v1402
    %2370 = vmatprep.subr.mxu0 0.0
    %2371 = vmatpush1.msra.mxu0 0.0
    %2372 = vmatprep.subr.mxu0 0.0
    %2373 = vmatpush1.msra.mxu0 0.0
    %2374 = vmatprep.subr.mxu0 0.0
    %2375 = vmatpush1.msra.mxu0 0.0
    %2376 = vmatprep.subr.mxu0 0.0
    %2377 = vmatpush1.msra.mxu0 0.0
    %2378 = vmatprep.subr.mxu0 0.0
    %2379 = vmatpush1.msra.mxu0 0.0
    %2380 = vmatprep.subr.mxu0 0.0
    %2381 = vmatpush1.msra.mxu0 0.0
    %2382 = vmatprep.subr.mxu0 0.0
    %2383 = vmatpush1.msra.mxu0 0.0
    %2384 = vmatprep.subr.mxu0 0.0
    %2385 = vmatpush1.msra.mxu0 0.0
    %2386 = vmatprep.subr.mxu0 0.0
    %2387 = vmatpush1.msra.mxu0 0.0
    %2388 = vmatprep.subr.mxu0 0.0
    %2389 = vmatpush1.msra.mxu0 0.0
    %2390 = vmatprep.subr.mxu0 0.0
    %2391 = vmatpush1.msra.mxu0 0.0
    %2392 = vmatprep.subr.mxu0 0.0
    %2393 = vmatpush1.msra.mxu0 0.0
    %2394 = vmatprep.subr.mxu0 0.0
    %2395 = vmatpush1.msra.mxu0 0.0
    %2396 = vmatprep.subr.mxu0 0.0
    %2397 = vmatpush1.msra.mxu0 0.0
    %2398 = vmatprep.subr.mxu0 0.0
    %2399 = vmatpush1.msra.mxu0 0.0
    %2400 = vmatprep.subr.mxu0 0.0
    %2401 = vmatpush1.msra.mxu0 0.0
    %2402 = vmatprep.subr.mxu0 0.0
    %2403 = vmatpush1.msra.mxu0 0.0
    %2404 = vmatprep.subr.mxu0 0.0
    %2405 = vmatpush1.msra.mxu0 0.0
    %2406 = vmatprep.subr.mxu0 0.0
    %2407 = vmatpush1.msra.mxu0 0.0
    %2408 = vmatprep.subr.mxu0 0.0
    %2409 = vmatpush1.msra.mxu0 0.0
    %2410 = vmatprep.subr.mxu0 0.0
    %2411 = vmatpush1.msra.mxu0 0.0
    %2412 = vmatprep.subr.mxu0 0.0
    %2413 = vmatpush1.msra.mxu0 0.0
    %2414 = vmatprep.subr.mxu0 0.0
    %2415 = vmatpush1.msra.mxu0 0.0
    %2416 = vmatprep.subr.mxu0 0.0
    %2417 = vmatpush1.msra.mxu0 0.0
    %2418 = vmatprep.mubr.f32.mxu0 0.0
    %2419 = vmatmul.mubr.f32.gmra.mrb[0].mxu0 %v2352
    %v2420 = vpop.f32.mrb[0].mxu0
    %v2421 = vadd.f32 0.0, %v2420
    %v2422 = vpop.f32.mrb[0].mxu0
    %v2423 = vadd.f32 0.0, %v2422
    %2424 = vdwg.mxu0
    %v2427 = vrot.slane %v2421, 2
    %v2428 = vrot.slane %v2423, 2
    %v2431 = vadd.f32 %v1599, %v2427
    %v2432 = vadd.f32 %v1600, %v2428
    %v2433 = vxor.u32 %v2431, 2147483648
    %v2434 = vxor.u32 %v2432, 2147483648
    %v2435 = vmul.f32 %v2433, 1.442695
    %v2436 = vpow.pop %v2435
    %v2437 = vmul.f32 %v2434, 1.442695
    %v2438 = vpow.pop %v2437
    %v2439 = vadd.f32 %v2436, 1.0
    %v2440 = vadd.f32 %v2438, 1.0
    %v2441 = vrcp.pop %v2439
    %v2442 = vmul.f32 1.0, %v2441
    %v2443 = vrcp.pop %v2440
    %v2444 = vmul.f32 1.0, %v2443
    %v2445 = vtanh.pop %v2432
    %v2447 = vrot.slane %v2345, 6
    %v2449 = vmul.f32 %v2442, %v2447
    %v2450 = vmul.f32 %v2442, %v2445
    %2452 = vrot.lane.b32.xlu0 %v2450, 64
    %v2453 = vpop.permute.xlu0 %2452
    %v2455 = vadd.f32 %v2449, %v2453
    %v2456 = vtanh.pop %v2455
    %v2457 = vmul.f32 %v2444, %v2456
    %v2460 = vrot.slane %v2457, 6
    %2461 = vrot.lane.b32.xlu0 %v2460, 64
    %v2462 = vpop.permute.xlu0 %2461
    %v2464 = vsel %vm200, %v1698, %v2462
    %v2467 = vsel %vm200, %v1808, %v2351
    %v2470 = vsel %vm200, %v1918, %v2241
    %v2473 = vsel %vm200, %v2028, %v2131
    %v2474 = vsel %vm200, %v2131, %v2028
    %v2475 = vsel %vm200, %v2241, %v1918
    %v2476 = vsel %vm200, %v2351, %v1808
    %v2477 = vsel %vm200, %v2462, %v1698
    %v2479 = vrot.slane %v2467, 6
    %v2482 = vrot.slane %v2470, 4
    %v2485 = vrot.slane %v2473, 2
    %v2488 = vrot.slane %v2475, 6
    %v2491 = vrot.slane %v2476, 4
    %v2494 = vrot.slane %v2477, 2
    %v2496 = vsel %vm260, %v2464, %v2479
    %v2497 = vsel %vm262, %v2496, %v2482
    %v2498 = vsel %vm264, %v2497, %v2485
    %v2499 = vsel %vm260, %v2474, %v2488
    %v2500 = vsel %vm262, %v2499, %v2491
    %v2501 = vsel %vm264, %v2500, %v2494
    %s2502 = scalar_lea.vmem %s1, 256
    %v2503 = vld [vmem:[%s2502] sm:$0xff]
    %v2504 = vld [vmem:[%s2502 + $0x8] sm:$0xff]
    %v2505 = vld [vmem:[%s2502 + $0x10] sm:$0xff]
    %v2506 = vld [vmem:[%s2502 + $0x18] sm:$0xff]
    %v2507 = vld [vmem:[%s2502 + $0x20] sm:$0xff]
    %v2508 = vld [vmem:[%s2502 + $0x28] sm:$0xff]
    %v2509 = vld [vmem:[%s2502 + $0x30] sm:$0xff]
    %v2510 = vld [vmem:[%s2502 + $0x38] sm:$0xff]
    %v2511 = vld [vmem:[%s2502 + $0x40] sm:$0xff]
    %v2512 = vld [vmem:[%s2502 + $0x48] sm:$0xff]
    %v2513 = vld [vmem:[%s2502 + $0x50] sm:$0xff]
    %v2514 = vld [vmem:[%s2502 + $0x58] sm:$0xff]
    %v2515 = vld [vmem:[%s2502 + $0x60] sm:$0xff]
    %v2516 = vld [vmem:[%s2502 + $0x68] sm:$0xff]
    %v2517 = vld [vmem:[%s2502 + $0x70] sm:$0xff]
    %v2518 = vld [vmem:[%s2502 + $0x78] sm:$0xff]
    %s2519 = scalar_lea.vmem %s2, 256
    %v2520 = vld [vmem:[%s2519] sm:$0xff]
    %v2521 = vld [vmem:[%s2519 + $0x8] sm:$0xff]
    %v2522 = vld [vmem:[%s2519 + $0x10] sm:$0xff]
    %v2523 = vld [vmem:[%s2519 + $0x18] sm:$0xff]
    %v2524 = vld [vmem:[%s2519 + $0x20] sm:$0xff]
    %v2525 = vld [vmem:[%s2519 + $0x28] sm:$0xff]
    %v2526 = vld [vmem:[%s2519 + $0x30] sm:$0xff]
    %v2527 = vld [vmem:[%s2519 + $0x38] sm:$0xff]
    %v2528 = vld [vmem:[%s2519 + $0x40] sm:$0xff]
    %v2529 = vld [vmem:[%s2519 + $0x48] sm:$0xff]
    %v2530 = vld [vmem:[%s2519 + $0x50] sm:$0xff]
    %v2531 = vld [vmem:[%s2519 + $0x58] sm:$0xff]
    %v2532 = vld [vmem:[%s2519 + $0x60] sm:$0xff]
    %v2533 = vld [vmem:[%s2519 + $0x68] sm:$0xff]
    %v2534 = vld [vmem:[%s2519 + $0x70] sm:$0xff]
    %v2535 = vld [vmem:[%s2519 + $0x78] sm:$0xff]
    %s2536 = scalar_lea.vmem [#allocation2], 256
    %v2537 = vld [vmem:[%s2536] sm:$0xff]
    %v2538 = vld [vmem:[%s2536 + $0x8] sm:$0xff]
    %v2539 = vld [vmem:[%s2536 + $0x10] sm:$0xff]
    %v2540 = vld [vmem:[%s2536 + $0x18] sm:$0xff]
    %v2541 = vld [vmem:[%s2536 + $0x20] sm:$0xff]
    %v2542 = vld [vmem:[%s2536 + $0x28] sm:$0xff]
    %v2543 = vld [vmem:[%s2536 + $0x30] sm:$0xff]
    %v2544 = vld [vmem:[%s2536 + $0x38] sm:$0xff]
    %v2545 = vld [vmem:[%s2536 + $0x40] sm:$0xff]
    %v2546 = vld [vmem:[%s2536 + $0x48] sm:$0xff]
    %v2547 = vld [vmem:[%s2536 + $0x50] sm:$0xff]
    %v2548 = vld [vmem:[%s2536 + $0x58] sm:$0xff]
    %v2549 = vld [vmem:[%s2536 + $0x60] sm:$0xff]
    %v2550 = vld [vmem:[%s2536 + $0x68] sm:$0xff]
    %v2551 = vld [vmem:[%s2536 + $0x70] sm:$0xff]
    %v2552 = vld [vmem:[%s2536 + $0x78] sm:$0xff]
    %s2553 = scalar_lea.vmem [#allocation5], 4
    %v2554 = vld [vmem:[%s2553] sm:$0x3]
    %v2556 = vrot.slane %v2501, 6
    %v2558 = vrot.slane %v2501, 2
    %v2561 = vrot.slane %v2498, 6
    %v2563 = vrot.slane %v2498, 2
    %v2565 = vsel %vm260, %v2556, %v2558
    %v2566 = vsel %vm262, %v2565, %v2556
    %v2567 = vsel %vm264, %v2566, %v2558
    %v2568 = vsel %vm260, %v2561, %v2563
    %v2569 = vsel %vm262, %v2568, %v2561
    %v2570 = vsel %vm264, %v2569, %v2563
    %v2572 = vsel %vm269, %v2567, 0
    %v2575 = vsel %vm269, %v2570, 0
    %2577 = vmatprep.subr.mxu0 %v2521
    %2578 = vmatpush1.msra.mxu0 %v2520
    %2579 = vmatprep.subr.mxu0 %v2523
    %2580 = vmatpush1.msra.mxu0 %v2522
    %2581 = vmatprep.subr.mxu0 %v2525
    %2582 = vmatpush1.msra.mxu0 %v2524
    %2583 = vmatprep.subr.mxu0 %v2527
    %2584 = vmatpush1.msra.mxu0 %v2526
    %2585 = vmatprep.subr.mxu0 %v2529
    %2586 = vmatpush1.msra.mxu0 %v2528
    %2587 = vmatprep.subr.mxu0 %v2531
    %2588 = vmatpush1.msra.mxu0 %v2530
    %2589 = vmatprep.subr.mxu0 %v2533
    %2590 = vmatpush1.msra.mxu0 %v2532
    %2591 = vmatprep.subr.mxu0 %v2535
    %2592 = vmatpush1.msra.mxu0 %v2534
    %2593 = vmatprep.subr.mxu0 0.0
    %2594 = vmatpush1.msra.mxu0 0.0
    %2595 = vmatprep.subr.mxu0 0.0
    %2596 = vmatpush1.msra.mxu0 0.0
    %2597 = vmatprep.subr.mxu0 0.0
    %2598 = vmatpush1.msra.mxu0 0.0
    %2599 = vmatprep.subr.mxu0 0.0
    %2600 = vmatpush1.msra.mxu0 0.0
    %2601 = vmatprep.subr.mxu0 0.0
    %2602 = vmatpush1.msra.mxu0 0.0
    %2603 = vmatprep.subr.mxu0 0.0
    %2604 = vmatpush1.msra.mxu0 0.0
    %2605 = vmatprep.subr.mxu0 0.0
    %2606 = vmatpush1.msra.mxu0 0.0
    %2607 = vmatprep.subr.mxu0 0.0
    %2608 = vmatpush1.msra.mxu0 0.0
    %2609 = vmatprep.subr.mxu0 0.0
    %2610 = vmatpush1.msra.mxu0 0.0
    %2611 = vmatprep.subr.mxu0 0.0
    %2612 = vmatpush1.msra.mxu0 0.0
    %2613 = vmatprep.subr.mxu0 0.0
    %2614 = vmatpush1.msra.mxu0 0.0
    %2615 = vmatprep.subr.mxu0 0.0
    %2616 = vmatpush1.msra.mxu0 0.0
    %2617 = vmatprep.subr.mxu0 0.0
    %2618 = vmatpush1.msra.mxu0 0.0
    %2619 = vmatprep.subr.mxu0 0.0
    %2620 = vmatpush1.msra.mxu0 0.0
    %2621 = vmatprep.subr.mxu0 0.0
    %2622 = vmatpush1.msra.mxu0 0.0
    %2623 = vmatprep.subr.mxu0 0.0
    %2624 = vmatpush1.msra.mxu0 0.0
    %2625 = vmatprep.subr.mxu0 0.0
    %2626 = vmatpush1.msra.mxu0 0.0
    %2627 = vmatprep.subr.mxu0 0.0
    %2628 = vmatpush1.msra.mxu0 0.0
    %2629 = vmatprep.subr.mxu0 0.0
    %2630 = vmatpush1.msra.mxu0 0.0
    %2631 = vmatprep.subr.mxu0 0.0
    %2632 = vmatpush1.msra.mxu0 0.0
    %2633 = vmatprep.subr.mxu0 0.0
    %2634 = vmatpush1.msra.mxu0 0.0
    %2635 = vmatprep.subr.mxu0 0.0
    %2636 = vmatpush1.msra.mxu0 0.0
    %2637 = vmatprep.subr.mxu0 0.0
    %2638 = vmatpush1.msra.mxu0 0.0
    %2639 = vmatprep.subr.mxu0 0.0
    %2640 = vmatpush1.msra.mxu0 0.0
    %2641 = vmatprep.mubr.f32.mxu0 0.0
    %2642 = vmatmul.mubr.f32.gmra.mrb[0].mxu0 %v2572
    %v2643 = vpop.f32.mrb[0].mxu0
    %v2644 = vadd.f32 0.0, %v2643
    %v2645 = vpop.f32.mrb[0].mxu0
    %v2646 = vadd.f32 0.0, %v2645
    %2647 = vmatprep.mubr.f32.mxu0 0.0
    %2648 = vmatmul.mubr.f32.gmra.mrb[0].mxu0 %v2575
    %v2649 = vpop.f32.mrb[0].mxu0
    %v2650 = vadd.f32 0.0, %v2649
    %v2651 = vpop.f32.mrb[0].mxu0
    %v2652 = vadd.f32 0.0, %v2651
    %2653 = vdwg.mxu0
    %v2654 = vsel %vm269, %v2498, 0
    %v2656 = vsel %vm269, %v2501, 0
    %2658 = vmatprep.subr.mxu0 %v2504
    %2659 = vmatpush1.msra.mxu0 %v2503
    %2660 = vmatprep.subr.mxu0 %v2506
    %2661 = vmatpush1.msra.mxu0 %v2505
    %2662 = vmatprep.subr.mxu0 %v2508
    %2663 = vmatpush1.msra.mxu0 %v2507
    %2664 = vmatprep.subr.mxu0 %v2510
    %2665 = vmatpush1.msra.mxu0 %v2509
    %2666 = vmatprep.subr.mxu0 %v2512
    %2667 = vmatpush1.msra.mxu0 %v2511
    %2668 = vmatprep.subr.mxu0 %v2514
    %2669 = vmatpush1.msra.mxu0 %v2513
    %2670 = vmatprep.subr.mxu0 %v2516
    %2671 = vmatpush1.msra.mxu0 %v2515
    %2672 = vmatprep.subr.mxu0 %v2518
    %2673 = vmatpush1.msra.mxu0 %v2517
    %2674 = vmatprep.subr.mxu0 0.0
    %2675 = vmatpush1.msra.mxu0 0.0
    %2676 = vmatprep.subr.mxu0 0.0
    %2677 = vmatpush1.msra.mxu0 0.0
    %2678 = vmatprep.subr.mxu0 0.0
    %2679 = vmatpush1.msra.mxu0 0.0
    %2680 = vmatprep.subr.mxu0 0.0
    %2681 = vmatpush1.msra.mxu0 0.0
    %2682 = vmatprep.subr.mxu0 0.0
    %2683 = vmatpush1.msra.mxu0 0.0
    %2684 = vmatprep.subr.mxu0 0.0
    %2685 = vmatpush1.msra.mxu0 0.0
    %2686 = vmatprep.subr.mxu0 0.0
    %2687 = vmatpush1.msra.mxu0 0.0
    %2688 = vmatprep.subr.mxu0 0.0
    %2689 = vmatpush1.msra.mxu0 0.0
    %2690 = vmatprep.subr.mxu0 0.0
    %2691 = vmatpush1.msra.mxu0 0.0
    %2692 = vmatprep.subr.mxu0 0.0
    %2693 = vmatpush1.msra.mxu0 0.0
    %2694 = vmatprep.subr.mxu0 0.0
    %2695 = vmatpush1.msra.mxu0 0.0
    %2696 = vmatprep.subr.mxu0 0.0
    %2697 = vmatpush1.msra.mxu0 0.0
    %2698 = vmatprep.subr.mxu0 0.0
    %2699 = vmatpush1.msra.mxu0 0.0
    %2700 = vmatprep.subr.mxu0 0.0
    %2701 = vmatpush1.msra.mxu0 0.0
    %2702 = vmatprep.subr.mxu0 0.0
    %2703 = vmatpush1.msra.mxu0 0.0
    %2704 = vmatprep.subr.mxu0 0.0
    %2705 = vmatpush1.msra.mxu0 0.0
    %2706 = vmatprep.subr.mxu0 0.0
    %2707 = vmatpush1.msra.mxu0 0.0
    %2708 = vmatprep.subr.mxu0 0.0
    %2709 = vmatpush1.msra.mxu0 0.0
    %2710 = vmatprep.subr.mxu0 0.0
    %2711 = vmatpush1.msra.mxu0 0.0
    %2712 = vmatprep.subr.mxu0 0.0
    %2713 = vmatpush1.msra.mxu0 0.0
    %2714 = vmatprep.subr.mxu0 0.0
    %2715 = vmatpush1.msra.mxu0 0.0
    %2716 = vmatprep.subr.mxu0 0.0
    %2717 = vmatpush1.msra.mxu0 0.0
    %2718 = vmatprep.subr.mxu0 0.0
    %2719 = vmatpush1.msra.mxu0 0.0
    %2720 = vmatprep.subr.mxu0 0.0
    %2721 = vmatpush1.msra.mxu0 0.0
    %2722 = vmatprep.mubr.f32.mxu0 0.0
    %2723 = vmatmul.mubr.f32.gmra.mrb[0].mxu0 %v2654
    %v2724 = vpop.f32.mrb[0].mxu0
    %v2725 = vadd.f32 %v2644, %v2724
    %v2726 = vpop.f32.mrb[0].mxu0
    %v2727 = vadd.f32 %v2646, %v2726
    %2728 = vmatprep.mubr.f32.mxu0 0.0
    %2729 = vmatmul.mubr.f32.gmra.mrb[0].mxu0 %v2656
    %v2730 = vpop.f32.mrb[0].mxu0
    %v2731 = vadd.f32 %v2650, %v2730
    %v2732 = vpop.f32.mrb[0].mxu0
    %v2733 = vadd.f32 %v2652, %v2732
    %2734 = vdwg.mxu0
    %v2736 = vlaneseq
    %v2737 = vshrl.u32 %v2736, 7
    %v2738 = vsub.s32 0, %v2737
    %v2739 = vrot.slane %v2554, %v2738
    %v2740 = vlaneseq
    %v2741 = vshrl.u32 %v2740, 7
    %v2742 = vsub.s32 1, %v2741
    %v2743 = vrot.slane %v2554, %v2742
    %v2746 = vadd.f32 %v2725, %v2739
    %v2747 = vadd.f32 %v2727, %v2743
    %v2748 = vadd.f32 %v2731, %v2739
    %v2749 = vadd.f32 %v2733, %v2743
    %2750 = vmatprep.subr.mxu0 %v2538
    %2751 = vmatpush1.msra.mxu0 %v2537
    %2752 = vmatprep.subr.mxu0 %v2540
    %2753 = vmatpush1.msra.mxu0 %v2539
    %2754 = vmatprep.subr.mxu0 %v2542
    %2755 = vmatpush1.msra.mxu0 %v2541
    %2756 = vmatprep.subr.mxu0 %v2544
    %2757 = vmatpush1.msra.mxu0 %v2543
    %2758 = vmatprep.subr.mxu0 %v2546
    %2759 = vmatpush1.msra.mxu0 %v2545
    %2760 = vmatprep.subr.mxu0 %v2548
    %2761 = vmatpush1.msra.mxu0 %v2547
    %2762 = vmatprep.subr.mxu0 %v2550
    %2763 = vmatpush1.msra.mxu0 %v2549
    %2764 = vmatprep.subr.mxu0 %v2552
    %2765 = vmatpush1.msra.mxu0 %v2551
    %2766 = vmatprep.subr.mxu0 0.0
    %2767 = vmatpush1.msra.mxu0 0.0
    %2768 = vmatprep.subr.mxu0 0.0
    %2769 = vmatpush1.msra.mxu0 0.0
    %2770 = vmatprep.subr.mxu0 0.0
    %2771 = vmatpush1.msra.mxu0 0.0
    %2772 = vmatprep.subr.mxu0 0.0
    %2773 = vmatpush1.msra.mxu0 0.0
    %2774 = vmatprep.subr.mxu0 0.0
    %2775 = vmatpush1.msra.mxu0 0.0
    %2776 = vmatprep.subr.mxu0 0.0
    %2777 = vmatpush1.msra.mxu0 0.0
    %2778 = vmatprep.subr.mxu0 0.0
    %2779 = vmatpush1.msra.mxu0 0.0
    %2780 = vmatprep.subr.mxu0 0.0
    %2781 = vmatpush1.msra.mxu0 0.0
    %2782 = vmatprep.subr.mxu0 0.0
    %2783 = vmatpush1.msra.mxu0 0.0
    %2784 = vmatprep.subr.mxu0 0.0
    %2785 = vmatpush1.msra.mxu0 0.0
    %2786 = vmatprep.subr.mxu0 0.0
    %2787 = vmatpush1.msra.mxu0 0.0
    %2788 = vmatprep.subr.mxu0 0.0
    %2789 = vmatpush1.msra.mxu0 0.0
    %2790 = vmatprep.subr.mxu0 0.0
    %2791 = vmatpush1.msra.mxu0 0.0
    %2792 = vmatprep.subr.mxu0 0.0
    %2793 = vmatpush1.msra.mxu0 0.0
    %2794 = vmatprep.subr.mxu0 0.0
    %2795 = vmatpush1.msra.mxu0 0.0
    %2796 = vmatprep.subr.mxu0 0.0
    %2797 = vmatpush1.msra.mxu0 0.0
    %2798 = vmatprep.subr.mxu0 0.0
    %2799 = vmatpush1.msra.mxu0 0.0
    %2800 = vmatprep.subr.mxu0 0.0
    %2801 = vmatpush1.msra.mxu0 0.0
    %2802 = vmatprep.subr.mxu0 0.0
    %2803 = vmatpush1.msra.mxu0 0.0
    %2804 = vmatprep.subr.mxu0 0.0
    %2805 = vmatpush1.msra.mxu0 0.0
    %2806 = vmatprep.subr.mxu0 0.0
    %2807 = vmatpush1.msra.mxu0 0.0
    %2808 = vmatprep.subr.mxu0 0.0
    %2809 = vmatpush1.msra.mxu0 0.0
    %2810 = vmatprep.subr.mxu0 0.0
    %2811 = vmatpush1.msra.mxu0 0.0
    %2812 = vmatprep.subr.mxu0 0.0
    %2813 = vmatpush1.msra.mxu0 0.0
    %2814 = vmatprep.mubr.f32.mxu0 0.0
    %2815 = vmatmul.mubr.f32.gmra.mrb[0].mxu0 %v450
    %v2816 = vpop.f32.mrb[0].mxu0
    %v2817 = vadd.f32 0.0, %v2816
    %v2818 = vpop.f32.mrb[0].mxu0
    %v2819 = vadd.f32 0.0, %v2818
    %2820 = vdwg.mxu0
    %v2821 = vadd.f32 %v2746, %v2817
    %v2822 = vadd.f32 %v2747, %v2819
    %v2823 = vxor.u32 %v2821, 2147483648
    %v2824 = vxor.u32 %v2822, 2147483648
    %v2825 = vmul.f32 %v2823, 1.442695
    %v2826 = vpow.pop %v2825
    %v2827 = vmul.f32 %v2824, 1.442695
    %v2828 = vpow.pop %v2827
    %v2829 = vadd.f32 %v2826, 1.0
    %v2830 = vadd.f32 %v2828, 1.0
    %v2831 = vrcp.pop %v2829
    %v2832 = vmul.f32 1.0, %v2831
    %v2833 = vrcp.pop %v2830
    %v2834 = vmul.f32 1.0, %v2833
    %v2835 = vtanh.pop %v2822
    %v2836 = vmul.f32 %v2832, 0.0
    %v2837 = vmul.f32 %v2832, %v2835
    %2839 = vrot.lane.b32.xlu0 %v2837, 64
    %v2840 = vpop.permute.xlu0 %2839
    %v2842 = vadd.f32 %v2836, %v2840
    %v2843 = vtanh.pop %v2842
    %v2844 = vmul.f32 %v2834, %v2843
    %2846 = vrot.lane.b32.xlu0 %v2844, 64
    %v2847 = vpop.permute.xlu0 %2846
    %v2848 = vsel %vm269, %v2847, 0
    %2850 = vmatprep.subr.mxu0 %v2538
    %2851 = vmatpush1.msra.mxu0 %v2537
    %2852 = vmatprep.subr.mxu0 %v2540
    %2853 = vmatpush1.msra.mxu0 %v2539
    %2854 = vmatprep.subr.mxu0 %v2542
    %2855 = vmatpush1.msra.mxu0 %v2541
    %2856 = vmatprep.subr.mxu0 %v2544
    %2857 = vmatpush1.msra.mxu0 %v2543
    %2858 = vmatprep.subr.mxu0 %v2546
    %2859 = vmatpush1.msra.mxu0 %v2545
    %2860 = vmatprep.subr.mxu0 %v2548
    %2861 = vmatpush1.msra.mxu0 %v2547
    %2862 = vmatprep.subr.mxu0 %v2550
    %2863 = vmatpush1.msra.mxu0 %v2549
    %2864 = vmatprep.subr.mxu0 %v2552
    %2865 = vmatpush1.msra.mxu0 %v2551
    %2866 = vmatprep.subr.mxu0 0.0
    %2867 = vmatpush1.msra.mxu0 0.0
    %2868 = vmatprep.subr.mxu0 0.0
    %2869 = vmatpush1.msra.mxu0 0.0
    %2870 = vmatprep.subr.mxu0 0.0
    %2871 = vmatpush1.msra.mxu0 0.0
    %2872 = vmatprep.subr.mxu0 0.0
    %2873 = vmatpush1.msra.mxu0 0.0
    %2874 = vmatprep.subr.mxu0 0.0
    %2875 = vmatpush1.msra.mxu0 0.0
    %2876 = vmatprep.subr.mxu0 0.0
    %2877 = vmatpush1.msra.mxu0 0.0
    %2878 = vmatprep.subr.mxu0 0.0
    %2879 = vmatpush1.msra.mxu0 0.0
    %2880 = vmatprep.subr.mxu0 0.0
    %2881 = vmatpush1.msra.mxu0 0.0
    %2882 = vmatprep.subr.mxu0 0.0
    %2883 = vmatpush1.msra.mxu0 0.0
    %2884 = vmatprep.subr.mxu0 0.0
    %2885 = vmatpush1.msra.mxu0 0.0
    %2886 = vmatprep.subr.mxu0 0.0
    %2887 = vmatpush1.msra.mxu0 0.0
    %2888 = vmatprep.subr.mxu0 0.0
    %2889 = vmatpush1.msra.mxu0 0.0
    %2890 = vmatprep.subr.mxu0 0.0
    %2891 = vmatpush1.msra.mxu0 0.0
    %2892 = vmatprep.subr.mxu0 0.0
    %2893 = vmatpush1.msra.mxu0 0.0
    %2894 = vmatprep.subr.mxu0 0.0
    %2895 = vmatpush1.msra.mxu0 0.0
    %2896 = vmatprep.subr.mxu0 0.0
    %2897 = vmatpush1.msra.mxu0 0.0
    %2898 = vmatprep.subr.mxu0 0.0
    %2899 = vmatpush1.msra.mxu0 0.0
    %2900 = vmatprep.subr.mxu0 0.0
    %2901 = vmatpush1.msra.mxu0 0.0
    %2902 = vmatprep.subr.mxu0 0.0
    %2903 = vmatpush1.msra.mxu0 0.0
    %2904 = vmatprep.subr.mxu0 0.0
    %2905 = vmatpush1.msra.mxu0 0.0
    %2906 = vmatprep.subr.mxu0 0.0
    %2907 = vmatpush1.msra.mxu0 0.0
    %2908 = vmatprep.subr.mxu0 0.0
    %2909 = vmatpush1.msra.mxu0 0.0
    %2910 = vmatprep.subr.mxu0 0.0
    %2911 = vmatpush1.msra.mxu0 0.0
    %2912 = vmatprep.subr.mxu0 0.0
    %2913 = vmatpush1.msra.mxu0 0.0
    %2914 = vmatprep.mubr.f32.mxu0 0.0
    %2915 = vmatmul.mubr.f32.gmra.mrb[0].mxu0 %v2848
    %v2916 = vpop.f32.mrb[0].mxu0
    %v2917 = vadd.f32 0.0, %v2916
    %v2918 = vpop.f32.mrb[0].mxu0
    %v2919 = vadd.f32 0.0, %v2918
    %2920 = vdwg.mxu0
    %v2923 = vrot.slane %v2917, 6
    %v2924 = vrot.slane %v2919, 6
    %v2927 = vadd.f32 %v2746, %v2923
    %v2928 = vadd.f32 %v2747, %v2924
    %v2929 = vxor.u32 %v2927, 2147483648
    %v2930 = vxor.u32 %v2928, 2147483648
    %v2931 = vmul.f32 %v2929, 1.442695
    %v2932 = vpow.pop %v2931
    %v2933 = vmul.f32 %v2930, 1.442695
    %v2934 = vpow.pop %v2933
    %v2935 = vadd.f32 %v2932, 1.0
    %v2936 = vadd.f32 %v2934, 1.0
    %v2937 = vrcp.pop %v2935
    %v2938 = vmul.f32 1.0, %v2937
    %v2939 = vrcp.pop %v2936
    %v2940 = vmul.f32 1.0, %v2939
    %v2941 = vtanh.pop %v2928
    %v2943 = vrot.slane %v2842, 6
    %v2945 = vmul.f32 %v2938, %v2943
    %v2946 = vmul.f32 %v2938, %v2941
    %2948 = vrot.lane.b32.xlu0 %v2946, 64
    %v2949 = vpop.permute.xlu0 %2948
    %v2951 = vadd.f32 %v2945, %v2949
    %v2952 = vtanh.pop %v2951
    %v2953 = vmul.f32 %v2940, %v2952
    %v2955 = vrot.slane %v2953, 2
    %2956 = vrot.lane.b32.xlu0 %v2955, 64
    %v2957 = vpop.permute.xlu0 %2956
    %v2958 = vsel %vm269, %v2957, 0
    %2960 = vmatprep.subr.mxu0 %v2538
    %2961 = vmatpush1.msra.mxu0 %v2537
    %2962 = vmatprep.subr.mxu0 %v2540
    %2963 = vmatpush1.msra.mxu0 %v2539
    %2964 = vmatprep.subr.mxu0 %v2542
    %2965 = vmatpush1.msra.mxu0 %v2541
    %2966 = vmatprep.subr.mxu0 %v2544
    %2967 = vmatpush1.msra.mxu0 %v2543
    %2968 = vmatprep.subr.mxu0 %v2546
    %2969 = vmatpush1.msra.mxu0 %v2545
    %2970 = vmatprep.subr.mxu0 %v2548
    %2971 = vmatpush1.msra.mxu0 %v2547
    %2972 = vmatprep.subr.mxu0 %v2550
    %2973 = vmatpush1.msra.mxu0 %v2549
    %2974 = vmatprep.subr.mxu0 %v2552
    %2975 = vmatpush1.msra.mxu0 %v2551
    %2976 = vmatprep.subr.mxu0 0.0
    %2977 = vmatpush1.msra.mxu0 0.0
    %2978 = vmatprep.subr.mxu0 0.0
    %2979 = vmatpush1.msra.mxu0 0.0
    %2980 = vmatprep.subr.mxu0 0.0
    %2981 = vmatpush1.msra.mxu0 0.0
    %2982 = vmatprep.subr.mxu0 0.0
    %2983 = vmatpush1.msra.mxu0 0.0
    %2984 = vmatprep.subr.mxu0 0.0
    %2985 = vmatpush1.msra.mxu0 0.0
    %2986 = vmatprep.subr.mxu0 0.0
    %2987 = vmatpush1.msra.mxu0 0.0
    %2988 = vmatprep.subr.mxu0 0.0
    %2989 = vmatpush1.msra.mxu0 0.0
    %2990 = vmatprep.subr.mxu0 0.0
    %2991 = vmatpush1.msra.mxu0 0.0
    %2992 = vmatprep.subr.mxu0 0.0
    %2993 = vmatpush1.msra.mxu0 0.0
    %2994 = vmatprep.subr.mxu0 0.0
    %2995 = vmatpush1.msra.mxu0 0.0
    %2996 = vmatprep.subr.mxu0 0.0
    %2997 = vmatpush1.msra.mxu0 0.0
    %2998 = vmatprep.subr.mxu0 0.0
    %2999 = vmatpush1.msra.mxu0 0.0
    %3000 = vmatprep.subr.mxu0 0.0
    %3001 = vmatpush1.msra.mxu0 0.0
    %3002 = vmatprep.subr.mxu0 0.0
    %3003 = vmatpush1.msra.mxu0 0.0
    %3004 = vmatprep.subr.mxu0 0.0
    %3005 = vmatpush1.msra.mxu0 0.0
    %3006 = vmatprep.subr.mxu0 0.0
    %3007 = vmatpush1.msra.mxu0 0.0
    %3008 = vmatprep.subr.mxu0 0.0
    %3009 = vmatpush1.msra.mxu0 0.0
    %3010 = vmatprep.subr.mxu0 0.0
    %3011 = vmatpush1.msra.mxu0 0.0
    %3012 = vmatprep.subr.mxu0 0.0
    %3013 = vmatpush1.msra.mxu0 0.0
    %3014 = vmatprep.subr.mxu0 0.0
    %3015 = vmatpush1.msra.mxu0 0.0
    %3016 = vmatprep.subr.mxu0 0.0
    %3017 = vmatpush1.msra.mxu0 0.0
    %3018 = vmatprep.subr.mxu0 0.0
    %3019 = vmatpush1.msra.mxu0 0.0
    %3020 = vmatprep.subr.mxu0 0.0
    %3021 = vmatpush1.msra.mxu0 0.0
    %3022 = vmatprep.subr.mxu0 0.0
    %3023 = vmatpush1.msra.mxu0 0.0
    %3024 = vmatprep.mubr.f32.mxu0 0.0
    %3025 = vmatmul.mubr.f32.gmra.mrb[0].mxu0 %v2958
    %v3026 = vpop.f32.mrb[0].mxu0
    %v3027 = vadd.f32 0.0, %v3026
    %v3028 = vpop.f32.mrb[0].mxu0
    %v3029 = vadd.f32 0.0, %v3028
    %3030 = vdwg.mxu0
    %v3033 = vrot.slane %v3027, 4
    %v3034 = vrot.slane %v3029, 4
    %v3037 = vadd.f32 %v2746, %v3033
    %v3038 = vadd.f32 %v2747, %v3034
    %v3039 = vxor.u32 %v3037, 2147483648
    %v3040 = vxor.u32 %v3038, 2147483648
    %v3041 = vmul.f32 %v3039, 1.442695
    %v3042 = vpow.pop %v3041
    %v3043 = vmul.f32 %v3040, 1.442695
    %v3044 = vpow.pop %v3043
    %v3045 = vadd.f32 %v3042, 1.0
    %v3046 = vadd.f32 %v3044, 1.0
    %v3047 = vrcp.pop %v3045
    %v3048 = vmul.f32 1.0, %v3047
    %v3049 = vrcp.pop %v3046
    %v3050 = vmul.f32 1.0, %v3049
    %v3051 = vtanh.pop %v3038
    %v3053 = vrot.slane %v2951, 6
    %v3055 = vmul.f32 %v3048, %v3053
    %v3056 = vmul.f32 %v3048, %v3051
    %3058 = vrot.lane.b32.xlu0 %v3056, 64
    %v3059 = vpop.permute.xlu0 %3058
    %v3061 = vadd.f32 %v3055, %v3059
    %v3062 = vtanh.pop %v3061
    %v3063 = vmul.f32 %v3050, %v3062
    %v3065 = vrot.slane %v3063, 4
    %3066 = vrot.lane.b32.xlu0 %v3065, 64
    %v3067 = vpop.permute.xlu0 %3066
    %v3068 = vsel %vm269, %v3067, 0
    %3070 = vmatprep.subr.mxu0 %v2538
    %3071 = vmatpush1.msra.mxu0 %v2537
    %3072 = vmatprep.subr.mxu0 %v2540
    %3073 = vmatpush1.msra.mxu0 %v2539
    %3074 = vmatprep.subr.mxu0 %v2542
    %3075 = vmatpush1.msra.mxu0 %v2541
    %3076 = vmatprep.subr.mxu0 %v2544
    %3077 = vmatpush1.msra.mxu0 %v2543
    %3078 = vmatprep.subr.mxu0 %v2546
    %3079 = vmatpush1.msra.mxu0 %v2545
    %3080 = vmatprep.subr.mxu0 %v2548
    %3081 = vmatpush1.msra.mxu0 %v2547
    %3082 = vmatprep.subr.mxu0 %v2550
    %3083 = vmatpush1.msra.mxu0 %v2549
    %3084 = vmatprep.subr.mxu0 %v2552
    %3085 = vmatpush1.msra.mxu0 %v2551
    %3086 = vmatprep.subr.mxu0 0.0
    %3087 = vmatpush1.msra.mxu0 0.0
    %3088 = vmatprep.subr.mxu0 0.0
    %3089 = vmatpush1.msra.mxu0 0.0
    %3090 = vmatprep.subr.mxu0 0.0
    %3091 = vmatpush1.msra.mxu0 0.0
    %3092 = vmatprep.subr.mxu0 0.0
    %3093 = vmatpush1.msra.mxu0 0.0
    %3094 = vmatprep.subr.mxu0 0.0
    %3095 = vmatpush1.msra.mxu0 0.0
    %3096 = vmatprep.subr.mxu0 0.0
    %3097 = vmatpush1.msra.mxu0 0.0
    %3098 = vmatprep.subr.mxu0 0.0
    %3099 = vmatpush1.msra.mxu0 0.0
    %3100 = vmatprep.subr.mxu0 0.0
    %3101 = vmatpush1.msra.mxu0 0.0
    %3102 = vmatprep.subr.mxu0 0.0
    %3103 = vmatpush1.msra.mxu0 0.0
    %3104 = vmatprep.subr.mxu0 0.0
    %3105 = vmatpush1.msra.mxu0 0.0
    %3106 = vmatprep.subr.mxu0 0.0
    %3107 = vmatpush1.msra.mxu0 0.0
    %3108 = vmatprep.subr.mxu0 0.0
    %3109 = vmatpush1.msra.mxu0 0.0
    %3110 = vmatprep.subr.mxu0 0.0
    %3111 = vmatpush1.msra.mxu0 0.0
    %3112 = vmatprep.subr.mxu0 0.0
    %3113 = vmatpush1.msra.mxu0 0.0
    %3114 = vmatprep.subr.mxu0 0.0
    %3115 = vmatpush1.msra.mxu0 0.0
    %3116 = vmatprep.subr.mxu0 0.0
    %3117 = vmatpush1.msra.mxu0 0.0
    %3118 = vmatprep.subr.mxu0 0.0
    %3119 = vmatpush1.msra.mxu0 0.0
    %3120 = vmatprep.subr.mxu0 0.0
    %3121 = vmatpush1.msra.mxu0 0.0
    %3122 = vmatprep.subr.mxu0 0.0
    %3123 = vmatpush1.msra.mxu0 0.0
    %3124 = vmatprep.subr.mxu0 0.0
    %3125 = vmatpush1.msra.mxu0 0.0
    %3126 = vmatprep.subr.mxu0 0.0
    %3127 = vmatpush1.msra.mxu0 0.0
    %3128 = vmatprep.subr.mxu0 0.0
    %3129 = vmatpush1.msra.mxu0 0.0
    %3130 = vmatprep.subr.mxu0 0.0
    %3131 = vmatpush1.msra.mxu0 0.0
    %3132 = vmatprep.subr.mxu0 0.0
    %3133 = vmatpush1.msra.mxu0 0.0
    %3134 = vmatprep.mubr.f32.mxu0 0.0
    %3135 = vmatmul.mubr.f32.gmra.mrb[0].mxu0 %v3068
    %v3136 = vpop.f32.mrb[0].mxu0
    %v3137 = vadd.f32 0.0, %v3136
    %v3138 = vpop.f32.mrb[0].mxu0
    %v3139 = vadd.f32 0.0, %v3138
    %3140 = vdwg.mxu0
    %v3143 = vrot.slane %v3137, 2
    %v3144 = vrot.slane %v3139, 2
    %v3147 = vadd.f32 %v2746, %v3143
    %v3148 = vadd.f32 %v2747, %v3144
    %v3149 = vxor.u32 %v3147, 2147483648
    %v3150 = vxor.u32 %v3148, 2147483648
    %v3151 = vmul.f32 %v3149, 1.442695
    %v3152 = vpow.pop %v3151
    %v3153 = vmul.f32 %v3150, 1.442695
    %v3154 = vpow.pop %v3153
    %v3155 = vadd.f32 %v3152, 1.0
    %v3156 = vadd.f32 %v3154, 1.0
    %v3157 = vrcp.pop %v3155
    %v3158 = vmul.f32 1.0, %v3157
    %v3159 = vrcp.pop %v3156
    %v3160 = vmul.f32 1.0, %v3159
    %v3161 = vtanh.pop %v3148
    %v3163 = vrot.slane %v3061, 6
    %v3165 = vmul.f32 %v3158, %v3163
    %v3166 = vmul.f32 %v3158, %v3161
    %3168 = vrot.lane.b32.xlu0 %v3166, 64
    %v3169 = vpop.permute.xlu0 %3168
    %v3171 = vadd.f32 %v3165, %v3169
    %v3172 = vtanh.pop %v3171
    %v3173 = vmul.f32 %v3160, %v3172
    %v3175 = vrot.slane %v3173, 6
    %3176 = vrot.lane.b32.xlu0 %v3175, 64
    %v3177 = vpop.permute.xlu0 %3176
    %v3178 = vsel %vm269, %v3177, 0
    %3180 = vmatprep.subr.mxu0 %v2538
    %3181 = vmatpush1.msra.mxu0 %v2537
    %3182 = vmatprep.subr.mxu0 %v2540
    %3183 = vmatpush1.msra.mxu0 %v2539
    %3184 = vmatprep.subr.mxu0 %v2542
    %3185 = vmatpush1.msra.mxu0 %v2541
    %3186 = vmatprep.subr.mxu0 %v2544
    %3187 = vmatpush1.msra.mxu0 %v2543
    %3188 = vmatprep.subr.mxu0 %v2546
    %3189 = vmatpush1.msra.mxu0 %v2545
    %3190 = vmatprep.subr.mxu0 %v2548
    %3191 = vmatpush1.msra.mxu0 %v2547
    %3192 = vmatprep.subr.mxu0 %v2550
    %3193 = vmatpush1.msra.mxu0 %v2549
    %3194 = vmatprep.subr.mxu0 %v2552
    %3195 = vmatpush1.msra.mxu0 %v2551
    %3196 = vmatprep.subr.mxu0 0.0
    %3197 = vmatpush1.msra.mxu0 0.0
    %3198 = vmatprep.subr.mxu0 0.0
    %3199 = vmatpush1.msra.mxu0 0.0
    %3200 = vmatprep.subr.mxu0 0.0
    %3201 = vmatpush1.msra.mxu0 0.0
    %3202 = vmatprep.subr.mxu0 0.0
    %3203 = vmatpush1.msra.mxu0 0.0
    %3204 = vmatprep.subr.mxu0 0.0
    %3205 = vmatpush1.msra.mxu0 0.0
    %3206 = vmatprep.subr.mxu0 0.0
    %3207 = vmatpush1.msra.mxu0 0.0
    %3208 = vmatprep.subr.mxu0 0.0
    %3209 = vmatpush1.msra.mxu0 0.0
    %3210 = vmatprep.subr.mxu0 0.0
    %3211 = vmatpush1.msra.mxu0 0.0
    %3212 = vmatprep.subr.mxu0 0.0
    %3213 = vmatpush1.msra.mxu0 0.0
    %3214 = vmatprep.subr.mxu0 0.0
    %3215 = vmatpush1.msra.mxu0 0.0
    %3216 = vmatprep.subr.mxu0 0.0
    %3217 = vmatpush1.msra.mxu0 0.0
    %3218 = vmatprep.subr.mxu0 0.0
    %3219 = vmatpush1.msra.mxu0 0.0
    %3220 = vmatprep.subr.mxu0 0.0
    %3221 = vmatpush1.msra.mxu0 0.0
    %3222 = vmatprep.subr.mxu0 0.0
    %3223 = vmatpush1.msra.mxu0 0.0
    %3224 = vmatprep.subr.mxu0 0.0
    %3225 = vmatpush1.msra.mxu0 0.0
    %3226 = vmatprep.subr.mxu0 0.0
    %3227 = vmatpush1.msra.mxu0 0.0
    %3228 = vmatprep.subr.mxu0 0.0
    %3229 = vmatpush1.msra.mxu0 0.0
    %3230 = vmatprep.subr.mxu0 0.0
    %3231 = vmatpush1.msra.mxu0 0.0
    %3232 = vmatprep.subr.mxu0 0.0
    %3233 = vmatpush1.msra.mxu0 0.0
    %3234 = vmatprep.subr.mxu0 0.0
    %3235 = vmatpush1.msra.mxu0 0.0
    %3236 = vmatprep.subr.mxu0 0.0
    %3237 = vmatpush1.msra.mxu0 0.0
    %3238 = vmatprep.subr.mxu0 0.0
    %3239 = vmatpush1.msra.mxu0 0.0
    %3240 = vmatprep.subr.mxu0 0.0
    %3241 = vmatpush1.msra.mxu0 0.0
    %3242 = vmatprep.subr.mxu0 0.0
    %3243 = vmatpush1.msra.mxu0 0.0
    %3244 = vmatprep.mubr.f32.mxu0 0.0
    %3245 = vmatmul.mubr.f32.gmra.mrb[0].mxu0 %v3178
    %v3246 = vpop.f32.mrb[0].mxu0
    %v3247 = vadd.f32 0.0, %v3246
    %v3248 = vpop.f32.mrb[0].mxu0
    %v3249 = vadd.f32 0.0, %v3248
    %3250 = vdwg.mxu0
    %v3251 = vadd.f32 %v2748, %v3247
    %v3252 = vadd.f32 %v2749, %v3249
    %v3253 = vxor.u32 %v3251, 2147483648
    %v3254 = vxor.u32 %v3252, 2147483648
    %v3255 = vmul.f32 %v3253, 1.442695
    %v3256 = vpow.pop %v3255
    %v3257 = vmul.f32 %v3254, 1.442695
    %v3258 = vpow.pop %v3257
    %v3259 = vadd.f32 %v3256, 1.0
    %v3260 = vadd.f32 %v3258, 1.0
    %v3261 = vrcp.pop %v3259
    %v3262 = vmul.f32 1.0, %v3261
    %v3263 = vrcp.pop %v3260
    %v3264 = vmul.f32 1.0, %v3263
    %v3265 = vtanh.pop %v3252
    %v3267 = vrot.slane %v3171, 6
    %v3269 = vmul.f32 %v3262, %v3267
    %v3270 = vmul.f32 %v3262, %v3265
    %3272 = vrot.lane.b32.xlu0 %v3270, 64
    %v3273 = vpop.permute.xlu0 %3272
    %v3275 = vadd.f32 %v3269, %v3273
    %v3276 = vtanh.pop %v3275
    %v3277 = vmul.f32 %v3264, %v3276
    %3279 = vrot.lane.b32.xlu0 %v3277, 64
    %v3280 = vpop.permute.xlu0 %3279
    %v3281 = vsel %vm269, %v3280, 0
    %3283 = vmatprep.subr.mxu0 %v2538
    %3284 = vmatpush1.msra.mxu0 %v2537
    %3285 = vmatprep.subr.mxu0 %v2540
    %3286 = vmatpush1.msra.mxu0 %v2539
    %3287 = vmatprep.subr.mxu0 %v2542
    %3288 = vmatpush1.msra.mxu0 %v2541
    %3289 = vmatprep.subr.mxu0 %v2544
    %3290 = vmatpush1.msra.mxu0 %v2543
    %3291 = vmatprep.subr.mxu0 %v2546
    %3292 = vmatpush1.msra.mxu0 %v2545
    %3293 = vmatprep.subr.mxu0 %v2548
    %3294 = vmatpush1.msra.mxu0 %v2547
    %3295 = vmatprep.subr.mxu0 %v2550
    %3296 = vmatpush1.msra.mxu0 %v2549
    %3297 = vmatprep.subr.mxu0 %v2552
    %3298 = vmatpush1.msra.mxu0 %v2551
    %3299 = vmatprep.subr.mxu0 0.0
    %3300 = vmatpush1.msra.mxu0 0.0
    %3301 = vmatprep.subr.mxu0 0.0
    %3302 = vmatpush1.msra.mxu0 0.0
    %3303 = vmatprep.subr.mxu0 0.0
    %3304 = vmatpush1.msra.mxu0 0.0
    %3305 = vmatprep.subr.mxu0 0.0
    %3306 = vmatpush1.msra.mxu0 0.0
    %3307 = vmatprep.subr.mxu0 0.0
    %3308 = vmatpush1.msra.mxu0 0.0
    %3309 = vmatprep.subr.mxu0 0.0
    %3310 = vmatpush1.msra.mxu0 0.0
    %3311 = vmatprep.subr.mxu0 0.0
    %3312 = vmatpush1.msra.mxu0 0.0
    %3313 = vmatprep.subr.mxu0 0.0
    %3314 = vmatpush1.msra.mxu0 0.0
    %3315 = vmatprep.subr.mxu0 0.0
    %3316 = vmatpush1.msra.mxu0 0.0
    %3317 = vmatprep.subr.mxu0 0.0
    %3318 = vmatpush1.msra.mxu0 0.0
    %3319 = vmatprep.subr.mxu0 0.0
    %3320 = vmatpush1.msra.mxu0 0.0
    %3321 = vmatprep.subr.mxu0 0.0
    %3322 = vmatpush1.msra.mxu0 0.0
    %3323 = vmatprep.subr.mxu0 0.0
    %3324 = vmatpush1.msra.mxu0 0.0
    %3325 = vmatprep.subr.mxu0 0.0
    %3326 = vmatpush1.msra.mxu0 0.0
    %3327 = vmatprep.subr.mxu0 0.0
    %3328 = vmatpush1.msra.mxu0 0.0
    %3329 = vmatprep.subr.mxu0 0.0
    %3330 = vmatpush1.msra.mxu0 0.0
    %3331 = vmatprep.subr.mxu0 0.0
    %3332 = vmatpush1.msra.mxu0 0.0
    %3333 = vmatprep.subr.mxu0 0.0
    %3334 = vmatpush1.msra.mxu0 0.0
    %3335 = vmatprep.subr.mxu0 0.0
    %3336 = vmatpush1.msra.mxu0 0.0
    %3337 = vmatprep.subr.mxu0 0.0
    %3338 = vmatpush1.msra.mxu0 0.0
    %3339 = vmatprep.subr.mxu0 0.0
    %3340 = vmatpush1.msra.mxu0 0.0
    %3341 = vmatprep.subr.mxu0 0.0
    %3342 = vmatpush1.msra.mxu0 0.0
    %3343 = vmatprep.subr.mxu0 0.0
    %3344 = vmatpush1.msra.mxu0 0.0
    %3345 = vmatprep.subr.mxu0 0.0
    %3346 = vmatpush1.msra.mxu0 0.0
    %3347 = vmatprep.mubr.f32.mxu0 0.0
    %3348 = vmatmul.mubr.f32.gmra.mrb[0].mxu0 %v3281
    %v3349 = vpop.f32.mrb[0].mxu0
    %v3350 = vadd.f32 0.0, %v3349
    %v3351 = vpop.f32.mrb[0].mxu0
    %v3352 = vadd.f32 0.0, %v3351
    %3353 = vdwg.mxu0
    %v3356 = vrot.slane %v3350, 6
    %v3357 = vrot.slane %v3352, 6
    %v3360 = vadd.f32 %v2748, %v3356
    %v3361 = vadd.f32 %v2749, %v3357
    %v3362 = vxor.u32 %v3360, 2147483648
    %v3363 = vxor.u32 %v3361, 2147483648
    %v3364 = vmul.f32 %v3362, 1.442695
    %v3365 = vpow.pop %v3364
    %v3366 = vmul.f32 %v3363, 1.442695
    %v3367 = vpow.pop %v3366
    %v3368 = vadd.f32 %v3365, 1.0
    %v3369 = vadd.f32 %v3367, 1.0
    %v3370 = vrcp.pop %v3368
    %v3371 = vmul.f32 1.0, %v3370
    %v3372 = vrcp.pop %v3369
    %v3373 = vmul.f32 1.0, %v3372
    %v3374 = vtanh.pop %v3361
    %v3376 = vrot.slane %v3275, 6
    %v3378 = vmul.f32 %v3371, %v3376
    %v3379 = vmul.f32 %v3371, %v3374
    %3381 = vrot.lane.b32.xlu0 %v3379, 64
    %v3382 = vpop.permute.xlu0 %3381
    %v3384 = vadd.f32 %v3378, %v3382
    %v3385 = vtanh.pop %v3384
    %v3386 = vmul.f32 %v3373, %v3385
    %v3388 = vrot.slane %v3386, 2
    %3389 = vrot.lane.b32.xlu0 %v3388, 64
    %v3390 = vpop.permute.xlu0 %3389
    %v3391 = vsel %vm269, %v3390, 0
    %3393 = vmatprep.subr.mxu0 %v2538
    %3394 = vmatpush1.msra.mxu0 %v2537
    %3395 = vmatprep.subr.mxu0 %v2540
    %3396 = vmatpush1.msra.mxu0 %v2539
    %3397 = vmatprep.subr.mxu0 %v2542
    %3398 = vmatpush1.msra.mxu0 %v2541
    %3399 = vmatprep.subr.mxu0 %v2544
    %3400 = vmatpush1.msra.mxu0 %v2543
    %3401 = vmatprep.subr.mxu0 %v2546
    %3402 = vmatpush1.msra.mxu0 %v2545
    %3403 = vmatprep.subr.mxu0 %v2548
    %3404 = vmatpush1.msra.mxu0 %v2547
    %3405 = vmatprep.subr.mxu0 %v2550
    %3406 = vmatpush1.msra.mxu0 %v2549
    %3407 = vmatprep.subr.mxu0 %v2552
    %3408 = vmatpush1.msra.mxu0 %v2551
    %3409 = vmatprep.subr.mxu0 0.0
    %3410 = vmatpush1.msra.mxu0 0.0
    %3411 = vmatprep.subr.mxu0 0.0
    %3412 = vmatpush1.msra.mxu0 0.0
    %3413 = vmatprep.subr.mxu0 0.0
    %3414 = vmatpush1.msra.mxu0 0.0
    %3415 = vmatprep.subr.mxu0 0.0
    %3416 = vmatpush1.msra.mxu0 0.0
    %3417 = vmatprep.subr.mxu0 0.0
    %3418 = vmatpush1.msra.mxu0 0.0
    %3419 = vmatprep.subr.mxu0 0.0
    %3420 = vmatpush1.msra.mxu0 0.0
    %3421 = vmatprep.subr.mxu0 0.0
    %3422 = vmatpush1.msra.mxu0 0.0
    %3423 = vmatprep.subr.mxu0 0.0
    %3424 = vmatpush1.msra.mxu0 0.0
    %3425 = vmatprep.subr.mxu0 0.0
    %3426 = vmatpush1.msra.mxu0 0.0
    %3427 = vmatprep.subr.mxu0 0.0
    %3428 = vmatpush1.msra.mxu0 0.0
    %3429 = vmatprep.subr.mxu0 0.0
    %3430 = vmatpush1.msra.mxu0 0.0
    %3431 = vmatprep.subr.mxu0 0.0
    %3432 = vmatpush1.msra.mxu0 0.0
    %3433 = vmatprep.subr.mxu0 0.0
    %3434 = vmatpush1.msra.mxu0 0.0
    %3435 = vmatprep.subr.mxu0 0.0
    %3436 = vmatpush1.msra.mxu0 0.0
    %3437 = vmatprep.subr.mxu0 0.0
    %3438 = vmatpush1.msra.mxu0 0.0
    %3439 = vmatprep.subr.mxu0 0.0
    %3440 = vmatpush1.msra.mxu0 0.0
    %3441 = vmatprep.subr.mxu0 0.0
    %3442 = vmatpush1.msra.mxu0 0.0
    %3443 = vmatprep.subr.mxu0 0.0
    %3444 = vmatpush1.msra.mxu0 0.0
    %3445 = vmatprep.subr.mxu0 0.0
    %3446 = vmatpush1.msra.mxu0 0.0
    %3447 = vmatprep.subr.mxu0 0.0
    %3448 = vmatpush1.msra.mxu0 0.0
    %3449 = vmatprep.subr.mxu0 0.0
    %3450 = vmatpush1.msra.mxu0 0.0
    %3451 = vmatprep.subr.mxu0 0.0
    %3452 = vmatpush1.msra.mxu0 0.0
    %3453 = vmatprep.subr.mxu0 0.0
    %3454 = vmatpush1.msra.mxu0 0.0
    %3455 = vmatprep.subr.mxu0 0.0
    %3456 = vmatpush1.msra.mxu0 0.0
    %3457 = vmatprep.mubr.f32.mxu0 0.0
    %3458 = vmatmul.mubr.f32.gmra.mrb[0].mxu0 %v3391
    %v3459 = vpop.f32.mrb[0].mxu0
    %v3460 = vadd.f32 0.0, %v3459
    %v3461 = vpop.f32.mrb[0].mxu0
    %v3462 = vadd.f32 0.0, %v3461
    %3463 = vdwg.mxu0
    %v3466 = vrot.slane %v3460, 4
    %v3467 = vrot.slane %v3462, 4
    %v3470 = vadd.f32 %v2748, %v3466
    %v3471 = vadd.f32 %v2749, %v3467
    %v3472 = vxor.u32 %v3470, 2147483648
    %v3473 = vxor.u32 %v3471, 2147483648
    %v3474 = vmul.f32 %v3472, 1.442695
    %v3475 = vpow.pop %v3474
    %v3476 = vmul.f32 %v3473, 1.442695
    %v3477 = vpow.pop %v3476
    %v3478 = vadd.f32 %v3475, 1.0
    %v3479 = vadd.f32 %v3477, 1.0
    %v3480 = vrcp.pop %v3478
    %v3481 = vmul.f32 1.0, %v3480
    %v3482 = vrcp.pop %v3479
    %v3483 = vmul.f32 1.0, %v3482
    %v3484 = vtanh.pop %v3471
    %v3486 = vrot.slane %v3384, 6
    %v3488 = vmul.f32 %v3481, %v3486
    %v3489 = vmul.f32 %v3481, %v3484
    %3491 = vrot.lane.b32.xlu0 %v3489, 64
    %v3492 = vpop.permute.xlu0 %3491
    %v3494 = vadd.f32 %v3488, %v3492
    %v3495 = vtanh.pop %v3494
    %v3496 = vmul.f32 %v3483, %v3495
    %v3498 = vrot.slane %v3496, 4
    %3499 = vrot.lane.b32.xlu0 %v3498, 64
    %v3500 = vpop.permute.xlu0 %3499
    %v3501 = vsel %vm269, %v3500, 0
    %3503 = vmatprep.subr.mxu0 %v2538
    %3504 = vmatpush1.msra.mxu0 %v2537
    %3505 = vmatprep.subr.mxu0 %v2540
    %3506 = vmatpush1.msra.mxu0 %v2539
    %3507 = vmatprep.subr.mxu0 %v2542
    %3508 = vmatpush1.msra.mxu0 %v2541
    %3509 = vmatprep.subr.mxu0 %v2544
    %3510 = vmatpush1.msra.mxu0 %v2543
    %3511 = vmatprep.subr.mxu0 %v2546
    %3512 = vmatpush1.msra.mxu0 %v2545
    %3513 = vmatprep.subr.mxu0 %v2548
    %3514 = vmatpush1.msra.mxu0 %v2547
    %3515 = vmatprep.subr.mxu0 %v2550
    %3516 = vmatpush1.msra.mxu0 %v2549
    %3517 = vmatprep.subr.mxu0 %v2552
    %3518 = vmatpush1.msra.mxu0 %v2551
    %3519 = vmatprep.subr.mxu0 0.0
    %3520 = vmatpush1.msra.mxu0 0.0
    %3521 = vmatprep.subr.mxu0 0.0
    %3522 = vmatpush1.msra.mxu0 0.0
    %3523 = vmatprep.subr.mxu0 0.0
    %3524 = vmatpush1.msra.mxu0 0.0
    %3525 = vmatprep.subr.mxu0 0.0
    %3526 = vmatpush1.msra.mxu0 0.0
    %3527 = vmatprep.subr.mxu0 0.0
    %3528 = vmatpush1.msra.mxu0 0.0
    %3529 = vmatprep.subr.mxu0 0.0
    %3530 = vmatpush1.msra.mxu0 0.0
    %3531 = vmatprep.subr.mxu0 0.0
    %3532 = vmatpush1.msra.mxu0 0.0
    %3533 = vmatprep.subr.mxu0 0.0
    %3534 = vmatpush1.msra.mxu0 0.0
    %3535 = vmatprep.subr.mxu0 0.0
    %3536 = vmatpush1.msra.mxu0 0.0
    %3537 = vmatprep.subr.mxu0 0.0
    %3538 = vmatpush1.msra.mxu0 0.0
    %3539 = vmatprep.subr.mxu0 0.0
    %3540 = vmatpush1.msra.mxu0 0.0
    %3541 = vmatprep.subr.mxu0 0.0
    %3542 = vmatpush1.msra.mxu0 0.0
    %3543 = vmatprep.subr.mxu0 0.0
    %3544 = vmatpush1.msra.mxu0 0.0
    %3545 = vmatprep.subr.mxu0 0.0
    %3546 = vmatpush1.msra.mxu0 0.0
    %3547 = vmatprep.subr.mxu0 0.0
    %3548 = vmatpush1.msra.mxu0 0.0
    %3549 = vmatprep.subr.mxu0 0.0
    %3550 = vmatpush1.msra.mxu0 0.0
    %3551 = vmatprep.subr.mxu0 0.0
    %3552 = vmatpush1.msra.mxu0 0.0
    %3553 = vmatprep.subr.mxu0 0.0
    %3554 = vmatpush1.msra.mxu0 0.0
    %3555 = vmatprep.subr.mxu0 0.0
    %3556 = vmatpush1.msra.mxu0 0.0
    %3557 = vmatprep.subr.mxu0 0.0
    %3558 = vmatpush1.msra.mxu0 0.0
    %3559 = vmatprep.subr.mxu0 0.0
    %3560 = vmatpush1.msra.mxu0 0.0
    %3561 = vmatprep.subr.mxu0 0.0
    %3562 = vmatpush1.msra.mxu0 0.0
    %3563 = vmatprep.subr.mxu0 0.0
    %3564 = vmatpush1.msra.mxu0 0.0
    %3565 = vmatprep.subr.mxu0 0.0
    %3566 = vmatpush1.msra.mxu0 0.0
    %3567 = vmatprep.mubr.f32.mxu0 0.0
    %3568 = vmatmul.mubr.f32.gmra.mrb[0].mxu0 %v3501
    %v3569 = vpop.f32.mrb[0].mxu0
    %v3570 = vadd.f32 0.0, %v3569
    %v3571 = vpop.f32.mrb[0].mxu0
    %v3572 = vadd.f32 0.0, %v3571
    %3573 = vdwg.mxu0
    %v3576 = vrot.slane %v3570, 2
    %v3577 = vrot.slane %v3572, 2
    %v3580 = vadd.f32 %v2748, %v3576
    %v3581 = vadd.f32 %v2749, %v3577
    %v3582 = vxor.u32 %v3580, 2147483648
    %v3583 = vxor.u32 %v3581, 2147483648
    %v3584 = vmul.f32 %v3582, 1.442695
    %v3585 = vpow.pop %v3584
    %v3586 = vmul.f32 %v3583, 1.442695
    %v3587 = vpow.pop %v3586
    %v3588 = vadd.f32 %v3585, 1.0
    %v3589 = vadd.f32 %v3587, 1.0
    %v3590 = vrcp.pop %v3588
    %v3591 = vmul.f32 1.0, %v3590
    %v3592 = vrcp.pop %v3589
    %v3593 = vmul.f32 1.0, %v3592
    %v3594 = vtanh.pop %v3581
    %v3596 = vrot.slane %v3494, 6
    %v3598 = vmul.f32 %v3591, %v3596
    %v3599 = vmul.f32 %v3591, %v3594
    %3601 = vrot.lane.b32.xlu0 %v3599, 64
    %v3602 = vpop.permute.xlu0 %3601
    %v3604 = vadd.f32 %v3598, %v3602
    %v3605 = vtanh.pop %v3604
    %v3606 = vmul.f32 %v3593, %v3605
    %v3609 = vrot.slane %v3606, 6
    %3610 = vrot.lane.b32.xlu0 %v3609, 64
    %v3611 = vpop.permute.xlu0 %3610
    %v3613 = vsel %vm200, %v2847, %v3611
    %v3616 = vsel %vm200, %v2957, %v3500
    %v3619 = vsel %vm200, %v3067, %v3390
    %v3622 = vsel %vm200, %v3177, %v3280
    %v3623 = vsel %vm200, %v3280, %v3177
    %v3624 = vsel %vm200, %v3390, %v3067
    %v3625 = vsel %vm200, %v3500, %v2957
    %v3626 = vsel %vm200, %v3611, %v2847
    %v3628 = vrot.slane %v3616, 6
    %v3631 = vrot.slane %v3619, 4
    %v3634 = vrot.slane %v3622, 2
    %v3637 = vrot.slane %v3624, 6
    %v3640 = vrot.slane %v3625, 4
    %v3643 = vrot.slane %v3626, 2
    %v3645 = vsel %vm260, %v3613, %v3628
    %v3646 = vsel %vm262, %v3645, %v3631
    %v3647 = vsel %vm264, %v3646, %v3634
    %v3648 = vsel %vm260, %v3623, %v3637
    %v3649 = vsel %vm262, %v3648, %v3640
    %v3650 = vsel %vm264, %v3649, %v3643
    %v3651 = vld [vmem:[#allocation7] sm:$0xff]
    %v3652 = vld [vmem:[#allocation7 + $0x8] sm:$0xff]
    %v3653 = vld [vmem:[#allocation7 + $0x10] sm:$0xff]
    %v3654 = vld [vmem:[#allocation7 + $0x18] sm:$0xff]
    %v3655 = vld [vmem:[#allocation7 + $0x20] sm:$0xff]
    %v3656 = vld [vmem:[#allocation7 + $0x28] sm:$0xff]
    %v3657 = vld [vmem:[#allocation7 + $0x30] sm:$0xff]
    %v3658 = vld [vmem:[#allocation7 + $0x38] sm:$0xff]
    %v3659 = vld [vmem:[#allocation7 + $0x40] sm:$0xff]
    %v3660 = vld [vmem:[#allocation7 + $0x48] sm:$0xff]
    %v3661 = vld [vmem:[#allocation7 + $0x50] sm:$0xff]
    %v3662 = vld [vmem:[#allocation7 + $0x58] sm:$0xff]
    %v3663 = vld [vmem:[#allocation7 + $0x60] sm:$0xff]
    %v3664 = vld [vmem:[#allocation7 + $0x68] sm:$0xff]
    %v3665 = vld [vmem:[#allocation7 + $0x70] sm:$0xff]
    %v3666 = vld [vmem:[#allocation7 + $0x78] sm:$0xff]
    %v3667 = vld [vmem:[%s6] sm:$0x3]
    %v3669 = vlaneseq
    %v3670 = vshrl.u32 %v3669, 7
    %v3671 = vsub.s32 0, %v3670
    %v3672 = vrot.slane %v3667, %v3671
    %v3673 = vlaneseq
    %v3674 = vshrl.u32 %v3673, 7
    %v3675 = vsub.s32 1, %v3674
    %v3676 = vrot.slane %v3667, %v3675
    %v3680 = vsel %vm269, %v3647, 0
    %v3683 = vsel %vm269, %v3650, 0
    %3685 = vmatprep.subr.mxu0 %v3652
    %3686 = vmatpush1.msra.mxu0 %v3651
    %3687 = vmatprep.subr.mxu0 %v3654
    %3688 = vmatpush1.msra.mxu0 %v3653
    %3689 = vmatprep.subr.mxu0 %v3656
    %3690 = vmatpush1.msra.mxu0 %v3655
    %3691 = vmatprep.subr.mxu0 %v3658
    %3692 = vmatpush1.msra.mxu0 %v3657
    %3693 = vmatprep.subr.mxu0 %v3660
    %3694 = vmatpush1.msra.mxu0 %v3659
    %3695 = vmatprep.subr.mxu0 %v3662
    %3696 = vmatpush1.msra.mxu0 %v3661
    %3697 = vmatprep.subr.mxu0 %v3664
    %3698 = vmatpush1.msra.mxu0 %v3663
    %3699 = vmatprep.subr.mxu0 %v3666
    %3700 = vmatpush1.msra.mxu0 %v3665
    %3701 = vmatprep.subr.mxu0 0.0
    %3702 = vmatpush1.msra.mxu0 0.0
    %3703 = vmatprep.subr.mxu0 0.0
    %3704 = vmatpush1.msra.mxu0 0.0
    %3705 = vmatprep.subr.mxu0 0.0
    %3706 = vmatpush1.msra.mxu0 0.0
    %3707 = vmatprep.subr.mxu0 0.0
    %3708 = vmatpush1.msra.mxu0 0.0
    %3709 = vmatprep.subr.mxu0 0.0
    %3710 = vmatpush1.msra.mxu0 0.0
    %3711 = vmatprep.subr.mxu0 0.0
    %3712 = vmatpush1.msra.mxu0 0.0
    %3713 = vmatprep.subr.mxu0 0.0
    %3714 = vmatpush1.msra.mxu0 0.0
    %3715 = vmatprep.subr.mxu0 0.0
    %3716 = vmatpush1.msra.mxu0 0.0
    %3717 = vmatprep.subr.mxu0 0.0
    %3718 = vmatpush1.msra.mxu0 0.0
    %3719 = vmatprep.subr.mxu0 0.0
    %3720 = vmatpush1.msra.mxu0 0.0
    %3721 = vmatprep.subr.mxu0 0.0
    %3722 = vmatpush1.msra.mxu0 0.0
    %3723 = vmatprep.subr.mxu0 0.0
    %3724 = vmatpush1.msra.mxu0 0.0
    %3725 = vmatprep.subr.mxu0 0.0
    %3726 = vmatpush1.msra.mxu0 0.0
    %3727 = vmatprep.subr.mxu0 0.0
    %3728 = vmatpush1.msra.mxu0 0.0
    %3729 = vmatprep.subr.mxu0 0.0
    %3730 = vmatpush1.msra.mxu0 0.0
    %3731 = vmatprep.subr.mxu0 0.0
    %3732 = vmatpush1.msra.mxu0 0.0
    %3733 = vmatprep.subr.mxu0 0.0
    %3734 = vmatpush1.msra.mxu0 0.0
    %3735 = vmatprep.subr.mxu0 0.0
    %3736 = vmatpush1.msra.mxu0 0.0
    %3737 = vmatprep.subr.mxu0 0.0
    %3738 = vmatpush1.msra.mxu0 0.0
    %3739 = vmatprep.subr.mxu0 0.0
    %3740 = vmatpush1.msra.mxu0 0.0
    %3741 = vmatprep.subr.mxu0 0.0
    %3742 = vmatpush1.msra.mxu0 0.0
    %3743 = vmatprep.subr.mxu0 0.0
    %3744 = vmatpush1.msra.mxu0 0.0
    %3745 = vmatprep.subr.mxu0 0.0
    %3746 = vmatpush1.msra.mxu0 0.0
    %3747 = vmatprep.subr.mxu0 0.0
    %3748 = vmatpush1.msra.mxu0 0.0
    %3749 = vmatprep.mubr.f32.mxu0 0.0
    %3750 = vmatmul.mubr.f32.gmra.mrb[0].mxu0 %v3680
    %v3751 = vpop.f32.mrb[0].mxu0
    %v3752 = vadd.f32 %v3672, %v3751
    %v3753 = vpop.f32.mrb[0].mxu0
    %v3754 = vadd.f32 %v3676, %v3753
    %3755 = vmatprep.mubr.f32.mxu0 0.0
    %3756 = vmatmul.mubr.f32.gmra.mrb[0].mxu0 %v3683
    %v3757 = vpop.f32.mrb[0].mxu0
    %v3758 = vadd.f32 %v3672, %v3757
    %v3759 = vpop.f32.mrb[0].mxu0
    %v3760 = vadd.f32 %v3676, %v3759
    %3761 = vdwg.mxu0
    %v3762 = vmul.f32 %v3752, 0.35355338
    %v3763 = vmul.f32 %v3758, 0.35355338
    %v3764 = vlaneseq
    %v3765 = vshrl.u32 %v3764, 7
    %v3766 = vadd.s32 %v3765, 8
    %vm3767 = vcmp.lt.s32.totalorder %v3765, 0
    %v3768 = vsub.s32 0, %v3765
    %v3769 = vsel %vm3767, %v3768, %v3765
    %v3770 = vshrl.u32 %v3769, 1
    %v3771 = vand.u32 %v3769, 1
    %v3772 = vsub.s32 0, %v3771
    %v3773 = vsel %vm3767, %v3772, %v3771
    %vm3774 = vcmp.lt.s32.totalorder %v3766, 0
    %v3775 = vsub.s32 0, %v3766
    %v3776 = vsel %vm3774, %v3775, %v3766
    %v3777 = vshrl.u32 %v3776, 1
    %v3778 = vand.u32 %v3776, 1
    %v3779 = vsub.s32 0, %v3778
    %v3780 = vsel %vm3774, %v3779, %v3778
    %vm3781 = vcmp.ne.s32.totalorder %v3773, 0
    %vm3782 = vcmp.ne.s32.totalorder %v3780, 0
    %vm3783 = vcmp.lt.s32.totalorder %v3773, 0
    %vm3784 = vcmp.lt.s32.totalorder %v3780, 0
    %vm3785 = vmand %vm3783, %vm3781
    %vm3786 = vmand %vm3784, %vm3782
    %v3787 = vadd.s32 %v3773, 2
    %v3788 = vadd.s32 %v3780, 2
    %v3789 = vsel %vm3785, %v3787, %v3773
    %v3790 = vsel %vm3786, %v3788, %v3780
    %vm3791 = vcmp.lt.s32.totalorder %v199, 0
    %v3792 = vsub.s32 0, %v199
    %v3793 = vsel %vm3791, %v3792, %v199
    %v3794 = vshrl.u32 %v3793, 1
    %v3795 = vand.u32 %v3793, 1
    %v3796 = vsub.s32 0, %v3795
    %v3797 = vsel %vm3791, %v3796, %v3795
    %vm3798 = vcmp.ne.s32.totalorder %v3797, 0
    %vm3799 = vcmp.lt.s32.totalorder %v3797, 0
    %vm3800 = vmand %vm3799, %vm3798
    %v3801 = vadd.s32 %v3797, 2
    %v3802 = vsel %vm3800, %v3801, %v3797
    %vm3803 = vcmp.eq.s32.totalorder %v3789, %v3802
    %vm3804 = vcmp.eq.s32.totalorder %v3790, %v3802
    %3807 = vrot.lane.b32.xlu0 %v3752, 64
    %v3808 = vpop.permute.xlu0 %3807
    %3809 = vrot.lane.b32.xlu0 %v3758, 64
    %v3810 = vpop.permute.xlu0 %3809
    %vm3811 = vcmask 64512
    %v3813 = vsel %vm3811, %v3762, 0
    %v3816 = vsel %vm3811, %v3763, 0
    %v3818 = vsel %vm3811, %v3808, 0
    %v3820 = vsel %vm3811, %v3810, 0
    %3822 = vmatprep.subr.mxu0 0.0
    %3823 = vmatpush1.xpose.msra.mxu0 %v3818
    %3824 = vmatprep.subr.mxu0 0.0
    %3825 = vmatpush1.xpose.msra.mxu0 %v3820
    %3826 = vmatprep.subr.mxu0 0.0
    %3827 = vmatpush1.xpose.msra.mxu0 0.0
    %3828 = vmatprep.subr.mxu0 0.0
    %3829 = vmatpush1.xpose.msra.mxu0 0.0
    %3830 = vmatprep.subr.mxu0 0.0
    %3831 = vmatpush1.xpose.msra.mxu0 0.0
    %3832 = vmatprep.subr.mxu0 0.0
    %3833 = vmatpush1.xpose.msra.mxu0 0.0
    %3834 = vmatprep.subr.mxu0 0.0
    %3835 = vmatpush1.xpose.msra.mxu0 0.0
    %3836 = vmatprep.subr.mxu0 0.0
    %3837 = vmatpush1.xpose.msra.mxu0 0.0
    %3838 = vmatprep.subr.mxu0 0.0
    %3839 = vmatpush1.xpose.msra.mxu0 0.0
    %3840 = vmatprep.subr.mxu0 0.0
    %3841 = vmatpush1.xpose.msra.mxu0 0.0
    %3842 = vmatprep.subr.mxu0 0.0
    %3843 = vmatpush1.xpose.msra.mxu0 0.0
    %3844 = vmatprep.subr.mxu0 0.0
    %3845 = vmatpush1.xpose.msra.mxu0 0.0
    %3846 = vmatprep.subr.mxu0 0.0
    %3847 = vmatpush1.xpose.msra.mxu0 0.0
    %3848 = vmatprep.subr.mxu0 0.0
    %3849 = vmatpush1.xpose.msra.mxu0 0.0
    %3850 = vmatprep.subr.mxu0 0.0
    %3851 = vmatpush1.xpose.msra.mxu0 0.0
    %3852 = vmatprep.subr.mxu0 0.0
    %3853 = vmatpush1.xpose.msra.mxu0 0.0
    %3854 = vmatprep.subr.mxu0 0.0
    %3855 = vmatpush1.xpose.msra.mxu0 0.0
    %3856 = vmatprep.subr.mxu0 0.0
    %3857 = vmatpush1.xpose.msra.mxu0 0.0
    %3858 = vmatprep.subr.mxu0 0.0
    %3859 = vmatpush1.xpose.msra.mxu0 0.0
    %3860 = vmatprep.subr.mxu0 0.0
    %3861 = vmatpush1.xpose.msra.mxu0 0.0
    %3862 = vmatprep.subr.mxu0 0.0
    %3863 = vmatpush1.xpose.msra.mxu0 0.0
    %3864 = vmatprep.subr.mxu0 0.0
    %3865 = vmatpush1.xpose.msra.mxu0 0.0
    %3866 = vmatprep.subr.mxu0 0.0
    %3867 = vmatpush1.xpose.msra.mxu0 0.0
    %3868 = vmatprep.subr.mxu0 0.0
    %3869 = vmatpush1.xpose.msra.mxu0 0.0
    %3870 = vmatprep.subr.mxu0 0.0
    %3871 = vmatpush1.xpose.msra.mxu0 0.0
    %3872 = vmatprep.subr.mxu0 0.0
    %3873 = vmatpush1.xpose.msra.mxu0 0.0
    %3874 = vmatprep.subr.mxu0 0.0
    %3875 = vmatpush1.xpose.msra.mxu0 0.0
    %3876 = vmatprep.subr.mxu0 0.0
    %3877 = vmatpush1.xpose.msra.mxu0 0.0
    %3878 = vmatprep.subr.mxu0 0.0
    %3879 = vmatpush1.xpose.msra.mxu0 0.0
    %3880 = vmatprep.subr.mxu0 0.0
    %3881 = vmatpush1.xpose.msra.mxu0 0.0
    %3882 = vmatprep.subr.mxu0 0.0
    %3883 = vmatpush1.xpose.msra.mxu0 0.0
    %3884 = vmatprep.subr.mxu0 0.0
    %3885 = vmatpush1.xpose.msra.mxu0 0.0
    %3886 = vmatprep.mubr.f32.mxu0 0.0
    %3887 = vmatmul.mubr.f32.gmra.mrb[0].mxu0 %v3813
    %v3888 = vpop.f32.mrb[0].mxu0
    %v3889 = vadd.f32 0.0, %v3888
    %v3890 = vpop.f32.mrb[0].mxu0
    %3891 = vmatprep.mubr.f32.mxu0 0.0
    %3892 = vmatmul.mubr.f32.gmra.mrb[0].mxu0 %v3816
    %v3893 = vpop.f32.mrb[0].mxu0
    %v3894 = vadd.f32 0.0, %v3893
    %v3895 = vpop.f32.mrb[0].mxu0
    %3896 = vdwg.mxu0
    %v3897 = vsel %vm3803, %v3889, -1e+30
    %v3898 = vsel %vm3804, %v3894, -1e+30
    %vm3899 = vcmask 130048
    %v3900 = vsel %vm3899, %v3897, -inf
    %3901 = vmax.xlane.f32.xlu0 %v3900
    %v3902 = vpop.xlane.xlu0 %3901
    %v3903 = vsel %vm3899, %v3898, -inf
    %3904 = vmax.xlane.f32.xlu0 %v3903
    %v3905 = vpop.xlane.xlu0 %3904
    %v3906 = vsub.f32 %v3897, %v3902
    %v3907 = vsub.f32 %v3898, %v3905
    %v3908 = vmul.f32 %v3906, 1.442695
    %v3909 = vpow.pop %v3908
    %v3910 = vmul.f32 %v3907, 1.442695
    %v3911 = vpow.pop %v3910
    %v3912 = vsel %vm3899, %v3909, 0.0
    %3913 = vadd.xlane.f32.xlu0 %v3912
    %v3914 = vpop.xlane.xlu0 %3913
    %v3915 = vsel %vm3899, %v3911, 0.0
    %3916 = vadd.xlane.f32.xlu0 %v3915
    %v3917 = vpop.xlane.xlu0 %3916
    %v3918 = vrcp.pop %v3914
    %v3919 = vmul.f32 %v3909, %v3918
    %v3920 = vrcp.pop %v3917
    %v3921 = vmul.f32 %v3911, %v3920
    %v3923 = vsel %vm3899, %v3919, 0
    %v3926 = vsel %vm3899, %v3921, 0
    %3928 = vmatprep.subr.mxu0 0.0
    %3929 = vmatpush1.msra.mxu0 %v3754
    %3930 = vmatprep.subr.mxu0 0.0
    %3931 = vmatpush1.msra.mxu0 %v3760
    %3932 = vmatprep.subr.mxu0 0.0
    %3933 = vmatpush1.msra.mxu0 0.0
    %3934 = vmatprep.subr.mxu0 0.0
    %3935 = vmatpush1.msra.mxu0 0.0
    %3936 = vmatprep.subr.mxu0 0.0
    %3937 = vmatpush1.msra.mxu0 0.0
    %3938 = vmatprep.subr.mxu0 0.0
    %3939 = vmatpush1.msra.mxu0 0.0
    %3940 = vmatprep.subr.mxu0 0.0
    %3941 = vmatpush1.msra.mxu0 0.0
    %3942 = vmatprep.subr.mxu0 0.0
    %3943 = vmatpush1.msra.mxu0 0.0
    %3944 = vmatprep.subr.mxu0 0.0
    %3945 = vmatpush1.msra.mxu0 0.0
    %3946 = vmatprep.subr.mxu0 0.0
    %3947 = vmatpush1.msra.mxu0 0.0
    %3948 = vmatprep.subr.mxu0 0.0
    %3949 = vmatpush1.msra.mxu0 0.0
    %3950 = vmatprep.subr.mxu0 0.0
    %3951 = vmatpush1.msra.mxu0 0.0
    %3952 = vmatprep.subr.mxu0 0.0
    %3953 = vmatpush1.msra.mxu0 0.0
    %3954 = vmatprep.subr.mxu0 0.0
    %3955 = vmatpush1.msra.mxu0 0.0
    %3956 = vmatprep.subr.mxu0 0.0
    %3957 = vmatpush1.msra.mxu0 0.0
    %3958 = vmatprep.subr.mxu0 0.0
    %3959 = vmatpush1.msra.mxu0 0.0
    %3960 = vmatprep.subr.mxu0 0.0
    %3961 = vmatpush1.msra.mxu0 0.0
    %3962 = vmatprep.subr.mxu0 0.0
    %3963 = vmatpush1.msra.mxu0 0.0
    %3964 = vmatprep.subr.mxu0 0.0
    %3965 = vmatpush1.msra.mxu0 0.0
    %3966 = vmatprep.subr.mxu0 0.0
    %3967 = vmatpush1.msra.mxu0 0.0
    %3968 = vmatprep.subr.mxu0 0.0
    %3969 = vmatpush1.msra.mxu0 0.0
    %3970 = vmatprep.subr.mxu0 0.0
    %3971 = vmatpush1.msra.mxu0 0.0
    %3972 = vmatprep.subr.mxu0 0.0
    %3973 = vmatpush1.msra.mxu0 0.0
    %3974 = vmatprep.subr.mxu0 0.0
    %3975 = vmatpush1.msra.mxu0 0.0
    %3976 = vmatprep.subr.mxu0 0.0
    %3977 = vmatpush1.msra.mxu0 0.0
    %3978 = vmatprep.subr.mxu0 0.0
    %3979 = vmatpush1.msra.mxu0 0.0
    %3980 = vmatprep.subr.mxu0 0.0
    %3981 = vmatpush1.msra.mxu0 0.0
    %3982 = vmatprep.subr.mxu0 0.0
    %3983 = vmatpush1.msra.mxu0 0.0
    %3984 = vmatprep.subr.mxu0 0.0
    %3985 = vmatpush1.msra.mxu0 0.0
    %3986 = vmatprep.subr.mxu0 0.0
    %3987 = vmatpush1.msra.mxu0 0.0
    %3988 = vmatprep.subr.mxu0 0.0
    %3989 = vmatpush1.msra.mxu0 0.0
    %3990 = vmatprep.subr.mxu0 0.0
    %3991 = vmatpush1.msra.mxu0 0.0
    %3992 = vmatprep.mubr.f32.mxu0 0.0
    %3993 = vmatmul.mubr.f32.gmra.mrb[0].mxu0 %v3923
    %v3994 = vpop.f32.mrb[0].mxu0
    %v3995 = vadd.f32 0.0, %v3994
    %v3996 = vpop.f32.mrb[0].mxu0
    %3997 = vmatprep.mubr.f32.mxu0 0.0
    %3998 = vmatmul.mubr.f32.gmra.mrb[0].mxu0 %v3926
    %v3999 = vpop.f32.mrb[0].mxu0
    %v4000 = vadd.f32 0.0, %v3999
    %v4001 = vpop.f32.mrb[0].mxu0
    %4002 = vdwg.mxu0
    %4003 = vrot.lane.b32.xlu0 %v3762, 120
    %v4004 = vpop.permute.xlu0 %4003
    %4005 = vrot.lane.b32.xlu0 %v3763, 120
    %v4006 = vpop.permute.xlu0 %4005
    %4007 = vrot.lane.b32.xlu0 %v3752, 56
    %v4008 = vpop.permute.xlu0 %4007
    %4009 = vrot.lane.b32.xlu0 %v3758, 56
    %v4010 = vpop.permute.xlu0 %4009
    %v4011 = vsel %vm3811, %v4004, 0
    %v4013 = vsel %vm3811, %v4006, 0
    %v4015 = vsel %vm3811, %v4008, 0
    %v4017 = vsel %vm3811, %v4010, 0
    %4019 = vmatprep.subr.mxu0 0.0
    %4020 = vmatpush1.xpose.msra.mxu0 %v4015
    %4021 = vmatprep.subr.mxu0 0.0
    %4022 = vmatpush1.xpose.msra.mxu0 %v4017
    %4023 = vmatprep.subr.mxu0 0.0
    %4024 = vmatpush1.xpose.msra.mxu0 0.0
    %4025 = vmatprep.subr.mxu0 0.0
    %4026 = vmatpush1.xpose.msra.mxu0 0.0
    %4027 = vmatprep.subr.mxu0 0.0
    %4028 = vmatpush1.xpose.msra.mxu0 0.0
    %4029 = vmatprep.subr.mxu0 0.0
    %4030 = vmatpush1.xpose.msra.mxu0 0.0
    %4031 = vmatprep.subr.mxu0 0.0
    %4032 = vmatpush1.xpose.msra.mxu0 0.0
    %4033 = vmatprep.subr.mxu0 0.0
    %4034 = vmatpush1.xpose.msra.mxu0 0.0
    %4035 = vmatprep.subr.mxu0 0.0
    %4036 = vmatpush1.xpose.msra.mxu0 0.0
    %4037 = vmatprep.subr.mxu0 0.0
    %4038 = vmatpush1.xpose.msra.mxu0 0.0
    %4039 = vmatprep.subr.mxu0 0.0
    %4040 = vmatpush1.xpose.msra.mxu0 0.0
    %4041 = vmatprep.subr.mxu0 0.0
    %4042 = vmatpush1.xpose.msra.mxu0 0.0
    %4043 = vmatprep.subr.mxu0 0.0
    %4044 = vmatpush1.xpose.msra.mxu0 0.0
    %4045 = vmatprep.subr.mxu0 0.0
    %4046 = vmatpush1.xpose.msra.mxu0 0.0
    %4047 = vmatprep.subr.mxu0 0.0
    %4048 = vmatpush1.xpose.msra.mxu0 0.0
    %4049 = vmatprep.subr.mxu0 0.0
    %4050 = vmatpush1.xpose.msra.mxu0 0.0
    %4051 = vmatprep.subr.mxu0 0.0
    %4052 = vmatpush1.xpose.msra.mxu0 0.0
    %4053 = vmatprep.subr.mxu0 0.0
    %4054 = vmatpush1.xpose.msra.mxu0 0.0
    %4055 = vmatprep.subr.mxu0 0.0
    %4056 = vmatpush1.xpose.msra.mxu0 0.0
    %4057 = vmatprep.subr.mxu0 0.0
    %4058 = vmatpush1.xpose.msra.mxu0 0.0
    %4059 = vmatprep.subr.mxu0 0.0
    %4060 = vmatpush1.xpose.msra.mxu0 0.0
    %4061 = vmatprep.subr.mxu0 0.0
    %4062 = vmatpush1.xpose.msra.mxu0 0.0
    %4063 = vmatprep.subr.mxu0 0.0
    %4064 = vmatpush1.xpose.msra.mxu0 0.0
    %4065 = vmatprep.subr.mxu0 0.0
    %4066 = vmatpush1.xpose.msra.mxu0 0.0
    %4067 = vmatprep.subr.mxu0 0.0
    %4068 = vmatpush1.xpose.msra.mxu0 0.0
    %4069 = vmatprep.subr.mxu0 0.0
    %4070 = vmatpush1.xpose.msra.mxu0 0.0
    %4071 = vmatprep.subr.mxu0 0.0
    %4072 = vmatpush1.xpose.msra.mxu0 0.0
    %4073 = vmatprep.subr.mxu0 0.0
    %4074 = vmatpush1.xpose.msra.mxu0 0.0
    %4075 = vmatprep.subr.mxu0 0.0
    %4076 = vmatpush1.xpose.msra.mxu0 0.0
    %4077 = vmatprep.subr.mxu0 0.0
    %4078 = vmatpush1.xpose.msra.mxu0 0.0
    %4079 = vmatprep.subr.mxu0 0.0
    %4080 = vmatpush1.xpose.msra.mxu0 0.0
    %4081 = vmatprep.subr.mxu0 0.0
    %4082 = vmatpush1.xpose.msra.mxu0 0.0
    %4083 = vmatprep.mubr.f32.mxu0 0.0
    %4084 = vmatmul.mubr.f32.gmra.mrb[0].mxu0 %v4011
    %v4085 = vpop.f32.mrb[0].mxu0
    %v4086 = vadd.f32 0.0, %v4085
    %v4087 = vpop.f32.mrb[0].mxu0
    %4088 = vmatprep.mubr.f32.mxu0 0.0
    %4089 = vmatmul.mubr.f32.gmra.mrb[0].mxu0 %v4013
    %v4090 = vpop.f32.mrb[0].mxu0
    %v4091 = vadd.f32 0.0, %v4090
    %v4092 = vpop.f32.mrb[0].mxu0
    %4093 = vdwg.mxu0
    %v4094 = vsel %vm3803, %v4086, -1e+30
    %v4095 = vsel %vm3804, %v4091, -1e+30
    %v4096 = vsel %vm3899, %v4094, -inf
    %4097 = vmax.xlane.f32.xlu0 %v4096
    %v4098 = vpop.xlane.xlu0 %4097
    %v4099 = vsel %vm3899, %v4095, -inf
    %4100 = vmax.xlane.f32.xlu0 %v4099
    %v4101 = vpop.xlane.xlu0 %4100
    %v4102 = vsub.f32 %v4094, %v4098
    %v4103 = vsub.f32 %v4095, %v4101
    %v4104 = vmul.f32 %v4102, 1.442695
    %v4105 = vpow.pop %v4104
    %v4106 = vmul.f32 %v4103, 1.442695
    %v4107 = vpow.pop %v4106
    %v4108 = vsel %vm3899, %v4105, 0.0
    %4109 = vadd.xlane.f32.xlu0 %v4108
    %v4110 = vpop.xlane.xlu0 %4109
    %v4111 = vsel %vm3899, %v4107, 0.0
    %4112 = vadd.xlane.f32.xlu0 %v4111
    %v4113 = vpop.xlane.xlu0 %4112
    %v4114 = vrcp.pop %v4110
    %v4115 = vmul.f32 %v4105, %v4114
    %v4116 = vrcp.pop %v4113
    %v4117 = vmul.f32 %v4107, %v4116
    %4120 = vrot.lane.b32.xlu0 %v3754, 120
    %v4121 = vpop.permute.xlu0 %4120
    %4122 = vrot.lane.b32.xlu0 %v3760, 120
    %v4123 = vpop.permute.xlu0 %4122
    %v4127 = vsel %vm3899, %v4115, 0
    %v4130 = vsel %vm3899, %v4117, 0
    %4132 = vmatprep.subr.mxu0 0.0
    %4133 = vmatpush1.msra.mxu0 %v4121
    %4134 = vmatprep.subr.mxu0 0.0
    %4135 = vmatpush1.msra.mxu0 %v4123
    %4136 = vmatprep.subr.mxu0 0.0
    %4137 = vmatpush1.msra.mxu0 0.0
    %4138 = vmatprep.subr.mxu0 0.0
    %4139 = vmatpush1.msra.mxu0 0.0
    %4140 = vmatprep.subr.mxu0 0.0
    %4141 = vmatpush1.msra.mxu0 0.0
    %4142 = vmatprep.subr.mxu0 0.0
    %4143 = vmatpush1.msra.mxu0 0.0
    %4144 = vmatprep.subr.mxu0 0.0
    %4145 = vmatpush1.msra.mxu0 0.0
    %4146 = vmatprep.subr.mxu0 0.0
    %4147 = vmatpush1.msra.mxu0 0.0
    %4148 = vmatprep.subr.mxu0 0.0
    %4149 = vmatpush1.msra.mxu0 0.0
    %4150 = vmatprep.subr.mxu0 0.0
    %4151 = vmatpush1.msra.mxu0 0.0
    %4152 = vmatprep.subr.mxu0 0.0
    %4153 = vmatpush1.msra.mxu0 0.0
    %4154 = vmatprep.subr.mxu0 0.0
    %4155 = vmatpush1.msra.mxu0 0.0
    %4156 = vmatprep.subr.mxu0 0.0
    %4157 = vmatpush1.msra.mxu0 0.0
    %4158 = vmatprep.subr.mxu0 0.0
    %4159 = vmatpush1.msra.mxu0 0.0
    %4160 = vmatprep.subr.mxu0 0.0
    %4161 = vmatpush1.msra.mxu0 0.0
    %4162 = vmatprep.subr.mxu0 0.0
    %4163 = vmatpush1.msra.mxu0 0.0
    %4164 = vmatprep.subr.mxu0 0.0
    %4165 = vmatpush1.msra.mxu0 0.0
    %4166 = vmatprep.subr.mxu0 0.0
    %4167 = vmatpush1.msra.mxu0 0.0
    %4168 = vmatprep.subr.mxu0 0.0
    %4169 = vmatpush1.msra.mxu0 0.0
    %4170 = vmatprep.subr.mxu0 0.0
    %4171 = vmatpush1.msra.mxu0 0.0
    %4172 = vmatprep.subr.mxu0 0.0
    %4173 = vmatpush1.msra.mxu0 0.0
    %4174 = vmatprep.subr.mxu0 0.0
    %4175 = vmatpush1.msra.mxu0 0.0
    %4176 = vmatprep.subr.mxu0 0.0
    %4177 = vmatpush1.msra.mxu0 0.0
    %4178 = vmatprep.subr.mxu0 0.0
    %4179 = vmatpush1.msra.mxu0 0.0
    %4180 = vmatprep.subr.mxu0 0.0
    %4181 = vmatpush1.msra.mxu0 0.0
    %4182 = vmatprep.subr.mxu0 0.0
    %4183 = vmatpush1.msra.mxu0 0.0
    %4184 = vmatprep.subr.mxu0 0.0
    %4185 = vmatpush1.msra.mxu0 0.0
    %4186 = vmatprep.subr.mxu0 0.0
    %4187 = vmatpush1.msra.mxu0 0.0
    %4188 = vmatprep.subr.mxu0 0.0
    %4189 = vmatpush1.msra.mxu0 0.0
    %4190 = vmatprep.subr.mxu0 0.0
    %4191 = vmatpush1.msra.mxu0 0.0
    %4192 = vmatprep.subr.mxu0 0.0
    %4193 = vmatpush1.msra.mxu0 0.0
    %4194 = vmatprep.subr.mxu0 0.0
    %4195 = vmatpush1.msra.mxu0 0.0
    %4196 = vmatprep.mubr.f32.mxu0 0.0
    %4197 = vmatmul.mubr.f32.gmra.mrb[0].mxu0 %v4127
    %v4198 = vpop.f32.mrb[0].mxu0
    %v4199 = vadd.f32 0.0, %v4198
    %v4200 = vpop.f32.mrb[0].mxu0
    %4201 = vmatprep.mubr.f32.mxu0 0.0
    %4202 = vmatmul.mubr.f32.gmra.mrb[0].mxu0 %v4130
    %v4203 = vpop.f32.mrb[0].mxu0
    %v4204 = vadd.f32 0.0, %v4203
    %v4205 = vpop.f32.mrb[0].mxu0
    %4206 = vdwg.mxu0
    %4207 = vrot.lane.b32.xlu0 %v3762, 112
    %v4208 = vpop.permute.xlu0 %4207
    %4209 = vrot.lane.b32.xlu0 %v3763, 112
    %v4210 = vpop.permute.xlu0 %4209
    %4211 = vrot.lane.b32.xlu0 %v3752, 48
    %v4212 = vpop.permute.xlu0 %4211
    %4213 = vrot.lane.b32.xlu0 %v3758, 48
    %v4214 = vpop.permute.xlu0 %4213
    %v4215 = vsel %vm3811, %v4208, 0
    %v4217 = vsel %vm3811, %v4210, 0
    %v4219 = vsel %vm3811, %v4212, 0
    %v4221 = vsel %vm3811, %v4214, 0
    %4223 = vmatprep.subr.mxu0 0.0
    %4224 = vmatpush1.xpose.msra.mxu0 %v4219
    %4225 = vmatprep.subr.mxu0 0.0
    %4226 = vmatpush1.xpose.msra.mxu0 %v4221
    %4227 = vmatprep.subr.mxu0 0.0
    %4228 = vmatpush1.xpose.msra.mxu0 0.0
    %4229 = vmatprep.subr.mxu0 0.0
    %4230 = vmatpush1.xpose.msra.mxu0 0.0
    %4231 = vmatprep.subr.mxu0 0.0
    %4232 = vmatpush1.xpose.msra.mxu0 0.0
    %4233 = vmatprep.subr.mxu0 0.0
    %4234 = vmatpush1.xpose.msra.mxu0 0.0
    %4235 = vmatprep.subr.mxu0 0.0
    %4236 = vmatpush1.xpose.msra.mxu0 0.0
    %4237 = vmatprep.subr.mxu0 0.0
    %4238 = vmatpush1.xpose.msra.mxu0 0.0
    %4239 = vmatprep.subr.mxu0 0.0
    %4240 = vmatpush1.xpose.msra.mxu0 0.0
    %4241 = vmatprep.subr.mxu0 0.0
    %4242 = vmatpush1.xpose.msra.mxu0 0.0
    %4243 = vmatprep.subr.mxu0 0.0
    %4244 = vmatpush1.xpose.msra.mxu0 0.0
    %4245 = vmatprep.subr.mxu0 0.0
    %4246 = vmatpush1.xpose.msra.mxu0 0.0
    %4247 = vmatprep.subr.mxu0 0.0
    %4248 = vmatpush1.xpose.msra.mxu0 0.0
    %4249 = vmatprep.subr.mxu0 0.0
    %4250 = vmatpush1.xpose.msra.mxu0 0.0
    %4251 = vmatprep.subr.mxu0 0.0
    %4252 = vmatpush1.xpose.msra.mxu0 0.0
    %4253 = vmatprep.subr.mxu0 0.0
    %4254 = vmatpush1.xpose.msra.mxu0 0.0
    %4255 = vmatprep.subr.mxu0 0.0
    %4256 = vmatpush1.xpose.msra.mxu0 0.0
    %4257 = vmatprep.subr.mxu0 0.0
    %4258 = vmatpush1.xpose.msra.mxu0 0.0
    %4259 = vmatprep.subr.mxu0 0.0
    %4260 = vmatpush1.xpose.msra.mxu0 0.0
    %4261 = vmatprep.subr.mxu0 0.0
    %4262 = vmatpush1.xpose.msra.mxu0 0.0
    %4263 = vmatprep.subr.mxu0 0.0
    %4264 = vmatpush1.xpose.msra.mxu0 0.0
    %4265 = vmatprep.subr.mxu0 0.0
    %4266 = vmatpush1.xpose.msra.mxu0 0.0
    %4267 = vmatprep.subr.mxu0 0.0
    %4268 = vmatpush1.xpose.msra.mxu0 0.0
    %4269 = vmatprep.subr.mxu0 0.0
    %4270 = vmatpush1.xpose.msra.mxu0 0.0
    %4271 = vmatprep.subr.mxu0 0.0
    %4272 = vmatpush1.xpose.msra.mxu0 0.0
    %4273 = vmatprep.subr.mxu0 0.0
    %4274 = vmatpush1.xpose.msra.mxu0 0.0
    %4275 = vmatprep.subr.mxu0 0.0
    %4276 = vmatpush1.xpose.msra.mxu0 0.0
    %4277 = vmatprep.subr.mxu0 0.0
    %4278 = vmatpush1.xpose.msra.mxu0 0.0
    %4279 = vmatprep.subr.mxu0 0.0
    %4280 = vmatpush1.xpose.msra.mxu0 0.0
    %4281 = vmatprep.subr.mxu0 0.0
    %4282 = vmatpush1.xpose.msra.mxu0 0.0
    %4283 = vmatprep.subr.mxu0 0.0
    %4284 = vmatpush1.xpose.msra.mxu0 0.0
    %4285 = vmatprep.subr.mxu0 0.0
    %4286 = vmatpush1.xpose.msra.mxu0 0.0
    %4287 = vmatprep.mubr.f32.mxu0 0.0
    %4288 = vmatmul.mubr.f32.gmra.mrb[0].mxu0 %v4215
    %v4289 = vpop.f32.mrb[0].mxu0
    %v4290 = vadd.f32 0.0, %v4289
    %v4291 = vpop.f32.mrb[0].mxu0
    %4292 = vmatprep.mubr.f32.mxu0 0.0
    %4293 = vmatmul.mubr.f32.gmra.mrb[0].mxu0 %v4217
    %v4294 = vpop.f32.mrb[0].mxu0
    %v4295 = vadd.f32 0.0, %v4294
    %v4296 = vpop.f32.mrb[0].mxu0
    %4297 = vdwg.mxu0
    %v4298 = vsel %vm3803, %v4290, -1e+30
    %v4299 = vsel %vm3804, %v4295, -1e+30
    %v4300 = vsel %vm3899, %v4298, -inf
    %4301 = vmax.xlane.f32.xlu0 %v4300
    %v4302 = vpop.xlane.xlu0 %4301
    %v4303 = vsel %vm3899, %v4299, -inf
    %4304 = vmax.xlane.f32.xlu0 %v4303
    %v4305 = vpop.xlane.xlu0 %4304
    %v4306 = vsub.f32 %v4298, %v4302
    %v4307 = vsub.f32 %v4299, %v4305
    %v4308 = vmul.f32 %v4306, 1.442695
    %v4309 = vpow.pop %v4308
    %v4310 = vmul.f32 %v4307, 1.442695
    %v4311 = vpow.pop %v4310
    %v4312 = vsel %vm3899, %v4309, 0.0
    %4313 = vadd.xlane.f32.xlu0 %v4312
    %v4314 = vpop.xlane.xlu0 %4313
    %v4315 = vsel %vm3899, %v4311, 0.0
    %4316 = vadd.xlane.f32.xlu0 %v4315
    %v4317 = vpop.xlane.xlu0 %4316
    %v4318 = vrcp.pop %v4314
    %v4319 = vmul.f32 %v4309, %v4318
    %v4320 = vrcp.pop %v4317
    %v4321 = vmul.f32 %v4311, %v4320
    %4322 = vrot.lane.b32.xlu0 %v3754, 112
    %v4323 = vpop.permute.xlu0 %4322
    %4324 = vrot.lane.b32.xlu0 %v3760, 112
    %v4325 = vpop.permute.xlu0 %4324
    %v4329 = vsel %vm3899, %v4319, 0
    %v4332 = vsel %vm3899, %v4321, 0
    %4334 = vmatprep.subr.mxu0 0.0
    %4335 = vmatpush1.msra.mxu0 %v4323
    %4336 = vmatprep.subr.mxu0 0.0
    %4337 = vmatpush1.msra.mxu0 %v4325
    %4338 = vmatprep.subr.mxu0 0.0
    %4339 = vmatpush1.msra.mxu0 0.0
    %4340 = vmatprep.subr.mxu0 0.0
    %4341 = vmatpush1.msra.mxu0 0.0
    %4342 = vmatprep.subr.mxu0 0.0
    %4343 = vmatpush1.msra.mxu0 0.0
    %4344 = vmatprep.subr.mxu0 0.0
    %4345 = vmatpush1.msra.mxu0 0.0
    %4346 = vmatprep.subr.mxu0 0.0
    %4347 = vmatpush1.msra.mxu0 0.0
    %4348 = vmatprep.subr.mxu0 0.0
    %4349 = vmatpush1.msra.mxu0 0.0
    %4350 = vmatprep.subr.mxu0 0.0
    %4351 = vmatpush1.msra.mxu0 0.0
    %4352 = vmatprep.subr.mxu0 0.0
    %4353 = vmatpush1.msra.mxu0 0.0
    %4354 = vmatprep.subr.mxu0 0.0
    %4355 = vmatpush1.msra.mxu0 0.0
    %4356 = vmatprep.subr.mxu0 0.0
    %4357 = vmatpush1.msra.mxu0 0.0
    %4358 = vmatprep.subr.mxu0 0.0
    %4359 = vmatpush1.msra.mxu0 0.0
    %4360 = vmatprep.subr.mxu0 0.0
    %4361 = vmatpush1.msra.mxu0 0.0
    %4362 = vmatprep.subr.mxu0 0.0
    %4363 = vmatpush1.msra.mxu0 0.0
    %4364 = vmatprep.subr.mxu0 0.0
    %4365 = vmatpush1.msra.mxu0 0.0
    %4366 = vmatprep.subr.mxu0 0.0
    %4367 = vmatpush1.msra.mxu0 0.0
    %4368 = vmatprep.subr.mxu0 0.0
    %4369 = vmatpush1.msra.mxu0 0.0
    %4370 = vmatprep.subr.mxu0 0.0
    %4371 = vmatpush1.msra.mxu0 0.0
    %4372 = vmatprep.subr.mxu0 0.0
    %4373 = vmatpush1.msra.mxu0 0.0
    %4374 = vmatprep.subr.mxu0 0.0
    %4375 = vmatpush1.msra.mxu0 0.0
    %4376 = vmatprep.subr.mxu0 0.0
    %4377 = vmatpush1.msra.mxu0 0.0
    %4378 = vmatprep.subr.mxu0 0.0
    %4379 = vmatpush1.msra.mxu0 0.0
    %4380 = vmatprep.subr.mxu0 0.0
    %4381 = vmatpush1.msra.mxu0 0.0
    %4382 = vmatprep.subr.mxu0 0.0
    %4383 = vmatpush1.msra.mxu0 0.0
    %4384 = vmatprep.subr.mxu0 0.0
    %4385 = vmatpush1.msra.mxu0 0.0
    %4386 = vmatprep.subr.mxu0 0.0
    %4387 = vmatpush1.msra.mxu0 0.0
    %4388 = vmatprep.subr.mxu0 0.0
    %4389 = vmatpush1.msra.mxu0 0.0
    %4390 = vmatprep.subr.mxu0 0.0
    %4391 = vmatpush1.msra.mxu0 0.0
    %4392 = vmatprep.subr.mxu0 0.0
    %4393 = vmatpush1.msra.mxu0 0.0
    %4394 = vmatprep.subr.mxu0 0.0
    %4395 = vmatpush1.msra.mxu0 0.0
    %4396 = vmatprep.subr.mxu0 0.0
    %4397 = vmatpush1.msra.mxu0 0.0
    %4398 = vmatprep.mubr.f32.mxu0 0.0
    %4399 = vmatmul.mubr.f32.gmra.mrb[0].mxu0 %v4329
    %v4400 = vpop.f32.mrb[0].mxu0
    %v4401 = vadd.f32 0.0, %v4400
    %v4402 = vpop.f32.mrb[0].mxu0
    %4403 = vmatprep.mubr.f32.mxu0 0.0
    %4404 = vmatmul.mubr.f32.gmra.mrb[0].mxu0 %v4332
    %v4405 = vpop.f32.mrb[0].mxu0
    %v4406 = vadd.f32 0.0, %v4405
    %v4407 = vpop.f32.mrb[0].mxu0
    %4408 = vdwg.mxu0
    %4409 = vrot.lane.b32.xlu0 %v3762, 104
    %v4410 = vpop.permute.xlu0 %4409
    %4411 = vrot.lane.b32.xlu0 %v3763, 104
    %v4412 = vpop.permute.xlu0 %4411
    %4413 = vrot.lane.b32.xlu0 %v3752, 40
    %v4414 = vpop.permute.xlu0 %4413
    %4415 = vrot.lane.b32.xlu0 %v3758, 40
    %v4416 = vpop.permute.xlu0 %4415
    %v4417 = vsel %vm3811, %v4410, 0
    %v4419 = vsel %vm3811, %v4412, 0
    %v4421 = vsel %vm3811, %v4414, 0
    %v4423 = vsel %vm3811, %v4416, 0
    %4425 = vmatprep.subr.mxu0 0.0
    %4426 = vmatpush1.xpose.msra.mxu0 %v4421
    %4427 = vmatprep.subr.mxu0 0.0
    %4428 = vmatpush1.xpose.msra.mxu0 %v4423
    %4429 = vmatprep.subr.mxu0 0.0
    %4430 = vmatpush1.xpose.msra.mxu0 0.0
    %4431 = vmatprep.subr.mxu0 0.0
    %4432 = vmatpush1.xpose.msra.mxu0 0.0
    %4433 = vmatprep.subr.mxu0 0.0
    %4434 = vmatpush1.xpose.msra.mxu0 0.0
    %4435 = vmatprep.subr.mxu0 0.0
    %4436 = vmatpush1.xpose.msra.mxu0 0.0
    %4437 = vmatprep.subr.mxu0 0.0
    %4438 = vmatpush1.xpose.msra.mxu0 0.0
    %4439 = vmatprep.subr.mxu0 0.0
    %4440 = vmatpush1.xpose.msra.mxu0 0.0
    %4441 = vmatprep.subr.mxu0 0.0
    %4442 = vmatpush1.xpose.msra.mxu0 0.0
    %4443 = vmatprep.subr.mxu0 0.0
    %4444 = vmatpush1.xpose.msra.mxu0 0.0
    %4445 = vmatprep.subr.mxu0 0.0
    %4446 = vmatpush1.xpose.msra.mxu0 0.0
    %4447 = vmatprep.subr.mxu0 0.0
    %4448 = vmatpush1.xpose.msra.mxu0 0.0
    %4449 = vmatprep.subr.mxu0 0.0
    %4450 = vmatpush1.xpose.msra.mxu0 0.0
    %4451 = vmatprep.subr.mxu0 0.0
    %4452 = vmatpush1.xpose.msra.mxu0 0.0
    %4453 = vmatprep.subr.mxu0 0.0
    %4454 = vmatpush1.xpose.msra.mxu0 0.0
    %4455 = vmatprep.subr.mxu0 0.0
    %4456 = vmatpush1.xpose.msra.mxu0 0.0
    %4457 = vmatprep.subr.mxu0 0.0
    %4458 = vmatpush1.xpose.msra.mxu0 0.0
    %4459 = vmatprep.subr.mxu0 0.0
    %4460 = vmatpush1.xpose.msra.mxu0 0.0
    %4461 = vmatprep.subr.mxu0 0.0
    %4462 = vmatpush1.xpose.msra.mxu0 0.0
    %4463 = vmatprep.subr.mxu0 0.0
    %4464 = vmatpush1.xpose.msra.mxu0 0.0
    %4465 = vmatprep.subr.mxu0 0.0
    %4466 = vmatpush1.xpose.msra.mxu0 0.0
    %4467 = vmatprep.subr.mxu0 0.0
    %4468 = vmatpush1.xpose.msra.mxu0 0.0
    %4469 = vmatprep.subr.mxu0 0.0
    %4470 = vmatpush1.xpose.msra.mxu0 0.0
    %4471 = vmatprep.subr.mxu0 0.0
    %4472 = vmatpush1.xpose.msra.mxu0 0.0
    %4473 = vmatprep.subr.mxu0 0.0
    %4474 = vmatpush1.xpose.msra.mxu0 0.0
    %4475 = vmatprep.subr.mxu0 0.0
    %4476 = vmatpush1.xpose.msra.mxu0 0.0
    %4477 = vmatprep.subr.mxu0 0.0
    %4478 = vmatpush1.xpose.msra.mxu0 0.0
    %4479 = vmatprep.subr.mxu0 0.0
    %4480 = vmatpush1.xpose.msra.mxu0 0.0
    %4481 = vmatprep.subr.mxu0 0.0
    %4482 = vmatpush1.xpose.msra.mxu0 0.0
    %4483 = vmatprep.subr.mxu0 0.0
    %4484 = vmatpush1.xpose.msra.mxu0 0.0
    %4485 = vmatprep.subr.mxu0 0.0
    %4486 = vmatpush1.xpose.msra.mxu0 0.0
    %4487 = vmatprep.subr.mxu0 0.0
    %4488 = vmatpush1.xpose.msra.mxu0 0.0
    %4489 = vmatprep.mubr.f32.mxu0 0.0
    %4490 = vmatmul.mubr.f32.gmra.mrb[0].mxu0 %v4417
    %v4491 = vpop.f32.mrb[0].mxu0
    %v4492 = vadd.f32 0.0, %v4491
    %v4493 = vpop.f32.mrb[0].mxu0
    %4494 = vmatprep.mubr.f32.mxu0 0.0
    %4495 = vmatmul.mubr.f32.gmra.mrb[0].mxu0 %v4419
    %v4496 = vpop.f32.mrb[0].mxu0
    %v4497 = vadd.f32 0.0, %v4496
    %v4498 = vpop.f32.mrb[0].mxu0
    %4499 = vdwg.mxu0
    %v4500 = vsel %vm3803, %v4492, -1e+30
    %v4501 = vsel %vm3804, %v4497, -1e+30
    %v4502 = vsel %vm3899, %v4500, -inf
    %4503 = vmax.xlane.f32.xlu0 %v4502
    %v4504 = vpop.xlane.xlu0 %4503
    %v4505 = vsel %vm3899, %v4501, -inf
    %4506 = vmax.xlane.f32.xlu0 %v4505
    %v4507 = vpop.xlane.xlu0 %4506
    %v4508 = vsub.f32 %v4500, %v4504
    %v4509 = vsub.f32 %v4501, %v4507
    %v4510 = vmul.f32 %v4508, 1.442695
    %v4511 = vpow.pop %v4510
    %v4512 = vmul.f32 %v4509, 1.442695
    %v4513 = vpow.pop %v4512
    %v4514 = vsel %vm3899, %v4511, 0.0
    %4515 = vadd.xlane.f32.xlu0 %v4514
    %v4516 = vpop.xlane.xlu0 %4515
    %v4517 = vsel %vm3899, %v4513, 0.0
    %4518 = vadd.xlane.f32.xlu0 %v4517
    %v4519 = vpop.xlane.xlu0 %4518
    %v4520 = vrcp.pop %v4516
    %v4521 = vmul.f32 %v4511, %v4520
    %v4522 = vrcp.pop %v4519
    %v4523 = vmul.f32 %v4513, %v4522
    %4524 = vrot.lane.b32.xlu0 %v3754, 104
    %v4525 = vpop.permute.xlu0 %4524
    %4526 = vrot.lane.b32.xlu0 %v3760, 104
    %v4527 = vpop.permute.xlu0 %4526
    %v4531 = vsel %vm3899, %v4521, 0
    %v4534 = vsel %vm3899, %v4523, 0
    %4536 = vmatprep.subr.mxu0 0.0
    %4537 = vmatpush1.msra.mxu0 %v4525
    %4538 = vmatprep.subr.mxu0 0.0
    %4539 = vmatpush1.msra.mxu0 %v4527
    %4540 = vmatprep.subr.mxu0 0.0
    %4541 = vmatpush1.msra.mxu0 0.0
    %4542 = vmatprep.subr.mxu0 0.0
    %4543 = vmatpush1.msra.mxu0 0.0
    %4544 = vmatprep.subr.mxu0 0.0
    %4545 = vmatpush1.msra.mxu0 0.0
    %4546 = vmatprep.subr.mxu0 0.0
    %4547 = vmatpush1.msra.mxu0 0.0
    %4548 = vmatprep.subr.mxu0 0.0
    %4549 = vmatpush1.msra.mxu0 0.0
    %4550 = vmatprep.subr.mxu0 0.0
    %4551 = vmatpush1.msra.mxu0 0.0
    %4552 = vmatprep.subr.mxu0 0.0
    %4553 = vmatpush1.msra.mxu0 0.0
    %4554 = vmatprep.subr.mxu0 0.0
    %4555 = vmatpush1.msra.mxu0 0.0
    %4556 = vmatprep.subr.mxu0 0.0
    %4557 = vmatpush1.msra.mxu0 0.0
    %4558 = vmatprep.subr.mxu0 0.0
    %4559 = vmatpush1.msra.mxu0 0.0
    %4560 = vmatprep.subr.mxu0 0.0
    %4561 = vmatpush1.msra.mxu0 0.0
    %4562 = vmatprep.subr.mxu0 0.0
    %4563 = vmatpush1.msra.mxu0 0.0
    %4564 = vmatprep.subr.mxu0 0.0
    %4565 = vmatpush1.msra.mxu0 0.0
    %4566 = vmatprep.subr.mxu0 0.0
    %4567 = vmatpush1.msra.mxu0 0.0
    %4568 = vmatprep.subr.mxu0 0.0
    %4569 = vmatpush1.msra.mxu0 0.0
    %4570 = vmatprep.subr.mxu0 0.0
    %4571 = vmatpush1.msra.mxu0 0.0
    %4572 = vmatprep.subr.mxu0 0.0
    %4573 = vmatpush1.msra.mxu0 0.0
    %4574 = vmatprep.subr.mxu0 0.0
    %4575 = vmatpush1.msra.mxu0 0.0
    %4576 = vmatprep.subr.mxu0 0.0
    %4577 = vmatpush1.msra.mxu0 0.0
    %4578 = vmatprep.subr.mxu0 0.0
    %4579 = vmatpush1.msra.mxu0 0.0
    %4580 = vmatprep.subr.mxu0 0.0
    %4581 = vmatpush1.msra.mxu0 0.0
    %4582 = vmatprep.subr.mxu0 0.0
    %4583 = vmatpush1.msra.mxu0 0.0
    %4584 = vmatprep.subr.mxu0 0.0
    %4585 = vmatpush1.msra.mxu0 0.0
    %4586 = vmatprep.subr.mxu0 0.0
    %4587 = vmatpush1.msra.mxu0 0.0
    %4588 = vmatprep.subr.mxu0 0.0
    %4589 = vmatpush1.msra.mxu0 0.0
    %4590 = vmatprep.subr.mxu0 0.0
    %4591 = vmatpush1.msra.mxu0 0.0
    %4592 = vmatprep.subr.mxu0 0.0
    %4593 = vmatpush1.msra.mxu0 0.0
    %4594 = vmatprep.subr.mxu0 0.0
    %4595 = vmatpush1.msra.mxu0 0.0
    %4596 = vmatprep.subr.mxu0 0.0
    %4597 = vmatpush1.msra.mxu0 0.0
    %4598 = vmatprep.subr.mxu0 0.0
    %4599 = vmatpush1.msra.mxu0 0.0
    %4600 = vmatprep.mubr.f32.mxu0 0.0
    %4601 = vmatmul.mubr.f32.gmra.mrb[0].mxu0 %v4531
    %v4602 = vpop.f32.mrb[0].mxu0
    %v4603 = vadd.f32 0.0, %v4602
    %v4604 = vpop.f32.mrb[0].mxu0
    %4605 = vmatprep.mubr.f32.mxu0 0.0
    %4606 = vmatmul.mubr.f32.gmra.mrb[0].mxu0 %v4534
    %v4607 = vpop.f32.mrb[0].mxu0
    %v4608 = vadd.f32 0.0, %v4607
    %v4609 = vpop.f32.mrb[0].mxu0
    %4610 = vdwg.mxu0
    %4611 = vrot.lane.b32.xlu0 %v3762, 96
    %v4612 = vpop.permute.xlu0 %4611
    %4613 = vrot.lane.b32.xlu0 %v3763, 96
    %v4614 = vpop.permute.xlu0 %4613
    %4615 = vrot.lane.b32.xlu0 %v3752, 32
    %v4616 = vpop.permute.xlu0 %4615
    %4617 = vrot.lane.b32.xlu0 %v3758, 32
    %v4618 = vpop.permute.xlu0 %4617
    %v4619 = vsel %vm3811, %v4612, 0
    %v4621 = vsel %vm3811, %v4614, 0
    %v4623 = vsel %vm3811, %v4616, 0
    %v4625 = vsel %vm3811, %v4618, 0
    %4627 = vmatprep.subr.mxu0 0.0
    %4628 = vmatpush1.xpose.msra.mxu0 %v4623
    %4629 = vmatprep.subr.mxu0 0.0
    %4630 = vmatpush1.xpose.msra.mxu0 %v4625
    %4631 = vmatprep.subr.mxu0 0.0
    %4632 = vmatpush1.xpose.msra.mxu0 0.0
    %4633 = vmatprep.subr.mxu0 0.0
    %4634 = vmatpush1.xpose.msra.mxu0 0.0
    %4635 = vmatprep.subr.mxu0 0.0
    %4636 = vmatpush1.xpose.msra.mxu0 0.0
    %4637 = vmatprep.subr.mxu0 0.0
    %4638 = vmatpush1.xpose.msra.mxu0 0.0
    %4639 = vmatprep.subr.mxu0 0.0
    %4640 = vmatpush1.xpose.msra.mxu0 0.0
    %4641 = vmatprep.subr.mxu0 0.0
    %4642 = vmatpush1.xpose.msra.mxu0 0.0
    %4643 = vmatprep.subr.mxu0 0.0
    %4644 = vmatpush1.xpose.msra.mxu0 0.0
    %4645 = vmatprep.subr.mxu0 0.0
    %4646 = vmatpush1.xpose.msra.mxu0 0.0
    %4647 = vmatprep.subr.mxu0 0.0
    %4648 = vmatpush1.xpose.msra.mxu0 0.0
    %4649 = vmatprep.subr.mxu0 0.0
    %4650 = vmatpush1.xpose.msra.mxu0 0.0
    %4651 = vmatprep.subr.mxu0 0.0
    %4652 = vmatpush1.xpose.msra.mxu0 0.0
    %4653 = vmatprep.subr.mxu0 0.0
    %4654 = vmatpush1.xpose.msra.mxu0 0.0
    %4655 = vmatprep.subr.mxu0 0.0
    %4656 = vmatpush1.xpose.msra.mxu0 0.0
    %4657 = vmatprep.subr.mxu0 0.0
    %4658 = vmatpush1.xpose.msra.mxu0 0.0
    %4659 = vmatprep.subr.mxu0 0.0
    %4660 = vmatpush1.xpose.msra.mxu0 0.0
    %4661 = vmatprep.subr.mxu0 0.0
    %4662 = vmatpush1.xpose.msra.mxu0 0.0
    %4663 = vmatprep.subr.mxu0 0.0
    %4664 = vmatpush1.xpose.msra.mxu0 0.0
    %4665 = vmatprep.subr.mxu0 0.0
    %4666 = vmatpush1.xpose.msra.mxu0 0.0
    %4667 = vmatprep.subr.mxu0 0.0
    %4668 = vmatpush1.xpose.msra.mxu0 0.0
    %4669 = vmatprep.subr.mxu0 0.0
    %4670 = vmatpush1.xpose.msra.mxu0 0.0
    %4671 = vmatprep.subr.mxu0 0.0
    %4672 = vmatpush1.xpose.msra.mxu0 0.0
    %4673 = vmatprep.subr.mxu0 0.0
    %4674 = vmatpush1.xpose.msra.mxu0 0.0
    %4675 = vmatprep.subr.mxu0 0.0
    %4676 = vmatpush1.xpose.msra.mxu0 0.0
    %4677 = vmatprep.subr.mxu0 0.0
    %4678 = vmatpush1.xpose.msra.mxu0 0.0
    %4679 = vmatprep.subr.mxu0 0.0
    %4680 = vmatpush1.xpose.msra.mxu0 0.0
    %4681 = vmatprep.subr.mxu0 0.0
    %4682 = vmatpush1.xpose.msra.mxu0 0.0
    %4683 = vmatprep.subr.mxu0 0.0
    %4684 = vmatpush1.xpose.msra.mxu0 0.0
    %4685 = vmatprep.subr.mxu0 0.0
    %4686 = vmatpush1.xpose.msra.mxu0 0.0
    %4687 = vmatprep.subr.mxu0 0.0
    %4688 = vmatpush1.xpose.msra.mxu0 0.0
    %4689 = vmatprep.subr.mxu0 0.0
    %4690 = vmatpush1.xpose.msra.mxu0 0.0
    %4691 = vmatprep.mubr.f32.mxu0 0.0
    %4692 = vmatmul.mubr.f32.gmra.mrb[0].mxu0 %v4619
    %v4693 = vpop.f32.mrb[0].mxu0
    %v4694 = vadd.f32 0.0, %v4693
    %v4695 = vpop.f32.mrb[0].mxu0
    %4696 = vmatprep.mubr.f32.mxu0 0.0
    %4697 = vmatmul.mubr.f32.gmra.mrb[0].mxu0 %v4621
    %v4698 = vpop.f32.mrb[0].mxu0
    %v4699 = vadd.f32 0.0, %v4698
    %v4700 = vpop.f32.mrb[0].mxu0
    %4701 = vdwg.mxu0
    %v4702 = vsel %vm3803, %v4694, -1e+30
    %v4703 = vsel %vm3804, %v4699, -1e+30
    %v4704 = vsel %vm3899, %v4702, -inf
    %4705 = vmax.xlane.f32.xlu0 %v4704
    %v4706 = vpop.xlane.xlu0 %4705
    %v4707 = vsel %vm3899, %v4703, -inf
    %4708 = vmax.xlane.f32.xlu0 %v4707
    %v4709 = vpop.xlane.xlu0 %4708
    %v4710 = vsub.f32 %v4702, %v4706
    %v4711 = vsub.f32 %v4703, %v4709
    %v4712 = vmul.f32 %v4710, 1.442695
    %v4713 = vpow.pop %v4712
    %v4714 = vmul.f32 %v4711, 1.442695
    %v4715 = vpow.pop %v4714
    %v4716 = vsel %vm3899, %v4713, 0.0
    %4717 = vadd.xlane.f32.xlu0 %v4716
    %v4718 = vpop.xlane.xlu0 %4717
    %v4719 = vsel %vm3899, %v4715, 0.0
    %4720 = vadd.xlane.f32.xlu0 %v4719
    %v4721 = vpop.xlane.xlu0 %4720
    %v4722 = vrcp.pop %v4718
    %v4723 = vmul.f32 %v4713, %v4722
    %v4724 = vrcp.pop %v4721
    %v4725 = vmul.f32 %v4715, %v4724
    %4726 = vrot.lane.b32.xlu0 %v3754, 96
    %v4727 = vpop.permute.xlu0 %4726
    %4728 = vrot.lane.b32.xlu0 %v3760, 96
    %v4729 = vpop.permute.xlu0 %4728
    %v4733 = vsel %vm3899, %v4723, 0
    %v4736 = vsel %vm3899, %v4725, 0
    %4738 = vmatprep.subr.mxu0 0.0
    %4739 = vmatpush1.msra.mxu0 %v4727
    %4740 = vmatprep.subr.mxu0 0.0
    %4741 = vmatpush1.msra.mxu0 %v4729
    %4742 = vmatprep.subr.mxu0 0.0
    %4743 = vmatpush1.msra.mxu0 0.0
    %4744 = vmatprep.subr.mxu0 0.0
    %4745 = vmatpush1.msra.mxu0 0.0
    %4746 = vmatprep.subr.mxu0 0.0
    %4747 = vmatpush1.msra.mxu0 0.0
    %4748 = vmatprep.subr.mxu0 0.0
    %4749 = vmatpush1.msra.mxu0 0.0
    %4750 = vmatprep.subr.mxu0 0.0
    %4751 = vmatpush1.msra.mxu0 0.0
    %4752 = vmatprep.subr.mxu0 0.0
    %4753 = vmatpush1.msra.mxu0 0.0
    %4754 = vmatprep.subr.mxu0 0.0
    %4755 = vmatpush1.msra.mxu0 0.0
    %4756 = vmatprep.subr.mxu0 0.0
    %4757 = vmatpush1.msra.mxu0 0.0
    %4758 = vmatprep.subr.mxu0 0.0
    %4759 = vmatpush1.msra.mxu0 0.0
    %4760 = vmatprep.subr.mxu0 0.0
    %4761 = vmatpush1.msra.mxu0 0.0
    %4762 = vmatprep.subr.mxu0 0.0
    %4763 = vmatpush1.msra.mxu0 0.0
    %4764 = vmatprep.subr.mxu0 0.0
    %4765 = vmatpush1.msra.mxu0 0.0
    %4766 = vmatprep.subr.mxu0 0.0
    %4767 = vmatpush1.msra.mxu0 0.0
    %4768 = vmatprep.subr.mxu0 0.0
    %4769 = vmatpush1.msra.mxu0 0.0
    %4770 = vmatprep.subr.mxu0 0.0
    %4771 = vmatpush1.msra.mxu0 0.0
    %4772 = vmatprep.subr.mxu0 0.0
    %4773 = vmatpush1.msra.mxu0 0.0
    %4774 = vmatprep.subr.mxu0 0.0
    %4775 = vmatpush1.msra.mxu0 0.0
    %4776 = vmatprep.subr.mxu0 0.0
    %4777 = vmatpush1.msra.mxu0 0.0
    %4778 = vmatprep.subr.mxu0 0.0
    %4779 = vmatpush1.msra.mxu0 0.0
    %4780 = vmatprep.subr.mxu0 0.0
    %4781 = vmatpush1.msra.mxu0 0.0
    %4782 = vmatprep.subr.mxu0 0.0
    %4783 = vmatpush1.msra.mxu0 0.0
    %4784 = vmatprep.subr.mxu0 0.0
    %4785 = vmatpush1.msra.mxu0 0.0
    %4786 = vmatprep.subr.mxu0 0.0
    %4787 = vmatpush1.msra.mxu0 0.0
    %4788 = vmatprep.subr.mxu0 0.0
    %4789 = vmatpush1.msra.mxu0 0.0
    %4790 = vmatprep.subr.mxu0 0.0
    %4791 = vmatpush1.msra.mxu0 0.0
    %4792 = vmatprep.subr.mxu0 0.0
    %4793 = vmatpush1.msra.mxu0 0.0
    %4794 = vmatprep.subr.mxu0 0.0
    %4795 = vmatpush1.msra.mxu0 0.0
    %4796 = vmatprep.subr.mxu0 0.0
    %4797 = vmatpush1.msra.mxu0 0.0
    %4798 = vmatprep.subr.mxu0 0.0
    %4799 = vmatpush1.msra.mxu0 0.0
    %4800 = vmatprep.subr.mxu0 0.0
    %4801 = vmatpush1.msra.mxu0 0.0
    %4802 = vmatprep.mubr.f32.mxu0 0.0
    %4803 = vmatmul.mubr.f32.gmra.mrb[0].mxu0 %v4733
    %v4804 = vpop.f32.mrb[0].mxu0
    %v4805 = vadd.f32 0.0, %v4804
    %v4806 = vpop.f32.mrb[0].mxu0
    %4807 = vmatprep.mubr.f32.mxu0 0.0
    %4808 = vmatmul.mubr.f32.gmra.mrb[0].mxu0 %v4736
    %v4809 = vpop.f32.mrb[0].mxu0
    %v4810 = vadd.f32 0.0, %v4809
    %v4811 = vpop.f32.mrb[0].mxu0
    %4812 = vdwg.mxu0
    %4813 = vrot.lane.b32.xlu0 %v3762, 88
    %v4814 = vpop.permute.xlu0 %4813
    %4815 = vrot.lane.b32.xlu0 %v3763, 88
    %v4816 = vpop.permute.xlu0 %4815
    %4817 = vrot.lane.b32.xlu0 %v3752, 24
    %v4818 = vpop.permute.xlu0 %4817
    %4819 = vrot.lane.b32.xlu0 %v3758, 24
    %v4820 = vpop.permute.xlu0 %4819
    %v4821 = vsel %vm3811, %v4814, 0
    %v4823 = vsel %vm3811, %v4816, 0
    %v4825 = vsel %vm3811, %v4818, 0
    %v4827 = vsel %vm3811, %v4820, 0
    %4829 = vmatprep.subr.mxu0 0.0
    %4830 = vmatpush1.xpose.msra.mxu0 %v4825
    %4831 = vmatprep.subr.mxu0 0.0
    %4832 = vmatpush1.xpose.msra.mxu0 %v4827
    %4833 = vmatprep.subr.mxu0 0.0
    %4834 = vmatpush1.xpose.msra.mxu0 0.0
    %4835 = vmatprep.subr.mxu0 0.0
    %4836 = vmatpush1.xpose.msra.mxu0 0.0
    %4837 = vmatprep.subr.mxu0 0.0
    %4838 = vmatpush1.xpose.msra.mxu0 0.0
    %4839 = vmatprep.subr.mxu0 0.0
    %4840 = vmatpush1.xpose.msra.mxu0 0.0
    %4841 = vmatprep.subr.mxu0 0.0
    %4842 = vmatpush1.xpose.msra.mxu0 0.0
    %4843 = vmatprep.subr.mxu0 0.0
    %4844 = vmatpush1.xpose.msra.mxu0 0.0
    %4845 = vmatprep.subr.mxu0 0.0
    %4846 = vmatpush1.xpose.msra.mxu0 0.0
    %4847 = vmatprep.subr.mxu0 0.0
    %4848 = vmatpush1.xpose.msra.mxu0 0.0
    %4849 = vmatprep.subr.mxu0 0.0
    %4850 = vmatpush1.xpose.msra.mxu0 0.0
    %4851 = vmatprep.subr.mxu0 0.0
    %4852 = vmatpush1.xpose.msra.mxu0 0.0
    %4853 = vmatprep.subr.mxu0 0.0
    %4854 = vmatpush1.xpose.msra.mxu0 0.0
    %4855 = vmatprep.subr.mxu0 0.0
    %4856 = vmatpush1.xpose.msra.mxu0 0.0
    %4857 = vmatprep.subr.mxu0 0.0
    %4858 = vmatpush1.xpose.msra.mxu0 0.0
    %4859 = vmatprep.subr.mxu0 0.0
    %4860 = vmatpush1.xpose.msra.mxu0 0.0
    %4861 = vmatprep.subr.mxu0 0.0
    %4862 = vmatpush1.xpose.msra.mxu0 0.0
    %4863 = vmatprep.subr.mxu0 0.0
    %4864 = vmatpush1.xpose.msra.mxu0 0.0
    %4865 = vmatprep.subr.mxu0 0.0
    %4866 = vmatpush1.xpose.msra.mxu0 0.0
    %4867 = vmatprep.subr.mxu0 0.0
    %4868 = vmatpush1.xpose.msra.mxu0 0.0
    %4869 = vmatprep.subr.mxu0 0.0
    %4870 = vmatpush1.xpose.msra.mxu0 0.0
    %4871 = vmatprep.subr.mxu0 0.0
    %4872 = vmatpush1.xpose.msra.mxu0 0.0
    %4873 = vmatprep.subr.mxu0 0.0
    %4874 = vmatpush1.xpose.msra.mxu0 0.0
    %4875 = vmatprep.subr.mxu0 0.0
    %4876 = vmatpush1.xpose.msra.mxu0 0.0
    %4877 = vmatprep.subr.mxu0 0.0
    %4878 = vmatpush1.xpose.msra.mxu0 0.0
    %4879 = vmatprep.subr.mxu0 0.0
    %4880 = vmatpush1.xpose.msra.mxu0 0.0
    %4881 = vmatprep.subr.mxu0 0.0
    %4882 = vmatpush1.xpose.msra.mxu0 0.0
    %4883 = vmatprep.subr.mxu0 0.0
    %4884 = vmatpush1.xpose.msra.mxu0 0.0
    %4885 = vmatprep.subr.mxu0 0.0
    %4886 = vmatpush1.xpose.msra.mxu0 0.0
    %4887 = vmatprep.subr.mxu0 0.0
    %4888 = vmatpush1.xpose.msra.mxu0 0.0
    %4889 = vmatprep.subr.mxu0 0.0
    %4890 = vmatpush1.xpose.msra.mxu0 0.0
    %4891 = vmatprep.subr.mxu0 0.0
    %4892 = vmatpush1.xpose.msra.mxu0 0.0
    %4893 = vmatprep.mubr.f32.mxu0 0.0
    %4894 = vmatmul.mubr.f32.gmra.mrb[0].mxu0 %v4821
    %v4895 = vpop.f32.mrb[0].mxu0
    %v4896 = vadd.f32 0.0, %v4895
    %v4897 = vpop.f32.mrb[0].mxu0
    %4898 = vmatprep.mubr.f32.mxu0 0.0
    %4899 = vmatmul.mubr.f32.gmra.mrb[0].mxu0 %v4823
    %v4900 = vpop.f32.mrb[0].mxu0
    %v4901 = vadd.f32 0.0, %v4900
    %v4902 = vpop.f32.mrb[0].mxu0
    %4903 = vdwg.mxu0
    %v4904 = vsel %vm3803, %v4896, -1e+30
    %v4905 = vsel %vm3804, %v4901, -1e+30
    %v4906 = vsel %vm3899, %v4904, -inf
    %4907 = vmax.xlane.f32.xlu0 %v4906
    %v4908 = vpop.xlane.xlu0 %4907
    %v4909 = vsel %vm3899, %v4905, -inf
    %4910 = vmax.xlane.f32.xlu0 %v4909
    %v4911 = vpop.xlane.xlu0 %4910
    %v4912 = vsub.f32 %v4904, %v4908
    %v4913 = vsub.f32 %v4905, %v4911
    %v4914 = vmul.f32 %v4912, 1.442695
    %v4915 = vpow.pop %v4914
    %v4916 = vmul.f32 %v4913, 1.442695
    %v4917 = vpow.pop %v4916
    %v4918 = vsel %vm3899, %v4915, 0.0
    %4919 = vadd.xlane.f32.xlu0 %v4918
    %v4920 = vpop.xlane.xlu0 %4919
    %v4921 = vsel %vm3899, %v4917, 0.0
    %4922 = vadd.xlane.f32.xlu0 %v4921
    %v4923 = vpop.xlane.xlu0 %4922
    %v4924 = vrcp.pop %v4920
    %v4925 = vmul.f32 %v4915, %v4924
    %v4926 = vrcp.pop %v4923
    %v4927 = vmul.f32 %v4917, %v4926
    %4928 = vrot.lane.b32.xlu0 %v3754, 88
    %v4929 = vpop.permute.xlu0 %4928
    %4930 = vrot.lane.b32.xlu0 %v3760, 88
    %v4931 = vpop.permute.xlu0 %4930
    %v4935 = vsel %vm3899, %v4925, 0
    %v4938 = vsel %vm3899, %v4927, 0
    %4940 = vmatprep.subr.mxu0 0.0
    %4941 = vmatpush1.msra.mxu0 %v4929
    %4942 = vmatprep.subr.mxu0 0.0
    %4943 = vmatpush1.msra.mxu0 %v4931
    %4944 = vmatprep.subr.mxu0 0.0
    %4945 = vmatpush1.msra.mxu0 0.0
    %4946 = vmatprep.subr.mxu0 0.0
    %4947 = vmatpush1.msra.mxu0 0.0
    %4948 = vmatprep.subr.mxu0 0.0
    %4949 = vmatpush1.msra.mxu0 0.0
    %4950 = vmatprep.subr.mxu0 0.0
    %4951 = vmatpush1.msra.mxu0 0.0
    %4952 = vmatprep.subr.mxu0 0.0
    %4953 = vmatpush1.msra.mxu0 0.0
    %4954 = vmatprep.subr.mxu0 0.0
    %4955 = vmatpush1.msra.mxu0 0.0
    %4956 = vmatprep.subr.mxu0 0.0
    %4957 = vmatpush1.msra.mxu0 0.0
    %4958 = vmatprep.subr.mxu0 0.0
    %4959 = vmatpush1.msra.mxu0 0.0
    %4960 = vmatprep.subr.mxu0 0.0
    %4961 = vmatpush1.msra.mxu0 0.0
    %4962 = vmatprep.subr.mxu0 0.0
    %4963 = vmatpush1.msra.mxu0 0.0
    %4964 = vmatprep.subr.mxu0 0.0
    %4965 = vmatpush1.msra.mxu0 0.0
    %4966 = vmatprep.subr.mxu0 0.0
    %4967 = vmatpush1.msra.mxu0 0.0
    %4968 = vmatprep.subr.mxu0 0.0
    %4969 = vmatpush1.msra.mxu0 0.0
    %4970 = vmatprep.subr.mxu0 0.0
    %4971 = vmatpush1.msra.mxu0 0.0
    %4972 = vmatprep.subr.mxu0 0.0
    %4973 = vmatpush1.msra.mxu0 0.0
    %4974 = vmatprep.subr.mxu0 0.0
    %4975 = vmatpush1.msra.mxu0 0.0
    %4976 = vmatprep.subr.mxu0 0.0
    %4977 = vmatpush1.msra.mxu0 0.0
    %4978 = vmatprep.subr.mxu0 0.0
    %4979 = vmatpush1.msra.mxu0 0.0
    %4980 = vmatprep.subr.mxu0 0.0
    %4981 = vmatpush1.msra.mxu0 0.0
    %4982 = vmatprep.subr.mxu0 0.0
    %4983 = vmatpush1.msra.mxu0 0.0
    %4984 = vmatprep.subr.mxu0 0.0
    %4985 = vmatpush1.msra.mxu0 0.0
    %4986 = vmatprep.subr.mxu0 0.0
    %4987 = vmatpush1.msra.mxu0 0.0
    %4988 = vmatprep.subr.mxu0 0.0
    %4989 = vmatpush1.msra.mxu0 0.0
    %4990 = vmatprep.subr.mxu0 0.0
    %4991 = vmatpush1.msra.mxu0 0.0
    %4992 = vmatprep.subr.mxu0 0.0
    %4993 = vmatpush1.msra.mxu0 0.0
    %4994 = vmatprep.subr.mxu0 0.0
    %4995 = vmatpush1.msra.mxu0 0.0
    %4996 = vmatprep.subr.mxu0 0.0
    %4997 = vmatpush1.msra.mxu0 0.0
    %4998 = vmatprep.subr.mxu0 0.0
    %4999 = vmatpush1.msra.mxu0 0.0
    %5000 = vmatprep.subr.mxu0 0.0
    %5001 = vmatpush1.msra.mxu0 0.0
    %5002 = vmatprep.subr.mxu0 0.0
    %5003 = vmatpush1.msra.mxu0 0.0
    %5004 = vmatprep.mubr.f32.mxu0 0.0
    %5005 = vmatmul.mubr.f32.gmra.mrb[0].mxu0 %v4935
    %v5006 = vpop.f32.mrb[0].mxu0
    %v5007 = vadd.f32 0.0, %v5006
    %v5008 = vpop.f32.mrb[0].mxu0
    %5009 = vmatprep.mubr.f32.mxu0 0.0
    %5010 = vmatmul.mubr.f32.gmra.mrb[0].mxu0 %v4938
    %v5011 = vpop.f32.mrb[0].mxu0
    %v5012 = vadd.f32 0.0, %v5011
    %v5013 = vpop.f32.mrb[0].mxu0
    %5014 = vdwg.mxu0
    %5015 = vrot.lane.b32.xlu0 %v3762, 80
    %v5016 = vpop.permute.xlu0 %5015
    %5017 = vrot.lane.b32.xlu0 %v3763, 80
    %v5018 = vpop.permute.xlu0 %5017
    %5019 = vrot.lane.b32.xlu0 %v3752, 16
    %v5020 = vpop.permute.xlu0 %5019
    %5021 = vrot.lane.b32.xlu0 %v3758, 16
    %v5022 = vpop.permute.xlu0 %5021
    %v5023 = vsel %vm3811, %v5016, 0
    %v5025 = vsel %vm3811, %v5018, 0
    %v5027 = vsel %vm3811, %v5020, 0
    %v5029 = vsel %vm3811, %v5022, 0
    %5031 = vmatprep.subr.mxu0 0.0
    %5032 = vmatpush1.xpose.msra.mxu0 %v5027
    %5033 = vmatprep.subr.mxu0 0.0
    %5034 = vmatpush1.xpose.msra.mxu0 %v5029
    %5035 = vmatprep.subr.mxu0 0.0
    %5036 = vmatpush1.xpose.msra.mxu0 0.0
    %5037 = vmatprep.subr.mxu0 0.0
    %5038 = vmatpush1.xpose.msra.mxu0 0.0
    %5039 = vmatprep.subr.mxu0 0.0
    %5040 = vmatpush1.xpose.msra.mxu0 0.0
    %5041 = vmatprep.subr.mxu0 0.0
    %5042 = vmatpush1.xpose.msra.mxu0 0.0
    %5043 = vmatprep.subr.mxu0 0.0
    %5044 = vmatpush1.xpose.msra.mxu0 0.0
    %5045 = vmatprep.subr.mxu0 0.0
    %5046 = vmatpush1.xpose.msra.mxu0 0.0
    %5047 = vmatprep.subr.mxu0 0.0
    %5048 = vmatpush1.xpose.msra.mxu0 0.0
    %5049 = vmatprep.subr.mxu0 0.0
    %5050 = vmatpush1.xpose.msra.mxu0 0.0
    %5051 = vmatprep.subr.mxu0 0.0
    %5052 = vmatpush1.xpose.msra.mxu0 0.0
    %5053 = vmatprep.subr.mxu0 0.0
    %5054 = vmatpush1.xpose.msra.mxu0 0.0
    %5055 = vmatprep.subr.mxu0 0.0
    %5056 = vmatpush1.xpose.msra.mxu0 0.0
    %5057 = vmatprep.subr.mxu0 0.0
    %5058 = vmatpush1.xpose.msra.mxu0 0.0
    %5059 = vmatprep.subr.mxu0 0.0
    %5060 = vmatpush1.xpose.msra.mxu0 0.0
    %5061 = vmatprep.subr.mxu0 0.0
    %5062 = vmatpush1.xpose.msra.mxu0 0.0
    %5063 = vmatprep.subr.mxu0 0.0
    %5064 = vmatpush1.xpose.msra.mxu0 0.0
    %5065 = vmatprep.subr.mxu0 0.0
    %5066 = vmatpush1.xpose.msra.mxu0 0.0
    %5067 = vmatprep.subr.mxu0 0.0
    %5068 = vmatpush1.xpose.msra.mxu0 0.0
    %5069 = vmatprep.subr.mxu0 0.0
    %5070 = vmatpush1.xpose.msra.mxu0 0.0
    %5071 = vmatprep.subr.mxu0 0.0
    %5072 = vmatpush1.xpose.msra.mxu0 0.0
    %5073 = vmatprep.subr.mxu0 0.0
    %5074 = vmatpush1.xpose.msra.mxu0 0.0
    %5075 = vmatprep.subr.mxu0 0.0
    %5076 = vmatpush1.xpose.msra.mxu0 0.0
    %5077 = vmatprep.subr.mxu0 0.0
    %5078 = vmatpush1.xpose.msra.mxu0 0.0
    %5079 = vmatprep.subr.mxu0 0.0
    %5080 = vmatpush1.xpose.msra.mxu0 0.0
    %5081 = vmatprep.subr.mxu0 0.0
    %5082 = vmatpush1.xpose.msra.mxu0 0.0
    %5083 = vmatprep.subr.mxu0 0.0
    %5084 = vmatpush1.xpose.msra.mxu0 0.0
    %5085 = vmatprep.subr.mxu0 0.0
    %5086 = vmatpush1.xpose.msra.mxu0 0.0
    %5087 = vmatprep.subr.mxu0 0.0
    %5088 = vmatpush1.xpose.msra.mxu0 0.0
    %5089 = vmatprep.subr.mxu0 0.0
    %5090 = vmatpush1.xpose.msra.mxu0 0.0
    %5091 = vmatprep.subr.mxu0 0.0
    %5092 = vmatpush1.xpose.msra.mxu0 0.0
    %5093 = vmatprep.subr.mxu0 0.0
    %5094 = vmatpush1.xpose.msra.mxu0 0.0
    %5095 = vmatprep.mubr.f32.mxu0 0.0
    %5096 = vmatmul.mubr.f32.gmra.mrb[0].mxu0 %v5023
    %v5097 = vpop.f32.mrb[0].mxu0
    %v5098 = vadd.f32 0.0, %v5097
    %v5099 = vpop.f32.mrb[0].mxu0
    %5100 = vmatprep.mubr.f32.mxu0 0.0
    %5101 = vmatmul.mubr.f32.gmra.mrb[0].mxu0 %v5025
    %v5102 = vpop.f32.mrb[0].mxu0
    %v5103 = vadd.f32 0.0, %v5102
    %v5104 = vpop.f32.mrb[0].mxu0
    %5105 = vdwg.mxu0
    %v5106 = vsel %vm3803, %v5098, -1e+30
    %v5107 = vsel %vm3804, %v5103, -1e+30
    %v5108 = vsel %vm3899, %v5106, -inf
    %5109 = vmax.xlane.f32.xlu0 %v5108
    %v5110 = vpop.xlane.xlu0 %5109
    %v5111 = vsel %vm3899, %v5107, -inf
    %5112 = vmax.xlane.f32.xlu0 %v5111
    %v5113 = vpop.xlane.xlu0 %5112
    %v5114 = vsub.f32 %v5106, %v5110
    %v5115 = vsub.f32 %v5107, %v5113
    %v5116 = vmul.f32 %v5114, 1.442695
    %v5117 = vpow.pop %v5116
    %v5118 = vmul.f32 %v5115, 1.442695
    %v5119 = vpow.pop %v5118
    %v5120 = vsel %vm3899, %v5117, 0.0
    %5121 = vadd.xlane.f32.xlu0 %v5120
    %v5122 = vpop.xlane.xlu0 %5121
    %v5123 = vsel %vm3899, %v5119, 0.0
    %5124 = vadd.xlane.f32.xlu0 %v5123
    %v5125 = vpop.xlane.xlu0 %5124
    %v5126 = vrcp.pop %v5122
    %v5127 = vmul.f32 %v5117, %v5126
    %v5128 = vrcp.pop %v5125
    %v5129 = vmul.f32 %v5119, %v5128
    %5130 = vrot.lane.b32.xlu0 %v3754, 80
    %v5131 = vpop.permute.xlu0 %5130
    %5132 = vrot.lane.b32.xlu0 %v3760, 80
    %v5133 = vpop.permute.xlu0 %5132
    %v5137 = vsel %vm3899, %v5127, 0
    %v5140 = vsel %vm3899, %v5129, 0
    %5142 = vmatprep.subr.mxu0 0.0
    %5143 = vmatpush1.msra.mxu0 %v5131
    %5144 = vmatprep.subr.mxu0 0.0
    %5145 = vmatpush1.msra.mxu0 %v5133
    %5146 = vmatprep.subr.mxu0 0.0
    %5147 = vmatpush1.msra.mxu0 0.0
    %5148 = vmatprep.subr.mxu0 0.0
    %5149 = vmatpush1.msra.mxu0 0.0
    %5150 = vmatprep.subr.mxu0 0.0
    %5151 = vmatpush1.msra.mxu0 0.0
    %5152 = vmatprep.subr.mxu0 0.0
    %5153 = vmatpush1.msra.mxu0 0.0
    %5154 = vmatprep.subr.mxu0 0.0
    %5155 = vmatpush1.msra.mxu0 0.0
    %5156 = vmatprep.subr.mxu0 0.0
    %5157 = vmatpush1.msra.mxu0 0.0
    %5158 = vmatprep.subr.mxu0 0.0
    %5159 = vmatpush1.msra.mxu0 0.0
    %5160 = vmatprep.subr.mxu0 0.0
    %5161 = vmatpush1.msra.mxu0 0.0
    %5162 = vmatprep.subr.mxu0 0.0
    %5163 = vmatpush1.msra.mxu0 0.0
    %5164 = vmatprep.subr.mxu0 0.0
    %5165 = vmatpush1.msra.mxu0 0.0
    %5166 = vmatprep.subr.mxu0 0.0
    %5167 = vmatpush1.msra.mxu0 0.0
    %5168 = vmatprep.subr.mxu0 0.0
    %5169 = vmatpush1.msra.mxu0 0.0
    %5170 = vmatprep.subr.mxu0 0.0
    %5171 = vmatpush1.msra.mxu0 0.0
    %5172 = vmatprep.subr.mxu0 0.0
    %5173 = vmatpush1.msra.mxu0 0.0
    %5174 = vmatprep.subr.mxu0 0.0
    %5175 = vmatpush1.msra.mxu0 0.0
    %5176 = vmatprep.subr.mxu0 0.0
    %5177 = vmatpush1.msra.mxu0 0.0
    %5178 = vmatprep.subr.mxu0 0.0
    %5179 = vmatpush1.msra.mxu0 0.0
    %5180 = vmatprep.subr.mxu0 0.0
    %5181 = vmatpush1.msra.mxu0 0.0
    %5182 = vmatprep.subr.mxu0 0.0
    %5183 = vmatpush1.msra.mxu0 0.0
    %5184 = vmatprep.subr.mxu0 0.0
    %5185 = vmatpush1.msra.mxu0 0.0
    %5186 = vmatprep.subr.mxu0 0.0
    %5187 = vmatpush1.msra.mxu0 0.0
    %5188 = vmatprep.subr.mxu0 0.0
    %5189 = vmatpush1.msra.mxu0 0.0
    %5190 = vmatprep.subr.mxu0 0.0
    %5191 = vmatpush1.msra.mxu0 0.0
    %5192 = vmatprep.subr.mxu0 0.0
    %5193 = vmatpush1.msra.mxu0 0.0
    %5194 = vmatprep.subr.mxu0 0.0
    %5195 = vmatpush1.msra.mxu0 0.0
    %5196 = vmatprep.subr.mxu0 0.0
    %5197 = vmatpush1.msra.mxu0 0.0
    %5198 = vmatprep.subr.mxu0 0.0
    %5199 = vmatpush1.msra.mxu0 0.0
    %5200 = vmatprep.subr.mxu0 0.0
    %5201 = vmatpush1.msra.mxu0 0.0
    %5202 = vmatprep.subr.mxu0 0.0
    %5203 = vmatpush1.msra.mxu0 0.0
    %5204 = vmatprep.subr.mxu0 0.0
    %5205 = vmatpush1.msra.mxu0 0.0
    %5206 = vmatprep.mubr.f32.mxu0 0.0
    %5207 = vmatmul.mubr.f32.gmra.mrb[0].mxu0 %v5137
    %v5208 = vpop.f32.mrb[0].mxu0
    %v5209 = vadd.f32 0.0, %v5208
    %v5210 = vpop.f32.mrb[0].mxu0
    %5211 = vmatprep.mubr.f32.mxu0 0.0
    %5212 = vmatmul.mubr.f32.gmra.mrb[0].mxu0 %v5140
    %v5213 = vpop.f32.mrb[0].mxu0
    %v5214 = vadd.f32 0.0, %v5213
    %v5215 = vpop.f32.mrb[0].mxu0
    %5216 = vdwg.mxu0
    %5217 = vrot.lane.b32.xlu0 %v3762, 72
    %v5218 = vpop.permute.xlu0 %5217
    %5219 = vrot.lane.b32.xlu0 %v3763, 72
    %v5220 = vpop.permute.xlu0 %5219
    %5221 = vrot.lane.b32.xlu0 %v3752, 8
    %v5222 = vpop.permute.xlu0 %5221
    %5223 = vrot.lane.b32.xlu0 %v3758, 8
    %v5224 = vpop.permute.xlu0 %5223
    %v5225 = vsel %vm3811, %v5218, 0
    %v5227 = vsel %vm3811, %v5220, 0
    %v5229 = vsel %vm3811, %v5222, 0
    %v5231 = vsel %vm3811, %v5224, 0
    %5233 = vmatprep.subr.mxu0 0.0
    %5234 = vmatpush1.xpose.msra.mxu0 %v5229
    %5235 = vmatprep.subr.mxu0 0.0
    %5236 = vmatpush1.xpose.msra.mxu0 %v5231
    %5237 = vmatprep.subr.mxu0 0.0
    %5238 = vmatpush1.xpose.msra.mxu0 0.0
    %5239 = vmatprep.subr.mxu0 0.0
    %5240 = vmatpush1.xpose.msra.mxu0 0.0
    %5241 = vmatprep.subr.mxu0 0.0
    %5242 = vmatpush1.xpose.msra.mxu0 0.0
    %5243 = vmatprep.subr.mxu0 0.0
    %5244 = vmatpush1.xpose.msra.mxu0 0.0
    %5245 = vmatprep.subr.mxu0 0.0
    %5246 = vmatpush1.xpose.msra.mxu0 0.0
    %5247 = vmatprep.subr.mxu0 0.0
    %5248 = vmatpush1.xpose.msra.mxu0 0.0
    %5249 = vmatprep.subr.mxu0 0.0
    %5250 = vmatpush1.xpose.msra.mxu0 0.0
    %5251 = vmatprep.subr.mxu0 0.0
    %5252 = vmatpush1.xpose.msra.mxu0 0.0
    %5253 = vmatprep.subr.mxu0 0.0
    %5254 = vmatpush1.xpose.msra.mxu0 0.0
    %5255 = vmatprep.subr.mxu0 0.0
    %5256 = vmatpush1.xpose.msra.mxu0 0.0
    %5257 = vmatprep.subr.mxu0 0.0
    %5258 = vmatpush1.xpose.msra.mxu0 0.0
    %5259 = vmatprep.subr.mxu0 0.0
    %5260 = vmatpush1.xpose.msra.mxu0 0.0
    %5261 = vmatprep.subr.mxu0 0.0
    %5262 = vmatpush1.xpose.msra.mxu0 0.0
    %5263 = vmatprep.subr.mxu0 0.0
    %5264 = vmatpush1.xpose.msra.mxu0 0.0
    %5265 = vmatprep.subr.mxu0 0.0
    %5266 = vmatpush1.xpose.msra.mxu0 0.0
    %5267 = vmatprep.subr.mxu0 0.0
    %5268 = vmatpush1.xpose.msra.mxu0 0.0
    %5269 = vmatprep.subr.mxu0 0.0
    %5270 = vmatpush1.xpose.msra.mxu0 0.0
    %5271 = vmatprep.subr.mxu0 0.0
    %5272 = vmatpush1.xpose.msra.mxu0 0.0
    %5273 = vmatprep.subr.mxu0 0.0
    %5274 = vmatpush1.xpose.msra.mxu0 0.0
    %5275 = vmatprep.subr.mxu0 0.0
    %5276 = vmatpush1.xpose.msra.mxu0 0.0
    %5277 = vmatprep.subr.mxu0 0.0
    %5278 = vmatpush1.xpose.msra.mxu0 0.0
    %5279 = vmatprep.subr.mxu0 0.0
    %5280 = vmatpush1.xpose.msra.mxu0 0.0
    %5281 = vmatprep.subr.mxu0 0.0
    %5282 = vmatpush1.xpose.msra.mxu0 0.0
    %5283 = vmatprep.subr.mxu0 0.0
    %5284 = vmatpush1.xpose.msra.mxu0 0.0
    %5285 = vmatprep.subr.mxu0 0.0
    %5286 = vmatpush1.xpose.msra.mxu0 0.0
    %5287 = vmatprep.subr.mxu0 0.0
    %5288 = vmatpush1.xpose.msra.mxu0 0.0
    %5289 = vmatprep.subr.mxu0 0.0
    %5290 = vmatpush1.xpose.msra.mxu0 0.0
    %5291 = vmatprep.subr.mxu0 0.0
    %5292 = vmatpush1.xpose.msra.mxu0 0.0
    %5293 = vmatprep.subr.mxu0 0.0
    %5294 = vmatpush1.xpose.msra.mxu0 0.0
    %5295 = vmatprep.subr.mxu0 0.0
    %5296 = vmatpush1.xpose.msra.mxu0 0.0
    %5297 = vmatprep.mubr.f32.mxu0 0.0
    %5298 = vmatmul.mubr.f32.gmra.mrb[0].mxu0 %v5225
    %v5299 = vpop.f32.mrb[0].mxu0
    %v5300 = vadd.f32 0.0, %v5299
    %v5301 = vpop.f32.mrb[0].mxu0
    %5302 = vmatprep.mubr.f32.mxu0 0.0
    %5303 = vmatmul.mubr.f32.gmra.mrb[0].mxu0 %v5227
    %v5304 = vpop.f32.mrb[0].mxu0
    %v5305 = vadd.f32 0.0, %v5304
    %v5306 = vpop.f32.mrb[0].mxu0
    %5307 = vdwg.mxu0
    %v5308 = vsel %vm3803, %v5300, -1e+30
    %v5309 = vsel %vm3804, %v5305, -1e+30
    %v5310 = vsel %vm3899, %v5308, -inf
    %5311 = vmax.xlane.f32.xlu0 %v5310
    %v5312 = vpop.xlane.xlu0 %5311
    %v5313 = vsel %vm3899, %v5309, -inf
    %5314 = vmax.xlane.f32.xlu0 %v5313
    %v5315 = vpop.xlane.xlu0 %5314
    %v5316 = vsub.f32 %v5308, %v5312
    %v5317 = vsub.f32 %v5309, %v5315
    %v5318 = vmul.f32 %v5316, 1.442695
    %v5319 = vpow.pop %v5318
    %v5320 = vmul.f32 %v5317, 1.442695
    %v5321 = vpow.pop %v5320
    %v5322 = vsel %vm3899, %v5319, 0.0
    %5323 = vadd.xlane.f32.xlu0 %v5322
    %v5324 = vpop.xlane.xlu0 %5323
    %v5325 = vsel %vm3899, %v5321, 0.0
    %5326 = vadd.xlane.f32.xlu0 %v5325
    %v5327 = vpop.xlane.xlu0 %5326
    %v5328 = vrcp.pop %v5324
    %v5329 = vmul.f32 %v5319, %v5328
    %v5330 = vrcp.pop %v5327
    %v5331 = vmul.f32 %v5321, %v5330
    %5332 = vrot.lane.b32.xlu0 %v3754, 72
    %v5333 = vpop.permute.xlu0 %5332
    %5334 = vrot.lane.b32.xlu0 %v3760, 72
    %v5335 = vpop.permute.xlu0 %5334
    %v5339 = vsel %vm3899, %v5329, 0
    %v5342 = vsel %vm3899, %v5331, 0
    %5344 = vmatprep.subr.mxu0 0.0
    %5345 = vmatpush1.msra.mxu0 %v5333
    %5346 = vmatprep.subr.mxu0 0.0
    %5347 = vmatpush1.msra.mxu0 %v5335
    %5348 = vmatprep.subr.mxu0 0.0
    %5349 = vmatpush1.msra.mxu0 0.0
    %5350 = vmatprep.subr.mxu0 0.0
    %5351 = vmatpush1.msra.mxu0 0.0
    %5352 = vmatprep.subr.mxu0 0.0
    %5353 = vmatpush1.msra.mxu0 0.0
    %5354 = vmatprep.subr.mxu0 0.0
    %5355 = vmatpush1.msra.mxu0 0.0
    %5356 = vmatprep.subr.mxu0 0.0
    %5357 = vmatpush1.msra.mxu0 0.0
    %5358 = vmatprep.subr.mxu0 0.0
    %5359 = vmatpush1.msra.mxu0 0.0
    %5360 = vmatprep.subr.mxu0 0.0
    %5361 = vmatpush1.msra.mxu0 0.0
    %5362 = vmatprep.subr.mxu0 0.0
    %5363 = vmatpush1.msra.mxu0 0.0
    %5364 = vmatprep.subr.mxu0 0.0
    %5365 = vmatpush1.msra.mxu0 0.0
    %5366 = vmatprep.subr.mxu0 0.0
    %5367 = vmatpush1.msra.mxu0 0.0
    %5368 = vmatprep.subr.mxu0 0.0
    %5369 = vmatpush1.msra.mxu0 0.0
    %5370 = vmatprep.subr.mxu0 0.0
    %5371 = vmatpush1.msra.mxu0 0.0
    %5372 = vmatprep.subr.mxu0 0.0
    %5373 = vmatpush1.msra.mxu0 0.0
    %5374 = vmatprep.subr.mxu0 0.0
    %5375 = vmatpush1.msra.mxu0 0.0
    %5376 = vmatprep.subr.mxu0 0.0
    %5377 = vmatpush1.msra.mxu0 0.0
    %5378 = vmatprep.subr.mxu0 0.0
    %5379 = vmatpush1.msra.mxu0 0.0
    %5380 = vmatprep.subr.mxu0 0.0
    %5381 = vmatpush1.msra.mxu0 0.0
    %5382 = vmatprep.subr.mxu0 0.0
    %5383 = vmatpush1.msra.mxu0 0.0
    %5384 = vmatprep.subr.mxu0 0.0
    %5385 = vmatpush1.msra.mxu0 0.0
    %5386 = vmatprep.subr.mxu0 0.0
    %5387 = vmatpush1.msra.mxu0 0.0
    %5388 = vmatprep.subr.mxu0 0.0
    %5389 = vmatpush1.msra.mxu0 0.0
    %5390 = vmatprep.subr.mxu0 0.0
    %5391 = vmatpush1.msra.mxu0 0.0
    %5392 = vmatprep.subr.mxu0 0.0
    %5393 = vmatpush1.msra.mxu0 0.0
    %5394 = vmatprep.subr.mxu0 0.0
    %5395 = vmatpush1.msra.mxu0 0.0
    %5396 = vmatprep.subr.mxu0 0.0
    %5397 = vmatpush1.msra.mxu0 0.0
    %5398 = vmatprep.subr.mxu0 0.0
    %5399 = vmatpush1.msra.mxu0 0.0
    %5400 = vmatprep.subr.mxu0 0.0
    %5401 = vmatpush1.msra.mxu0 0.0
    %5402 = vmatprep.subr.mxu0 0.0
    %5403 = vmatpush1.msra.mxu0 0.0
    %5404 = vmatprep.subr.mxu0 0.0
    %5405 = vmatpush1.msra.mxu0 0.0
    %5406 = vmatprep.subr.mxu0 0.0
    %5407 = vmatpush1.msra.mxu0 0.0
    %5408 = vmatprep.mubr.f32.mxu0 0.0
    %5409 = vmatmul.mubr.f32.gmra.mrb[0].mxu0 %v5339
    %v5410 = vpop.f32.mrb[0].mxu0
    %v5411 = vadd.f32 0.0, %v5410
    %v5412 = vpop.f32.mrb[0].mxu0
    %5413 = vmatprep.mubr.f32.mxu0 0.0
    %5414 = vmatmul.mubr.f32.gmra.mrb[0].mxu0 %v5342
    %v5415 = vpop.f32.mrb[0].mxu0
    %v5416 = vadd.f32 0.0, %v5415
    %v5417 = vpop.f32.mrb[0].mxu0
    %5418 = vdwg.mxu0
    %5421 = vrot.lane.b32.xlu0 %v4199, 8
    %v5422 = vpop.permute.xlu0 %5421
    %5423 = vrot.lane.b32.xlu0 %v4204, 8
    %v5424 = vpop.permute.xlu0 %5423
    %5429 = vrot.lane.b32.xlu0 %v4401, 16
    %v5430 = vpop.permute.xlu0 %5429
    %5431 = vrot.lane.b32.xlu0 %v4406, 16
    %v5432 = vpop.permute.xlu0 %5431
    %5437 = vrot.lane.b32.xlu0 %v4603, 24
    %v5438 = vpop.permute.xlu0 %5437
    %5439 = vrot.lane.b32.xlu0 %v4608, 24
    %v5440 = vpop.permute.xlu0 %5439
    %5445 = vrot.lane.b32.xlu0 %v4805, 32
    %v5446 = vpop.permute.xlu0 %5445
    %5447 = vrot.lane.b32.xlu0 %v4810, 32
    %v5448 = vpop.permute.xlu0 %5447
    %5453 = vrot.lane.b32.xlu0 %v5007, 40
    %v5454 = vpop.permute.xlu0 %5453
    %5455 = vrot.lane.b32.xlu0 %v5012, 40
    %v5456 = vpop.permute.xlu0 %5455
    %5461 = vrot.lane.b32.xlu0 %v5209, 48
    %v5462 = vpop.permute.xlu0 %5461
    %5463 = vrot.lane.b32.xlu0 %v5214, 48
    %v5464 = vpop.permute.xlu0 %5463
    %5469 = vrot.lane.b32.xlu0 %v5411, 56
    %v5470 = vpop.permute.xlu0 %5469
    %5471 = vrot.lane.b32.xlu0 %v5416, 56
    %v5472 = vpop.permute.xlu0 %5471
    %v5475 = vsel %vm3811, %v3995, %v5422
    %v5476 = vsel %vm3811, %v4000, %v5424
    %v5477 = vsel %vm3899, %v5475, %v5430
    %v5478 = vsel %vm3899, %v5476, %v5432
    %vm5479 = vcmask 195584
    %v5480 = vsel %vm5479, %v5477, %v5438
    %v5481 = vsel %vm5479, %v5478, %v5440
    %vm5482 = vcmask 261120
    %v5483 = vsel %vm5482, %v5480, %v5446
    %v5484 = vsel %vm5482, %v5481, %v5448
    %vm5485 = vcmask 326656
    %v5486 = vsel %vm5485, %v5483, %v5454
    %v5487 = vsel %vm5485, %v5484, %v5456
    %vm5488 = vcmask 392192
    %v5489 = vsel %vm5488, %v5486, %v5462
    %v5490 = vsel %vm5488, %v5487, %v5464
    %vm5491 = vcmask 457728
    %v5492 = vsel %vm5491, %v5489, %v5470
    %v5493 = vsel %vm5491, %v5490, %v5472
    %v5494 = vld [vmem:[#allocation8] sm:$0xff]
    %v5495 = vld [vmem:[#allocation8 + $0x8] sm:$0xff]
    %v5496 = vld [vmem:[#allocation8 + $0x10] sm:$0xff]
    %v5497 = vld [vmem:[#allocation8 + $0x18] sm:$0xff]
    %v5498 = vld [vmem:[#allocation8 + $0x20] sm:$0xff]
    %v5499 = vld [vmem:[#allocation8 + $0x28] sm:$0xff]
    %v5500 = vld [vmem:[#allocation8 + $0x30] sm:$0xff]
    %v5501 = vld [vmem:[#allocation8 + $0x38] sm:$0xff]
    %v5502 = vld [vmem:[#allocation10] sm:$0x1]
    %v5504 = vlaneseq
    %v5505 = vshrl.u32 %v5504, 7
    %v5506 = vsub.s32 0, %v5505
    %v5507 = vrot.slane %v5502, %v5506
    %v5510 = vsel %vm269, %v5492, 0
    %v5513 = vsel %vm269, %v5493, 0
    %5515 = vmatprep.subr.mxu0 0.0
    %5516 = vmatpush1.msra.mxu0 %v5494
    %5517 = vmatprep.subr.mxu0 0.0
    %5518 = vmatpush1.msra.mxu0 %v5495
    %5519 = vmatprep.subr.mxu0 0.0
    %5520 = vmatpush1.msra.mxu0 %v5496
    %5521 = vmatprep.subr.mxu0 0.0
    %5522 = vmatpush1.msra.mxu0 %v5497
    %5523 = vmatprep.subr.mxu0 0.0
    %5524 = vmatpush1.msra.mxu0 %v5498
    %5525 = vmatprep.subr.mxu0 0.0
    %5526 = vmatpush1.msra.mxu0 %v5499
    %5527 = vmatprep.subr.mxu0 0.0
    %5528 = vmatpush1.msra.mxu0 %v5500
    %5529 = vmatprep.subr.mxu0 0.0
    %5530 = vmatpush1.msra.mxu0 %v5501
    %5531 = vmatprep.subr.mxu0 0.0
    %5532 = vmatpush1.msra.mxu0 0.0
    %5533 = vmatprep.subr.mxu0 0.0
    %5534 = vmatpush1.msra.mxu0 0.0
    %5535 = vmatprep.subr.mxu0 0.0
    %5536 = vmatpush1.msra.mxu0 0.0
    %5537 = vmatprep.subr.mxu0 0.0
    %5538 = vmatpush1.msra.mxu0 0.0
    %5539 = vmatprep.subr.mxu0 0.0
    %5540 = vmatpush1.msra.mxu0 0.0
    %5541 = vmatprep.subr.mxu0 0.0
    %5542 = vmatpush1.msra.mxu0 0.0
    %5543 = vmatprep.subr.mxu0 0.0
    %5544 = vmatpush1.msra.mxu0 0.0
    %5545 = vmatprep.subr.mxu0 0.0
    %5546 = vmatpush1.msra.mxu0 0.0
    %5547 = vmatprep.subr.mxu0 0.0
    %5548 = vmatpush1.msra.mxu0 0.0
    %5549 = vmatprep.subr.mxu0 0.0
    %5550 = vmatpush1.msra.mxu0 0.0
    %5551 = vmatprep.subr.mxu0 0.0
    %5552 = vmatpush1.msra.mxu0 0.0
    %5553 = vmatprep.subr.mxu0 0.0
    %5554 = vmatpush1.msra.mxu0 0.0
    %5555 = vmatprep.subr.mxu0 0.0
    %5556 = vmatpush1.msra.mxu0 0.0
    %5557 = vmatprep.subr.mxu0 0.0
    %5558 = vmatpush1.msra.mxu0 0.0
    %5559 = vmatprep.subr.mxu0 0.0
    %5560 = vmatpush1.msra.mxu0 0.0
    %5561 = vmatprep.subr.mxu0 0.0
    %5562 = vmatpush1.msra.mxu0 0.0
    %5563 = vmatprep.subr.mxu0 0.0
    %5564 = vmatpush1.msra.mxu0 0.0
    %5565 = vmatprep.subr.mxu0 0.0
    %5566 = vmatpush1.msra.mxu0 0.0
    %5567 = vmatprep.subr.mxu0 0.0
    %5568 = vmatpush1.msra.mxu0 0.0
    %5569 = vmatprep.subr.mxu0 0.0
    %5570 = vmatpush1.msra.mxu0 0.0
    %5571 = vmatprep.subr.mxu0 0.0
    %5572 = vmatpush1.msra.mxu0 0.0
    %5573 = vmatprep.subr.mxu0 0.0
    %5574 = vmatpush1.msra.mxu0 0.0
    %5575 = vmatprep.subr.mxu0 0.0
    %5576 = vmatpush1.msra.mxu0 0.0
    %5577 = vmatprep.subr.mxu0 0.0
    %5578 = vmatpush1.msra.mxu0 0.0
    %5579 = vmatprep.mubr.f32.mxu0 0.0
    %5580 = vmatmul.mubr.f32.gmra.mrb[0].mxu0 %v5510
    %v5581 = vpop.f32.mrb[0].mxu0
    %v5582 = vadd.f32 %v5507, %v5581
    %v5583 = vpop.f32.mrb[0].mxu0
    %5584 = vmatprep.mubr.f32.mxu0 0.0
    %5585 = vmatmul.mubr.f32.gmra.mrb[0].mxu0 %v5513
    %v5586 = vpop.f32.mrb[0].mxu0
    %v5587 = vadd.f32 %v5507, %v5586
    %v5588 = vpop.f32.mrb[0].mxu0
    %5589 = vdwg.mxu0
    %v5590 = vld [vmem:[%s9] sm:$0xff]
    %v5591 = vld [vmem:[%s9 + $0x8] sm:$0xff]
    %v5592 = vld [vmem:[%s9 + $0x10] sm:$0xff]
    %v5593 = vld [vmem:[%s9 + $0x18] sm:$0xff]
    %v5594 = vld [vmem:[%s9 + $0x20] sm:$0xff]
    %v5595 = vld [vmem:[%s9 + $0x28] sm:$0xff]
    %v5596 = vld [vmem:[%s9 + $0x30] sm:$0xff]
    %v5597 = vld [vmem:[%s9 + $0x38] sm:$0xff]
    %v5598 = vld [vmem:[%s9 + $0x40] sm:$0xff]
    %v5599 = vld [vmem:[%s9 + $0x48] sm:$0xff]
    %v5600 = vld [vmem:[%s9 + $0x50] sm:$0xff]
    %v5601 = vld [vmem:[%s9 + $0x58] sm:$0xff]
    %v5602 = vld [vmem:[%s9 + $0x60] sm:$0xff]
    %v5603 = vld [vmem:[%s9 + $0x68] sm:$0xff]
    %v5604 = vld [vmem:[%s9 + $0x70] sm:$0xff]
    %v5605 = vld [vmem:[%s9 + $0x78] sm:$0xff]
    %v5606 = vld [vmem:[%s9 + $0x80] sm:$0xff]
    %v5607 = vld [vmem:[%s9 + $0x88] sm:$0xff]
    %v5608 = vld [vmem:[%s9 + $0x90] sm:$0xff]
    %v5609 = vld [vmem:[%s9 + $0x98] sm:$0xff]
    %v5610 = vld [vmem:[%s9 + $0xa0] sm:$0xff]
    %v5611 = vld [vmem:[%s9 + $0xa8] sm:$0xff]
    %v5612 = vld [vmem:[%s9 + $0xb0] sm:$0xff]
    %v5613 = vld [vmem:[%s9 + $0xb8] sm:$0xff]
    %v5614 = vld [vmem:[%s9 + $0xc0] sm:$0xff]
    %v5615 = vld [vmem:[%s9 + $0xc8] sm:$0xff]
    %v5616 = vld [vmem:[%s9 + $0xd0] sm:$0xff]
    %v5617 = vld [vmem:[%s9 + $0xd8] sm:$0xff]
    %v5618 = vld [vmem:[%s9 + $0xe0] sm:$0xff]
    %v5619 = vld [vmem:[%s9 + $0xe8] sm:$0xff]
    %v5620 = vld [vmem:[%s9 + $0xf0] sm:$0xff]
    %v5621 = vld [vmem:[%s9 + $0xf8] sm:$0xff]
    %v5622 = vld [vmem:[%s9 + $0x100] sm:$0xff]
    %v5623 = vld [vmem:[%s9 + $0x108] sm:$0xff]
    %v5624 = vld [vmem:[%s9 + $0x110] sm:$0xff]
    %v5625 = vld [vmem:[%s9 + $0x118] sm:$0xff]
    %v5626 = vld [vmem:[%s9 + $0x120] sm:$0xff]
    %v5627 = vld [vmem:[%s9 + $0x128] sm:$0xff]
    %v5628 = vld [vmem:[%s9 + $0x130] sm:$0xff]
    %v5629 = vld [vmem:[%s9 + $0x138] sm:$0xff]
    %v5630 = vld [vmem:[%s9 + $0x140] sm:$0xff]
    %v5631 = vld [vmem:[%s9 + $0x148] sm:$0xff]
    %v5632 = vld [vmem:[%s9 + $0x150] sm:$0xff]
    %v5633 = vld [vmem:[%s9 + $0x158] sm:$0xff]
    %v5634 = vld [vmem:[%s9 + $0x160] sm:$0xff]
    %v5635 = vld [vmem:[%s9 + $0x168] sm:$0xff]
    %v5636 = vld [vmem:[%s9 + $0x170] sm:$0xff]
    %v5637 = vld [vmem:[%s9 + $0x178] sm:$0xff]
    %v5638 = vld [vmem:[%s9 + $0x180] sm:$0xff]
    %v5639 = vld [vmem:[%s9 + $0x188] sm:$0xff]
    %v5640 = vld [vmem:[%s9 + $0x190] sm:$0xff]
    %v5641 = vld [vmem:[%s9 + $0x198] sm:$0xff]
    %v5642 = vld [vmem:[%s9 + $0x1a0] sm:$0xff]
    %v5643 = vld [vmem:[%s9 + $0x1a8] sm:$0xff]
    %v5644 = vld [vmem:[%s9 + $0x1b0] sm:$0xff]
    %v5645 = vld [vmem:[%s9 + $0x1b8] sm:$0xff]
    %v5646 = vld [vmem:[%s9 + $0x1c0] sm:$0xff]
    %v5647 = vld [vmem:[%s9 + $0x1c8] sm:$0xff]
    %v5648 = vld [vmem:[%s9 + $0x1d0] sm:$0xff]
    %v5649 = vld [vmem:[%s9 + $0x1d8] sm:$0xff]
    %v5650 = vld [vmem:[%s9 + $0x1e0] sm:$0xff]
    %v5651 = vld [vmem:[%s9 + $0x1e8] sm:$0xff]
    %v5652 = vld [vmem:[%s9 + $0x1f0] sm:$0xff]
    %v5653 = vld [vmem:[%s9 + $0x1f8] sm:$0xff]
    %v5655 = vrot.slane %v5582, 2
    %v5656 = vsel %vm269, %v5655, 0
    %5658 = vmatprep.subr.mxu0 0.0
    %5659 = vmatpush1.msra.mxu0 %v5598
    %5660 = vmatprep.subr.mxu0 0.0
    %5661 = vmatpush1.msra.mxu0 %v5599
    %5662 = vmatprep.subr.mxu0 0.0
    %5663 = vmatpush1.msra.mxu0 %v5600
    %5664 = vmatprep.subr.mxu0 0.0
    %5665 = vmatpush1.msra.mxu0 %v5601
    %5666 = vmatprep.subr.mxu0 0.0
    %5667 = vmatpush1.msra.mxu0 %v5602
    %5668 = vmatprep.subr.mxu0 0.0
    %5669 = vmatpush1.msra.mxu0 %v5603
    %5670 = vmatprep.subr.mxu0 0.0
    %5671 = vmatpush1.msra.mxu0 %v5604
    %5672 = vmatprep.subr.mxu0 0.0
    %5673 = vmatpush1.msra.mxu0 %v5605
    %5674 = vmatprep.subr.mxu0 0.0
    %5675 = vmatpush1.msra.mxu0 0.0
    %5676 = vmatprep.subr.mxu0 0.0
    %5677 = vmatpush1.msra.mxu0 0.0
    %5678 = vmatprep.subr.mxu0 0.0
    %5679 = vmatpush1.msra.mxu0 0.0
    %5680 = vmatprep.subr.mxu0 0.0
    %5681 = vmatpush1.msra.mxu0 0.0
    %5682 = vmatprep.subr.mxu0 0.0
    %5683 = vmatpush1.msra.mxu0 0.0
    %5684 = vmatprep.subr.mxu0 0.0
    %5685 = vmatpush1.msra.mxu0 0.0
    %5686 = vmatprep.subr.mxu0 0.0
    %5687 = vmatpush1.msra.mxu0 0.0
    %5688 = vmatprep.subr.mxu0 0.0
    %5689 = vmatpush1.msra.mxu0 0.0
    %5690 = vmatprep.subr.mxu0 0.0
    %5691 = vmatpush1.msra.mxu0 0.0
    %5692 = vmatprep.subr.mxu0 0.0
    %5693 = vmatpush1.msra.mxu0 0.0
    %5694 = vmatprep.subr.mxu0 0.0
    %5695 = vmatpush1.msra.mxu0 0.0
    %5696 = vmatprep.subr.mxu0 0.0
    %5697 = vmatpush1.msra.mxu0 0.0
    %5698 = vmatprep.subr.mxu0 0.0
    %5699 = vmatpush1.msra.mxu0 0.0
    %5700 = vmatprep.subr.mxu0 0.0
    %5701 = vmatpush1.msra.mxu0 0.0
    %5702 = vmatprep.subr.mxu0 0.0
    %5703 = vmatpush1.msra.mxu0 0.0
    %5704 = vmatprep.subr.mxu0 0.0
    %5705 = vmatpush1.msra.mxu0 0.0
    %5706 = vmatprep.subr.mxu0 0.0
    %5707 = vmatpush1.msra.mxu0 0.0
    %5708 = vmatprep.subr.mxu0 0.0
    %5709 = vmatpush1.msra.mxu0 0.0
    %5710 = vmatprep.subr.mxu0 0.0
    %5711 = vmatpush1.msra.mxu0 0.0
    %5712 = vmatprep.subr.mxu0 0.0
    %5713 = vmatpush1.msra.mxu0 0.0
    %5714 = vmatprep.subr.mxu0 0.0
    %5715 = vmatpush1.msra.mxu0 0.0
    %5716 = vmatprep.subr.mxu0 0.0
    %5717 = vmatpush1.msra.mxu0 0.0
    %5718 = vmatprep.subr.mxu0 0.0
    %5719 = vmatpush1.msra.mxu0 0.0
    %5720 = vmatprep.subr.mxu0 0.0
    %5721 = vmatpush1.msra.mxu0 0.0
    %5722 = vmatprep.mubr.f32.mxu0 0.0
    %5723 = vmatmul.mubr.f32.gmra.mrb[0].mxu0 %v5656
    %v5724 = vpop.f32.mrb[0].mxu0
    %v5725 = vadd.f32 0.0, %v5724
    %v5726 = vpop.f32.mrb[0].mxu0
    %5727 = vdwg.mxu0
    %v5728 = vsel %vm269, %v5582, 0
    %5730 = vmatprep.subr.mxu0 0.0
    %5731 = vmatpush1.msra.mxu0 %v5590
    %5732 = vmatprep.subr.mxu0 0.0
    %5733 = vmatpush1.msra.mxu0 %v5591
    %5734 = vmatprep.subr.mxu0 0.0
    %5735 = vmatpush1.msra.mxu0 %v5592
    %5736 = vmatprep.subr.mxu0 0.0
    %5737 = vmatpush1.msra.mxu0 %v5593
    %5738 = vmatprep.subr.mxu0 0.0
    %5739 = vmatpush1.msra.mxu0 %v5594
    %5740 = vmatprep.subr.mxu0 0.0
    %5741 = vmatpush1.msra.mxu0 %v5595
    %5742 = vmatprep.subr.mxu0 0.0
    %5743 = vmatpush1.msra.mxu0 %v5596
    %5744 = vmatprep.subr.mxu0 0.0
    %5745 = vmatpush1.msra.mxu0 %v5597
    %5746 = vmatprep.subr.mxu0 0.0
    %5747 = vmatpush1.msra.mxu0 0.0
    %5748 = vmatprep.subr.mxu0 0.0
    %5749 = vmatpush1.msra.mxu0 0.0
    %5750 = vmatprep.subr.mxu0 0.0
    %5751 = vmatpush1.msra.mxu0 0.0
    %5752 = vmatprep.subr.mxu0 0.0
    %5753 = vmatpush1.msra.mxu0 0.0
    %5754 = vmatprep.subr.mxu0 0.0
    %5755 = vmatpush1.msra.mxu0 0.0
    %5756 = vmatprep.subr.mxu0 0.0
    %5757 = vmatpush1.msra.mxu0 0.0
    %5758 = vmatprep.subr.mxu0 0.0
    %5759 = vmatpush1.msra.mxu0 0.0
    %5760 = vmatprep.subr.mxu0 0.0
    %5761 = vmatpush1.msra.mxu0 0.0
    %5762 = vmatprep.subr.mxu0 0.0
    %5763 = vmatpush1.msra.mxu0 0.0
    %5764 = vmatprep.subr.mxu0 0.0
    %5765 = vmatpush1.msra.mxu0 0.0
    %5766 = vmatprep.subr.mxu0 0.0
    %5767 = vmatpush1.msra.mxu0 0.0
    %5768 = vmatprep.subr.mxu0 0.0
    %5769 = vmatpush1.msra.mxu0 0.0
    %5770 = vmatprep.subr.mxu0 0.0
    %5771 = vmatpush1.msra.mxu0 0.0
    %5772 = vmatprep.subr.mxu0 0.0
    %5773 = vmatpush1.msra.mxu0 0.0
    %5774 = vmatprep.subr.mxu0 0.0
    %5775 = vmatpush1.msra.mxu0 0.0
    %5776 = vmatprep.subr.mxu0 0.0
    %5777 = vmatpush1.msra.mxu0 0.0
    %5778 = vmatprep.subr.mxu0 0.0
    %5779 = vmatpush1.msra.mxu0 0.0
    %5780 = vmatprep.subr.mxu0 0.0
    %5781 = vmatpush1.msra.mxu0 0.0
    %5782 = vmatprep.subr.mxu0 0.0
    %5783 = vmatpush1.msra.mxu0 0.0
    %5784 = vmatprep.subr.mxu0 0.0
    %5785 = vmatpush1.msra.mxu0 0.0
    %5786 = vmatprep.subr.mxu0 0.0
    %5787 = vmatpush1.msra.mxu0 0.0
    %5788 = vmatprep.subr.mxu0 0.0
    %5789 = vmatpush1.msra.mxu0 0.0
    %5790 = vmatprep.subr.mxu0 0.0
    %5791 = vmatpush1.msra.mxu0 0.0
    %5792 = vmatprep.subr.mxu0 0.0
    %5793 = vmatpush1.msra.mxu0 0.0
    %5794 = vmatprep.mubr.f32.mxu0 0.0
    %5795 = vmatmul.mubr.f32.gmra.mrb[0].mxu0 %v5728
    %v5796 = vpop.f32.mrb[0].mxu0
    %v5797 = vadd.f32 %v5725, %v5796
    %v5798 = vpop.f32.mrb[0].mxu0
    %5799 = vdwg.mxu0
    %v5800 = vrot.slane %v5582, 4
    %v5801 = vsel %vm269, %v5800, 0
    %5803 = vmatprep.subr.mxu0 0.0
    %5804 = vmatpush1.msra.mxu0 %v5606
    %5805 = vmatprep.subr.mxu0 0.0
    %5806 = vmatpush1.msra.mxu0 %v5607
    %5807 = vmatprep.subr.mxu0 0.0
    %5808 = vmatpush1.msra.mxu0 %v5608
    %5809 = vmatprep.subr.mxu0 0.0
    %5810 = vmatpush1.msra.mxu0 %v5609
    %5811 = vmatprep.subr.mxu0 0.0
    %5812 = vmatpush1.msra.mxu0 %v5610
    %5813 = vmatprep.subr.mxu0 0.0
    %5814 = vmatpush1.msra.mxu0 %v5611
    %5815 = vmatprep.subr.mxu0 0.0
    %5816 = vmatpush1.msra.mxu0 %v5612
    %5817 = vmatprep.subr.mxu0 0.0
    %5818 = vmatpush1.msra.mxu0 %v5613
    %5819 = vmatprep.subr.mxu0 0.0
    %5820 = vmatpush1.msra.mxu0 0.0
    %5821 = vmatprep.subr.mxu0 0.0
    %5822 = vmatpush1.msra.mxu0 0.0
    %5823 = vmatprep.subr.mxu0 0.0
    %5824 = vmatpush1.msra.mxu0 0.0
    %5825 = vmatprep.subr.mxu0 0.0
    %5826 = vmatpush1.msra.mxu0 0.0
    %5827 = vmatprep.subr.mxu0 0.0
    %5828 = vmatpush1.msra.mxu0 0.0
    %5829 = vmatprep.subr.mxu0 0.0
    %5830 = vmatpush1.msra.mxu0 0.0
    %5831 = vmatprep.subr.mxu0 0.0
    %5832 = vmatpush1.msra.mxu0 0.0
    %5833 = vmatprep.subr.mxu0 0.0
    %5834 = vmatpush1.msra.mxu0 0.0
    %5835 = vmatprep.subr.mxu0 0.0
    %5836 = vmatpush1.msra.mxu0 0.0
    %5837 = vmatprep.subr.mxu0 0.0
    %5838 = vmatpush1.msra.mxu0 0.0
    %5839 = vmatprep.subr.mxu0 0.0
    %5840 = vmatpush1.msra.mxu0 0.0
    %5841 = vmatprep.subr.mxu0 0.0
    %5842 = vmatpush1.msra.mxu0 0.0
    %5843 = vmatprep.subr.mxu0 0.0
    %5844 = vmatpush1.msra.mxu0 0.0
    %5845 = vmatprep.subr.mxu0 0.0
    %5846 = vmatpush1.msra.mxu0 0.0
    %5847 = vmatprep.subr.mxu0 0.0
    %5848 = vmatpush1.msra.mxu0 0.0
    %5849 = vmatprep.subr.mxu0 0.0
    %5850 = vmatpush1.msra.mxu0 0.0
    %5851 = vmatprep.subr.mxu0 0.0
    %5852 = vmatpush1.msra.mxu0 0.0
    %5853 = vmatprep.subr.mxu0 0.0
    %5854 = vmatpush1.msra.mxu0 0.0
    %5855 = vmatprep.subr.mxu0 0.0
    %5856 = vmatpush1.msra.mxu0 0.0
    %5857 = vmatprep.subr.mxu0 0.0
    %5858 = vmatpush1.msra.mxu0 0.0
    %5859 = vmatprep.subr.mxu0 0.0
    %5860 = vmatpush1.msra.mxu0 0.0
    %5861 = vmatprep.subr.mxu0 0.0
    %5862 = vmatpush1.msra.mxu0 0.0
    %5863 = vmatprep.subr.mxu0 0.0
    %5864 = vmatpush1.msra.mxu0 0.0
    %5865 = vmatprep.subr.mxu0 0.0
    %5866 = vmatpush1.msra.mxu0 0.0
    %5867 = vmatprep.mubr.f32.mxu0 0.0
    %5868 = vmatmul.mubr.f32.gmra.mrb[0].mxu0 %v5801
    %v5869 = vpop.f32.mrb[0].mxu0
    %v5870 = vadd.f32 0.0, %v5869
    %v5871 = vpop.f32.mrb[0].mxu0
    %5872 = vdwg.mxu0
    %v5873 = vadd.f32 %v5797, %v5870
    %v5874 = vrot.slane %v5582, 6
    %v5875 = vsel %vm269, %v5874, 0
    %5877 = vmatprep.subr.mxu0 0.0
    %5878 = vmatpush1.msra.mxu0 %v5614
    %5879 = vmatprep.subr.mxu0 0.0
    %5880 = vmatpush1.msra.mxu0 %v5615
    %5881 = vmatprep.subr.mxu0 0.0
    %5882 = vmatpush1.msra.mxu0 %v5616
    %5883 = vmatprep.subr.mxu0 0.0
    %5884 = vmatpush1.msra.mxu0 %v5617
    %5885 = vmatprep.subr.mxu0 0.0
    %5886 = vmatpush1.msra.mxu0 %v5618
    %5887 = vmatprep.subr.mxu0 0.0
    %5888 = vmatpush1.msra.mxu0 %v5619
    %5889 = vmatprep.subr.mxu0 0.0
    %5890 = vmatpush1.msra.mxu0 %v5620
    %5891 = vmatprep.subr.mxu0 0.0
    %5892 = vmatpush1.msra.mxu0 %v5621
    %5893 = vmatprep.subr.mxu0 0.0
    %5894 = vmatpush1.msra.mxu0 0.0
    %5895 = vmatprep.subr.mxu0 0.0
    %5896 = vmatpush1.msra.mxu0 0.0
    %5897 = vmatprep.subr.mxu0 0.0
    %5898 = vmatpush1.msra.mxu0 0.0
    %5899 = vmatprep.subr.mxu0 0.0
    %5900 = vmatpush1.msra.mxu0 0.0
    %5901 = vmatprep.subr.mxu0 0.0
    %5902 = vmatpush1.msra.mxu0 0.0
    %5903 = vmatprep.subr.mxu0 0.0
    %5904 = vmatpush1.msra.mxu0 0.0
    %5905 = vmatprep.subr.mxu0 0.0
    %5906 = vmatpush1.msra.mxu0 0.0
    %5907 = vmatprep.subr.mxu0 0.0
    %5908 = vmatpush1.msra.mxu0 0.0
    %5909 = vmatprep.subr.mxu0 0.0
    %5910 = vmatpush1.msra.mxu0 0.0
    %5911 = vmatprep.subr.mxu0 0.0
    %5912 = vmatpush1.msra.mxu0 0.0
    %5913 = vmatprep.subr.mxu0 0.0
    %5914 = vmatpush1.msra.mxu0 0.0
    %5915 = vmatprep.subr.mxu0 0.0
    %5916 = vmatpush1.msra.mxu0 0.0
    %5917 = vmatprep.subr.mxu0 0.0
    %5918 = vmatpush1.msra.mxu0 0.0
    %5919 = vmatprep.subr.mxu0 0.0
    %5920 = vmatpush1.msra.mxu0 0.0
    %5921 = vmatprep.subr.mxu0 0.0
    %5922 = vmatpush1.msra.mxu0 0.0
    %5923 = vmatprep.subr.mxu0 0.0
    %5924 = vmatpush1.msra.mxu0 0.0
    %5925 = vmatprep.subr.mxu0 0.0
    %5926 = vmatpush1.msra.mxu0 0.0
    %5927 = vmatprep.subr.mxu0 0.0
    %5928 = vmatpush1.msra.mxu0 0.0
    %5929 = vmatprep.subr.mxu0 0.0
    %5930 = vmatpush1.msra.mxu0 0.0
    %5931 = vmatprep.subr.mxu0 0.0
    %5932 = vmatpush1.msra.mxu0 0.0
    %5933 = vmatprep.subr.mxu0 0.0
    %5934 = vmatpush1.msra.mxu0 0.0
    %5935 = vmatprep.subr.mxu0 0.0
    %5936 = vmatpush1.msra.mxu0 0.0
    %5937 = vmatprep.subr.mxu0 0.0
    %5938 = vmatpush1.msra.mxu0 0.0
    %5939 = vmatprep.subr.mxu0 0.0
    %5940 = vmatpush1.msra.mxu0 0.0
    %5941 = vmatprep.mubr.f32.mxu0 0.0
    %5942 = vmatmul.mubr.f32.gmra.mrb[0].mxu0 %v5875
    %v5943 = vpop.f32.mrb[0].mxu0
    %v5944 = vadd.f32 0.0, %v5943
    %v5945 = vpop.f32.mrb[0].mxu0
    %5946 = vdwg.mxu0
    %v5947 = vadd.f32 %v5873, %v5944
    %v5949 = vsel %vm269, %v5587, 0
    %5951 = vmatprep.subr.mxu0 0.0
    %5952 = vmatpush1.msra.mxu0 %v5622
    %5953 = vmatprep.subr.mxu0 0.0
    %5954 = vmatpush1.msra.mxu0 %v5623
    %5955 = vmatprep.subr.mxu0 0.0
    %5956 = vmatpush1.msra.mxu0 %v5624
    %5957 = vmatprep.subr.mxu0 0.0
    %5958 = vmatpush1.msra.mxu0 %v5625
    %5959 = vmatprep.subr.mxu0 0.0
    %5960 = vmatpush1.msra.mxu0 %v5626
    %5961 = vmatprep.subr.mxu0 0.0
    %5962 = vmatpush1.msra.mxu0 %v5627
    %5963 = vmatprep.subr.mxu0 0.0
    %5964 = vmatpush1.msra.mxu0 %v5628
    %5965 = vmatprep.subr.mxu0 0.0
    %5966 = vmatpush1.msra.mxu0 %v5629
    %5967 = vmatprep.subr.mxu0 0.0
    %5968 = vmatpush1.msra.mxu0 0.0
    %5969 = vmatprep.subr.mxu0 0.0
    %5970 = vmatpush1.msra.mxu0 0.0
    %5971 = vmatprep.subr.mxu0 0.0
    %5972 = vmatpush1.msra.mxu0 0.0
    %5973 = vmatprep.subr.mxu0 0.0
    %5974 = vmatpush1.msra.mxu0 0.0
    %5975 = vmatprep.subr.mxu0 0.0
    %5976 = vmatpush1.msra.mxu0 0.0
    %5977 = vmatprep.subr.mxu0 0.0
    %5978 = vmatpush1.msra.mxu0 0.0
    %5979 = vmatprep.subr.mxu0 0.0
    %5980 = vmatpush1.msra.mxu0 0.0
    %5981 = vmatprep.subr.mxu0 0.0
    %5982 = vmatpush1.msra.mxu0 0.0
    %5983 = vmatprep.subr.mxu0 0.0
    %5984 = vmatpush1.msra.mxu0 0.0
    %5985 = vmatprep.subr.mxu0 0.0
    %5986 = vmatpush1.msra.mxu0 0.0
    %5987 = vmatprep.subr.mxu0 0.0
    %5988 = vmatpush1.msra.mxu0 0.0
    %5989 = vmatprep.subr.mxu0 0.0
    %5990 = vmatpush1.msra.mxu0 0.0
    %5991 = vmatprep.subr.mxu0 0.0
    %5992 = vmatpush1.msra.mxu0 0.0
    %5993 = vmatprep.subr.mxu0 0.0
    %5994 = vmatpush1.msra.mxu0 0.0
    %5995 = vmatprep.subr.mxu0 0.0
    %5996 = vmatpush1.msra.mxu0 0.0
    %5997 = vmatprep.subr.mxu0 0.0
    %5998 = vmatpush1.msra.mxu0 0.0
    %5999 = vmatprep.subr.mxu0 0.0
    %6000 = vmatpush1.msra.mxu0 0.0
    %6001 = vmatprep.subr.mxu0 0.0
    %6002 = vmatpush1.msra.mxu0 0.0
    %6003 = vmatprep.subr.mxu0 0.0
    %6004 = vmatpush1.msra.mxu0 0.0
    %6005 = vmatprep.subr.mxu0 0.0
    %6006 = vmatpush1.msra.mxu0 0.0
    %6007 = vmatprep.subr.mxu0 0.0
    %6008 = vmatpush1.msra.mxu0 0.0
    %6009 = vmatprep.subr.mxu0 0.0
    %6010 = vmatpush1.msra.mxu0 0.0
    %6011 = vmatprep.subr.mxu0 0.0
    %6012 = vmatpush1.msra.mxu0 0.0
    %6013 = vmatprep.subr.mxu0 0.0
    %6014 = vmatpush1.msra.mxu0 0.0
    %6015 = vmatprep.mubr.f32.mxu0 0.0
    %6016 = vmatmul.mubr.f32.gmra.mrb[0].mxu0 %v5949
    %v6017 = vpop.f32.mrb[0].mxu0
    %v6018 = vadd.f32 0.0, %v6017
    %v6019 = vpop.f32.mrb[0].mxu0
    %6020 = vdwg.mxu0
    %v6021 = vadd.f32 %v5947, %v6018
    %v6022 = vrot.slane %v5587, 2
    %v6023 = vsel %vm269, %v6022, 0
    %6025 = vmatprep.subr.mxu0 0.0
    %6026 = vmatpush1.msra.mxu0 %v5630
    %6027 = vmatprep.subr.mxu0 0.0
    %6028 = vmatpush1.msra.mxu0 %v5631
    %6029 = vmatprep.subr.mxu0 0.0
    %6030 = vmatpush1.msra.mxu0 %v5632
    %6031 = vmatprep.subr.mxu0 0.0
    %6032 = vmatpush1.msra.mxu0 %v5633
    %6033 = vmatprep.subr.mxu0 0.0
    %6034 = vmatpush1.msra.mxu0 %v5634
    %6035 = vmatprep.subr.mxu0 0.0
    %6036 = vmatpush1.msra.mxu0 %v5635
    %6037 = vmatprep.subr.mxu0 0.0
    %6038 = vmatpush1.msra.mxu0 %v5636
    %6039 = vmatprep.subr.mxu0 0.0
    %6040 = vmatpush1.msra.mxu0 %v5637
    %6041 = vmatprep.subr.mxu0 0.0
    %6042 = vmatpush1.msra.mxu0 0.0
    %6043 = vmatprep.subr.mxu0 0.0
    %6044 = vmatpush1.msra.mxu0 0.0
    %6045 = vmatprep.subr.mxu0 0.0
    %6046 = vmatpush1.msra.mxu0 0.0
    %6047 = vmatprep.subr.mxu0 0.0
    %6048 = vmatpush1.msra.mxu0 0.0
    %6049 = vmatprep.subr.mxu0 0.0
    %6050 = vmatpush1.msra.mxu0 0.0
    %6051 = vmatprep.subr.mxu0 0.0
    %6052 = vmatpush1.msra.mxu0 0.0
    %6053 = vmatprep.subr.mxu0 0.0
    %6054 = vmatpush1.msra.mxu0 0.0
    %6055 = vmatprep.subr.mxu0 0.0
    %6056 = vmatpush1.msra.mxu0 0.0
    %6057 = vmatprep.subr.mxu0 0.0
    %6058 = vmatpush1.msra.mxu0 0.0
    %6059 = vmatprep.subr.mxu0 0.0
    %6060 = vmatpush1.msra.mxu0 0.0
    %6061 = vmatprep.subr.mxu0 0.0
    %6062 = vmatpush1.msra.mxu0 0.0
    %6063 = vmatprep.subr.mxu0 0.0
    %6064 = vmatpush1.msra.mxu0 0.0
    %6065 = vmatprep.subr.mxu0 0.0
    %6066 = vmatpush1.msra.mxu0 0.0
    %6067 = vmatprep.subr.mxu0 0.0
    %6068 = vmatpush1.msra.mxu0 0.0
    %6069 = vmatprep.subr.mxu0 0.0
    %6070 = vmatpush1.msra.mxu0 0.0
    %6071 = vmatprep.subr.mxu0 0.0
    %6072 = vmatpush1.msra.mxu0 0.0
    %6073 = vmatprep.subr.mxu0 0.0
    %6074 = vmatpush1.msra.mxu0 0.0
    %6075 = vmatprep.subr.mxu0 0.0
    %6076 = vmatpush1.msra.mxu0 0.0
    %6077 = vmatprep.subr.mxu0 0.0
    %6078 = vmatpush1.msra.mxu0 0.0
    %6079 = vmatprep.subr.mxu0 0.0
    %6080 = vmatpush1.msra.mxu0 0.0
    %6081 = vmatprep.subr.mxu0 0.0
    %6082 = vmatpush1.msra.mxu0 0.0
    %6083 = vmatprep.subr.mxu0 0.0
    %6084 = vmatpush1.msra.mxu0 0.0
    %6085 = vmatprep.subr.mxu0 0.0
    %6086 = vmatpush1.msra.mxu0 0.0
    %6087 = vmatprep.subr.mxu0 0.0
    %6088 = vmatpush1.msra.mxu0 0.0
    %6089 = vmatprep.mubr.f32.mxu0 0.0
    %6090 = vmatmul.mubr.f32.gmra.mrb[0].mxu0 %v6023
    %v6091 = vpop.f32.mrb[0].mxu0
    %v6092 = vadd.f32 0.0, %v6091
    %v6093 = vpop.f32.mrb[0].mxu0
    %6094 = vdwg.mxu0
    %v6095 = vadd.f32 %v6021, %v6092
    %v6096 = vrot.slane %v5587, 4
    %v6097 = vsel %vm269, %v6096, 0
    %6099 = vmatprep.subr.mxu0 0.0
    %6100 = vmatpush1.msra.mxu0 %v5638
    %6101 = vmatprep.subr.mxu0 0.0
    %6102 = vmatpush1.msra.mxu0 %v5639
    %6103 = vmatprep.subr.mxu0 0.0
    %6104 = vmatpush1.msra.mxu0 %v5640
    %6105 = vmatprep.subr.mxu0 0.0
    %6106 = vmatpush1.msra.mxu0 %v5641
    %6107 = vmatprep.subr.mxu0 0.0
    %6108 = vmatpush1.msra.mxu0 %v5642
    %6109 = vmatprep.subr.mxu0 0.0
    %6110 = vmatpush1.msra.mxu0 %v5643
    %6111 = vmatprep.subr.mxu0 0.0
    %6112 = vmatpush1.msra.mxu0 %v5644
    %6113 = vmatprep.subr.mxu0 0.0
    %6114 = vmatpush1.msra.mxu0 %v5645
    %6115 = vmatprep.subr.mxu0 0.0
    %6116 = vmatpush1.msra.mxu0 0.0
    %6117 = vmatprep.subr.mxu0 0.0
    %6118 = vmatpush1.msra.mxu0 0.0
    %6119 = vmatprep.subr.mxu0 0.0
    %6120 = vmatpush1.msra.mxu0 0.0
    %6121 = vmatprep.subr.mxu0 0.0
    %6122 = vmatpush1.msra.mxu0 0.0
    %6123 = vmatprep.subr.mxu0 0.0
    %6124 = vmatpush1.msra.mxu0 0.0
    %6125 = vmatprep.subr.mxu0 0.0
    %6126 = vmatpush1.msra.mxu0 0.0
    %6127 = vmatprep.subr.mxu0 0.0
    %6128 = vmatpush1.msra.mxu0 0.0
    %6129 = vmatprep.subr.mxu0 0.0
    %6130 = vmatpush1.msra.mxu0 0.0
    %6131 = vmatprep.subr.mxu0 0.0
    %6132 = vmatpush1.msra.mxu0 0.0
    %6133 = vmatprep.subr.mxu0 0.0
    %6134 = vmatpush1.msra.mxu0 0.0
    %6135 = vmatprep.subr.mxu0 0.0
    %6136 = vmatpush1.msra.mxu0 0.0
    %6137 = vmatprep.subr.mxu0 0.0
    %6138 = vmatpush1.msra.mxu0 0.0
    %6139 = vmatprep.subr.mxu0 0.0
    %6140 = vmatpush1.msra.mxu0 0.0
    %6141 = vmatprep.subr.mxu0 0.0
    %6142 = vmatpush1.msra.mxu0 0.0
    %6143 = vmatprep.subr.mxu0 0.0
    %6144 = vmatpush1.msra.mxu0 0.0
    %6145 = vmatprep.subr.mxu0 0.0
    %6146 = vmatpush1.msra.mxu0 0.0
    %6147 = vmatprep.subr.mxu0 0.0
    %6148 = vmatpush1.msra.mxu0 0.0
    %6149 = vmatprep.subr.mxu0 0.0
    %6150 = vmatpush1.msra.mxu0 0.0
    %6151 = vmatprep.subr.mxu0 0.0
    %6152 = vmatpush1.msra.mxu0 0.0
    %6153 = vmatprep.subr.mxu0 0.0
    %6154 = vmatpush1.msra.mxu0 0.0
    %6155 = vmatprep.subr.mxu0 0.0
    %6156 = vmatpush1.msra.mxu0 0.0
    %6157 = vmatprep.subr.mxu0 0.0
    %6158 = vmatpush1.msra.mxu0 0.0
    %6159 = vmatprep.subr.mxu0 0.0
    %6160 = vmatpush1.msra.mxu0 0.0
    %6161 = vmatprep.subr.mxu0 0.0
    %6162 = vmatpush1.msra.mxu0 0.0
    %6163 = vmatprep.mubr.f32.mxu0 0.0
    %6164 = vmatmul.mubr.f32.gmra.mrb[0].mxu0 %v6097
    %v6165 = vpop.f32.mrb[0].mxu0
    %v6166 = vadd.f32 0.0, %v6165
    %v6167 = vpop.f32.mrb[0].mxu0
    %6168 = vdwg.mxu0
    %v6169 = vadd.f32 %v6095, %v6166
    %v6170 = vrot.slane %v5587, 6
    %v6171 = vsel %vm269, %v6170, 0
    %6173 = vmatprep.subr.mxu0 0.0
    %6174 = vmatpush1.msra.mxu0 %v5646
    %6175 = vmatprep.subr.mxu0 0.0
    %6176 = vmatpush1.msra.mxu0 %v5647
    %6177 = vmatprep.subr.mxu0 0.0
    %6178 = vmatpush1.msra.mxu0 %v5648
    %6179 = vmatprep.subr.mxu0 0.0
    %6180 = vmatpush1.msra.mxu0 %v5649
    %6181 = vmatprep.subr.mxu0 0.0
    %6182 = vmatpush1.msra.mxu0 %v5650
    %6183 = vmatprep.subr.mxu0 0.0
    %6184 = vmatpush1.msra.mxu0 %v5651
    %6185 = vmatprep.subr.mxu0 0.0
    %6186 = vmatpush1.msra.mxu0 %v5652
    %6187 = vmatprep.subr.mxu0 0.0
    %6188 = vmatpush1.msra.mxu0 %v5653
    %6189 = vmatprep.subr.mxu0 0.0
    %6190 = vmatpush1.msra.mxu0 0.0
    %6191 = vmatprep.subr.mxu0 0.0
    %6192 = vmatpush1.msra.mxu0 0.0
    %6193 = vmatprep.subr.mxu0 0.0
    %6194 = vmatpush1.msra.mxu0 0.0
    %6195 = vmatprep.subr.mxu0 0.0
    %6196 = vmatpush1.msra.mxu0 0.0
    %6197 = vmatprep.subr.mxu0 0.0
    %6198 = vmatpush1.msra.mxu0 0.0
    %6199 = vmatprep.subr.mxu0 0.0
    %6200 = vmatpush1.msra.mxu0 0.0
    %6201 = vmatprep.subr.mxu0 0.0
    %6202 = vmatpush1.msra.mxu0 0.0
    %6203 = vmatprep.subr.mxu0 0.0
    %6204 = vmatpush1.msra.mxu0 0.0
    %6205 = vmatprep.subr.mxu0 0.0
    %6206 = vmatpush1.msra.mxu0 0.0
    %6207 = vmatprep.subr.mxu0 0.0
    %6208 = vmatpush1.msra.mxu0 0.0
    %6209 = vmatprep.subr.mxu0 0.0
    %6210 = vmatpush1.msra.mxu0 0.0
    %6211 = vmatprep.subr.mxu0 0.0
    %6212 = vmatpush1.msra.mxu0 0.0
    %6213 = vmatprep.subr.mxu0 0.0
    %6214 = vmatpush1.msra.mxu0 0.0
    %6215 = vmatprep.subr.mxu0 0.0
    %6216 = vmatpush1.msra.mxu0 0.0
    %6217 = vmatprep.subr.mxu0 0.0
    %6218 = vmatpush1.msra.mxu0 0.0
    %6219 = vmatprep.subr.mxu0 0.0
    %6220 = vmatpush1.msra.mxu0 0.0
    %6221 = vmatprep.subr.mxu0 0.0
    %6222 = vmatpush1.msra.mxu0 0.0
    %6223 = vmatprep.subr.mxu0 0.0
    %6224 = vmatpush1.msra.mxu0 0.0
    %6225 = vmatprep.subr.mxu0 0.0
    %6226 = vmatpush1.msra.mxu0 0.0
    %6227 = vmatprep.subr.mxu0 0.0
    %6228 = vmatpush1.msra.mxu0 0.0
    %6229 = vmatprep.subr.mxu0 0.0
    %6230 = vmatpush1.msra.mxu0 0.0
    %6231 = vmatprep.subr.mxu0 0.0
    %6232 = vmatpush1.msra.mxu0 0.0
    %6233 = vmatprep.subr.mxu0 0.0
    %6234 = vmatpush1.msra.mxu0 0.0
    %6235 = vmatprep.subr.mxu0 0.0
    %6236 = vmatpush1.msra.mxu0 0.0
    %6237 = vmatprep.mubr.f32.mxu0 0.0
    %6238 = vmatmul.mubr.f32.gmra.mrb[0].mxu0 %v6171
    %v6239 = vpop.f32.mrb[0].mxu0
    %v6240 = vadd.f32 0.0, %v6239
    %v6241 = vpop.f32.mrb[0].mxu0
    %6242 = vdwg.mxu0
    %v6243 = vadd.f32 %v6169, %v6240
    %v6244 = vld [vmem:[#allocation11] sm:$0x1]
    %v6246 = vlaneseq
    %v6247 = vshrl.u32 %v6246, 7
    %v6248 = vsub.s32 0, %v6247
    %v6249 = vrot.slane %v6244, %v6248
    %v6251 = vadd.f32 %v6243, %v6249
    %v6252 = vadd.f32 %v6251, 3.0
    %v6253 = vmax.f32 %v6252, 0.0
    %v6254 = vmin.f32 %v6253, 6.0
    %v6255 = vmul.f32 %v6251, %v6254
    %v6256 = vmul.f32 %v6255, 0.16666667
    %v6257 = vld [vmem:[#allocation13] sm:$0xff]
    %v6258 = vld [vmem:[#allocation13 + $0x8] sm:$0xff]
    %v6259 = vld [vmem:[#allocation13 + $0x10] sm:$0xff]
    %v6260 = vld [vmem:[#allocation13 + $0x18] sm:$0xff]
    %v6261 = vld [vmem:[#allocation14] sm:$0x1]
    %v6263 = vlaneseq
    %v6264 = vshrl.u32 %v6263, 7
    %v6265 = vsub.s32 0, %v6264
    %v6266 = vrot.slane %v6261, %v6265
    %v6269 = vsel %vm5482, %v6256, 0
    %6271 = vmatprep.subr.mxu0 0.0
    %6272 = vmatpush1.msra.mxu0 %v6257
    %6273 = vmatprep.subr.mxu0 0.0
    %6274 = vmatpush1.msra.mxu0 %v6258
    %6275 = vmatprep.subr.mxu0 0.0
    %6276 = vmatpush1.msra.mxu0 %v6259
    %6277 = vmatprep.subr.mxu0 0.0
    %6278 = vmatpush1.msra.mxu0 %v6260
    %6279 = vmatprep.subr.mxu0 0.0
    %6280 = vmatpush1.msra.mxu0 0.0
    %6281 = vmatprep.subr.mxu0 0.0
    %6282 = vmatpush1.msra.mxu0 0.0
    %6283 = vmatprep.subr.mxu0 0.0
    %6284 = vmatpush1.msra.mxu0 0.0
    %6285 = vmatprep.subr.mxu0 0.0
    %6286 = vmatpush1.msra.mxu0 0.0
    %6287 = vmatprep.subr.mxu0 0.0
    %6288 = vmatpush1.msra.mxu0 0.0
    %6289 = vmatprep.subr.mxu0 0.0
    %6290 = vmatpush1.msra.mxu0 0.0
    %6291 = vmatprep.subr.mxu0 0.0
    %6292 = vmatpush1.msra.mxu0 0.0
    %6293 = vmatprep.subr.mxu0 0.0
    %6294 = vmatpush1.msra.mxu0 0.0
    %6295 = vmatprep.subr.mxu0 0.0
    %6296 = vmatpush1.msra.mxu0 0.0
    %6297 = vmatprep.subr.mxu0 0.0
    %6298 = vmatpush1.msra.mxu0 0.0
    %6299 = vmatprep.subr.mxu0 0.0
    %6300 = vmatpush1.msra.mxu0 0.0
    %6301 = vmatprep.subr.mxu0 0.0
    %6302 = vmatpush1.msra.mxu0 0.0
    %6303 = vmatprep.subr.mxu0 0.0
    %6304 = vmatpush1.msra.mxu0 0.0
    %6305 = vmatprep.subr.mxu0 0.0
    %6306 = vmatpush1.msra.mxu0 0.0
    %6307 = vmatprep.subr.mxu0 0.0
    %6308 = vmatpush1.msra.mxu0 0.0
    %6309 = vmatprep.subr.mxu0 0.0
    %6310 = vmatpush1.msra.mxu0 0.0
    %6311 = vmatprep.subr.mxu0 0.0
    %6312 = vmatpush1.msra.mxu0 0.0
    %6313 = vmatprep.subr.mxu0 0.0
    %6314 = vmatpush1.msra.mxu0 0.0
    %6315 = vmatprep.subr.mxu0 0.0
    %6316 = vmatpush1.msra.mxu0 0.0
    %6317 = vmatprep.subr.mxu0 0.0
    %6318 = vmatpush1.msra.mxu0 0.0
    %6319 = vmatprep.subr.mxu0 0.0
    %6320 = vmatpush1.msra.mxu0 0.0
    %6321 = vmatprep.subr.mxu0 0.0
    %6322 = vmatpush1.msra.mxu0 0.0
    %6323 = vmatprep.subr.mxu0 0.0
    %6324 = vmatpush1.msra.mxu0 0.0
    %6325 = vmatprep.subr.mxu0 0.0
    %6326 = vmatpush1.msra.mxu0 0.0
    %6327 = vmatprep.subr.mxu0 0.0
    %6328 = vmatpush1.msra.mxu0 0.0
    %6329 = vmatprep.subr.mxu0 0.0
    %6330 = vmatpush1.msra.mxu0 0.0
    %6331 = vmatprep.subr.mxu0 0.0
    %6332 = vmatpush1.msra.mxu0 0.0
    %6333 = vmatprep.subr.mxu0 0.0
    %6334 = vmatpush1.msra.mxu0 0.0
    %6335 = vmatprep.mubr.f32.mxu0 0.0
    %6336 = vmatmul.mubr.f32.gmra.mrb[0].mxu0 %v6269
    %v6337 = vpop.f32.mrb[0].mxu0
    %v6338 = vadd.f32 %v6266, %v6337
    %v6339 = vpop.f32.mrb[0].mxu0
    %6340 = vdwg.mxu0
    %v6341 = vadd.f32 %v6338, 3.0
    %v6342 = vmax.f32 %v6341, 0.0
    %v6343 = vmin.f32 %v6342, 6.0
    %v6344 = vmul.f32 %v6338, %v6343
    %v6345 = vmul.f32 %v6344, 0.16666667
    %v6346 = vld [vmem:[#allocation16] sm:$0xff]
    %v6347 = vld [vmem:[#allocation16 + $0x8] sm:$0xff]
    %v6348 = vld [vmem:[#allocation16 + $0x10] sm:$0xff]
    %v6349 = vld [vmem:[#allocation16 + $0x18] sm:$0xff]
    %v6350 = vld [vmem:[#allocation17] sm:$0x1]
    %v6352 = vlaneseq
    %v6353 = vshrl.u32 %v6352, 7
    %v6354 = vsub.s32 0, %v6353
    %v6355 = vrot.slane %v6350, %v6354
    %v6358 = vsel %vm5482, %v6345, 0
    %6360 = vmatprep.subr.mxu0 0.0
    %6361 = vmatpush1.msra.mxu0 %v6346
    %6362 = vmatprep.subr.mxu0 0.0
    %6363 = vmatpush1.msra.mxu0 %v6347
    %6364 = vmatprep.subr.mxu0 0.0
    %6365 = vmatpush1.msra.mxu0 %v6348
    %6366 = vmatprep.subr.mxu0 0.0
    %6367 = vmatpush1.msra.mxu0 %v6349
    %6368 = vmatprep.subr.mxu0 0.0
    %6369 = vmatpush1.msra.mxu0 0.0
    %6370 = vmatprep.subr.mxu0 0.0
    %6371 = vmatpush1.msra.mxu0 0.0
    %6372 = vmatprep.subr.mxu0 0.0
    %6373 = vmatpush1.msra.mxu0 0.0
    %6374 = vmatprep.subr.mxu0 0.0
    %6375 = vmatpush1.msra.mxu0 0.0
    %6376 = vmatprep.subr.mxu0 0.0
    %6377 = vmatpush1.msra.mxu0 0.0
    %6378 = vmatprep.subr.mxu0 0.0
    %6379 = vmatpush1.msra.mxu0 0.0
    %6380 = vmatprep.subr.mxu0 0.0
    %6381 = vmatpush1.msra.mxu0 0.0
    %6382 = vmatprep.subr.mxu0 0.0
    %6383 = vmatpush1.msra.mxu0 0.0
    %6384 = vmatprep.subr.mxu0 0.0
    %6385 = vmatpush1.msra.mxu0 0.0
    %6386 = vmatprep.subr.mxu0 0.0
    %6387 = vmatpush1.msra.mxu0 0.0
    %6388 = vmatprep.subr.mxu0 0.0
    %6389 = vmatpush1.msra.mxu0 0.0
    %6390 = vmatprep.subr.mxu0 0.0
    %6391 = vmatpush1.msra.mxu0 0.0
    %6392 = vmatprep.subr.mxu0 0.0
    %6393 = vmatpush1.msra.mxu0 0.0
    %6394 = vmatprep.subr.mxu0 0.0
    %6395 = vmatpush1.msra.mxu0 0.0
    %6396 = vmatprep.subr.mxu0 0.0
    %6397 = vmatpush1.msra.mxu0 0.0
    %6398 = vmatprep.subr.mxu0 0.0
    %6399 = vmatpush1.msra.mxu0 0.0
    %6400 = vmatprep.subr.mxu0 0.0
    %6401 = vmatpush1.msra.mxu0 0.0
    %6402 = vmatprep.subr.mxu0 0.0
    %6403 = vmatpush1.msra.mxu0 0.0
    %6404 = vmatprep.subr.mxu0 0.0
    %6405 = vmatpush1.msra.mxu0 0.0
    %6406 = vmatprep.subr.mxu0 0.0
    %6407 = vmatpush1.msra.mxu0 0.0
    %6408 = vmatprep.subr.mxu0 0.0
    %6409 = vmatpush1.msra.mxu0 0.0
    %6410 = vmatprep.subr.mxu0 0.0
    %6411 = vmatpush1.msra.mxu0 0.0
    %6412 = vmatprep.subr.mxu0 0.0
    %6413 = vmatpush1.msra.mxu0 0.0
    %6414 = vmatprep.subr.mxu0 0.0
    %6415 = vmatpush1.msra.mxu0 0.0
    %6416 = vmatprep.subr.mxu0 0.0
    %6417 = vmatpush1.msra.mxu0 0.0
    %6418 = vmatprep.subr.mxu0 0.0
    %6419 = vmatpush1.msra.mxu0 0.0
    %6420 = vmatprep.subr.mxu0 0.0
    %6421 = vmatpush1.msra.mxu0 0.0
    %6422 = vmatprep.subr.mxu0 0.0
    %6423 = vmatpush1.msra.mxu0 0.0
    %6424 = vmatprep.mubr.f32.mxu0 0.0
    %6425 = vmatmul.mubr.f32.gmra.mrb[0].mxu0 %v6358
    %v6426 = vpop.f32.mrb[0].mxu0
    %v6427 = vadd.f32 %v6355, %v6426
    %v6428 = vpop.f32.mrb[0].mxu0
    %6429 = vdwg.mxu0
    %v6430 = vadd.f32 %v6427, 3.0
    %v6431 = vmax.f32 %v6430, 0.0
    %v6432 = vmin.f32 %v6431, 6.0
    %v6433 = vmul.f32 %v6427, %v6432
    %v6434 = vmul.f32 %v6433, 0.16666667
    %v6435 = vld [vmem:[%s15] sm:$0xff]
    %v6436 = vld [vmem:[%s15 + $0x8] sm:$0xff]
    %v6437 = vld [vmem:[%s15 + $0x10] sm:$0xff]
    %v6438 = vld [vmem:[%s15 + $0x18] sm:$0xff]
    %v6439 = vld [vmem:[#allocation19] sm:$0x1]
    %v6441 = vlaneseq
    %v6442 = vshrl.u32 %v6441, 7
    %v6443 = vsub.s32 0, %v6442
    %v6444 = vrot.slane %v6439, %v6443
    %v6447 = vsel %vm5482, %v6434, 0
    %6449 = vmatprep.subr.mxu0 0.0
    %6450 = vmatpush1.msra.mxu0 %v6435
    %6451 = vmatprep.subr.mxu0 0.0
    %6452 = vmatpush1.msra.mxu0 %v6436
    %6453 = vmatprep.subr.mxu0 0.0
    %6454 = vmatpush1.msra.mxu0 %v6437
    %6455 = vmatprep.subr.mxu0 0.0
    %6456 = vmatpush1.msra.mxu0 %v6438
    %6457 = vmatprep.subr.mxu0 0.0
    %6458 = vmatpush1.msra.mxu0 0.0
    %6459 = vmatprep.subr.mxu0 0.0
    %6460 = vmatpush1.msra.mxu0 0.0
    %6461 = vmatprep.subr.mxu0 0.0
    %6462 = vmatpush1.msra.mxu0 0.0
    %6463 = vmatprep.subr.mxu0 0.0
    %6464 = vmatpush1.msra.mxu0 0.0
    %6465 = vmatprep.subr.mxu0 0.0
    %6466 = vmatpush1.msra.mxu0 0.0
    %6467 = vmatprep.subr.mxu0 0.0
    %6468 = vmatpush1.msra.mxu0 0.0
    %6469 = vmatprep.subr.mxu0 0.0
    %6470 = vmatpush1.msra.mxu0 0.0
    %6471 = vmatprep.subr.mxu0 0.0
    %6472 = vmatpush1.msra.mxu0 0.0
    %6473 = vmatprep.subr.mxu0 0.0
    %6474 = vmatpush1.msra.mxu0 0.0
    %6475 = vmatprep.subr.mxu0 0.0
    %6476 = vmatpush1.msra.mxu0 0.0
    %6477 = vmatprep.subr.mxu0 0.0
    %6478 = vmatpush1.msra.mxu0 0.0
    %6479 = vmatprep.subr.mxu0 0.0
    %6480 = vmatpush1.msra.mxu0 0.0
    %6481 = vmatprep.subr.mxu0 0.0
    %6482 = vmatpush1.msra.mxu0 0.0
    %6483 = vmatprep.subr.mxu0 0.0
    %6484 = vmatpush1.msra.mxu0 0.0
    %6485 = vmatprep.subr.mxu0 0.0
    %6486 = vmatpush1.msra.mxu0 0.0
    %6487 = vmatprep.subr.mxu0 0.0
    %6488 = vmatpush1.msra.mxu0 0.0
    %6489 = vmatprep.subr.mxu0 0.0
    %6490 = vmatpush1.msra.mxu0 0.0
    %6491 = vmatprep.subr.mxu0 0.0
    %6492 = vmatpush1.msra.mxu0 0.0
    %6493 = vmatprep.subr.mxu0 0.0
    %6494 = vmatpush1.msra.mxu0 0.0
    %6495 = vmatprep.subr.mxu0 0.0
    %6496 = vmatpush1.msra.mxu0 0.0
    %6497 = vmatprep.subr.mxu0 0.0
    %6498 = vmatpush1.msra.mxu0 0.0
    %6499 = vmatprep.subr.mxu0 0.0
    %6500 = vmatpush1.msra.mxu0 0.0
    %6501 = vmatprep.subr.mxu0 0.0
    %6502 = vmatpush1.msra.mxu0 0.0
    %6503 = vmatprep.subr.mxu0 0.0
    %6504 = vmatpush1.msra.mxu0 0.0
    %6505 = vmatprep.subr.mxu0 0.0
    %6506 = vmatpush1.msra.mxu0 0.0
    %6507 = vmatprep.subr.mxu0 0.0
    %6508 = vmatpush1.msra.mxu0 0.0
    %6509 = vmatprep.subr.mxu0 0.0
    %6510 = vmatpush1.msra.mxu0 0.0
    %6511 = vmatprep.subr.mxu0 0.0
    %6512 = vmatpush1.msra.mxu0 0.0
    %6513 = vmatprep.mubr.f32.mxu0 0.0
    %6514 = vmatmul.mubr.f32.gmra.mrb[0].mxu0 %v6447
    %v6515 = vpop.f32.mrb[0].mxu0
    %v6516 = vadd.f32 %v6444, %v6515
    %v6517 = vpop.f32.mrb[0].mxu0
    %6518 = vdwg.mxu0
    %vm6519 = vcmask 9216
    %6520 = vst.msk [vmem:[#allocation20] sm:$0x3] %vm6519, %v6516
    // Predicated region
    $region114: #{forward.1} parent=1 // pred_check
      _
    $region115: #{forward.1} parent=1 // pred_check_branch
      %6522 = sbr.rel (0) target = $region117
    $region116: #{forward.1} parent=1 // pred_region
      %s6524 = ssub.s32 32, 32
      %6525 = vsyncadd [#allocation4], %s6524
      %s6527 = sshll.u32 [#allocation20], 4
      %s6528 = int_to_ptr.vmem [resolvable:$true] %s6527
      %6530 = dma.vmem_to_hbm [thread:$0]  %s6528, 32, %s17, [#allocation4]
    $region117: #{forward.1} parent=1 // pred_fallthru
      _
    // Predicated region
    $region118: #{forward.1} parent=1 // pred_check
      _
    $region119: #{forward.1} parent=1 // pred_check_branch
      %6532 = sbr.rel (0) target = $region121
    $region120: #{forward.1} parent=1 // pred_region
      %6533 = dma.done [#allocation4], 32
    $region121: #{forward.1} parent=1 // pred_fallthru
      _
    %6534 = vsyncpa [#allocation3], 1
    %6535 = vsyncpa [#allocation6], 1
    %6536 = vsyncpa [#allocation9], 1
    %6537 = vsyncpa [#allocation12], 1
    %6538 = vsyncpa [#allocation15], 1
    %6539 = vsyncpa [#allocation18], 1
    %6540 = vsyncpa [#allocation4], 1

</llo_original>
